<compile_context>
chip_gen: v6e
topology: v6e:2x2x1
jax: 0.10.0
libtpu: 0.0.40
codegen_flags: <defaults>
</compile_context>

<pallas_src>
import functools

import jax
import jax.numpy as jnp
from jax import lax
from jax.experimental import pallas as pl
from jax.experimental.pallas import tpu as pltpu


# ============================ Kernel 1: Attention_CA ============================

def _ca1_kernel(x_ref, t_ref, wp_ref, o_ref, *, num_heads, rep_l):
    # x_ref : (1, C, HW)   query image, channels-first, pixels lane-dense
    # t_ref : (1, c_kv, L) kv sequence
    # wp_ref: (C, C)       ca1.project_out weight (out, in), bias-free
    # o_ref : (1, C, HW)
    f32 = jnp.float32
    x = x_ref[0]                       # (C, HW)
    t = t_ref[0]                       # (c_kv, L)
    C, HW = x.shape
    c_kv, L = t.shape
    cp = c_kv // 4

    # F.avg_pool1d(kv.transpose(1,2), 4): mean over groups of 4 consecutive channels.
    rows = [jnp.sum(t[4 * g:4 * g + 4, :], axis=0, keepdims=True) * 0.25
            for g in range(cp)]
    pool = jnp.concatenate(rows, axis=0) if cp > 1 else rows[0]       # (cp, L)

    cq = C // num_heads
    ck = cp // num_heads
    head_outs = []
    for hh in range(num_heads):
        qh = x[hh * cq:(hh + 1) * cq, :]
        kh = pool[hh * ck:(hh + 1) * ck, :]
        qn = qh * lax.rsqrt(jnp.maximum(jnp.sum(qh * qh, axis=-1, keepdims=True), 1e-24))
        kn = kh * lax.rsqrt(jnp.maximum(jnp.sum(kh * kh, axis=-1, keepdims=True), 1e-24))
        # pixel tiling of k/v:  <q, tile_L(k)> == <fold_L(q), k>
        qf = qn[:, 0:L]
        for s in range(1, rep_l):
            qf = qf + qn[:, s * L:(s + 1) * L]
        # channel tiling (rep_c) of k/v duplicates identical softmax columns -> exact no-op.
        scores = lax.dot_general(qf, kn, (((1,), (1,)), ((), ())),
                                 preferred_element_type=f32)          # (cq, ck)
        scores = scores - jnp.max(scores, axis=-1, keepdims=True)
        e = jnp.exp(scores)
        attn = e / jnp.sum(e, axis=-1, keepdims=True)
        head_outs.append(jnp.dot(attn, kn, preferred_element_type=f32))   # v == k
    ca = jnp.concatenate(head_outs, axis=0)                           # (C, L)

    # ca1.project_out (1x1, bias=False); pixel tiling commutes with it -> tile after.
    proj = jnp.dot(wp_ref[...], ca, preferred_element_type=f32)       # (C, L)
    o = jnp.concatenate([proj] * rep_l, axis=1) if rep_l > 1 else proj
    o_ref[0] = o


def _ca1_call(x_flat, t, w_proj, num_heads, rep_l):
    B, C, HW = x_flat.shape
    _, c_kv, L = t.shape
    kern = functools.partial(_ca1_kernel, num_heads=num_heads, rep_l=rep_l)
    return pl.pallas_call(
        kern,
        out_shape=jax.ShapeDtypeStruct((B, C, HW), jnp.float32),
        grid=(B,),
        in_specs=[
            pl.BlockSpec((1, C, HW), lambda b: (b, 0, 0)),
            pl.BlockSpec((1, c_kv, L), lambda b: (b, 0, 0)),
            pl.BlockSpec((C, C), lambda b: (0, 0)),
        ],
        out_specs=pl.BlockSpec((1, C, HW), lambda b: (b, 0, 0)),
        compiler_params=pltpu.CompilerParams(dimension_semantics=("parallel",)),
    )(x_flat, t, w_proj)


# ===================== Kernel 2: EX + convs + channel attention =====================

def _main_kernel(x_ref, mask_ref, wcat_ref, bcat_ref, wexo_ref, bexo_ref,
                 wkv_ref, bkv_ref, wkvdw_ref, bkvdw_ref, wqdw_ref, bqdw_ref,
                 temp_ref, wpo_ref, bpo_ref, o_ref,
                 pad_x, pad_cat, pad_f, pad_kv, *, num_heads, H, W):
    # Channels-first; every activation lives in a zero-padded flat pixel frame
    # (lane axis), convs are one MXU matmul per tap on flat-shifted slices.
    f32 = jnp.float32
    C = x_ref.shape[1]
    C4 = wcat_ref.shape[1]
    C2 = wkv_ref.shape[0]
    Wp = W + 4                         # 2-pixel horizontal pad
    Nf = (H + 8) * Wp                  # 4-row vertical pad (slack for the 5x5 taps)
    o0 = 3 * Wp                        # compute span = frame rows [3, H+5)
    Ns = (H + 2) * Wp

    mask = mask_ref[...]               # (1, Ns): 1.0 on the true image interior

    # ---- place input into its padded frame (full-row writes; only the top/bottom
    # ---- border strips need refreshing, no full-buffer zeroing) ----
    x = x_ref[0]                       # (C, HW)
    zrow = jnp.zeros((C, 4 * Wp), f32)
    zc = jnp.zeros((C, 2), f32)
    pad_x[:, 0:4 * Wp] = zrow
    pad_x[:, (4 + H) * Wp:Nf] = zrow
    for h in range(H):
        r0 = (4 + h) * Wp
        pad_x[:, r0:r0 + Wp] = jnp.concatenate([zc, x[:, h * W:(h + 1) * W], zc], axis=1)
    xp = pad_x[...]                    # (C, Nf)

    # ---- EX: 4 selected convs fused as one dense 5x5 conv (C -> 4C) ----
    cat = jnp.zeros((C4, Ns), f32)
    for dy in range(5):
        for dx in range(5):
            t = dy * 5 + dx
            off = o0 + (dy - 2) * Wp + (dx - 2)
            cat = cat + jnp.dot(wcat_ref[t], xp[:, off:off + Ns],
                                preferred_element_type=f32)
    cat = (cat + bcat_ref[...]) * mask
    pad_cat[:, 0:o0] = jnp.zeros((C4, o0), f32)
    pad_cat[:, o0:o0 + Ns] = cat
    pad_cat[:, o0 + Ns:Nf] = jnp.zeros((C4, Nf - o0 - Ns), f32)
    cfr = pad_cat[...]

    # ---- EX output conv: 3x3, 4C -> C ----
    f = jnp.zeros((C, Ns), f32)
    for dy in range(3):
        for dx in range(3):
            t = dy * 3 + dx
            off = o0 + (dy - 1) * Wp + (dx - 1)
            f = f + jnp.dot(wexo_ref[t], cfr[:, off:off + Ns],
                            preferred_element_type=f32)
    f = (f + bexo_ref[...]) * mask
    pad_f[:, 0:o0] = jnp.zeros((C, o0), f32)
    pad_f[:, o0:o0 + Ns] = f
    pad_f[:, o0 + Ns:Nf] = jnp.zeros((C, Nf - o0 - Ns), f32)

    # ---- kv = 1x1 conv (C -> 2C) ----
    kv = (jnp.dot(wkv_ref[...], f, preferred_element_type=f32) + bkv_ref[...]) * mask
    pad_kv[:, 0:o0] = jnp.zeros((C2, o0), f32)
    pad_kv[:, o0:o0 + Ns] = kv
    pad_kv[:, o0 + Ns:Nf] = jnp.zeros((C2, Nf - o0 - Ns), f32)
    kfr = pad_kv[...]
    ffr = pad_f[...]

    # ---- depthwise 3x3 convs (per-channel weight = sublane broadcast) ----
    kvd = jnp.zeros((C2, Ns), f32)
    qd = jnp.zeros((C, Ns), f32)
    for dy in range(3):
        for dx in range(3):
            t = dy * 3 + dx
            off = o0 + (dy - 1) * Wp + (dx - 1)
            kvd = kvd + wkvdw_ref[:, t:t + 1] * kfr[:, off:off + Ns]
            qd = qd + wqdw_ref[:, t:t + 1] * ffr[:, off:off + Ns]
    kvd = (kvd + bkvdw_ref[...]) * mask
    qd = (qd + bqdw_ref[...]) * mask

    # ---- transposed (channel) attention; zero border pixels contribute nothing ----
    ch = C // num_heads
    outs = []
    for hh in range(num_heads):
        qh = qd[hh * ch:(hh + 1) * ch, :]
        kh = kvd[hh * ch:(hh + 1) * ch, :]
        vh = kvd[C + hh * ch:C + (hh + 1) * ch, :]
        qn = qh * lax.rsqrt(jnp.maximum(jnp.sum(qh * qh, axis=-1, keepdims=True), 1e-24))
        kn = kh * lax.rsqrt(jnp.maximum(jnp.sum(kh * kh, axis=-1, keepdims=True), 1e-24))
        st = lax.dot_general(qn, kn, (((1,), (1,)), ((), ())),
                             preferred_element_type=f32)               # (ch, ch)
        st = st * temp_ref[hh:hh + 1, :]
        st = st - jnp.max(st, axis=-1, keepdims=True)
        e = jnp.exp(st)
        attn = e / jnp.sum(e, axis=-1, keepdims=True)
        outs.append(jnp.dot(attn, vh, preferred_element_type=f32))     # (ch, Ns)
    att = jnp.concatenate(outs, axis=0)                                # (C, Ns)

    # ---- project_out: 1x1 conv (C -> C); bias added on the extracted interior ----
    proj = jnp.dot(wpo_ref[...], att, preferred_element_type=f32)      # (C, Ns)
    rows_out = [proj[:, (1 + h) * Wp + 2:(1 + h) * Wp + 2 + W] for h in range(H)]
    o_ref[0] = jnp.concatenate(rows_out, axis=1) + bpo_ref[...]


def _main_call(x_flat, mask, wcat_t, b_cat, wexo_t, b_exo, wkv, b_kv,
               wkvdw, b_kvdw, wqdw, b_qdw, temp, wpo, b_po, *, num_heads, H, W):
    B, C, HW = x_flat.shape
    C4 = wcat_t.shape[1]
    C2 = wkv.shape[0]
    Wp = W + 4
    Nf = (H + 8) * Wp
    Ns = mask.shape[1]
    kern = functools.partial(_main_kernel, num_heads=num_heads, H=H, W=W)
    c2 = lambda b: (0, 0)
    c3 = lambda b: (0, 0, 0)
    return pl.pallas_call(
        kern,
        out_shape=jax.ShapeDtypeStruct((B, C, HW), jnp.float32),
        grid=(B,),
        in_specs=[
            pl.BlockSpec((1, C, HW), lambda b: (b, 0, 0)),   # input image, (B, C, H*W)
            pl.BlockSpec((1, Ns), c2),                       # interior mask (span coords)
            pl.BlockSpec((25, C4, C), c3),                   # fused EX 5x5 weights (tap-major)
            pl.BlockSpec((C4, 1), c2),
            pl.BlockSpec((9, C, C4), c3),                    # EX output 3x3
            pl.BlockSpec((C, 1), c2),
            pl.BlockSpec((C2, C), c2),                       # kv 1x1
            pl.BlockSpec((C2, 1), c2),
            pl.BlockSpec((C2, 9), c2),                       # kv depthwise 3x3
            pl.BlockSpec((C2, 1), c2),
            pl.BlockSpec((C, 9), c2),                        # q depthwise 3x3
            pl.BlockSpec((C, 1), c2),
            pl.BlockSpec((temp.shape[0], 1), c2),            # temperature
            pl.BlockSpec((C, C), c2),                        # project_out
            pl.BlockSpec((C, 1), c2),
        ],
        out_specs=pl.BlockSpec((1, C, HW), lambda b: (b, 0, 0)),
        scratch_shapes=[
            pltpu.VMEM((C, Nf), jnp.float32),                # padded input frame
            pltpu.VMEM((C4, Nf), jnp.float32),               # padded concat-of-4-convs frame
            pltpu.VMEM((C, Nf), jnp.float32),                # padded F frame
            pltpu.VMEM((C2, Nf), jnp.float32),               # padded kv frame
        ],
        compiler_params=pltpu.CompilerParams(dimension_semantics=("parallel",)),
    )(x_flat, mask, wcat_t, b_cat, wexo_t, b_exo, wkv, b_kv,
      wkvdw, b_kvdw, wqdw, b_qdw, temp, wpo, b_po)


# ============================== wrapper (module forward) ==============================

def _densify_ex_convs(conv_ws, conv_bs, dim):
    """Embed every EX conv (1x1/3x3/5x5, dense or depthwise) into a dense (dim,dim,5,5) kernel."""
    eye = jnp.eye(dim, dtype=jnp.float32)
    dense = []
    for w in conv_ws:
        k = w.shape[-1]
        p = (5 - k) // 2
        if w.shape[1] == dim:                        # ordinary conv
            wk = w
        else:                                        # depthwise (groups=dim)
            wk = eye[:, :, None, None] * w[:, 0][:, None, :, :]
        dense.append(jnp.zeros((dim, dim, 5, 5), jnp.float32)
                     .at[:, :, p:p + k, p:p + k].set(wk))
    return jnp.stack(dense, axis=0), jnp.stack(conv_bs, axis=0)


def attention_c_forward(I, T, params, num_heads):
    """Pallas implementation of Attention_C.forward(I, T).  I: (B,C,H,W), T: (B,c_kv,L)."""
    B, C, H, W = I.shape
    HW = H * W
    _, c_kv, L = T.shape

    if H == 512:
        rep = (1, 64)
    elif H == 256:
        rep = (1, 16)
    elif H == 128:
        rep = (2, 4)
    else:
        rep = (4, 1)
    assert L * rep[1] == HW, "Attention_CA requires kv length * repeat == h*w"

    # ---------- kernel 1: Attention_CA fused ----------
    wca = params["ca_proj_w"][:, :, 0, 0]                                 # (Cout, Cin), no bias
    F1 = _ca1_call(I.reshape(B, C, HW), T, wca, num_heads, rep[1])        # (B, C, HW)
    F1_img = F1.reshape(B, C, H, W)

    # ---------- JAX glue: EX data-dependent conv selection ----------
    # TODO(synk): picking 4 of 12 nn.Conv2d modules (AdaptiveAvgPool3d -> softmax -> topk) is
    # data-dependent module dispatch; done as tiny scalar JAX work here, only the gathered
    # (pre-densified) 5x5 weights are fed to the fused Pallas kernel.
    cols = []
    for j in range(12):
        s = (j * W) // 12
        e = -(-((j + 1) * W) // 12)
        cols.append(jnp.mean(F1_img[:, :, :, s:e], axis=(1, 2, 3)))
    sel = jax.nn.softmax(jnp.stack(cols, axis=1), axis=-1)                # (B, 12)
    _, idx = jax.lax.top_k(sel[0], 4)                                     # batch-0 indices (as in PyTorch)

    w_dense = params["ex_dense_w"]                                        # pre-densified at init
    b_dense = params["ex_dense_b"]
    w_cat = jnp.take(w_dense, idx, axis=0).reshape(4 * C, C, 5, 5)
    b_cat = jnp.take(b_dense, idx, axis=0).reshape(4 * C, 1)

    # tap-major (W @ x) weight layouts; weights stay VMEM-resident in the kernel
    wcat_t = jnp.transpose(w_cat, (2, 3, 0, 1)).reshape(25, 4 * C, C)
    wexo_t = jnp.transpose(params["ex_out_w"], (2, 3, 0, 1)).reshape(9, C, 4 * C)
    wkv = params["kv_w"][:, :, 0, 0]                                      # (2C, C)
    wkvdw = params["kv_dw_w"][:, 0].reshape(2 * C, 9)
    wqdw = params["q_dw_w"][:, 0].reshape(C, 9)
    wpo = params["proj_w"][:, :, 0, 0]                                    # (C, C)

    # interior mask in padded-span coordinates for kernel 2
    Wp = W + 4
    Ns = (H + 2) * Wp
    ar = jnp.arange(Ns)
    rr = ar // Wp
    cc = ar - rr * Wp
    mask = (((rr >= 1) & (rr <= H) & (cc >= 2) & (cc < 2 + W))
            .astype(jnp.float32).reshape(1, Ns))

    # ---------- kernel 2: everything after the selection, fused per batch ----------
    out = _main_call(
        I.reshape(B, C, HW), mask, wcat_t, b_cat,
        wexo_t, params["ex_out_b"].reshape(C, 1),
        wkv, params["kv_b"].reshape(2 * C, 1),
        wkvdw, params["kv_dw_b"].reshape(2 * C, 1),
        wqdw, params["q_dw_b"].reshape(C, 1),
        params["temperature"].reshape(num_heads, 1),
        wpo, params["proj_b"].reshape(C, 1),
        num_heads=num_heads, H=H, W=W)
    return out.reshape(B, C, H, W)


# ============================== pure-JAX reference ==============================

def _conv_ref(x, w, b, groups=1):
    k = w.shape[-1]
    p = k // 2
    y = lax.conv_general_dilated(x, w, window_strides=(1, 1),
                                 padding=[(p, p), (p, p)],
                                 dimension_numbers=("NCHW", "OIHW", "NCHW"),
                                 feature_group_count=groups)
    return y + b[None, :, None, None]


def attention_c_ref(I, T, params, num_heads):
    B, C, H, W = I.shape
    HW = H * W
    _, c_kv, L = T.shape

    def l2n(a):
        return a / jnp.maximum(jnp.linalg.norm(a, axis=-1, keepdims=True), 1e-12)

    # ---- Attention_CA ----
    xp = T.reshape(B, c_kv // 4, 4, L).mean(axis=2)
    q = l2n(I.reshape(B, num_heads, C // num_heads, HW))
    k = l2n(xp.reshape(B, num_heads, (c_kv // 4) // num_heads, L))
    v = k
    if H == 512:
        reps = (1, 1, 1, 64)
    elif H == 256:
        reps = (1, 1, 1, 16)
    elif H == 128:
        reps = (1, 1, 2, 4)
    else:
        reps = (1, 1, 4, 1)
    k = jnp.tile(k, reps)
    v = jnp.tile(v, reps)
    attn = jax.nn.softmax(jnp.einsum('bhcn,bhdn->bhcd', q, k), axis=-1)
    out = jnp.einsum('bhcd,bhdn->bhcn', attn, v).reshape(B, C, H, W)
    F1 = jnp.einsum('oi,bihw->bohw', params["ca_proj_w"][:, :, 0, 0], out)

    # ---- EX ----
    cols = []
    for j in range(12):
        s = (j * W) // 12
        e = -(-((j + 1) * W) // 12)
        cols.append(jnp.mean(F1[:, :, :, s:e], axis=(1, 2, 3)))
    sel = jax.nn.softmax(jnp.stack(cols, axis=1), axis=-1)
    _, idx = jax.lax.top_k(sel[0], 4)
    branches = []
    for j in range(12):
        wj, bj = params["ex_conv_w"][j], params["ex_conv_b"][j]
        gj = C if wj.shape[1] == 1 else 1
        branches.append(lambda x, wj=wj, bj=bj, gj=gj: _conv_ref(x, wj, bj, gj))
    outs = [lax.switch(idx[i], branches, I) for i in range(4)]
    cat = jnp.concatenate(outs, axis=1)
    F2 = _conv_ref(cat, params["ex_out_w"], params["ex_out_b"])

    # ---- main transposed attention ----
    kv = _conv_ref(F2, params["kv_w"], params["kv_b"])
    kv = _conv_ref(kv, params["kv_dw_w"], params["kv_dw_b"], groups=2 * C)
    kk, vv = kv[:, :C], kv[:, C:]
    qq = _conv_ref(F2, params["q_dw_w"], params["q_dw_b"], groups=C)
    ch = C // num_heads
    qh = l2n(qq.reshape(B, num_heads, ch, HW))
    kh = l2n(kk.reshape(B, num_heads, ch, HW))
    vh = vv.reshape(B, num_heads, ch, HW)
    temp = params["temperature"].reshape(1, num_heads, 1, 1)
    att = jax.nn.softmax(jnp.einsum('bhcn,bhdn->bhcd', qh, kh) * temp, axis=-1)
    o = jnp.einsum('bhcd,bhdn->bhcn', att, vh).reshape(B, C, H, W)
    o = jnp.einsum('oi,bihw->bohw', params["proj_w"][:, :, 0, 0], o)
    return o + params["proj_b"][None, :, None, None]


# ===================================== main =====================================

if __name__ == "__main__":
    B, dim, num_heads, H, W = 2, 4, 2, 16, 16
    HW = H * W
    c_kv, L = 8, HW                       # kv sequence: channels pooled by 4, length == h*w

    key = jax.random.PRNGKey(0)
    kit = iter(jax.random.split(key, 48))

    def rnd(shape, scale=0.1):
        return (scale * jax.random.normal(next(kit), shape)).astype(jnp.float32)

    # EX's 12 convs: 6 ordinary (1x1, 3x3, 5x5) x2 and 6 depthwise (1x1, 3x3, 5x5) x2
    ex_conv_w, ex_conv_b = [], []
    for ksz in (1, 3, 5, 1, 3, 5):
        ex_conv_w.append(rnd((dim, dim, ksz, ksz)))
        ex_conv_b.append(rnd((dim,)))
    for ksz in (1, 3, 5, 1, 3, 5):
        ex_conv_w.append(rnd((dim, 1, ksz, ksz)))
        ex_conv_b.append(rnd((dim,)))

    params = {
        "temperature": (1.0 + rnd((num_heads, 1, 1), 0.5)),
        "kv_w": rnd((2 * dim, dim, 1, 1)), "kv_b": rnd((2 * dim,)),
        "kv_dw_w": rnd((2 * dim, 1, 3, 3)), "kv_dw_b": rnd((2 * dim,)),
        "q_dw_w": rnd((dim, 1, 3, 3)), "q_dw_b": rnd((dim,)),
        "proj_w": rnd((dim, dim, 1, 1)), "proj_b": rnd((dim,)),
        "ca_proj_w": rnd((dim, dim, 1, 1)),              # Attention_CA.project_out (bias=False)
        "ex_conv_w": ex_conv_w, "ex_conv_b": ex_conv_b,
        "ex_out_w": rnd((dim, 4 * dim, 3, 3)), "ex_out_b": rnd((dim,)),
    }
    # pre-densify the 12 EX convs once at init (hoisted out of the per-call path)
    params["ex_dense_w"], params["ex_dense_b"] = _densify_ex_convs(ex_conv_w, ex_conv_b, dim)

    I = jax.random.normal(next(kit), (B, dim, H, W), dtype=jnp.float32)   # NCHW query image
    T = jax.random.normal(next(kit), (B, c_kv, L), dtype=jnp.float32)     # (b, c, l) kv sequence

    fwd = jax.jit(attention_c_forward, static_argnums=(3,))
    out = jax.block_until_ready(fwd(I, T, params, num_heads))
    ref = jax.block_until_ready(attention_c_ref(I, T, params, num_heads))

    assert out.shape == (B, dim, H, W) and out.dtype == jnp.float32
    err = float(jnp.max(jnp.abs(out - ref)))
    ref_mag = float(jnp.max(jnp.abs(ref)))
    assert err <= 1e-4 * max(1.0, ref_mag), (err, ref_mag)

    print("KERNEL_OK")
</pallas_src>

<mosaic_0001>
module attributes {stable_mosaic.version = 11 : i64} {
  func.func @_ca1_kernel(%arg0: i32, %arg1: memref<1x4x256xf32, #tpu.memory_space<vmem>>, %arg2: memref<1x8x256xf32, #tpu.memory_space<vmem>>, %arg3: memref<4x4xf32, #tpu.memory_space<vmem>>, %arg4: memref<1x4x256xf32, #tpu.memory_space<vmem>>) attributes {dimension_semantics = [#tpu.dimension_semantics<parallel>], iteration_bounds = array<i64: 2>, scalar_prefetch = 0 : i64, scratch_operands = 0 : i64, tpu.core_type = #tpu.core_type<tc>, window_params = [{transform_indices = @transform_0, window_bounds = array<i64: 1, 4, 256>}, {transform_indices = @transform_1, window_bounds = array<i64: 1, 8, 256>}, {pipeline_mode = #tpu.pipeline_mode<synchronous>, transform_indices = @transform_2, window_bounds = array<i64: 4, 4>}, {transform_indices = @transform_3, window_bounds = array<i64: 1, 4, 256>}]} {
    %c0 = arith.constant 0 : index
    %c0_0 = arith.constant 0 : index
    %c0_1 = arith.constant 0 : index
    %0 = vector.load %arg1[%c0, %c0_0, %c0_1] : memref<1x4x256xf32, #tpu.memory_space<vmem>>, vector<1x4x256xf32>
    %1 = vector.shape_cast %0 : vector<1x4x256xf32> to vector<4x256xf32>
    %c0_2 = arith.constant 0 : index
    %c0_3 = arith.constant 0 : index
    %c0_4 = arith.constant 0 : index
    %2 = vector.load %arg2[%c0_2, %c0_3, %c0_4] : memref<1x8x256xf32, #tpu.memory_space<vmem>>, vector<1x8x256xf32>
    %3 = vector.shape_cast %2 : vector<1x8x256xf32> to vector<8x256xf32>
    %4 = vector.extract_strided_slice %3 {offsets = [0, 0], sizes = [4, 256], strides = [1, 1]} : vector<8x256xf32> to vector<4x256xf32>
    %cst = arith.constant dense<0.000000e+00> : vector<256xf32>
    %5 = vector.multi_reduction <add>, %4, %cst [0] : vector<4x256xf32> to vector<256xf32>
    %6 = vector.shape_cast %5 : vector<256xf32> to vector<1x256xf32>
    %cst_5 = arith.constant 2.500000e-01 : f32
    %7 = vector.broadcast %cst_5 : f32 to vector<1x256xf32>
    %8 = arith.mulf %6, %7 : vector<1x256xf32>
    %9 = vector.extract_strided_slice %3 {offsets = [4, 0], sizes = [4, 256], strides = [1, 1]} : vector<8x256xf32> to vector<4x256xf32>
    %cst_6 = arith.constant dense<0.000000e+00> : vector<256xf32>
    %10 = vector.multi_reduction <add>, %9, %cst_6 [0] : vector<4x256xf32> to vector<256xf32>
    %11 = vector.shape_cast %10 : vector<256xf32> to vector<1x256xf32>
    %cst_7 = arith.constant 2.500000e-01 : f32
    %12 = vector.broadcast %cst_7 : f32 to vector<1x256xf32>
    %13 = arith.mulf %11, %12 : vector<1x256xf32>
    %14 = tpu.concatenate %8, %13 in 0 : vector<1x256xf32>, vector<1x256xf32> -> vector<2x256xf32>
    %15 = vector.extract_strided_slice %1 {offsets = [0, 0], sizes = [2, 256], strides = [1, 1]} : vector<4x256xf32> to vector<2x256xf32>
    %16 = vector.extract_strided_slice %14 {offsets = [0, 0], sizes = [1, 256], strides = [1, 1]} : vector<2x256xf32> to vector<1x256xf32>
    %17 = arith.mulf %15, %15 : vector<2x256xf32>
    %cst_8 = arith.constant dense<0.000000e+00> : vector<2xf32>
    %18 = vector.multi_reduction <add>, %17, %cst_8 [1] : vector<2x256xf32> to vector<2xf32>
    %19 = vector.shape_cast %18 : vector<2xf32> to vector<2x1xf32>
    %cst_9 = arith.constant 1.000000e-24 : f32
    %20 = vector.broadcast %cst_9 : f32 to vector<2x1xf32>
    %21 = arith.maximumf %19, %20 : vector<2x1xf32>
    %22 = math.rsqrt %21 : vector<2x1xf32>
    %23 = vector.broadcast %22 : vector<2x1xf32> to vector<2x256xf32>
    %24 = arith.mulf %15, %23 : vector<2x256xf32>
    %25 = arith.mulf %16, %16 : vector<1x256xf32>
    %cst_10 = arith.constant dense<0.000000e+00> : vector<1xf32>
    %26 = vector.multi_reduction <add>, %25, %cst_10 [1] : vector<1x256xf32> to vector<1xf32>
    %27 = vector.shape_cast %26 : vector<1xf32> to vector<1x1xf32>
    %cst_11 = arith.constant 1.000000e-24 : f32
    %28 = vector.broadcast %cst_11 : f32 to vector<1x1xf32>
    %29 = arith.maximumf %27, %28 : vector<1x1xf32>
    %30 = math.rsqrt %29 : vector<1x1xf32>
    %31 = vector.broadcast %30 : vector<1x1xf32> to vector<1x256xf32>
    %32 = arith.mulf %16, %31 : vector<1x256xf32>
    %cst_12 = arith.constant dense<0.000000e+00> : vector<2x1xf32>
    %33 = tpu.matmul %24, %32, %cst_12 {dimension_numbers = #tpu.dot_dimension_numbers<[1], [1], [0], [0], [0, 0, 1, 0], [], []>} : vector<2x256xf32>, vector<1x256xf32>, vector<2x1xf32> -> vector<2x1xf32>
    %cst_13 = arith.constant dense<0xFF800000> : vector<2xf32>
    %34 = vector.multi_reduction <maximumf>, %33, %cst_13 [1] : vector<2x1xf32> to vector<2xf32>
    %35 = vector.shape_cast %34 : vector<2xf32> to vector<2x1xf32>
    %36 = arith.subf %33, %35 : vector<2x1xf32>
    %37 = math.exp %36 : vector<2x1xf32>
    %cst_14 = arith.constant dense<0.000000e+00> : vector<2xf32>
    %38 = vector.multi_reduction <add>, %37, %cst_14 [1] : vector<2x1xf32> to vector<2xf32>
    %39 = vector.shape_cast %38 : vector<2xf32> to vector<2x1xf32>
    %40 = arith.divf %37, %39 : vector<2x1xf32>
    %cst_15 = arith.constant dense<0.000000e+00> : vector<2x256xf32>
    %41 = tpu.matmul %40, %32, %cst_15 {dimension_numbers = #tpu.dot_dimension_numbers<[1], [0], [0], [1], [0, 0, 1, 1], [], []>} : vector<2x1xf32>, vector<1x256xf32>, vector<2x256xf32> -> vector<2x256xf32>
    %42 = vector.extract_strided_slice %1 {offsets = [2, 0], sizes = [2, 256], strides = [1, 1]} : vector<4x256xf32> to vector<2x256xf32>
    %43 = vector.extract_strided_slice %14 {offsets = [1, 0], sizes = [1, 256], strides = [1, 1]} : vector<2x256xf32> to vector<1x256xf32>
    %44 = arith.mulf %42, %42 : vector<2x256xf32>
    %cst_16 = arith.constant dense<0.000000e+00> : vector<2xf32>
    %45 = vector.multi_reduction <add>, %44, %cst_16 [1] : vector<2x256xf32> to vector<2xf32>
    %46 = vector.shape_cast %45 : vector<2xf32> to vector<2x1xf32>
    %cst_17 = arith.constant 1.000000e-24 : f32
    %47 = vector.broadcast %cst_17 : f32 to vector<2x1xf32>
    %48 = arith.maximumf %46, %47 : vector<2x1xf32>
    %49 = math.rsqrt %48 : vector<2x1xf32>
    %50 = vector.broadcast %49 : vector<2x1xf32> to vector<2x256xf32>
    %51 = arith.mulf %42, %50 : vector<2x256xf32>
    %52 = arith.mulf %43, %43 : vector<1x256xf32>
    %cst_18 = arith.constant dense<0.000000e+00> : vector<1xf32>
    %53 = vector.multi_reduction <add>, %52, %cst_18 [1] : vector<1x256xf32> to vector<1xf32>
    %54 = vector.shape_cast %53 : vector<1xf32> to vector<1x1xf32>
    %cst_19 = arith.constant 1.000000e-24 : f32
    %55 = vector.broadcast %cst_19 : f32 to vector<1x1xf32>
    %56 = arith.maximumf %54, %55 : vector<1x1xf32>
    %57 = math.rsqrt %56 : vector<1x1xf32>
    %58 = vector.broadcast %57 : vector<1x1xf32> to vector<1x256xf32>
    %59 = arith.mulf %43, %58 : vector<1x256xf32>
    %cst_20 = arith.constant dense<0.000000e+00> : vector<2x1xf32>
    %60 = tpu.matmul %51, %59, %cst_20 {dimension_numbers = #tpu.dot_dimension_numbers<[1], [1], [0], [0], [0, 0, 1, 0], [], []>} : vector<2x256xf32>, vector<1x256xf32>, vector<2x1xf32> -> vector<2x1xf32>
    %cst_21 = arith.constant dense<0xFF800000> : vector<2xf32>
    %61 = vector.multi_reduction <maximumf>, %60, %cst_21 [1] : vector<2x1xf32> to vector<2xf32>
    %62 = vector.shape_cast %61 : vector<2xf32> to vector<2x1xf32>
    %63 = arith.subf %60, %62 : vector<2x1xf32>
    %64 = math.exp %63 : vector<2x1xf32>
    %cst_22 = arith.constant dense<0.000000e+00> : vector<2xf32>
    %65 = vector.multi_reduction <add>, %64, %cst_22 [1] : vector<2x1xf32> to vector<2xf32>
    %66 = vector.shape_cast %65 : vector<2xf32> to vector<2x1xf32>
    %67 = arith.divf %64, %66 : vector<2x1xf32>
    %cst_23 = arith.constant dense<0.000000e+00> : vector<2x256xf32>
    %68 = tpu.matmul %67, %59, %cst_23 {dimension_numbers = #tpu.dot_dimension_numbers<[1], [0], [0], [1], [0, 0, 1, 1], [], []>} : vector<2x1xf32>, vector<1x256xf32>, vector<2x256xf32> -> vector<2x256xf32>
    %69 = tpu.concatenate %41, %68 in 0 : vector<2x256xf32>, vector<2x256xf32> -> vector<4x256xf32>
    %c0_24 = arith.constant 0 : index
    %c0_25 = arith.constant 0 : index
    %70 = vector.load %arg3[%c0_24, %c0_25] : memref<4x4xf32, #tpu.memory_space<vmem>>, vector<4x4xf32>
    %cst_26 = arith.constant dense<0.000000e+00> : vector<4x256xf32>
    %71 = tpu.matmul %70, %69, %cst_26 {dimension_numbers = #tpu.dot_dimension_numbers<[1], [0], [0], [1], [0, 0, 1, 1], [], []>} : vector<4x4xf32>, vector<4x256xf32>, vector<4x256xf32> -> vector<4x256xf32>
    %c0_27 = arith.constant 0 : index
    %c0_28 = arith.constant 0 : index
    %c0_29 = arith.constant 0 : index
    %72 = vector.load %arg4[%c0_27, %c0_28, %c0_29] : memref<1x4x256xf32, #tpu.memory_space<vmem>>, vector<1x4x256xf32>
    %73 = vector.shape_cast %72 : vector<1x4x256xf32> to vector<4x256xf32>
    %74 = vector.shape_cast %71 : vector<4x256xf32> to vector<1x4x256xf32>
    tpu.vector_store %arg4[%c0_27, %c0_28, %c0_29], %74 {strides = array<i32>} : memref<1x4x256xf32, #tpu.memory_space<vmem>>, vector<1x4x256xf32>,
    return
  }
  func.func @transform_0(%arg0: i32) -> (i32, i32, i32) {
    %c0_i32 = arith.constant 0 : i32
    %c0_i32_0 = arith.constant 0 : i32
    %c0_i32_1 = arith.constant 0 : i32
    return %arg0, %c0_i32, %c0_i32_0 : i32, i32, i32
  }
  func.func @transform_1(%arg0: i32) -> (i32, i32, i32) {
    %c0_i32 = arith.constant 0 : i32
    %c0_i32_0 = arith.constant 0 : i32
    %c0_i32_1 = arith.constant 0 : i32
    return %arg0, %c0_i32, %c0_i32_0 : i32, i32, i32
  }
  func.func @transform_2(%arg0: i32) -> (i32, i32) {
    %c0_i32 = arith.constant 0 : i32
    %c0_i32_0 = arith.constant 0 : i32
    %c0_i32_1 = arith.constant 0 : i32
    return %c0_i32, %c0_i32_0 : i32, i32
  }
  func.func @transform_3(%arg0: i32) -> (i32, i32, i32) {
    %c0_i32 = arith.constant 0 : i32
    %c0_i32_0 = arith.constant 0 : i32
    %c0_i32_1 = arith.constant 0 : i32
    return %arg0, %c0_i32, %c0_i32_0 : i32, i32, i32
  }
}

module attributes {stable_mosaic.version = 11 : i64} {
  func.func @_main_kernel(%arg0: i32, %arg1: memref<1x4x256xf32, #tpu.memory_space<vmem>>, %arg2: memref<1x360xf32, #tpu.memory_space<vmem>>, %arg3: memref<25x16x4xf32, #tpu.memory_space<vmem>>, %arg4: memref<16x1xf32, #tpu.memory_space<vmem>>, %arg5: memref<9x4x16xf32, #tpu.memory_space<vmem>>, %arg6: memref<4x1xf32, #tpu.memory_space<vmem>>, %arg7: memref<8x4xf32, #tpu.memory_space<vmem>>, %arg8: memref<8x1xf32, #tpu.memory_space<vmem>>, %arg9: memref<8x9xf32, #tpu.memory_space<vmem>>, %arg10: memref<8x1xf32, #tpu.memory_space<vmem>>, %arg11: memref<4x9xf32, #tpu.memory_space<vmem>>, %arg12: memref<4x1xf32, #tpu.memory_space<vmem>>, %arg13: memref<2x1xf32, #tpu.memory_space<vmem>>, %arg14: memref<4x4xf32, #tpu.memory_space<vmem>>, %arg15: memref<4x1xf32, #tpu.memory_space<vmem>>, %arg16: memref<1x4x256xf32, #tpu.memory_space<vmem>>, %arg17: memref<4x480xf32, #tpu.memory_space<vmem>>, %arg18: memref<16x480xf32, #tpu.memory_space<vmem>>, %arg19: memref<4x480xf32, #tpu.memory_space<vmem>>, %arg20: memref<8x480xf32, #tpu.memory_space<vmem>>) attributes {dimension_semantics = [#tpu.dimension_semantics<parallel>], iteration_bounds = array<i64: 2>, scalar_prefetch = 0 : i64, scratch_operands = 4 : i64, tpu.core_type = #tpu.core_type<tc>, window_params = [{transform_indices = @transform_0, window_bounds = array<i64: 1, 4, 256>}, {pipeline_mode = #tpu.pipeline_mode<synchronous>, transform_indices = @transform_1, window_bounds = array<i64: 1, 360>}, {pipeline_mode = #tpu.pipeline_mode<synchronous>, transform_indices = @transform_2, window_bounds = array<i64: 25, 16, 4>}, {pipeline_mode = #tpu.pipeline_mode<synchronous>, transform_indices = @transform_3, window_bounds = array<i64: 16, 1>}, {pipeline_mode = #tpu.pipeline_mode<synchronous>, transform_indices = @transform_4, window_bounds = array<i64: 9, 4, 16>}, {pipeline_mode = #tpu.pipeline_mode<synchronous>, transform_indices = @transform_5, window_bounds = array<i64: 4, 1>}, {pipeline_mode = #tpu.pipeline_mode<synchronous>, transform_indices = @transform_6, window_bounds = array<i64: 8, 4>}, {pipeline_mode = #tpu.pipeline_mode<synchronous>, transform_indices = @transform_7, window_bounds = array<i64: 8, 1>}, {pipeline_mode = #tpu.pipeline_mode<synchronous>, transform_indices = @transform_8, window_bounds = array<i64: 8, 9>}, {pipeline_mode = #tpu.pipeline_mode<synchronous>, transform_indices = @transform_9, window_bounds = array<i64: 8, 1>}, {pipeline_mode = #tpu.pipeline_mode<synchronous>, transform_indices = @transform_10, window_bounds = array<i64: 4, 9>}, {pipeline_mode = #tpu.pipeline_mode<synchronous>, transform_indices = @transform_11, window_bounds = array<i64: 4, 1>}, {pipeline_mode = #tpu.pipeline_mode<synchronous>, transform_indices = @transform_12, window_bounds = array<i64: 2, 1>}, {pipeline_mode = #tpu.pipeline_mode<synchronous>, transform_indices = @transform_13, window_bounds = array<i64: 4, 4>}, {pipeline_mode = #tpu.pipeline_mode<synchronous>, transform_indices = @transform_14, window_bounds = array<i64: 4, 1>}, {transform_indices = @transform_15, window_bounds = array<i64: 1, 4, 256>}]} {
    %c0 = arith.constant 0 : index
    %c0_0 = arith.constant 0 : index
    %0 = vector.load %arg2[%c0, %c0_0] : memref<1x360xf32, #tpu.memory_space<vmem>>, vector<1x360xf32>
    %c0_1 = arith.constant 0 : index
    %c0_2 = arith.constant 0 : index
    %c0_3 = arith.constant 0 : index
    %1 = vector.load %arg1[%c0_1, %c0_2, %c0_3] : memref<1x4x256xf32, #tpu.memory_space<vmem>>, vector<1x4x256xf32>
    %2 = vector.shape_cast %1 : vector<1x4x256xf32> to vector<4x256xf32>
    %cst = arith.constant 0.000000e+00 : f32
    %3 = vector.broadcast %cst : f32 to vector<4x80xf32>
    %cst_4 = arith.constant 0.000000e+00 : f32
    %4 = vector.broadcast %cst_4 : f32 to vector<4x2xf32>
    %c0_5 = arith.constant 0 : index
    %c0_6 = arith.constant 0 : index
    %5 = vector.load %arg17[%c0_5, %c0_6] : memref<4x480xf32, #tpu.memory_space<vmem>>, vector<4x80xf32>
    tpu.vector_store %arg17[%c0_5, %c0_6], %3 {strides = array<i32>} : memref<4x480xf32, #tpu.memory_space<vmem>>, vector<4x80xf32>,
    %c0_7 = arith.constant 0 : index
    %c400 = arith.constant 400 : index
    %6 = vector.load %arg17[%c0_7, %c400] : memref<4x480xf32, #tpu.memory_space<vmem>>, vector<4x80xf32>
    tpu.vector_store %arg17[%c0_7, %c400], %3 {strides = array<i32>} : memref<4x480xf32, #tpu.memory_space<vmem>>, vector<4x80xf32>,
    %7 = vector.extract_strided_slice %2 {offsets = [0, 0], sizes = [4, 16], strides = [1, 1]} : vector<4x256xf32> to vector<4x16xf32>
    %8 = tpu.concatenate %4, %7, %4 in 1 : vector<4x2xf32>, vector<4x16xf32>, vector<4x2xf32> -> vector<4x20xf32>
    %c0_8 = arith.constant 0 : index
    %c80 = arith.constant 80 : index
    %9 = vector.load %arg17[%c0_8, %c80] : memref<4x480xf32, #tpu.memory_space<vmem>>, vector<4x20xf32>
    tpu.vector_store %arg17[%c0_8, %c80], %8 {strides = array<i32>} : memref<4x480xf32, #tpu.memory_space<vmem>>, vector<4x20xf32>,
    %10 = vector.extract_strided_slice %2 {offsets = [0, 16], sizes = [4, 16], strides = [1, 1]} : vector<4x256xf32> to vector<4x16xf32>
    %11 = tpu.concatenate %4, %10, %4 in 1 : vector<4x2xf32>, vector<4x16xf32>, vector<4x2xf32> -> vector<4x20xf32>
    %c0_9 = arith.constant 0 : index
    %c100 = arith.constant 100 : index
    %12 = vector.load %arg17[%c0_9, %c100] : memref<4x480xf32, #tpu.memory_space<vmem>>, vector<4x20xf32>
    tpu.vector_store %arg17[%c0_9, %c100], %11 {strides = array<i32>} : memref<4x480xf32, #tpu.memory_space<vmem>>, vector<4x20xf32>,
    %13 = vector.extract_strided_slice %2 {offsets = [0, 32], sizes = [4, 16], strides = [1, 1]} : vector<4x256xf32> to vector<4x16xf32>
    %14 = tpu.concatenate %4, %13, %4 in 1 : vector<4x2xf32>, vector<4x16xf32>, vector<4x2xf32> -> vector<4x20xf32>
    %c0_10 = arith.constant 0 : index
    %c120 = arith.constant 120 : index
    %15 = vector.load %arg17[%c0_10, %c120] : memref<4x480xf32, #tpu.memory_space<vmem>>, vector<4x20xf32>
    tpu.vector_store %arg17[%c0_10, %c120], %14 {strides = array<i32>} : memref<4x480xf32, #tpu.memory_space<vmem>>, vector<4x20xf32>,
    %16 = vector.extract_strided_slice %2 {offsets = [0, 48], sizes = [4, 16], strides = [1, 1]} : vector<4x256xf32> to vector<4x16xf32>
    %17 = tpu.concatenate %4, %16, %4 in 1 : vector<4x2xf32>, vector<4x16xf32>, vector<4x2xf32> -> vector<4x20xf32>
    %c0_11 = arith.constant 0 : index
    %c140 = arith.constant 140 : index
    %18 = vector.load %arg17[%c0_11, %c140] : memref<4x480xf32, #tpu.memory_space<vmem>>, vector<4x20xf32>
    tpu.vector_store %arg17[%c0_11, %c140], %17 {strides = array<i32>} : memref<4x480xf32, #tpu.memory_space<vmem>>, vector<4x20xf32>,
    %19 = vector.extract_strided_slice %2 {offsets = [0, 64], sizes = [4, 16], strides = [1, 1]} : vector<4x256xf32> to vector<4x16xf32>
    %20 = tpu.concatenate %4, %19, %4 in 1 : vector<4x2xf32>, vector<4x16xf32>, vector<4x2xf32> -> vector<4x20xf32>
    %c0_12 = arith.constant 0 : index
    %c160 = arith.constant 160 : index
    %21 = vector.load %arg17[%c0_12, %c160] : memref<4x480xf32, #tpu.memory_space<vmem>>, vector<4x20xf32>
    tpu.vector_store %arg17[%c0_12, %c160], %20 {strides = array<i32>} : memref<4x480xf32, #tpu.memory_space<vmem>>, vector<4x20xf32>,
    %22 = vector.extract_strided_slice %2 {offsets = [0, 80], sizes = [4, 16], strides = [1, 1]} : vector<4x256xf32> to vector<4x16xf32>
    %23 = tpu.concatenate %4, %22, %4 in 1 : vector<4x2xf32>, vector<4x16xf32>, vector<4x2xf32> -> vector<4x20xf32>
    %c0_13 = arith.constant 0 : index
    %c180 = arith.constant 180 : index
    %24 = vector.load %arg17[%c0_13, %c180] : memref<4x480xf32, #tpu.memory_space<vmem>>, vector<4x20xf32>
    tpu.vector_store %arg17[%c0_13, %c180], %23 {strides = array<i32>} : memref<4x480xf32, #tpu.memory_space<vmem>>, vector<4x20xf32>,
    %25 = vector.extract_strided_slice %2 {offsets = [0, 96], sizes = [4, 16], strides = [1, 1]} : vector<4x256xf32> to vector<4x16xf32>
    %26 = tpu.concatenate %4, %25, %4 in 1 : vector<4x2xf32>, vector<4x16xf32>, vector<4x2xf32> -> vector<4x20xf32>
    %c0_14 = arith.constant 0 : index
    %c200 = arith.constant 200 : index
    %27 = vector.load %arg17[%c0_14, %c200] : memref<4x480xf32, #tpu.memory_space<vmem>>, vector<4x20xf32>
    tpu.vector_store %arg17[%c0_14, %c200], %26 {strides = array<i32>} : memref<4x480xf32, #tpu.memory_space<vmem>>, vector<4x20xf32>,
    %28 = vector.extract_strided_slice %2 {offsets = [0, 112], sizes = [4, 16], strides = [1, 1]} : vector<4x256xf32> to vector<4x16xf32>
    %29 = tpu.concatenate %4, %28, %4 in 1 : vector<4x2xf32>, vector<4x16xf32>, vector<4x2xf32> -> vector<4x20xf32>
    %c0_15 = arith.constant 0 : index
    %c220 = arith.constant 220 : index
    %30 = vector.load %arg17[%c0_15, %c220] : memref<4x480xf32, #tpu.memory_space<vmem>>, vector<4x20xf32>
    tpu.vector_store %arg17[%c0_15, %c220], %29 {strides = array<i32>} : memref<4x480xf32, #tpu.memory_space<vmem>>, vector<4x20xf32>,
    %31 = vector.extract_strided_slice %2 {offsets = [0, 128], sizes = [4, 16], strides = [1, 1]} : vector<4x256xf32> to vector<4x16xf32>
    %32 = tpu.concatenate %4, %31, %4 in 1 : vector<4x2xf32>, vector<4x16xf32>, vector<4x2xf32> -> vector<4x20xf32>
    %c0_16 = arith.constant 0 : index
    %c240 = arith.constant 240 : index
    %33 = vector.load %arg17[%c0_16, %c240] : memref<4x480xf32, #tpu.memory_space<vmem>>, vector<4x20xf32>
    tpu.vector_store %arg17[%c0_16, %c240], %32 {strides = array<i32>} : memref<4x480xf32, #tpu.memory_space<vmem>>, vector<4x20xf32>,
    %34 = vector.extract_strided_slice %2 {offsets = [0, 144], sizes = [4, 16], strides = [1, 1]} : vector<4x256xf32> to vector<4x16xf32>
    %35 = tpu.concatenate %4, %34, %4 in 1 : vector<4x2xf32>, vector<4x16xf32>, vector<4x2xf32> -> vector<4x20xf32>
    %c0_17 = arith.constant 0 : index
    %c260 = arith.constant 260 : index
    %36 = vector.load %arg17[%c0_17, %c260] : memref<4x480xf32, #tpu.memory_space<vmem>>, vector<4x20xf32>
    tpu.vector_store %arg17[%c0_17, %c260], %35 {strides = array<i32>} : memref<4x480xf32, #tpu.memory_space<vmem>>, vector<4x20xf32>,
    %37 = vector.extract_strided_slice %2 {offsets = [0, 160], sizes = [4, 16], strides = [1, 1]} : vector<4x256xf32> to vector<4x16xf32>
    %38 = tpu.concatenate %4, %37, %4 in 1 : vector<4x2xf32>, vector<4x16xf32>, vector<4x2xf32> -> vector<4x20xf32>
    %c0_18 = arith.constant 0 : index
    %c280 = arith.constant 280 : index
    %39 = vector.load %arg17[%c0_18, %c280] : memref<4x480xf32, #tpu.memory_space<vmem>>, vector<4x20xf32>
    tpu.vector_store %arg17[%c0_18, %c280], %38 {strides = array<i32>} : memref<4x480xf32, #tpu.memory_space<vmem>>, vector<4x20xf32>,
    %40 = vector.extract_strided_slice %2 {offsets = [0, 176], sizes = [4, 16], strides = [1, 1]} : vector<4x256xf32> to vector<4x16xf32>
    %41 = tpu.concatenate %4, %40, %4 in 1 : vector<4x2xf32>, vector<4x16xf32>, vector<4x2xf32> -> vector<4x20xf32>
    %c0_19 = arith.constant 0 : index
    %c300 = arith.constant 300 : index
    %42 = vector.load %arg17[%c0_19, %c300] : memref<4x480xf32, #tpu.memory_space<vmem>>, vector<4x20xf32>
    tpu.vector_store %arg17[%c0_19, %c300], %41 {strides = array<i32>} : memref<4x480xf32, #tpu.memory_space<vmem>>, vector<4x20xf32>,
    %43 = vector.extract_strided_slice %2 {offsets = [0, 192], sizes = [4, 16], strides = [1, 1]} : vector<4x256xf32> to vector<4x16xf32>
    %44 = tpu.concatenate %4, %43, %4 in 1 : vector<4x2xf32>, vector<4x16xf32>, vector<4x2xf32> -> vector<4x20xf32>
    %c0_20 = arith.constant 0 : index
    %c320 = arith.constant 320 : index
    %45 = vector.load %arg17[%c0_20, %c320] : memref<4x480xf32, #tpu.memory_space<vmem>>, vector<4x20xf32>
    tpu.vector_store %arg17[%c0_20, %c320], %44 {strides = array<i32>} : memref<4x480xf32, #tpu.memory_space<vmem>>, vector<4x20xf32>,
    %46 = vector.extract_strided_slice %2 {offsets = [0, 208], sizes = [4, 16], strides = [1, 1]} : vector<4x256xf32> to vector<4x16xf32>
    %47 = tpu.concatenate %4, %46, %4 in 1 : vector<4x2xf32>, vector<4x16xf32>, vector<4x2xf32> -> vector<4x20xf32>
    %c0_21 = arith.constant 0 : index
    %c340 = arith.constant 340 : index
    %48 = vector.load %arg17[%c0_21, %c340] : memref<4x480xf32, #tpu.memory_space<vmem>>, vector<4x20xf32>
    tpu.vector_store %arg17[%c0_21, %c340], %47 {strides = array<i32>} : memref<4x480xf32, #tpu.memory_space<vmem>>, vector<4x20xf32>,
    %49 = vector.extract_strided_slice %2 {offsets = [0, 224], sizes = [4, 16], strides = [1, 1]} : vector<4x256xf32> to vector<4x16xf32>
    %50 = tpu.concatenate %4, %49, %4 in 1 : vector<4x2xf32>, vector<4x16xf32>, vector<4x2xf32> -> vector<4x20xf32>
    %c0_22 = arith.constant 0 : index
    %c360 = arith.constant 360 : index
    %51 = vector.load %arg17[%c0_22, %c360] : memref<4x480xf32, #tpu.memory_space<vmem>>, vector<4x20xf32>
    tpu.vector_store %arg17[%c0_22, %c360], %50 {strides = array<i32>} : memref<4x480xf32, #tpu.memory_space<vmem>>, vector<4x20xf32>,
    %52 = vector.extract_strided_slice %2 {offsets = [0, 240], sizes = [4, 16], strides = [1, 1]} : vector<4x256xf32> to vector<4x16xf32>
    %53 = tpu.concatenate %4, %52, %4 in 1 : vector<4x2xf32>, vector<4x16xf32>, vector<4x2xf32> -> vector<4x20xf32>
    %c0_23 = arith.constant 0 : index
    %c380 = arith.constant 380 : index
    %54 = vector.load %arg17[%c0_23, %c380] : memref<4x480xf32, #tpu.memory_space<vmem>>, vector<4x20xf32>
    tpu.vector_store %arg17[%c0_23, %c380], %53 {strides = array<i32>} : memref<4x480xf32, #tpu.memory_space<vmem>>, vector<4x20xf32>,
    %c0_24 = arith.constant 0 : index
    %c0_25 = arith.constant 0 : index
    %55 = vector.load %arg17[%c0_24, %c0_25] : memref<4x480xf32, #tpu.memory_space<vmem>>, vector<4x480xf32>
    %cst_26 = arith.constant 0.000000e+00 : f32
    %56 = vector.broadcast %cst_26 : f32 to vector<16x360xf32>
    %c0_27 = arith.constant 0 : index
    %c0_28 = arith.constant 0 : index
    %c0_29 = arith.constant 0 : index
    %57 = vector.load %arg3[%c0_27, %c0_28, %c0_29] : memref<25x16x4xf32, #tpu.memory_space<vmem>>, vector<1x16x4xf32>
    %58 = vector.shape_cast %57 : vector<1x16x4xf32> to vector<16x4xf32>
    %59 = vector.extract_strided_slice %55 {offsets = [0, 18], sizes = [4, 360], strides = [1, 1]} : vector<4x480xf32> to vector<4x360xf32>
    %cst_30 = arith.constant dense<0.000000e+00> : vector<16x360xf32>
    %60 = tpu.matmul %58, %59, %cst_30 {dimension_numbers = #tpu.dot_dimension_numbers<[1], [0], [0], [1], [0, 0, 1, 1], [], []>} : vector<16x4xf32>, vector<4x360xf32>, vector<16x360xf32> -> vector<16x360xf32>
    %61 = arith.addf %56, %60 : vector<16x360xf32>
    %c1 = arith.constant 1 : index
    %c0_31 = arith.constant 0 : index
    %c0_32 = arith.constant 0 : index
    %62 = vector.load %arg3[%c1, %c0_31, %c0_32] : memref<25x16x4xf32, #tpu.memory_space<vmem>>, vector<1x16x4xf32>
    %63 = vector.shape_cast %62 : vector<1x16x4xf32> to vector<16x4xf32>
    %64 = vector.extract_strided_slice %55 {offsets = [0, 19], sizes = [4, 360], strides = [1, 1]} : vector<4x480xf32> to vector<4x360xf32>
    %cst_33 = arith.constant dense<0.000000e+00> : vector<16x360xf32>
    %65 = tpu.matmul %63, %64, %cst_33 {dimension_numbers = #tpu.dot_dimension_numbers<[1], [0], [0], [1], [0, 0, 1, 1], [], []>} : vector<16x4xf32>, vector<4x360xf32>, vector<16x360xf32> -> vector<16x360xf32>
    %66 = arith.addf %61, %65 : vector<16x360xf32>
    %c2 = arith.constant 2 : index
    %c0_34 = arith.constant 0 : index
    %c0_35 = arith.constant 0 : index
    %67 = vector.load %arg3[%c2, %c0_34, %c0_35] : memref<25x16x4xf32, #tpu.memory_space<vmem>>, vector<1x16x4xf32>
    %68 = vector.shape_cast %67 : vector<1x16x4xf32> to vector<16x4xf32>
    %69 = vector.extract_strided_slice %55 {offsets = [0, 20], sizes = [4, 360], strides = [1, 1]} : vector<4x480xf32> to vector<4x360xf32>
    %cst_36 = arith.constant dense<0.000000e+00> : vector<16x360xf32>
    %70 = tpu.matmul %68, %69, %cst_36 {dimension_numbers = #tpu.dot_dimension_numbers<[1], [0], [0], [1], [0, 0, 1, 1], [], []>} : vector<16x4xf32>, vector<4x360xf32>, vector<16x360xf32> -> vector<16x360xf32>
    %71 = arith.addf %66, %70 : vector<16x360xf32>
    %c3 = arith.constant 3 : index
    %c0_37 = arith.constant 0 : index
    %c0_38 = arith.constant 0 : index
    %72 = vector.load %arg3[%c3, %c0_37, %c0_38] : memref<25x16x4xf32, #tpu.memory_space<vmem>>, vector<1x16x4xf32>
    %73 = vector.shape_cast %72 : vector<1x16x4xf32> to vector<16x4xf32>
    %74 = vector.extract_strided_slice %55 {offsets = [0, 21], sizes = [4, 360], strides = [1, 1]} : vector<4x480xf32> to vector<4x360xf32>
    %cst_39 = arith.constant dense<0.000000e+00> : vector<16x360xf32>
    %75 = tpu.matmul %73, %74, %cst_39 {dimension_numbers = #tpu.dot_dimension_numbers<[1], [0], [0], [1], [0, 0, 1, 1], [], []>} : vector<16x4xf32>, vector<4x360xf32>, vector<16x360xf32> -> vector<16x360xf32>
    %76 = arith.addf %71, %75 : vector<16x360xf32>
    %c4 = arith.constant 4 : index
    %c0_40 = arith.constant 0 : index
    %c0_41 = arith.constant 0 : index
    %77 = vector.load %arg3[%c4, %c0_40, %c0_41] : memref<25x16x4xf32, #tpu.memory_space<vmem>>, vector<1x16x4xf32>
    %78 = vector.shape_cast %77 : vector<1x16x4xf32> to vector<16x4xf32>
    %79 = vector.extract_strided_slice %55 {offsets = [0, 22], sizes = [4, 360], strides = [1, 1]} : vector<4x480xf32> to vector<4x360xf32>
    %cst_42 = arith.constant dense<0.000000e+00> : vector<16x360xf32>
    %80 = tpu.matmul %78, %79, %cst_42 {dimension_numbers = #tpu.dot_dimension_numbers<[1], [0], [0], [1], [0, 0, 1, 1], [], []>} : vector<16x4xf32>, vector<4x360xf32>, vector<16x360xf32> -> vector<16x360xf32>
    %81 = arith.addf %76, %80 : vector<16x360xf32>
    %c5 = arith.constant 5 : index
    %c0_43 = arith.constant 0 : index
    %c0_44 = arith.constant 0 : index
    %82 = vector.load %arg3[%c5, %c0_43, %c0_44] : memref<25x16x4xf32, #tpu.memory_space<vmem>>, vector<1x16x4xf32>
    %83 = vector.shape_cast %82 : vector<1x16x4xf32> to vector<16x4xf32>
    %84 = vector.extract_strided_slice %55 {offsets = [0, 38], sizes = [4, 360], strides = [1, 1]} : vector<4x480xf32> to vector<4x360xf32>
    %cst_45 = arith.constant dense<0.000000e+00> : vector<16x360xf32>
    %85 = tpu.matmul %83, %84, %cst_45 {dimension_numbers = #tpu.dot_dimension_numbers<[1], [0], [0], [1], [0, 0, 1, 1], [], []>} : vector<16x4xf32>, vector<4x360xf32>, vector<16x360xf32> -> vector<16x360xf32>
    %86 = arith.addf %81, %85 : vector<16x360xf32>
    %c6 = arith.constant 6 : index
    %c0_46 = arith.constant 0 : index
    %c0_47 = arith.constant 0 : index
    %87 = vector.load %arg3[%c6, %c0_46, %c0_47] : memref<25x16x4xf32, #tpu.memory_space<vmem>>, vector<1x16x4xf32>
    %88 = vector.shape_cast %87 : vector<1x16x4xf32> to vector<16x4xf32>
    %89 = vector.extract_strided_slice %55 {offsets = [0, 39], sizes = [4, 360], strides = [1, 1]} : vector<4x480xf32> to vector<4x360xf32>
    %cst_48 = arith.constant dense<0.000000e+00> : vector<16x360xf32>
    %90 = tpu.matmul %88, %89, %cst_48 {dimension_numbers = #tpu.dot_dimension_numbers<[1], [0], [0], [1], [0, 0, 1, 1], [], []>} : vector<16x4xf32>, vector<4x360xf32>, vector<16x360xf32> -> vector<16x360xf32>
    %91 = arith.addf %86, %90 : vector<16x360xf32>
    %c7 = arith.constant 7 : index
    %c0_49 = arith.constant 0 : index
    %c0_50 = arith.constant 0 : index
    %92 = vector.load %arg3[%c7, %c0_49, %c0_50] : memref<25x16x4xf32, #tpu.memory_space<vmem>>, vector<1x16x4xf32>
    %93 = vector.shape_cast %92 : vector<1x16x4xf32> to vector<16x4xf32>
    %94 = vector.extract_strided_slice %55 {offsets = [0, 40], sizes = [4, 360], strides = [1, 1]} : vector<4x480xf32> to vector<4x360xf32>
    %cst_51 = arith.constant dense<0.000000e+00> : vector<16x360xf32>
    %95 = tpu.matmul %93, %94, %cst_51 {dimension_numbers = #tpu.dot_dimension_numbers<[1], [0], [0], [1], [0, 0, 1, 1], [], []>} : vector<16x4xf32>, vector<4x360xf32>, vector<16x360xf32> -> vector<16x360xf32>
    %96 = arith.addf %91, %95 : vector<16x360xf32>
    %c8 = arith.constant 8 : index
    %c0_52 = arith.constant 0 : index
    %c0_53 = arith.constant 0 : index
    %97 = vector.load %arg3[%c8, %c0_52, %c0_53] : memref<25x16x4xf32, #tpu.memory_space<vmem>>, vector<1x16x4xf32>
    %98 = vector.shape_cast %97 : vector<1x16x4xf32> to vector<16x4xf32>
    %99 = vector.extract_strided_slice %55 {offsets = [0, 41], sizes = [4, 360], strides = [1, 1]} : vector<4x480xf32> to vector<4x360xf32>
    %cst_54 = arith.constant dense<0.000000e+00> : vector<16x360xf32>
    %100 = tpu.matmul %98, %99, %cst_54 {dimension_numbers = #tpu.dot_dimension_numbers<[1], [0], [0], [1], [0, 0, 1, 1], [], []>} : vector<16x4xf32>, vector<4x360xf32>, vector<16x360xf32> -> vector<16x360xf32>
    %101 = arith.addf %96, %100 : vector<16x360xf32>
    %c9 = arith.constant 9 : index
    %c0_55 = arith.constant 0 : index
    %c0_56 = arith.constant 0 : index
    %102 = vector.load %arg3[%c9, %c0_55, %c0_56] : memref<25x16x4xf32, #tpu.memory_space<vmem>>, vector<1x16x4xf32>
    %103 = vector.shape_cast %102 : vector<1x16x4xf32> to vector<16x4xf32>
    %104 = vector.extract_strided_slice %55 {offsets = [0, 42], sizes = [4, 360], strides = [1, 1]} : vector<4x480xf32> to vector<4x360xf32>
    %cst_57 = arith.constant dense<0.000000e+00> : vector<16x360xf32>
    %105 = tpu.matmul %103, %104, %cst_57 {dimension_numbers = #tpu.dot_dimension_numbers<[1], [0], [0], [1], [0, 0, 1, 1], [], []>} : vector<16x4xf32>, vector<4x360xf32>, vector<16x360xf32> -> vector<16x360xf32>
    %106 = arith.addf %101, %105 : vector<16x360xf32>
    %c10 = arith.constant 10 : index
    %c0_58 = arith.constant 0 : index
    %c0_59 = arith.constant 0 : index
    %107 = vector.load %arg3[%c10, %c0_58, %c0_59] : memref<25x16x4xf32, #tpu.memory_space<vmem>>, vector<1x16x4xf32>
    %108 = vector.shape_cast %107 : vector<1x16x4xf32> to vector<16x4xf32>
    %109 = vector.extract_strided_slice %55 {offsets = [0, 58], sizes = [4, 360], strides = [1, 1]} : vector<4x480xf32> to vector<4x360xf32>
    %cst_60 = arith.constant dense<0.000000e+00> : vector<16x360xf32>
    %110 = tpu.matmul %108, %109, %cst_60 {dimension_numbers = #tpu.dot_dimension_numbers<[1], [0], [0], [1], [0, 0, 1, 1], [], []>} : vector<16x4xf32>, vector<4x360xf32>, vector<16x360xf32> -> vector<16x360xf32>
    %111 = arith.addf %106, %110 : vector<16x360xf32>
    %c11 = arith.constant 11 : index
    %c0_61 = arith.constant 0 : index
    %c0_62 = arith.constant 0 : index
    %112 = vector.load %arg3[%c11, %c0_61, %c0_62] : memref<25x16x4xf32, #tpu.memory_space<vmem>>, vector<1x16x4xf32>
    %113 = vector.shape_cast %112 : vector<1x16x4xf32> to vector<16x4xf32>
    %114 = vector.extract_strided_slice %55 {offsets = [0, 59], sizes = [4, 360], strides = [1, 1]} : vector<4x480xf32> to vector<4x360xf32>
    %cst_63 = arith.constant dense<0.000000e+00> : vector<16x360xf32>
    %115 = tpu.matmul %113, %114, %cst_63 {dimension_numbers = #tpu.dot_dimension_numbers<[1], [0], [0], [1], [0, 0, 1, 1], [], []>} : vector<16x4xf32>, vector<4x360xf32>, vector<16x360xf32> -> vector<16x360xf32>
    %116 = arith.addf %111, %115 : vector<16x360xf32>
    %c12 = arith.constant 12 : index
    %c0_64 = arith.constant 0 : index
    %c0_65 = arith.constant 0 : index
    %117 = vector.load %arg3[%c12, %c0_64, %c0_65] : memref<25x16x4xf32, #tpu.memory_space<vmem>>, vector<1x16x4xf32>
    %118 = vector.shape_cast %117 : vector<1x16x4xf32> to vector<16x4xf32>
    %119 = vector.extract_strided_slice %55 {offsets = [0, 60], sizes = [4, 360], strides = [1, 1]} : vector<4x480xf32> to vector<4x360xf32>
    %cst_66 = arith.constant dense<0.000000e+00> : vector<16x360xf32>
    %120 = tpu.matmul %118, %119, %cst_66 {dimension_numbers = #tpu.dot_dimension_numbers<[1], [0], [0], [1], [0, 0, 1, 1], [], []>} : vector<16x4xf32>, vector<4x360xf32>, vector<16x360xf32> -> vector<16x360xf32>
    %121 = arith.addf %116, %120 : vector<16x360xf32>
    %c13 = arith.constant 13 : index
    %c0_67 = arith.constant 0 : index
    %c0_68 = arith.constant 0 : index
    %122 = vector.load %arg3[%c13, %c0_67, %c0_68] : memref<25x16x4xf32, #tpu.memory_space<vmem>>, vector<1x16x4xf32>
    %123 = vector.shape_cast %122 : vector<1x16x4xf32> to vector<16x4xf32>
    %124 = vector.extract_strided_slice %55 {offsets = [0, 61], sizes = [4, 360], strides = [1, 1]} : vector<4x480xf32> to vector<4x360xf32>
    %cst_69 = arith.constant dense<0.000000e+00> : vector<16x360xf32>
    %125 = tpu.matmul %123, %124, %cst_69 {dimension_numbers = #tpu.dot_dimension_numbers<[1], [0], [0], [1], [0, 0, 1, 1], [], []>} : vector<16x4xf32>, vector<4x360xf32>, vector<16x360xf32> -> vector<16x360xf32>
    %126 = arith.addf %121, %125 : vector<16x360xf32>
    %c14 = arith.constant 14 : index
    %c0_70 = arith.constant 0 : index
    %c0_71 = arith.constant 0 : index
    %127 = vector.load %arg3[%c14, %c0_70, %c0_71] : memref<25x16x4xf32, #tpu.memory_space<vmem>>, vector<1x16x4xf32>
    %128 = vector.shape_cast %127 : vector<1x16x4xf32> to vector<16x4xf32>
    %129 = vector.extract_strided_slice %55 {offsets = [0, 62], sizes = [4, 360], strides = [1, 1]} : vector<4x480xf32> to vector<4x360xf32>
    %cst_72 = arith.constant dense<0.000000e+00> : vector<16x360xf32>
    %130 = tpu.matmul %128, %129, %cst_72 {dimension_numbers = #tpu.dot_dimension_numbers<[1], [0], [0], [1], [0, 0, 1, 1], [], []>} : vector<16x4xf32>, vector<4x360xf32>, vector<16x360xf32> -> vector<16x360xf32>
    %131 = arith.addf %126, %130 : vector<16x360xf32>
    %c15 = arith.constant 15 : index
    %c0_73 = arith.constant 0 : index
    %c0_74 = arith.constant 0 : index
    %132 = vector.load %arg3[%c15, %c0_73, %c0_74] : memref<25x16x4xf32, #tpu.memory_space<vmem>>, vector<1x16x4xf32>
    %133 = vector.shape_cast %132 : vector<1x16x4xf32> to vector<16x4xf32>
    %134 = vector.extract_strided_slice %55 {offsets = [0, 78], sizes = [4, 360], strides = [1, 1]} : vector<4x480xf32> to vector<4x360xf32>
    %cst_75 = arith.constant dense<0.000000e+00> : vector<16x360xf32>
    %135 = tpu.matmul %133, %134, %cst_75 {dimension_numbers = #tpu.dot_dimension_numbers<[1], [0], [0], [1], [0, 0, 1, 1], [], []>} : vector<16x4xf32>, vector<4x360xf32>, vector<16x360xf32> -> vector<16x360xf32>
    %136 = arith.addf %131, %135 : vector<16x360xf32>
    %c16 = arith.constant 16 : index
    %c0_76 = arith.constant 0 : index
    %c0_77 = arith.constant 0 : index
    %137 = vector.load %arg3[%c16, %c0_76, %c0_77] : memref<25x16x4xf32, #tpu.memory_space<vmem>>, vector<1x16x4xf32>
    %138 = vector.shape_cast %137 : vector<1x16x4xf32> to vector<16x4xf32>
    %139 = vector.extract_strided_slice %55 {offsets = [0, 79], sizes = [4, 360], strides = [1, 1]} : vector<4x480xf32> to vector<4x360xf32>
    %cst_78 = arith.constant dense<0.000000e+00> : vector<16x360xf32>
    %140 = tpu.matmul %138, %139, %cst_78 {dimension_numbers = #tpu.dot_dimension_numbers<[1], [0], [0], [1], [0, 0, 1, 1], [], []>} : vector<16x4xf32>, vector<4x360xf32>, vector<16x360xf32> -> vector<16x360xf32>
    %141 = arith.addf %136, %140 : vector<16x360xf32>
    %c17 = arith.constant 17 : index
    %c0_79 = arith.constant 0 : index
    %c0_80 = arith.constant 0 : index
    %142 = vector.load %arg3[%c17, %c0_79, %c0_80] : memref<25x16x4xf32, #tpu.memory_space<vmem>>, vector<1x16x4xf32>
    %143 = vector.shape_cast %142 : vector<1x16x4xf32> to vector<16x4xf32>
    %144 = vector.extract_strided_slice %55 {offsets = [0, 80], sizes = [4, 360], strides = [1, 1]} : vector<4x480xf32> to vector<4x360xf32>
    %cst_81 = arith.constant dense<0.000000e+00> : vector<16x360xf32>
    %145 = tpu.matmul %143, %144, %cst_81 {dimension_numbers = #tpu.dot_dimension_numbers<[1], [0], [0], [1], [0, 0, 1, 1], [], []>} : vector<16x4xf32>, vector<4x360xf32>, vector<16x360xf32> -> vector<16x360xf32>
    %146 = arith.addf %141, %145 : vector<16x360xf32>
    %c18 = arith.constant 18 : index
    %c0_82 = arith.constant 0 : index
    %c0_83 = arith.constant 0 : index
    %147 = vector.load %arg3[%c18, %c0_82, %c0_83] : memref<25x16x4xf32, #tpu.memory_space<vmem>>, vector<1x16x4xf32>
    %148 = vector.shape_cast %147 : vector<1x16x4xf32> to vector<16x4xf32>
    %149 = vector.extract_strided_slice %55 {offsets = [0, 81], sizes = [4, 360], strides = [1, 1]} : vector<4x480xf32> to vector<4x360xf32>
    %cst_84 = arith.constant dense<0.000000e+00> : vector<16x360xf32>
    %150 = tpu.matmul %148, %149, %cst_84 {dimension_numbers = #tpu.dot_dimension_numbers<[1], [0], [0], [1], [0, 0, 1, 1], [], []>} : vector<16x4xf32>, vector<4x360xf32>, vector<16x360xf32> -> vector<16x360xf32>
    %151 = arith.addf %146, %150 : vector<16x360xf32>
    %c19 = arith.constant 19 : index
    %c0_85 = arith.constant 0 : index
    %c0_86 = arith.constant 0 : index
    %152 = vector.load %arg3[%c19, %c0_85, %c0_86] : memref<25x16x4xf32, #tpu.memory_space<vmem>>, vector<1x16x4xf32>
    %153 = vector.shape_cast %152 : vector<1x16x4xf32> to vector<16x4xf32>
    %154 = vector.extract_strided_slice %55 {offsets = [0, 82], sizes = [4, 360], strides = [1, 1]} : vector<4x480xf32> to vector<4x360xf32>
    %cst_87 = arith.constant dense<0.000000e+00> : vector<16x360xf32>
    %155 = tpu.matmul %153, %154, %cst_87 {dimension_numbers = #tpu.dot_dimension_numbers<[1], [0], [0], [1], [0, 0, 1, 1], [], []>} : vector<16x4xf32>, vector<4x360xf32>, vector<16x360xf32> -> vector<16x360xf32>
    %156 = arith.addf %151, %155 : vector<16x360xf32>
    %c20 = arith.constant 20 : index
    %c0_88 = arith.constant 0 : index
    %c0_89 = arith.constant 0 : index
    %157 = vector.load %arg3[%c20, %c0_88, %c0_89] : memref<25x16x4xf32, #tpu.memory_space<vmem>>, vector<1x16x4xf32>
    %158 = vector.shape_cast %157 : vector<1x16x4xf32> to vector<16x4xf32>
    %159 = vector.extract_strided_slice %55 {offsets = [0, 98], sizes = [4, 360], strides = [1, 1]} : vector<4x480xf32> to vector<4x360xf32>
    %cst_90 = arith.constant dense<0.000000e+00> : vector<16x360xf32>
    %160 = tpu.matmul %158, %159, %cst_90 {dimension_numbers = #tpu.dot_dimension_numbers<[1], [0], [0], [1], [0, 0, 1, 1], [], []>} : vector<16x4xf32>, vector<4x360xf32>, vector<16x360xf32> -> vector<16x360xf32>
    %161 = arith.addf %156, %160 : vector<16x360xf32>
    %c21 = arith.constant 21 : index
    %c0_91 = arith.constant 0 : index
    %c0_92 = arith.constant 0 : index
    %162 = vector.load %arg3[%c21, %c0_91, %c0_92] : memref<25x16x4xf32, #tpu.memory_space<vmem>>, vector<1x16x4xf32>
    %163 = vector.shape_cast %162 : vector<1x16x4xf32> to vector<16x4xf32>
    %164 = vector.extract_strided_slice %55 {offsets = [0, 99], sizes = [4, 360], strides = [1, 1]} : vector<4x480xf32> to vector<4x360xf32>
    %cst_93 = arith.constant dense<0.000000e+00> : vector<16x360xf32>
    %165 = tpu.matmul %163, %164, %cst_93 {dimension_numbers = #tpu.dot_dimension_numbers<[1], [0], [0], [1], [0, 0, 1, 1], [], []>} : vector<16x4xf32>, vector<4x360xf32>, vector<16x360xf32> -> vector<16x360xf32>
    %166 = arith.addf %161, %165 : vector<16x360xf32>
    %c22 = arith.constant 22 : index
    %c0_94 = arith.constant 0 : index
    %c0_95 = arith.constant 0 : index
    %167 = vector.load %arg3[%c22, %c0_94, %c0_95] : memref<25x16x4xf32, #tpu.memory_space<vmem>>, vector<1x16x4xf32>
    %168 = vector.shape_cast %167 : vector<1x16x4xf32> to vector<16x4xf32>
    %169 = vector.extract_strided_slice %55 {offsets = [0, 100], sizes = [4, 360], strides = [1, 1]} : vector<4x480xf32> to vector<4x360xf32>
    %cst_96 = arith.constant dense<0.000000e+00> : vector<16x360xf32>
    %170 = tpu.matmul %168, %169, %cst_96 {dimension_numbers = #tpu.dot_dimension_numbers<[1], [0], [0], [1], [0, 0, 1, 1], [], []>} : vector<16x4xf32>, vector<4x360xf32>, vector<16x360xf32> -> vector<16x360xf32>
    %171 = arith.addf %166, %170 : vector<16x360xf32>
    %c23 = arith.constant 23 : index
    %c0_97 = arith.constant 0 : index
    %c0_98 = arith.constant 0 : index
    %172 = vector.load %arg3[%c23, %c0_97, %c0_98] : memref<25x16x4xf32, #tpu.memory_space<vmem>>, vector<1x16x4xf32>
    %173 = vector.shape_cast %172 : vector<1x16x4xf32> to vector<16x4xf32>
    %174 = vector.extract_strided_slice %55 {offsets = [0, 101], sizes = [4, 360], strides = [1, 1]} : vector<4x480xf32> to vector<4x360xf32>
    %cst_99 = arith.constant dense<0.000000e+00> : vector<16x360xf32>
    %175 = tpu.matmul %173, %174, %cst_99 {dimension_numbers = #tpu.dot_dimension_numbers<[1], [0], [0], [1], [0, 0, 1, 1], [], []>} : vector<16x4xf32>, vector<4x360xf32>, vector<16x360xf32> -> vector<16x360xf32>
    %176 = arith.addf %171, %175 : vector<16x360xf32>
    %c24 = arith.constant 24 : index
    %c0_100 = arith.constant 0 : index
    %c0_101 = arith.constant 0 : index
    %177 = vector.load %arg3[%c24, %c0_100, %c0_101] : memref<25x16x4xf32, #tpu.memory_space<vmem>>, vector<1x16x4xf32>
    %178 = vector.shape_cast %177 : vector<1x16x4xf32> to vector<16x4xf32>
    %179 = vector.extract_strided_slice %55 {offsets = [0, 102], sizes = [4, 360], strides = [1, 1]} : vector<4x480xf32> to vector<4x360xf32>
    %cst_102 = arith.constant dense<0.000000e+00> : vector<16x360xf32>
    %180 = tpu.matmul %178, %179, %cst_102 {dimension_numbers = #tpu.dot_dimension_numbers<[1], [0], [0], [1], [0, 0, 1, 1], [], []>} : vector<16x4xf32>, vector<4x360xf32>, vector<16x360xf32> -> vector<16x360xf32>
    %181 = arith.addf %176, %180 : vector<16x360xf32>
    %c0_103 = arith.constant 0 : index
    %c0_104 = arith.constant 0 : index
    %182 = vector.load %arg4[%c0_103, %c0_104] : memref<16x1xf32, #tpu.memory_space<vmem>>, vector<16x1xf32>
    %183 = vector.broadcast %182 : vector<16x1xf32> to vector<16x360xf32>
    %184 = arith.addf %181, %183 : vector<16x360xf32>
    %185 = vector.broadcast %0 : vector<1x360xf32> to vector<16x360xf32>
    %186 = arith.mulf %184, %185 : vector<16x360xf32>
    %cst_105 = arith.constant 0.000000e+00 : f32
    %187 = vector.broadcast %cst_105 : f32 to vector<16x60xf32>
    %c0_106 = arith.constant 0 : index
    %c0_107 = arith.constant 0 : index
    %188 = vector.load %arg18[%c0_106, %c0_107] : memref<16x480xf32, #tpu.memory_space<vmem>>, vector<16x60xf32>
    tpu.vector_store %arg18[%c0_106, %c0_107], %187 {strides = array<i32>} : memref<16x480xf32, #tpu.memory_space<vmem>>, vector<16x60xf32>,
    %c0_108 = arith.constant 0 : index
    %c60 = arith.constant 60 : index
    %189 = vector.load %arg18[%c0_108, %c60] : memref<16x480xf32, #tpu.memory_space<vmem>>, vector<16x360xf32>
    tpu.vector_store %arg18[%c0_108, %c60], %186 {strides = array<i32>} : memref<16x480xf32, #tpu.memory_space<vmem>>, vector<16x360xf32>,
    %cst_109 = arith.constant 0.000000e+00 : f32
    %190 = vector.broadcast %cst_109 : f32 to vector<16x60xf32>
    %c0_110 = arith.constant 0 : index
    %c420 = arith.constant 420 : index
    %191 = vector.load %arg18[%c0_110, %c420] : memref<16x480xf32, #tpu.memory_space<vmem>>, vector<16x60xf32>
    tpu.vector_store %arg18[%c0_110, %c420], %190 {strides = array<i32>} : memref<16x480xf32, #tpu.memory_space<vmem>>, vector<16x60xf32>,
    %c0_111 = arith.constant 0 : index
    %c0_112 = arith.constant 0 : index
    %192 = vector.load %arg18[%c0_111, %c0_112] : memref<16x480xf32, #tpu.memory_space<vmem>>, vector<16x480xf32>
    %cst_113 = arith.constant 0.000000e+00 : f32
    %193 = vector.broadcast %cst_113 : f32 to vector<4x360xf32>
    %c0_114 = arith.constant 0 : index
    %c0_115 = arith.constant 0 : index
    %c0_116 = arith.constant 0 : index
    %194 = vector.load %arg5[%c0_114, %c0_115, %c0_116] : memref<9x4x16xf32, #tpu.memory_space<vmem>>, vector<1x4x16xf32>
    %195 = vector.shape_cast %194 : vector<1x4x16xf32> to vector<4x16xf32>
    %196 = vector.extract_strided_slice %192 {offsets = [0, 39], sizes = [16, 360], strides = [1, 1]} : vector<16x480xf32> to vector<16x360xf32>
    %cst_117 = arith.constant dense<0.000000e+00> : vector<4x360xf32>
    %197 = tpu.matmul %195, %196, %cst_117 {dimension_numbers = #tpu.dot_dimension_numbers<[1], [0], [0], [1], [0, 0, 1, 1], [], []>} : vector<4x16xf32>, vector<16x360xf32>, vector<4x360xf32> -> vector<4x360xf32>
    %198 = arith.addf %193, %197 : vector<4x360xf32>
    %c1_118 = arith.constant 1 : index
    %c0_119 = arith.constant 0 : index
    %c0_120 = arith.constant 0 : index
    %199 = vector.load %arg5[%c1_118, %c0_119, %c0_120] : memref<9x4x16xf32, #tpu.memory_space<vmem>>, vector<1x4x16xf32>
    %200 = vector.shape_cast %199 : vector<1x4x16xf32> to vector<4x16xf32>
    %201 = vector.extract_strided_slice %192 {offsets = [0, 40], sizes = [16, 360], strides = [1, 1]} : vector<16x480xf32> to vector<16x360xf32>
    %cst_121 = arith.constant dense<0.000000e+00> : vector<4x360xf32>
    %202 = tpu.matmul %200, %201, %cst_121 {dimension_numbers = #tpu.dot_dimension_numbers<[1], [0], [0], [1], [0, 0, 1, 1], [], []>} : vector<4x16xf32>, vector<16x360xf32>, vector<4x360xf32> -> vector<4x360xf32>
    %203 = arith.addf %198, %202 : vector<4x360xf32>
    %c2_122 = arith.constant 2 : index
    %c0_123 = arith.constant 0 : index
    %c0_124 = arith.constant 0 : index
    %204 = vector.load %arg5[%c2_122, %c0_123, %c0_124] : memref<9x4x16xf32, #tpu.memory_space<vmem>>, vector<1x4x16xf32>
    %205 = vector.shape_cast %204 : vector<1x4x16xf32> to vector<4x16xf32>
    %206 = vector.extract_strided_slice %192 {offsets = [0, 41], sizes = [16, 360], strides = [1, 1]} : vector<16x480xf32> to vector<16x360xf32>
    %cst_125 = arith.constant dense<0.000000e+00> : vector<4x360xf32>
    %207 = tpu.matmul %205, %206, %cst_125 {dimension_numbers = #tpu.dot_dimension_numbers<[1], [0], [0], [1], [0, 0, 1, 1], [], []>} : vector<4x16xf32>, vector<16x360xf32>, vector<4x360xf32> -> vector<4x360xf32>
    %208 = arith.addf %203, %207 : vector<4x360xf32>
    %c3_126 = arith.constant 3 : index
    %c0_127 = arith.constant 0 : index
    %c0_128 = arith.constant 0 : index
    %209 = vector.load %arg5[%c3_126, %c0_127, %c0_128] : memref<9x4x16xf32, #tpu.memory_space<vmem>>, vector<1x4x16xf32>
    %210 = vector.shape_cast %209 : vector<1x4x16xf32> to vector<4x16xf32>
    %211 = vector.extract_strided_slice %192 {offsets = [0, 59], sizes = [16, 360], strides = [1, 1]} : vector<16x480xf32> to vector<16x360xf32>
    %cst_129 = arith.constant dense<0.000000e+00> : vector<4x360xf32>
    %212 = tpu.matmul %210, %211, %cst_129 {dimension_numbers = #tpu.dot_dimension_numbers<[1], [0], [0], [1], [0, 0, 1, 1], [], []>} : vector<4x16xf32>, vector<16x360xf32>, vector<4x360xf32> -> vector<4x360xf32>
    %213 = arith.addf %208, %212 : vector<4x360xf32>
    %c4_130 = arith.constant 4 : index
    %c0_131 = arith.constant 0 : index
    %c0_132 = arith.constant 0 : index
    %214 = vector.load %arg5[%c4_130, %c0_131, %c0_132] : memref<9x4x16xf32, #tpu.memory_space<vmem>>, vector<1x4x16xf32>
    %215 = vector.shape_cast %214 : vector<1x4x16xf32> to vector<4x16xf32>
    %216 = vector.extract_strided_slice %192 {offsets = [0, 60], sizes = [16, 360], strides = [1, 1]} : vector<16x480xf32> to vector<16x360xf32>
    %cst_133 = arith.constant dense<0.000000e+00> : vector<4x360xf32>
    %217 = tpu.matmul %215, %216, %cst_133 {dimension_numbers = #tpu.dot_dimension_numbers<[1], [0], [0], [1], [0, 0, 1, 1], [], []>} : vector<4x16xf32>, vector<16x360xf32>, vector<4x360xf32> -> vector<4x360xf32>
    %218 = arith.addf %213, %217 : vector<4x360xf32>
    %c5_134 = arith.constant 5 : index
    %c0_135 = arith.constant 0 : index
    %c0_136 = arith.constant 0 : index
    %219 = vector.load %arg5[%c5_134, %c0_135, %c0_136] : memref<9x4x16xf32, #tpu.memory_space<vmem>>, vector<1x4x16xf32>
    %220 = vector.shape_cast %219 : vector<1x4x16xf32> to vector<4x16xf32>
    %221 = vector.extract_strided_slice %192 {offsets = [0, 61], sizes = [16, 360], strides = [1, 1]} : vector<16x480xf32> to vector<16x360xf32>
    %cst_137 = arith.constant dense<0.000000e+00> : vector<4x360xf32>
    %222 = tpu.matmul %220, %221, %cst_137 {dimension_numbers = #tpu.dot_dimension_numbers<[1], [0], [0], [1], [0, 0, 1, 1], [], []>} : vector<4x16xf32>, vector<16x360xf32>, vector<4x360xf32> -> vector<4x360xf32>
    %223 = arith.addf %218, %222 : vector<4x360xf32>
    %c6_138 = arith.constant 6 : index
    %c0_139 = arith.constant 0 : index
    %c0_140 = arith.constant 0 : index
    %224 = vector.load %arg5[%c6_138, %c0_139, %c0_140] : memref<9x4x16xf32, #tpu.memory_space<vmem>>, vector<1x4x16xf32>
    %225 = vector.shape_cast %224 : vector<1x4x16xf32> to vector<4x16xf32>
    %226 = vector.extract_strided_slice %192 {offsets = [0, 79], sizes = [16, 360], strides = [1, 1]} : vector<16x480xf32> to vector<16x360xf32>
    %cst_141 = arith.constant dense<0.000000e+00> : vector<4x360xf32>
    %227 = tpu.matmul %225, %226, %cst_141 {dimension_numbers = #tpu.dot_dimension_numbers<[1], [0], [0], [1], [0, 0, 1, 1], [], []>} : vector<4x16xf32>, vector<16x360xf32>, vector<4x360xf32> -> vector<4x360xf32>
    %228 = arith.addf %223, %227 : vector<4x360xf32>
    %c7_142 = arith.constant 7 : index
    %c0_143 = arith.constant 0 : index
    %c0_144 = arith.constant 0 : index
    %229 = vector.load %arg5[%c7_142, %c0_143, %c0_144] : memref<9x4x16xf32, #tpu.memory_space<vmem>>, vector<1x4x16xf32>
    %230 = vector.shape_cast %229 : vector<1x4x16xf32> to vector<4x16xf32>
    %231 = vector.extract_strided_slice %192 {offsets = [0, 80], sizes = [16, 360], strides = [1, 1]} : vector<16x480xf32> to vector<16x360xf32>
    %cst_145 = arith.constant dense<0.000000e+00> : vector<4x360xf32>
    %232 = tpu.matmul %230, %231, %cst_145 {dimension_numbers = #tpu.dot_dimension_numbers<[1], [0], [0], [1], [0, 0, 1, 1], [], []>} : vector<4x16xf32>, vector<16x360xf32>, vector<4x360xf32> -> vector<4x360xf32>
    %233 = arith.addf %228, %232 : vector<4x360xf32>
    %c8_146 = arith.constant 8 : index
    %c0_147 = arith.constant 0 : index
    %c0_148 = arith.constant 0 : index
    %234 = vector.load %arg5[%c8_146, %c0_147, %c0_148] : memref<9x4x16xf32, #tpu.memory_space<vmem>>, vector<1x4x16xf32>
    %235 = vector.shape_cast %234 : vector<1x4x16xf32> to vector<4x16xf32>
    %236 = vector.extract_strided_slice %192 {offsets = [0, 81], sizes = [16, 360], strides = [1, 1]} : vector<16x480xf32> to vector<16x360xf32>
    %cst_149 = arith.constant dense<0.000000e+00> : vector<4x360xf32>
    %237 = tpu.matmul %235, %236, %cst_149 {dimension_numbers = #tpu.dot_dimension_numbers<[1], [0], [0], [1], [0, 0, 1, 1], [], []>} : vector<4x16xf32>, vector<16x360xf32>, vector<4x360xf32> -> vector<4x360xf32>
    %238 = arith.addf %233, %237 : vector<4x360xf32>
    %c0_150 = arith.constant 0 : index
    %c0_151 = arith.constant 0 : index
    %239 = vector.load %arg6[%c0_150, %c0_151] : memref<4x1xf32, #tpu.memory_space<vmem>>, vector<4x1xf32>
    %240 = vector.broadcast %239 : vector<4x1xf32> to vector<4x360xf32>
    %241 = arith.addf %238, %240 : vector<4x360xf32>
    %242 = vector.broadcast %0 : vector<1x360xf32> to vector<4x360xf32>
    %243 = arith.mulf %241, %242 : vector<4x360xf32>
    %cst_152 = arith.constant 0.000000e+00 : f32
    %244 = vector.broadcast %cst_152 : f32 to vector<4x60xf32>
    %c0_153 = arith.constant 0 : index
    %c0_154 = arith.constant 0 : index
    %245 = vector.load %arg19[%c0_153, %c0_154] : memref<4x480xf32, #tpu.memory_space<vmem>>, vector<4x60xf32>
    tpu.vector_store %arg19[%c0_153, %c0_154], %244 {strides = array<i32>} : memref<4x480xf32, #tpu.memory_space<vmem>>, vector<4x60xf32>,
    %c0_155 = arith.constant 0 : index
    %c60_156 = arith.constant 60 : index
    %246 = vector.load %arg19[%c0_155, %c60_156] : memref<4x480xf32, #tpu.memory_space<vmem>>, vector<4x360xf32>
    tpu.vector_store %arg19[%c0_155, %c60_156], %243 {strides = array<i32>} : memref<4x480xf32, #tpu.memory_space<vmem>>, vector<4x360xf32>,
    %cst_157 = arith.constant 0.000000e+00 : f32
    %247 = vector.broadcast %cst_157 : f32 to vector<4x60xf32>
    %c0_158 = arith.constant 0 : index
    %c420_159 = arith.constant 420 : index
    %248 = vector.load %arg19[%c0_158, %c420_159] : memref<4x480xf32, #tpu.memory_space<vmem>>, vector<4x60xf32>
    tpu.vector_store %arg19[%c0_158, %c420_159], %247 {strides = array<i32>} : memref<4x480xf32, #tpu.memory_space<vmem>>, vector<4x60xf32>,
    %c0_160 = arith.constant 0 : index
    %c0_161 = arith.constant 0 : index
    %249 = vector.load %arg7[%c0_160, %c0_161] : memref<8x4xf32, #tpu.memory_space<vmem>>, vector<8x4xf32>
    %cst_162 = arith.constant dense<0.000000e+00> : vector<8x360xf32>
    %250 = tpu.matmul %249, %243, %cst_162 {dimension_numbers = #tpu.dot_dimension_numbers<[1], [0], [0], [1], [0, 0, 1, 1], [], []>} : vector<8x4xf32>, vector<4x360xf32>, vector<8x360xf32> -> vector<8x360xf32>
    %c0_163 = arith.constant 0 : index
    %c0_164 = arith.constant 0 : index
    %251 = vector.load %arg8[%c0_163, %c0_164] : memref<8x1xf32, #tpu.memory_space<vmem>>, vector<8x1xf32>
    %252 = vector.broadcast %251 : vector<8x1xf32> to vector<8x360xf32>
    %253 = arith.addf %250, %252 : vector<8x360xf32>
    %254 = vector.broadcast %0 : vector<1x360xf32> to vector<8x360xf32>
    %255 = arith.mulf %253, %254 : vector<8x360xf32>
    %cst_165 = arith.constant 0.000000e+00 : f32
    %256 = vector.broadcast %cst_165 : f32 to vector<8x60xf32>
    %c0_166 = arith.constant 0 : index
    %c0_167 = arith.constant 0 : index
    %257 = vector.load %arg20[%c0_166, %c0_167] : memref<8x480xf32, #tpu.memory_space<vmem>>, vector<8x60xf32>
    tpu.vector_store %arg20[%c0_166, %c0_167], %256 {strides = array<i32>} : memref<8x480xf32, #tpu.memory_space<vmem>>, vector<8x60xf32>,
    %c0_168 = arith.constant 0 : index
    %c60_169 = arith.constant 60 : index
    %258 = vector.load %arg20[%c0_168, %c60_169] : memref<8x480xf32, #tpu.memory_space<vmem>>, vector<8x360xf32>
    tpu.vector_store %arg20[%c0_168, %c60_169], %255 {strides = array<i32>} : memref<8x480xf32, #tpu.memory_space<vmem>>, vector<8x360xf32>,
    %cst_170 = arith.constant 0.000000e+00 : f32
    %259 = vector.broadcast %cst_170 : f32 to vector<8x60xf32>
    %c0_171 = arith.constant 0 : index
    %c420_172 = arith.constant 420 : index
    %260 = vector.load %arg20[%c0_171, %c420_172] : memref<8x480xf32, #tpu.memory_space<vmem>>, vector<8x60xf32>
    tpu.vector_store %arg20[%c0_171, %c420_172], %259 {strides = array<i32>} : memref<8x480xf32, #tpu.memory_space<vmem>>, vector<8x60xf32>,
    %c0_173 = arith.constant 0 : index
    %c0_174 = arith.constant 0 : index
    %261 = vector.load %arg20[%c0_173, %c0_174] : memref<8x480xf32, #tpu.memory_space<vmem>>, vector<8x480xf32>
    %c0_175 = arith.constant 0 : index
    %c0_176 = arith.constant 0 : index
    %262 = vector.load %arg19[%c0_175, %c0_176] : memref<4x480xf32, #tpu.memory_space<vmem>>, vector<4x480xf32>
    %cst_177 = arith.constant 0.000000e+00 : f32
    %263 = vector.broadcast %cst_177 : f32 to vector<8x360xf32>
    %cst_178 = arith.constant 0.000000e+00 : f32
    %264 = vector.broadcast %cst_178 : f32 to vector<4x360xf32>
    %c0_179 = arith.constant 0 : index
    %c0_180 = arith.constant 0 : index
    %265 = vector.load %arg9[%c0_179, %c0_180] : memref<8x9xf32, #tpu.memory_space<vmem>>, vector<8x1xf32>
    %266 = vector.extract_strided_slice %261 {offsets = [0, 39], sizes = [8, 360], strides = [1, 1]} : vector<8x480xf32> to vector<8x360xf32>
    %267 = vector.broadcast %265 : vector<8x1xf32> to vector<8x360xf32>
    %268 = arith.mulf %267, %266 : vector<8x360xf32>
    %269 = arith.addf %263, %268 : vector<8x360xf32>
    %c0_181 = arith.constant 0 : index
    %c0_182 = arith.constant 0 : index
    %270 = vector.load %arg11[%c0_181, %c0_182] : memref<4x9xf32, #tpu.memory_space<vmem>>, vector<4x1xf32>
    %271 = vector.extract_strided_slice %262 {offsets = [0, 39], sizes = [4, 360], strides = [1, 1]} : vector<4x480xf32> to vector<4x360xf32>
    %272 = vector.broadcast %270 : vector<4x1xf32> to vector<4x360xf32>
    %273 = arith.mulf %272, %271 : vector<4x360xf32>
    %274 = arith.addf %264, %273 : vector<4x360xf32>
    %c0_183 = arith.constant 0 : index
    %c1_184 = arith.constant 1 : index
    %275 = vector.load %arg9[%c0_183, %c1_184] : memref<8x9xf32, #tpu.memory_space<vmem>>, vector<8x1xf32>
    %276 = vector.extract_strided_slice %261 {offsets = [0, 40], sizes = [8, 360], strides = [1, 1]} : vector<8x480xf32> to vector<8x360xf32>
    %277 = vector.broadcast %275 : vector<8x1xf32> to vector<8x360xf32>
    %278 = arith.mulf %277, %276 : vector<8x360xf32>
    %279 = arith.addf %269, %278 : vector<8x360xf32>
    %c0_185 = arith.constant 0 : index
    %c1_186 = arith.constant 1 : index
    %280 = vector.load %arg11[%c0_185, %c1_186] : memref<4x9xf32, #tpu.memory_space<vmem>>, vector<4x1xf32>
    %281 = vector.extract_strided_slice %262 {offsets = [0, 40], sizes = [4, 360], strides = [1, 1]} : vector<4x480xf32> to vector<4x360xf32>
    %282 = vector.broadcast %280 : vector<4x1xf32> to vector<4x360xf32>
    %283 = arith.mulf %282, %281 : vector<4x360xf32>
    %284 = arith.addf %274, %283 : vector<4x360xf32>
    %c0_187 = arith.constant 0 : index
    %c2_188 = arith.constant 2 : index
    %285 = vector.load %arg9[%c0_187, %c2_188] : memref<8x9xf32, #tpu.memory_space<vmem>>, vector<8x1xf32>
    %286 = vector.extract_strided_slice %261 {offsets = [0, 41], sizes = [8, 360], strides = [1, 1]} : vector<8x480xf32> to vector<8x360xf32>
    %287 = vector.broadcast %285 : vector<8x1xf32> to vector<8x360xf32>
    %288 = arith.mulf %287, %286 : vector<8x360xf32>
    %289 = arith.addf %279, %288 : vector<8x360xf32>
    %c0_189 = arith.constant 0 : index
    %c2_190 = arith.constant 2 : index
    %290 = vector.load %arg11[%c0_189, %c2_190] : memref<4x9xf32, #tpu.memory_space<vmem>>, vector<4x1xf32>
    %291 = vector.extract_strided_slice %262 {offsets = [0, 41], sizes = [4, 360], strides = [1, 1]} : vector<4x480xf32> to vector<4x360xf32>
    %292 = vector.broadcast %290 : vector<4x1xf32> to vector<4x360xf32>
    %293 = arith.mulf %292, %291 : vector<4x360xf32>
    %294 = arith.addf %284, %293 : vector<4x360xf32>
    %c0_191 = arith.constant 0 : index
    %c3_192 = arith.constant 3 : index
    %295 = vector.load %arg9[%c0_191, %c3_192] : memref<8x9xf32, #tpu.memory_space<vmem>>, vector<8x1xf32>
    %296 = vector.extract_strided_slice %261 {offsets = [0, 59], sizes = [8, 360], strides = [1, 1]} : vector<8x480xf32> to vector<8x360xf32>
    %297 = vector.broadcast %295 : vector<8x1xf32> to vector<8x360xf32>
    %298 = arith.mulf %297, %296 : vector<8x360xf32>
    %299 = arith.addf %289, %298 : vector<8x360xf32>
    %c0_193 = arith.constant 0 : index
    %c3_194 = arith.constant 3 : index
    %300 = vector.load %arg11[%c0_193, %c3_194] : memref<4x9xf32, #tpu.memory_space<vmem>>, vector<4x1xf32>
    %301 = vector.extract_strided_slice %262 {offsets = [0, 59], sizes = [4, 360], strides = [1, 1]} : vector<4x480xf32> to vector<4x360xf32>
    %302 = vector.broadcast %300 : vector<4x1xf32> to vector<4x360xf32>
    %303 = arith.mulf %302, %301 : vector<4x360xf32>
    %304 = arith.addf %294, %303 : vector<4x360xf32>
    %c0_195 = arith.constant 0 : index
    %c4_196 = arith.constant 4 : index
    %305 = vector.load %arg9[%c0_195, %c4_196] : memref<8x9xf32, #tpu.memory_space<vmem>>, vector<8x1xf32>
    %306 = vector.extract_strided_slice %261 {offsets = [0, 60], sizes = [8, 360], strides = [1, 1]} : vector<8x480xf32> to vector<8x360xf32>
    %307 = vector.broadcast %305 : vector<8x1xf32> to vector<8x360xf32>
    %308 = arith.mulf %307, %306 : vector<8x360xf32>
    %309 = arith.addf %299, %308 : vector<8x360xf32>
    %c0_197 = arith.constant 0 : index
    %c4_198 = arith.constant 4 : index
    %310 = vector.load %arg11[%c0_197, %c4_198] : memref<4x9xf32, #tpu.memory_space<vmem>>, vector<4x1xf32>
    %311 = vector.extract_strided_slice %262 {offsets = [0, 60], sizes = [4, 360], strides = [1, 1]} : vector<4x480xf32> to vector<4x360xf32>
    %312 = vector.broadcast %310 : vector<4x1xf32> to vector<4x360xf32>
    %313 = arith.mulf %312, %311 : vector<4x360xf32>
    %314 = arith.addf %304, %313 : vector<4x360xf32>
    %c0_199 = arith.constant 0 : index
    %c5_200 = arith.constant 5 : index
    %315 = vector.load %arg9[%c0_199, %c5_200] : memref<8x9xf32, #tpu.memory_space<vmem>>, vector<8x1xf32>
    %316 = vector.extract_strided_slice %261 {offsets = [0, 61], sizes = [8, 360], strides = [1, 1]} : vector<8x480xf32> to vector<8x360xf32>
    %317 = vector.broadcast %315 : vector<8x1xf32> to vector<8x360xf32>
    %318 = arith.mulf %317, %316 : vector<8x360xf32>
    %319 = arith.addf %309, %318 : vector<8x360xf32>
    %c0_201 = arith.constant 0 : index
    %c5_202 = arith.constant 5 : index
    %320 = vector.load %arg11[%c0_201, %c5_202] : memref<4x9xf32, #tpu.memory_space<vmem>>, vector<4x1xf32>
    %321 = vector.extract_strided_slice %262 {offsets = [0, 61], sizes = [4, 360], strides = [1, 1]} : vector<4x480xf32> to vector<4x360xf32>
    %322 = vector.broadcast %320 : vector<4x1xf32> to vector<4x360xf32>
    %323 = arith.mulf %322, %321 : vector<4x360xf32>
    %324 = arith.addf %314, %323 : vector<4x360xf32>
    %c0_203 = arith.constant 0 : index
    %c6_204 = arith.constant 6 : index
    %325 = vector.load %arg9[%c0_203, %c6_204] : memref<8x9xf32, #tpu.memory_space<vmem>>, vector<8x1xf32>
    %326 = vector.extract_strided_slice %261 {offsets = [0, 79], sizes = [8, 360], strides = [1, 1]} : vector<8x480xf32> to vector<8x360xf32>
    %327 = vector.broadcast %325 : vector<8x1xf32> to vector<8x360xf32>
    %328 = arith.mulf %327, %326 : vector<8x360xf32>
    %329 = arith.addf %319, %328 : vector<8x360xf32>
    %c0_205 = arith.constant 0 : index
    %c6_206 = arith.constant 6 : index
    %330 = vector.load %arg11[%c0_205, %c6_206] : memref<4x9xf32, #tpu.memory_space<vmem>>, vector<4x1xf32>
    %331 = vector.extract_strided_slice %262 {offsets = [0, 79], sizes = [4, 360], strides = [1, 1]} : vector<4x480xf32> to vector<4x360xf32>
    %332 = vector.broadcast %330 : vector<4x1xf32> to vector<4x360xf32>
    %333 = arith.mulf %332, %331 : vector<4x360xf32>
    %334 = arith.addf %324, %333 : vector<4x360xf32>
    %c0_207 = arith.constant 0 : index
    %c7_208 = arith.constant 7 : index
    %335 = vector.load %arg9[%c0_207, %c7_208] : memref<8x9xf32, #tpu.memory_space<vmem>>, vector<8x1xf32>
    %336 = vector.extract_strided_slice %261 {offsets = [0, 80], sizes = [8, 360], strides = [1, 1]} : vector<8x480xf32> to vector<8x360xf32>
    %337 = vector.broadcast %335 : vector<8x1xf32> to vector<8x360xf32>
    %338 = arith.mulf %337, %336 : vector<8x360xf32>
    %339 = arith.addf %329, %338 : vector<8x360xf32>
    %c0_209 = arith.constant 0 : index
    %c7_210 = arith.constant 7 : index
    %340 = vector.load %arg11[%c0_209, %c7_210] : memref<4x9xf32, #tpu.memory_space<vmem>>, vector<4x1xf32>
    %341 = vector.extract_strided_slice %262 {offsets = [0, 80], sizes = [4, 360], strides = [1, 1]} : vector<4x480xf32> to vector<4x360xf32>
    %342 = vector.broadcast %340 : vector<4x1xf32> to vector<4x360xf32>
    %343 = arith.mulf %342, %341 : vector<4x360xf32>
    %344 = arith.addf %334, %343 : vector<4x360xf32>
    %c0_211 = arith.constant 0 : index
    %c8_212 = arith.constant 8 : index
    %345 = vector.load %arg9[%c0_211, %c8_212] : memref<8x9xf32, #tpu.memory_space<vmem>>, vector<8x1xf32>
    %346 = vector.extract_strided_slice %261 {offsets = [0, 81], sizes = [8, 360], strides = [1, 1]} : vector<8x480xf32> to vector<8x360xf32>
    %347 = vector.broadcast %345 : vector<8x1xf32> to vector<8x360xf32>
    %348 = arith.mulf %347, %346 : vector<8x360xf32>
    %349 = arith.addf %339, %348 : vector<8x360xf32>
    %c0_213 = arith.constant 0 : index
    %c8_214 = arith.constant 8 : index
    %350 = vector.load %arg11[%c0_213, %c8_214] : memref<4x9xf32, #tpu.memory_space<vmem>>, vector<4x1xf32>
    %351 = vector.extract_strided_slice %262 {offsets = [0, 81], sizes = [4, 360], strides = [1, 1]} : vector<4x480xf32> to vector<4x360xf32>
    %352 = vector.broadcast %350 : vector<4x1xf32> to vector<4x360xf32>
    %353 = arith.mulf %352, %351 : vector<4x360xf32>
    %354 = arith.addf %344, %353 : vector<4x360xf32>
    %c0_215 = arith.constant 0 : index
    %c0_216 = arith.constant 0 : index
    %355 = vector.load %arg10[%c0_215, %c0_216] : memref<8x1xf32, #tpu.memory_space<vmem>>, vector<8x1xf32>
    %356 = vector.broadcast %355 : vector<8x1xf32> to vector<8x360xf32>
    %357 = arith.addf %349, %356 : vector<8x360xf32>
    %358 = vector.broadcast %0 : vector<1x360xf32> to vector<8x360xf32>
    %359 = arith.mulf %357, %358 : vector<8x360xf32>
    %c0_217 = arith.constant 0 : index
    %c0_218 = arith.constant 0 : index
    %360 = vector.load %arg12[%c0_217, %c0_218] : memref<4x1xf32, #tpu.memory_space<vmem>>, vector<4x1xf32>
    %361 = vector.broadcast %360 : vector<4x1xf32> to vector<4x360xf32>
    %362 = arith.addf %354, %361 : vector<4x360xf32>
    %363 = vector.broadcast %0 : vector<1x360xf32> to vector<4x360xf32>
    %364 = arith.mulf %362, %363 : vector<4x360xf32>
    %365 = vector.extract_strided_slice %364 {offsets = [0, 0], sizes = [2, 360], strides = [1, 1]} : vector<4x360xf32> to vector<2x360xf32>
    %366 = vector.extract_strided_slice %359 {offsets = [0, 0], sizes = [2, 360], strides = [1, 1]} : vector<8x360xf32> to vector<2x360xf32>
    %367 = vector.extract_strided_slice %359 {offsets = [4, 0], sizes = [2, 360], strides = [1, 1]} : vector<8x360xf32> to vector<2x360xf32>
    %368 = arith.mulf %365, %365 : vector<2x360xf32>
    %cst_219 = arith.constant dense<0.000000e+00> : vector<2xf32>
    %369 = vector.multi_reduction <add>, %368, %cst_219 [1] : vector<2x360xf32> to vector<2xf32>
    %370 = vector.shape_cast %369 : vector<2xf32> to vector<2x1xf32>
    %cst_220 = arith.constant 1.000000e-24 : f32
    %371 = vector.broadcast %cst_220 : f32 to vector<2x1xf32>
    %372 = arith.maximumf %370, %371 : vector<2x1xf32>
    %373 = math.rsqrt %372 : vector<2x1xf32>
    %374 = vector.broadcast %373 : vector<2x1xf32> to vector<2x360xf32>
    %375 = arith.mulf %365, %374 : vector<2x360xf32>
    %376 = arith.mulf %366, %366 : vector<2x360xf32>
    %cst_221 = arith.constant dense<0.000000e+00> : vector<2xf32>
    %377 = vector.multi_reduction <add>, %376, %cst_221 [1] : vector<2x360xf32> to vector<2xf32>
    %378 = vector.shape_cast %377 : vector<2xf32> to vector<2x1xf32>
    %cst_222 = arith.constant 1.000000e-24 : f32
    %379 = vector.broadcast %cst_222 : f32 to vector<2x1xf32>
    %380 = arith.maximumf %378, %379 : vector<2x1xf32>
    %381 = math.rsqrt %380 : vector<2x1xf32>
    %382 = vector.broadcast %381 : vector<2x1xf32> to vector<2x360xf32>
    %383 = arith.mulf %366, %382 : vector<2x360xf32>
    %cst_223 = arith.constant dense<0.000000e+00> : vector<2x2xf32>
    %384 = tpu.matmul %375, %383, %cst_223 {dimension_numbers = #tpu.dot_dimension_numbers<[1], [1], [0], [0], [0, 0, 1, 0], [], []>} : vector<2x360xf32>, vector<2x360xf32>, vector<2x2xf32> -> vector<2x2xf32>
    %c0_224 = arith.constant 0 : index
    %c0_225 = arith.constant 0 : index
    %385 = vector.load %arg13[%c0_224, %c0_225] : memref<2x1xf32, #tpu.memory_space<vmem>>, vector<1x1xf32>
    %386 = vector.broadcast %385 : vector<1x1xf32> to vector<2x2xf32>
    %387 = arith.mulf %384, %386 : vector<2x2xf32>
    %cst_226 = arith.constant dense<0xFF800000> : vector<2xf32>
    %388 = vector.multi_reduction <maximumf>, %387, %cst_226 [1] : vector<2x2xf32> to vector<2xf32>
    %389 = vector.shape_cast %388 : vector<2xf32> to vector<2x1xf32>
    %390 = vector.broadcast %389 : vector<2x1xf32> to vector<2x2xf32>
    %391 = arith.subf %387, %390 : vector<2x2xf32>
    %392 = math.exp %391 : vector<2x2xf32>
    %cst_227 = arith.constant dense<0.000000e+00> : vector<2xf32>
    %393 = vector.multi_reduction <add>, %392, %cst_227 [1] : vector<2x2xf32> to vector<2xf32>
    %394 = vector.shape_cast %393 : vector<2xf32> to vector<2x1xf32>
    %395 = vector.broadcast %394 : vector<2x1xf32> to vector<2x2xf32>
    %396 = arith.divf %392, %395 : vector<2x2xf32>
    %cst_228 = arith.constant dense<0.000000e+00> : vector<2x360xf32>
    %397 = tpu.matmul %396, %367, %cst_228 {dimension_numbers = #tpu.dot_dimension_numbers<[1], [0], [0], [1], [0, 0, 1, 1], [], []>} : vector<2x2xf32>, vector<2x360xf32>, vector<2x360xf32> -> vector<2x360xf32>
    %398 = vector.extract_strided_slice %364 {offsets = [2, 0], sizes = [2, 360], strides = [1, 1]} : vector<4x360xf32> to vector<2x360xf32>
    %399 = vector.extract_strided_slice %359 {offsets = [2, 0], sizes = [2, 360], strides = [1, 1]} : vector<8x360xf32> to vector<2x360xf32>
    %400 = vector.extract_strided_slice %359 {offsets = [6, 0], sizes = [2, 360], strides = [1, 1]} : vector<8x360xf32> to vector<2x360xf32>
    %401 = arith.mulf %398, %398 : vector<2x360xf32>
    %cst_229 = arith.constant dense<0.000000e+00> : vector<2xf32>
    %402 = vector.multi_reduction <add>, %401, %cst_229 [1] : vector<2x360xf32> to vector<2xf32>
    %403 = vector.shape_cast %402 : vector<2xf32> to vector<2x1xf32>
    %cst_230 = arith.constant 1.000000e-24 : f32
    %404 = vector.broadcast %cst_230 : f32 to vector<2x1xf32>
    %405 = arith.maximumf %403, %404 : vector<2x1xf32>
    %406 = math.rsqrt %405 : vector<2x1xf32>
    %407 = vector.broadcast %406 : vector<2x1xf32> to vector<2x360xf32>
    %408 = arith.mulf %398, %407 : vector<2x360xf32>
    %409 = arith.mulf %399, %399 : vector<2x360xf32>
    %cst_231 = arith.constant dense<0.000000e+00> : vector<2xf32>
    %410 = vector.multi_reduction <add>, %409, %cst_231 [1] : vector<2x360xf32> to vector<2xf32>
    %411 = vector.shape_cast %410 : vector<2xf32> to vector<2x1xf32>
    %cst_232 = arith.constant 1.000000e-24 : f32
    %412 = vector.broadcast %cst_232 : f32 to vector<2x1xf32>
    %413 = arith.maximumf %411, %412 : vector<2x1xf32>
    %414 = math.rsqrt %413 : vector<2x1xf32>
    %415 = vector.broadcast %414 : vector<2x1xf32> to vector<2x360xf32>
    %416 = arith.mulf %399, %415 : vector<2x360xf32>
    %cst_233 = arith.constant dense<0.000000e+00> : vector<2x2xf32>
    %417 = tpu.matmul %408, %416, %cst_233 {dimension_numbers = #tpu.dot_dimension_numbers<[1], [1], [0], [0], [0, 0, 1, 0], [], []>} : vector<2x360xf32>, vector<2x360xf32>, vector<2x2xf32> -> vector<2x2xf32>
    %c1_234 = arith.constant 1 : index
    %c0_235 = arith.constant 0 : index
    %418 = vector.load %arg13[%c1_234, %c0_235] : memref<2x1xf32, #tpu.memory_space<vmem>>, vector<1x1xf32>
    %419 = vector.broadcast %418 : vector<1x1xf32> to vector<2x2xf32>
    %420 = arith.mulf %417, %419 : vector<2x2xf32>
    %cst_236 = arith.constant dense<0xFF800000> : vector<2xf32>
    %421 = vector.multi_reduction <maximumf>, %420, %cst_236 [1] : vector<2x2xf32> to vector<2xf32>
    %422 = vector.shape_cast %421 : vector<2xf32> to vector<2x1xf32>
    %423 = vector.broadcast %422 : vector<2x1xf32> to vector<2x2xf32>
    %424 = arith.subf %420, %423 : vector<2x2xf32>
    %425 = math.exp %424 : vector<2x2xf32>
    %cst_237 = arith.constant dense<0.000000e+00> : vector<2xf32>
    %426 = vector.multi_reduction <add>, %425, %cst_237 [1] : vector<2x2xf32> to vector<2xf32>
    %427 = vector.shape_cast %426 : vector<2xf32> to vector<2x1xf32>
    %428 = vector.broadcast %427 : vector<2x1xf32> to vector<2x2xf32>
    %429 = arith.divf %425, %428 : vector<2x2xf32>
    %cst_238 = arith.constant dense<0.000000e+00> : vector<2x360xf32>
    %430 = tpu.matmul %429, %400, %cst_238 {dimension_numbers = #tpu.dot_dimension_numbers<[1], [0], [0], [1], [0, 0, 1, 1], [], []>} : vector<2x2xf32>, vector<2x360xf32>, vector<2x360xf32> -> vector<2x360xf32>
    %431 = tpu.concatenate %397, %430 in 0 : vector<2x360xf32>, vector<2x360xf32> -> vector<4x360xf32>
    %c0_239 = arith.constant 0 : index
    %c0_240 = arith.constant 0 : index
    %432 = vector.load %arg14[%c0_239, %c0_240] : memref<4x4xf32, #tpu.memory_space<vmem>>, vector<4x4xf32>
    %cst_241 = arith.constant dense<0.000000e+00> : vector<4x360xf32>
    %433 = tpu.matmul %432, %431, %cst_241 {dimension_numbers = #tpu.dot_dimension_numbers<[1], [0], [0], [1], [0, 0, 1, 1], [], []>} : vector<4x4xf32>, vector<4x360xf32>, vector<4x360xf32> -> vector<4x360xf32>
    %434 = vector.extract_strided_slice %433 {offsets = [0, 22], sizes = [4, 16], strides = [1, 1]} : vector<4x360xf32> to vector<4x16xf32>
    %435 = vector.extract_strided_slice %433 {offsets = [0, 42], sizes = [4, 16], strides = [1, 1]} : vector<4x360xf32> to vector<4x16xf32>
    %436 = vector.extract_strided_slice %433 {offsets = [0, 62], sizes = [4, 16], strides = [1, 1]} : vector<4x360xf32> to vector<4x16xf32>
    %437 = vector.extract_strided_slice %433 {offsets = [0, 82], sizes = [4, 16], strides = [1, 1]} : vector<4x360xf32> to vector<4x16xf32>
    %438 = vector.extract_strided_slice %433 {offsets = [0, 102], sizes = [4, 16], strides = [1, 1]} : vector<4x360xf32> to vector<4x16xf32>
    %439 = vector.extract_strided_slice %433 {offsets = [0, 122], sizes = [4, 16], strides = [1, 1]} : vector<4x360xf32> to vector<4x16xf32>
    %440 = vector.extract_strided_slice %433 {offsets = [0, 142], sizes = [4, 16], strides = [1, 1]} : vector<4x360xf32> to vector<4x16xf32>
    %441 = vector.extract_strided_slice %433 {offsets = [0, 162], sizes = [4, 16], strides = [1, 1]} : vector<4x360xf32> to vector<4x16xf32>
    %442 = vector.extract_strided_slice %433 {offsets = [0, 182], sizes = [4, 16], strides = [1, 1]} : vector<4x360xf32> to vector<4x16xf32>
    %443 = vector.extract_strided_slice %433 {offsets = [0, 202], sizes = [4, 16], strides = [1, 1]} : vector<4x360xf32> to vector<4x16xf32>
    %444 = vector.extract_strided_slice %433 {offsets = [0, 222], sizes = [4, 16], strides = [1, 1]} : vector<4x360xf32> to vector<4x16xf32>
    %445 = vector.extract_strided_slice %433 {offsets = [0, 242], sizes = [4, 16], strides = [1, 1]} : vector<4x360xf32> to vector<4x16xf32>
    %446 = vector.extract_strided_slice %433 {offsets = [0, 262], sizes = [4, 16], strides = [1, 1]} : vector<4x360xf32> to vector<4x16xf32>
    %447 = vector.extract_strided_slice %433 {offsets = [0, 282], sizes = [4, 16], strides = [1, 1]} : vector<4x360xf32> to vector<4x16xf32>
    %448 = vector.extract_strided_slice %433 {offsets = [0, 302], sizes = [4, 16], strides = [1, 1]} : vector<4x360xf32> to vector<4x16xf32>
    %449 = vector.extract_strided_slice %433 {offsets = [0, 322], sizes = [4, 16], strides = [1, 1]} : vector<4x360xf32> to vector<4x16xf32>
    %450 = tpu.concatenate %434, %435, %436, %437, %438, %439, %440, %441, %442, %443, %444, %445, %446, %447, %448, %449 in 1 : vector<4x16xf32>, vector<4x16xf32>, vector<4x16xf32>, vector<4x16xf32>, vector<4x16xf32>, vector<4x16xf32>, vector<4x16xf32>, vector<4x16xf32>, vector<4x16xf32>, vector<4x16xf32>, vector<4x16xf32>, vector<4x16xf32>, vector<4x16xf32>, vector<4x16xf32>, vector<4x16xf32>, vector<4x16xf32> -> vector<4x256xf32>
    %c0_242 = arith.constant 0 : index
    %c0_243 = arith.constant 0 : index
    %451 = vector.load %arg15[%c0_242, %c0_243] : memref<4x1xf32, #tpu.memory_space<vmem>>, vector<4x1xf32>
    %452 = vector.broadcast %451 : vector<4x1xf32> to vector<4x256xf32>
    %453 = arith.addf %450, %452 : vector<4x256xf32>
    %c0_244 = arith.constant 0 : index
    %c0_245 = arith.constant 0 : index
    %c0_246 = arith.constant 0 : index
    %454 = vector.load %arg16[%c0_244, %c0_245, %c0_246] : memref<1x4x256xf32, #tpu.memory_space<vmem>>, vector<1x4x256xf32>
    %455 = vector.shape_cast %454 : vector<1x4x256xf32> to vector<4x256xf32>
    %456 = vector.shape_cast %453 : vector<4x256xf32> to vector<1x4x256xf32>
    tpu.vector_store %arg16[%c0_244, %c0_245, %c0_246], %456 {strides = array<i32>} : memref<1x4x256xf32, #tpu.memory_space<vmem>>, vector<1x4x256xf32>,
    return
  }
  func.func @transform_0(%arg0: i32) -> (i32, i32, i32) {
    %c0_i32 = arith.constant 0 : i32
    %c0_i32_0 = arith.constant 0 : i32
    %c0_i32_1 = arith.constant 0 : i32
    return %arg0, %c0_i32, %c0_i32_0 : i32, i32, i32
  }
  func.func @transform_1(%arg0: i32) -> (i32, i32) {
    %c0_i32 = arith.constant 0 : i32
    %c0_i32_0 = arith.constant 0 : i32
    %c0_i32_1 = arith.constant 0 : i32
    return %c0_i32, %c0_i32_0 : i32, i32
  }
  func.func @transform_2(%arg0: i32) -> (i32, i32, i32) {
    %c0_i32 = arith.constant 0 : i32
    %c0_i32_0 = arith.constant 0 : i32
    %c0_i32_1 = arith.constant 0 : i32
    %c0_i32_2 = arith.constant 0 : i32
    return %c0_i32, %c0_i32_0, %c0_i32_1 : i32, i32, i32
  }
  func.func @transform_3(%arg0: i32) -> (i32, i32) {
    %c0_i32 = arith.constant 0 : i32
    %c0_i32_0 = arith.constant 0 : i32
    %c0_i32_1 = arith.constant 0 : i32
    return %c0_i32, %c0_i32_0 : i32, i32
  }
  func.func @transform_4(%arg0: i32) -> (i32, i32, i32) {
    %c0_i32 = arith.constant 0 : i32
    %c0_i32_0 = arith.constant 0 : i32
    %c0_i32_1 = arith.constant 0 : i32
    %c0_i32_2 = arith.constant 0 : i32
    return %c0_i32, %c0_i32_0, %c0_i32_1 : i32, i32, i32
  }
  func.func @transform_5(%arg0: i32) -> (i32, i32) {
    %c0_i32 = arith.constant 0 : i32
    %c0_i32_0 = arith.constant 0 : i32
    %c0_i32_1 = arith.constant 0 : i32
    return %c0_i32, %c0_i32_0 : i32, i32
  }
  func.func @transform_6(%arg0: i32) -> (i32, i32) {
    %c0_i32 = arith.constant 0 : i32
    %c0_i32_0 = arith.constant 0 : i32
    %c0_i32_1 = arith.constant 0 : i32
    return %c0_i32, %c0_i32_0 : i32, i32
  }
  func.func @transform_7(%arg0: i32) -> (i32, i32) {
    %c0_i32 = arith.constant 0 : i32
    %c0_i32_0 = arith.constant 0 : i32
    %c0_i32_1 = arith.constant 0 : i32
    return %c0_i32, %c0_i32_0 : i32, i32
  }
  func.func @transform_8(%arg0: i32) -> (i32, i32) {
    %c0_i32 = arith.constant 0 : i32
    %c0_i32_0 = arith.constant 0 : i32
    %c0_i32_1 = arith.constant 0 : i32
    return %c0_i32, %c0_i32_0 : i32, i32
  }
  func.func @transform_9(%arg0: i32) -> (i32, i32) {
    %c0_i32 = arith.constant 0 : i32
    %c0_i32_0 = arith.constant 0 : i32
    %c0_i32_1 = arith.constant 0 : i32
    return %c0_i32, %c0_i32_0 : i32, i32
  }
  func.func @transform_10(%arg0: i32) -> (i32, i32) {
    %c0_i32 = arith.constant 0 : i32
    %c0_i32_0 = arith.constant 0 : i32
    %c0_i32_1 = arith.constant 0 : i32
    return %c0_i32, %c0_i32_0 : i32, i32
  }
  func.func @transform_11(%arg0: i32) -> (i32, i32) {
    %c0_i32 = arith.constant 0 : i32
    %c0_i32_0 = arith.constant 0 : i32
    %c0_i32_1 = arith.constant 0 : i32
    return %c0_i32, %c0_i32_0 : i32, i32
  }
  func.func @transform_12(%arg0: i32) -> (i32, i32) {
    %c0_i32 = arith.constant 0 : i32
    %c0_i32_0 = arith.constant 0 : i32
    %c0_i32_1 = arith.constant 0 : i32
    return %c0_i32, %c0_i32_0 : i32, i32
  }
  func.func @transform_13(%arg0: i32) -> (i32, i32) {
    %c0_i32 = arith.constant 0 : i32
    %c0_i32_0 = arith.constant 0 : i32
    %c0_i32_1 = arith.constant 0 : i32
    return %c0_i32, %c0_i32_0 : i32, i32
  }
  func.func @transform_14(%arg0: i32) -> (i32, i32) {
    %c0_i32 = arith.constant 0 : i32
    %c0_i32_0 = arith.constant 0 : i32
    %c0_i32_1 = arith.constant 0 : i32
    return %c0_i32, %c0_i32_0 : i32, i32
  }
  func.func @transform_15(%arg0: i32) -> (i32, i32, i32) {
    %c0_i32 = arith.constant 0 : i32
    %c0_i32_0 = arith.constant 0 : i32
    %c0_i32_1 = arith.constant 0 : i32
    return %arg0, %c0_i32, %c0_i32_0 : i32, i32, i32
  }
}

</mosaic_0001>

<llo_original>
// kernel: attention_c_forward.2
$region0: #{attention_c_forward.2}
  #allocation0 [shape = 'u32[]', space=smem, size = 0x4, offset = 0x4, fixed_abs, tag = 'smem constant byte address 0x4 - core index']
  #allocation1 [shape = 'u32[144,128]{1,0:T(1,128)}', space=vmem, size = 0x12000, scoped, tag = 'internal scratch']
  %s0 = inlined_call_operand.vmem [shape: f32[2,4,256], index: 0, kind: input, shape index: {}]
  %s1 = inlined_call_operand.vmem [shape: f32[2,8,256], index: 1, kind: input, shape index: {}]
  %s2 = inlined_call_operand.vmem [shape: f32[4,4], index: 2, kind: input, shape index: {}]
  %s3 = inlined_call_operand.vmem [shape: f32[2,4,256], index: 3, kind: output, shape index: {}]
  %s4 = sld [smem:[#allocation0]]
  $region45: #{attention_c_forward.2} parent=0
    _
  %s6 = ssub.s32 1, %s4
  %s7 = scalar_select 0, %s6, %s4
  loop: start=0, step=1, limit=4
  $region2: #{attention_c_forward.2} parent=0 // loop_pre_header
    _
  $region3: #{attention_c_forward.2} parent=0 // loop_header
    %s9 = sphi 0, %s13
    %p10 = scmp.ge.s32.totalorder %s9, 4
    %s19 = sphi 0, %s21
    %s22 = sphi 0, %s19
    %s23 = sphi 0, %s22
    %s39 = sphi 0, %s23
    %s45 = sphi 0, %s47
    %s48 = sphi 0, %s45
    %s49 = sphi 0, %s48
    %s65 = sphi 0, %s49
    %s69 = sphi 0, %s69
    %s71 = sphi 0, %s69
    %s72 = sphi 0, %s71
    %s86 = sphi 0, %s72
    %s92 = sphi 0, %s94
    %s95 = sphi 0, %s92
    %s96 = sphi 0, %s95
    %s112 = sphi 0, %s96
  $region4: #{attention_c_forward.2} parent=0 // loop_header_branch
    %12 = sbr.rel (%p10) target = $region8
  $region5: #{attention_c_forward.2} parent=0 // loop_body
    %s14 = ssub.s32 %s9, 1
    %s15 = ssub.s32 %s9, 2
    %s16 = sadd.s32 %s9, 1
    %s17 = ssub.s32 %s9, %s16
    %p18 = scmp.eq.s32.totalorder %s17, 0
    %s20 = sadd.s32 %s19, 1
    %s21 = scalar_select %p18, %s19, %s20
    %p24 = pneg %p18
    %p25 = scmp.eq.s32.totalorder %s9, 1
    %p26 = por %p24, %p25
    %p27 = scmp.ne.s32.totalorder %s19, %s22
    %p28 = scmp.eq.s32.totalorder %s9, 0
    %p29 = por %p27, %p28
    %p30 = scmp.ne.s32.totalorder %s19, %s22
    %p31 = scmp.eq.s32.totalorder %s14, 1
    %p32 = por %p30, %p31
    %p33 = scmp.ne.s32.totalorder %s22, %s23
    %p34 = scmp.eq.s32.totalorder %s14, 0
    %p35 = por %p33, %p34
    %p36 = scmp.ne.s32.totalorder %s22, %s23
    %p37 = scmp.eq.s32.totalorder %s15, 1
    %p38 = por %p36, %p37
    %p40 = scmp.ne.s32.totalorder %s23, %s39
    %p41 = scmp.eq.s32.totalorder %s15, 0
    %p42 = por %p40, %p41
    %s43 = ssub.s32 %s9, %s16
    %p44 = scmp.eq.s32.totalorder %s43, 0
    %s46 = sadd.s32 %s45, 1
    %s47 = scalar_select %p44, %s45, %s46
    %p50 = pneg %p44
    %p51 = scmp.eq.s32.totalorder %s9, 1
    %p52 = por %p50, %p51
    %p53 = scmp.ne.s32.totalorder %s45, %s48
    %p54 = scmp.eq.s32.totalorder %s9, 0
    %p55 = por %p53, %p54
    %p56 = scmp.ne.s32.totalorder %s45, %s48
    %p57 = scmp.eq.s32.totalorder %s14, 1
    %p58 = por %p56, %p57
    %p59 = scmp.ne.s32.totalorder %s48, %s49
    %p60 = scmp.eq.s32.totalorder %s14, 0
    %p61 = por %p59, %p60
    %p62 = scmp.ne.s32.totalorder %s48, %s49
    %p63 = scmp.eq.s32.totalorder %s15, 1
    %p64 = por %p62, %p63
    %p66 = scmp.ne.s32.totalorder %s49, %s65
    %p67 = scmp.eq.s32.totalorder %s15, 0
    %p68 = por %p66, %p67
    %s70 = sadd.s32 %s69, 1
    %p73 = scmp.eq.s32.totalorder %s9, 1
    %p74 = scmp.ne.s32.totalorder %s69, %s71
    %p75 = scmp.eq.s32.totalorder %s9, 0
    %p76 = por %p74, %p75
    %p77 = scmp.ne.s32.totalorder %s69, %s71
    %p78 = scmp.eq.s32.totalorder %s14, 1
    %p79 = por %p77, %p78
    %p80 = scmp.ne.s32.totalorder %s71, %s72
    %p81 = scmp.eq.s32.totalorder %s14, 0
    %p82 = por %p80, %p81
    %p83 = scmp.ne.s32.totalorder %s71, %s72
    %p84 = scmp.eq.s32.totalorder %s15, 1
    %p85 = por %p83, %p84
    %p87 = scmp.ne.s32.totalorder %s72, %s86
    %p88 = scmp.eq.s32.totalorder %s15, 0
    %p89 = por %p87, %p88
    %s90 = ssub.s32 %s9, %s16
    %p91 = scmp.eq.s32.totalorder %s90, 0
    %s93 = sadd.s32 %s92, 1
    %s94 = scalar_select %p91, %s92, %s93
    %p97 = pneg %p91
    %p98 = scmp.eq.s32.totalorder %s9, 1
    %p99 = por %p97, %p98
    %p100 = scmp.ne.s32.totalorder %s92, %s95
    %p101 = scmp.eq.s32.totalorder %s9, 0
    %p102 = por %p100, %p101
    %p103 = scmp.ne.s32.totalorder %s92, %s95
    %p104 = scmp.eq.s32.totalorder %s14, 1
    %p105 = por %p103, %p104
    %p106 = scmp.ne.s32.totalorder %s95, %s96
    %p107 = scmp.eq.s32.totalorder %s14, 0
    %p108 = por %p106, %p107
    %p109 = scmp.ne.s32.totalorder %s95, %s96
    %p110 = scmp.eq.s32.totalorder %s15, 1
    %p111 = por %p109, %p110
    %p113 = scmp.ne.s32.totalorder %s96, %s112
    %p114 = scmp.eq.s32.totalorder %s15, 0
    %p115 = por %p113, %p114
    %p116 = scmp.le.s32.totalorder 1, %s9
    %p117 = scmp.lt.s32.totalorder %s9, 3
    %p118 = pnand %p116, %p117
    %p119 = pneg %p118
    // Predicated region
    $region9: #{attention_c_forward.2} parent=5 // pred_check
      _
    $region10: #{attention_c_forward.2} parent=5 // pred_check_branch
      %121 = sbr.rel (%p118) target = $region12
    $region11: #{attention_c_forward.2} parent=5 // pred_region
      %s122 = ssub.s32 %s9, 1
      // Predicated region
      $region13: #{attention_c_forward.2} parent=11 // pred_check
        %p123 = pneg %p82
      $region14: #{attention_c_forward.2} parent=11 // pred_check_branch
        %125 = sbr.rel (%p123) target = $region16
      $region15: #{attention_c_forward.2} parent=11 // pred_region
        _
      $region16: #{attention_c_forward.2} parent=11 // pred_fallthru
        _
    $region12: #{attention_c_forward.2} parent=5 // pred_fallthru
      _
    %p126 = scmp.lt.s32.totalorder %s9, 2
    // Predicated region
    $region17: #{attention_c_forward.2} parent=5 // pred_check
      %p127 = pneg %p126
    $region18: #{attention_c_forward.2} parent=5 // pred_check_branch
      %129 = sbr.rel (%p127) target = $region20
    $region19: #{attention_c_forward.2} parent=5 // pred_region
      // Predicated region
      $region21: #{attention_c_forward.2} parent=19 // pred_check
        %p130 = pneg %p29
      $region22: #{attention_c_forward.2} parent=19 // pred_check_branch
        %132 = sbr.rel (%p130) target = $region24
      $region23: #{attention_c_forward.2} parent=19 // pred_region
        %p133 = scmp.lt.s32.totalorder %s9, 1
        %s134 = scalar_select %p133, %s9, 1
        %s135 = smul.addr %s134, 2
        %s136 = smul.addr %s135, 4
        %s137 = scalar_lea.vmem %s0, %s136
      $region24: #{attention_c_forward.2} parent=19 // pred_fallthru
        _
      // Predicated region
      $region25: #{attention_c_forward.2} parent=19 // pred_check
        %p138 = pneg %p55
      $region26: #{attention_c_forward.2} parent=19 // pred_check_branch
        %140 = sbr.rel (%p138) target = $region28
      $region27: #{attention_c_forward.2} parent=19 // pred_region
        %p141 = scmp.lt.s32.totalorder %s9, 1
        %s142 = scalar_select %p141, %s9, 1
        %s143 = smul.addr %s142, 2
        %s144 = smul.addr %s143, 8
        %s145 = scalar_lea.vmem %s1, %s144
      $region28: #{attention_c_forward.2} parent=19 // pred_fallthru
        _
    $region20: #{attention_c_forward.2} parent=5 // pred_fallthru
      _
    %p146 = scmp.le.s32.totalorder 1, %s9
    %p147 = scmp.lt.s32.totalorder %s9, 3
    %p148 = pnand %p146, %p147
    %p149 = pneg %p148
    // Predicated region
    $region29: #{attention_c_forward.2} parent=5 // pred_check
      _
    $region30: #{attention_c_forward.2} parent=5 // pred_check_branch
      %151 = sbr.rel (%p148) target = $region32
    $region31: #{attention_c_forward.2} parent=5 // pred_region
      %s152 = ssub.s32 %s9, 1
      %p153 = scmp.lt.s32.totalorder %s14, 1
      %s154 = scalar_select %p153, %s14, 1
      %s155 = smul.addr %s154, 2
      %s156 = smul.addr %s155, 4
      %s157 = scalar_lea.vmem %s0, %s156
      %p158 = pneg %p35
      %p159 = pneg %p32
      %p160 = scmp.lt.s32.totalorder %s14, 1
      %s161 = scalar_select %p160, %s14, 1
      %s162 = smul.addr %s161, 2
      %s163 = smul.addr %s162, 8
      %s164 = scalar_lea.vmem %s1, %s163
      %p165 = pneg %p61
      %p166 = pneg %p58
      %p167 = pneg %p82
      %p168 = pneg %p79
      %p169 = pneg %p108
      %p170 = pneg %p105
      %p171 = scmp.lt.s32.totalorder %s14, 1
      %s172 = scalar_select %p171, %s14, 1
      %s173 = smul.addr %s172, 2
      %s174 = smul.addr %s173, 4
      %s175 = scalar_lea.vmem %s3, %s174
      %p176 = scmp.lt.s32.totalorder %s14, 1
      %s177 = scalar_select %p176, %s14, 1
      %s178 = smul.addr %s177, 2
      %s179 = smul.addr %s178, 4
      %s180 = scalar_lea.vmem %s0, %s179
      %p181 = scmp.lt.s32.totalorder %s14, 1
      %s182 = scalar_select %p181, %s14, 1
      %s183 = smul.addr %s182, 2
      %s184 = smul.addr %s183, 8
      %s185 = scalar_lea.vmem %s1, %s184
      %p186 = scmp.lt.s32.totalorder %s14, 1
      %s187 = scalar_select %p186, %s14, 1
      %s188 = smul.addr %s187, 2
      %s189 = smul.addr %s188, 4
      %s190 = scalar_lea.vmem %s3, %s189
      %v191 = vld [vmem:[%s180] sm:$0xff]
      %v192 = vld [vmem:[%s185] sm:$0xff]
      %v193 = vld [vmem:[%s185 + $0x8] sm:$0xff]
      %vm194 = vcmask 1043456
      %v195 = vsel %vm194, %v192, 0.0
      %v196 = vrot.slane %v195, 4
      %v197 = vadd.f32 %v195, %v196
      %v198 = vrot.slane %v197, 2
      %v199 = vadd.f32 %v197, %v198
      %v200 = vrot.slane %v199, 1
      %v201 = vadd.f32 %v199, %v200
      %v202 = vsel %vm194, %v193, 0.0
      %v203 = vrot.slane %v202, 4
      %v204 = vadd.f32 %v202, %v203
      %v205 = vrot.slane %v204, 2
      %v206 = vadd.f32 %v204, %v205
      %v207 = vrot.slane %v206, 1
      %v208 = vadd.f32 %v206, %v207
      %v209 = vmul.f32 %v201, 0.25
      %v210 = vmul.f32 %v208, 0.25
      %v213 = vrot.slane %v192, 4
      %v214 = vrot.slane %v193, 4
      %v217 = vsel %vm194, %v213, 0.0
      %v218 = vrot.slane %v217, 4
      %v219 = vadd.f32 %v217, %v218
      %v220 = vrot.slane %v219, 2
      %v221 = vadd.f32 %v219, %v220
      %v222 = vrot.slane %v221, 1
      %v223 = vadd.f32 %v221, %v222
      %v224 = vsel %vm194, %v214, 0.0
      %v225 = vrot.slane %v224, 4
      %v226 = vadd.f32 %v224, %v225
      %v227 = vrot.slane %v226, 2
      %v228 = vadd.f32 %v226, %v227
      %v229 = vrot.slane %v228, 1
      %v230 = vadd.f32 %v228, %v229
      %v231 = vmul.f32 %v223, 0.25
      %v232 = vmul.f32 %v230, 0.25
      %vm233 = vcmask 1040384
      %v234 = vsel %vm233, %v209, %v231
      %v235 = vsel %vm233, %v210, %v232
      %v236 = vmul.f32 %v191, %v191
      %v238 = vcombine.high %v236, %v236
      %vm240 = vcmask 1041408
      %v241 = vsel %vm240, %v236, 0.0
      %v242 = vsel %vm240, %v238, 0.0
      %v243 = vadd.f32 %v241, %v242
      %244 = vadd.xlane.f32.xlu0 %v243
      %v245 = vpop.xlane.xlu0 %244
      %v246 = vmax.f32 %v245, 1e-24
      %v247 = vrsqrt.pop %v246
      %v250 = vunpack.c.l.s4 839922192
      %v251 = vunpack.c.0.s8 %v250
      %v252 = vlaneseq
      %v253 = vshrl.u32 %v252, 7
      %v254 = vsub.s32 %v251, %v253
      %v255 = vrot.slane %v247, %v254
      %v257 = vmul.f32 %v191, %v255
      %v258 = vmul.f32 %v234, %v234
      %v259 = vmul.f32 %v235, %v235
      %v260 = vsel %vm233, %v258, 0.0
      %v261 = vsel %vm233, %v259, 0.0
      %v262 = vadd.f32 %v260, %v261
      %263 = vadd.xlane.f32.xlu0 %v262
      %v264 = vpop.xlane.xlu0 %263
      %v265 = vmax.f32 %v264, 1e-24
      %v266 = vrsqrt.pop %v265
      %v267 = vmul.f32 %v234, %v266
      %v268 = vmul.f32 %v235, %v266
      %v269 = vlaneseq
      %v270 = vshrl.u32 %v269, 7
      %v271 = vsub.s32 0, %v270
      %v272 = vrot.slane %v267, %v271
      %v273 = vlaneseq
      %v274 = vshrl.u32 %v273, 7
      %v275 = vsub.s32 0, %v274
      %v276 = vrot.slane %v268, %v275
      %v279 = vcombine.low %v272, %v276
      %v281 = vmul.f32 %v257, %v279
      %v283 = vcombine.high %v281, %v281
      %v285 = vsel %vm240, %v281, 0.0
      %v286 = vsel %vm240, %v283, 0.0
      %v287 = vadd.f32 %v285, %v286
      %288 = vadd.xlane.f32.xlu0 %v287
      %v289 = vpop.xlane.xlu0 %288
      %v290 = vsub.f32 %v289, %v289
      %v291 = vmul.f32 %v290, 1.442695
      %v292 = vpow.pop %v291
      %v293 = vadd.f32 %v292, 0.0
      %v294 = vrcp.pop %v293
      %v295 = vmul.f32 %v292, %v294
      %vm296 = vcmask 7168
      %v298 = vsel %vm296, %v295, 0
      %v301 = vsel %vm233, %v267, 0
      %v304 = vsel %vm233, %v268, 0
      %306 = vmatprep.subr.mxu0 0.0
      %307 = vmatpush1.msra.mxu0 0.0
      %308 = vmatprep.subr.mxu0 0.0
      %309 = vmatpush1.msra.mxu0 0.0
      %310 = vmatprep.subr.mxu0 0.0
      %311 = vmatpush1.msra.mxu0 0.0
      %312 = vmatprep.subr.mxu0 0.0
      %313 = vmatpush1.msra.mxu0 0.0
      %314 = vmatprep.subr.mxu0 0.0
      %315 = vmatpush1.msra.mxu0 0.0
      %316 = vmatprep.subr.mxu0 0.0
      %317 = vmatpush1.msra.mxu0 0.0
      %318 = vmatprep.subr.mxu0 0.0
      %319 = vmatpush1.msra.mxu0 0.0
      %320 = vmatprep.subr.mxu0 0.0
      %321 = vmatpush1.msra.mxu0 0.0
      %322 = vmatprep.subr.mxu0 0.0
      %323 = vmatpush1.msra.mxu0 0.0
      %324 = vmatprep.subr.mxu0 0.0
      %325 = vmatpush1.msra.mxu0 0.0
      %326 = vmatprep.subr.mxu0 0.0
      %327 = vmatpush1.msra.mxu0 0.0
      %328 = vmatprep.subr.mxu0 0.0
      %329 = vmatpush1.msra.mxu0 0.0
      %330 = vmatprep.subr.mxu0 0.0
      %331 = vmatpush1.msra.mxu0 0.0
      %332 = vmatprep.subr.mxu0 0.0
      %333 = vmatpush1.msra.mxu0 0.0
      %334 = vmatprep.subr.mxu0 0.0
      %335 = vmatpush1.msra.mxu0 0.0
      %336 = vmatprep.subr.mxu0 %v304
      %337 = vmatpush1.msra.mxu0 %v301
      %338 = vmatprep.subr.mxu0 0.0
      %339 = vmatpush2.msra.mxu0 0.0
      %340 = vmatprep.subr.mxu0 0.0
      %341 = vmatpush2.msra.mxu0 0.0
      %342 = vmatprep.subr.mxu0 0.0
      %343 = vmatpush2.msra.mxu0 0.0
      %344 = vmatprep.subr.mxu0 0.0
      %345 = vmatpush2.msra.mxu0 0.0
      %346 = vmatprep.subr.mxu0 0.0
      %347 = vmatpush2.msra.mxu0 0.0
      %348 = vmatprep.subr.mxu0 0.0
      %349 = vmatpush2.msra.mxu0 0.0
      %350 = vmatprep.subr.mxu0 0.0
      %351 = vmatpush2.msra.mxu0 0.0
      %352 = vmatprep.subr.mxu0 0.0
      %353 = vmatpush2.msra.mxu0 0.0
      %354 = vmatprep.subr.mxu0 0.0
      %355 = vmatpush2.msra.mxu0 0.0
      %356 = vmatprep.subr.mxu0 0.0
      %357 = vmatpush2.msra.mxu0 0.0
      %358 = vmatprep.subr.mxu0 0.0
      %359 = vmatpush2.msra.mxu0 0.0
      %360 = vmatprep.subr.mxu0 0.0
      %361 = vmatpush2.msra.mxu0 0.0
      %362 = vmatprep.subr.mxu0 0.0
      %363 = vmatpush2.msra.mxu0 0.0
      %364 = vmatprep.subr.mxu0 0.0
      %365 = vmatpush2.msra.mxu0 0.0
      %366 = vmatprep.subr.mxu0 0.0
      %367 = vmatpush2.msra.mxu0 0.0
      %368 = vmatprep.subr.mxu0 0.0
      %369 = vmatpush2.msra.mxu0 0.0
      %370 = vmatprep.mubr.f32.mxu0 0.0
      %371 = vmatmul.mubr.f32.gmra.mxu0 %v298
      %v372 = vpop.f32.mrf.mxu0
      %v373 = vadd.f32 0.0, %v372
      %v374 = vpop.f32.mrf.mxu0
      %v375 = vadd.f32 0.0, %v374
      %376 = vdwg.mxu0
      %vm377 = vcmask 1043458
      %v378 = vsel %vm377, %v236, 0.0
      %v379 = vsel %vm377, %v238, 0.0
      %v380 = vadd.f32 %v378, %v379
      %381 = vadd.xlane.f32.xlu0 %v380
      %v382 = vpop.xlane.xlu0 %381
      %v383 = vmax.f32 %v382, 1e-24
      %v384 = vrsqrt.pop %v383
      %v387 = vunpack.c.l.s4 839922192
      %v388 = vunpack.c.0.s8 %v387
      %v389 = vlaneseq
      %v390 = vshrl.u32 %v389, 7
      %v391 = vsub.s32 %v388, %v390
      %v392 = vrot.slane %v384, %v391
      %v394 = vmul.f32 %v191, %v392
      %vm395 = vcmask 1041409
      %v396 = vsel %vm395, %v258, 0.0
      %v397 = vsel %vm395, %v259, 0.0
      %v398 = vadd.f32 %v396, %v397
      %399 = vadd.xlane.f32.xlu0 %v398
      %v400 = vpop.xlane.xlu0 %399
      %v401 = vmax.f32 %v400, 1e-24
      %v402 = vrsqrt.pop %v401
      %v403 = vmul.f32 %v234, %v402
      %v404 = vmul.f32 %v235, %v402
      %v405 = vlaneseq
      %v406 = vshrl.u32 %v405, 7
      %v407 = vsub.s32 1, %v406
      %v408 = vrot.slane %v403, %v407
      %v409 = vlaneseq
      %v410 = vshrl.u32 %v409, 7
      %v411 = vsub.s32 1, %v410
      %v412 = vrot.slane %v404, %v411
      %v415 = vcombine.low %v408, %v412
      %v416 = vrot.slane %v415, 6
      %v418 = vmul.f32 %v394, %v416
      %v420 = vcombine.high %v418, %v418
      %v422 = vsel %vm377, %v418, 0.0
      %v423 = vsel %vm377, %v420, 0.0
      %v424 = vadd.f32 %v422, %v423
      %425 = vadd.xlane.f32.xlu0 %v424
      %v426 = vpop.xlane.xlu0 %425
      %v427 = vsub.f32 %v426, %v426
      %v428 = vmul.f32 %v427, 1.442695
      %v429 = vpow.pop %v428
      %v430 = vadd.f32 %v429, 0.0
      %v431 = vrcp.pop %v430
      %v432 = vmul.f32 %v429, %v431
      %v434 = vrot.slane %v432, 2
      %v437 = vrot.slane %v403, 1
      %v438 = vrot.slane %v404, 1
      %v439 = vsel %vm296, %v434, 0
      %v441 = vsel %vm233, %v437, 0
      %v443 = vsel %vm233, %v438, 0
      %445 = vmatprep.subr.mxu0 0.0
      %446 = vmatpush1.msra.mxu0 0.0
      %447 = vmatprep.subr.mxu0 0.0
      %448 = vmatpush1.msra.mxu0 0.0
      %449 = vmatprep.subr.mxu0 0.0
      %450 = vmatpush1.msra.mxu0 0.0
      %451 = vmatprep.subr.mxu0 0.0
      %452 = vmatpush1.msra.mxu0 0.0
      %453 = vmatprep.subr.mxu0 0.0
      %454 = vmatpush1.msra.mxu0 0.0
      %455 = vmatprep.subr.mxu0 0.0
      %456 = vmatpush1.msra.mxu0 0.0
      %457 = vmatprep.subr.mxu0 0.0
      %458 = vmatpush1.msra.mxu0 0.0
      %459 = vmatprep.subr.mxu0 0.0
      %460 = vmatpush1.msra.mxu0 0.0
      %461 = vmatprep.subr.mxu0 0.0
      %462 = vmatpush1.msra.mxu0 0.0
      %463 = vmatprep.subr.mxu0 0.0
      %464 = vmatpush1.msra.mxu0 0.0
      %465 = vmatprep.subr.mxu0 0.0
      %466 = vmatpush1.msra.mxu0 0.0
      %467 = vmatprep.subr.mxu0 0.0
      %468 = vmatpush1.msra.mxu0 0.0
      %469 = vmatprep.subr.mxu0 0.0
      %470 = vmatpush1.msra.mxu0 0.0
      %471 = vmatprep.subr.mxu0 0.0
      %472 = vmatpush1.msra.mxu0 0.0
      %473 = vmatprep.subr.mxu0 0.0
      %474 = vmatpush1.msra.mxu0 0.0
      %475 = vmatprep.subr.mxu0 %v443
      %476 = vmatpush1.msra.mxu0 %v441
      %477 = vmatprep.subr.mxu0 0.0
      %478 = vmatpush2.msra.mxu0 0.0
      %479 = vmatprep.subr.mxu0 0.0
      %480 = vmatpush2.msra.mxu0 0.0
      %481 = vmatprep.subr.mxu0 0.0
      %482 = vmatpush2.msra.mxu0 0.0
      %483 = vmatprep.subr.mxu0 0.0
      %484 = vmatpush2.msra.mxu0 0.0
      %485 = vmatprep.subr.mxu0 0.0
      %486 = vmatpush2.msra.mxu0 0.0
      %487 = vmatprep.subr.mxu0 0.0
      %488 = vmatpush2.msra.mxu0 0.0
      %489 = vmatprep.subr.mxu0 0.0
      %490 = vmatpush2.msra.mxu0 0.0
      %491 = vmatprep.subr.mxu0 0.0
      %492 = vmatpush2.msra.mxu0 0.0
      %493 = vmatprep.subr.mxu0 0.0
      %494 = vmatpush2.msra.mxu0 0.0
      %495 = vmatprep.subr.mxu0 0.0
      %496 = vmatpush2.msra.mxu0 0.0
      %497 = vmatprep.subr.mxu0 0.0
      %498 = vmatpush2.msra.mxu0 0.0
      %499 = vmatprep.subr.mxu0 0.0
      %500 = vmatpush2.msra.mxu0 0.0
      %501 = vmatprep.subr.mxu0 0.0
      %502 = vmatpush2.msra.mxu0 0.0
      %503 = vmatprep.subr.mxu0 0.0
      %504 = vmatpush2.msra.mxu0 0.0
      %505 = vmatprep.subr.mxu0 0.0
      %506 = vmatpush2.msra.mxu0 0.0
      %507 = vmatprep.subr.mxu0 0.0
      %508 = vmatpush2.msra.mxu0 0.0
      %509 = vmatprep.mubr.f32.mxu0 0.0
      %510 = vmatmul.mubr.f32.gmra.mxu0 %v439
      %v511 = vpop.f32.mrf.mxu0
      %v512 = vadd.f32 0.0, %v511
      %v513 = vpop.f32.mrf.mxu0
      %v514 = vadd.f32 0.0, %v513
      %515 = vdwg.mxu0
      %v518 = vrot.slane %v512, 6
      %v519 = vrot.slane %v514, 6
      %v522 = vsel %vm240, %v373, %v518
      %v523 = vsel %vm240, %v375, %v519
      %v524 = vld [vmem:[%s2] sm:$0xf]
      %vm525 = vcmask 31744
      %v527 = vsel %vm525, %v524, 0
      %v530 = vsel %vm194, %v522, 0
      %v533 = vsel %vm194, %v523, 0
      %535 = vmatprep.subr.mxu0 0.0
      %536 = vmatpush1.msra.mxu0 0.0
      %537 = vmatprep.subr.mxu0 0.0
      %538 = vmatpush1.msra.mxu0 0.0
      %539 = vmatprep.subr.mxu0 0.0
      %540 = vmatpush1.msra.mxu0 0.0
      %541 = vmatprep.subr.mxu0 0.0
      %542 = vmatpush1.msra.mxu0 0.0
      %543 = vmatprep.subr.mxu0 0.0
      %544 = vmatpush1.msra.mxu0 0.0
      %545 = vmatprep.subr.mxu0 0.0
      %546 = vmatpush1.msra.mxu0 0.0
      %547 = vmatprep.subr.mxu0 0.0
      %548 = vmatpush1.msra.mxu0 0.0
      %549 = vmatprep.subr.mxu0 0.0
      %550 = vmatpush1.msra.mxu0 0.0
      %551 = vmatprep.subr.mxu0 0.0
      %552 = vmatpush1.msra.mxu0 0.0
      %553 = vmatprep.subr.mxu0 0.0
      %554 = vmatpush1.msra.mxu0 0.0
      %555 = vmatprep.subr.mxu0 0.0
      %556 = vmatpush1.msra.mxu0 0.0
      %557 = vmatprep.subr.mxu0 0.0
      %558 = vmatpush1.msra.mxu0 0.0
      %559 = vmatprep.subr.mxu0 0.0
      %560 = vmatpush1.msra.mxu0 0.0
      %561 = vmatprep.subr.mxu0 0.0
      %562 = vmatpush1.msra.mxu0 0.0
      %563 = vmatprep.subr.mxu0 0.0
      %564 = vmatpush1.msra.mxu0 0.0
      %565 = vmatprep.subr.mxu0 %v533
      %566 = vmatpush1.msra.mxu0 %v530
      %567 = vmatprep.subr.mxu0 0.0
      %568 = vmatpush2.msra.mxu0 0.0
      %569 = vmatprep.subr.mxu0 0.0
      %570 = vmatpush2.msra.mxu0 0.0
      %571 = vmatprep.subr.mxu0 0.0
      %572 = vmatpush2.msra.mxu0 0.0
      %573 = vmatprep.subr.mxu0 0.0
      %574 = vmatpush2.msra.mxu0 0.0
      %575 = vmatprep.subr.mxu0 0.0
      %576 = vmatpush2.msra.mxu0 0.0
      %577 = vmatprep.subr.mxu0 0.0
      %578 = vmatpush2.msra.mxu0 0.0
      %579 = vmatprep.subr.mxu0 0.0
      %580 = vmatpush2.msra.mxu0 0.0
      %581 = vmatprep.subr.mxu0 0.0
      %582 = vmatpush2.msra.mxu0 0.0
      %583 = vmatprep.subr.mxu0 0.0
      %584 = vmatpush2.msra.mxu0 0.0
      %585 = vmatprep.subr.mxu0 0.0
      %586 = vmatpush2.msra.mxu0 0.0
      %587 = vmatprep.subr.mxu0 0.0
      %588 = vmatpush2.msra.mxu0 0.0
      %589 = vmatprep.subr.mxu0 0.0
      %590 = vmatpush2.msra.mxu0 0.0
      %591 = vmatprep.subr.mxu0 0.0
      %592 = vmatpush2.msra.mxu0 0.0
      %593 = vmatprep.subr.mxu0 0.0
      %594 = vmatpush2.msra.mxu0 0.0
      %595 = vmatprep.subr.mxu0 0.0
      %596 = vmatpush2.msra.mxu0 0.0
      %597 = vmatprep.subr.mxu0 0.0
      %598 = vmatpush2.msra.mxu0 0.0
      %599 = vmatprep.mubr.f32.mxu0 0.0
      %600 = vmatmul.mubr.f32.gmra.mxu0 %v527
      %v601 = vpop.f32.mrf.mxu0
      %v602 = vadd.f32 0.0, %v601
      %v603 = vpop.f32.mrf.mxu0
      %v604 = vadd.f32 0.0, %v603
      %605 = vdwg.mxu0
      %v608 = vcombine.low %v602, %v604
      %610 = vst [vmem:[%s190] sm:$0xff] %v608
      %p611 = scmp.lt.s32.totalorder %s14, 1
      %s612 = scalar_select %p611, %s14, 1
      %s613 = smul.addr %s612, 2
      %s614 = smul.addr %s613, 4
      %s615 = scalar_lea.vmem %s3, %s614
      // Predicated region
      $region33: #{attention_c_forward.2} parent=31 // pred_check
        %p616 = pneg %p105
      $region34: #{attention_c_forward.2} parent=31 // pred_check_branch
        %618 = sbr.rel (%p616) target = $region36
      $region35: #{attention_c_forward.2} parent=31 // pred_region
        _
      $region36: #{attention_c_forward.2} parent=31 // pred_fallthru
        _
    $region32: #{attention_c_forward.2} parent=5 // pred_fallthru
      _
    %p619 = scmp.le.s32.totalorder 2, %s9
    // Predicated region
    $region37: #{attention_c_forward.2} parent=5 // pred_check
      %p620 = pneg %p619
    $region38: #{attention_c_forward.2} parent=5 // pred_check_branch
      %622 = sbr.rel (%p620) target = $region40
    $region39: #{attention_c_forward.2} parent=5 // pred_region
      %s623 = ssub.s32 %s9, 2
      // Predicated region
      $region41: #{attention_c_forward.2} parent=39 // pred_check
        %p624 = pneg %p111
      $region42: #{attention_c_forward.2} parent=39 // pred_check_branch
        %626 = sbr.rel (%p624) target = $region44
      $region43: #{attention_c_forward.2} parent=39 // pred_region
        %p627 = scmp.lt.s32.totalorder %s15, 1
        %s628 = scalar_select %p627, %s15, 1
        %s629 = smul.addr %s628, 2
        %s630 = smul.addr %s629, 4
        %s631 = scalar_lea.vmem %s3, %s630
      $region44: #{attention_c_forward.2} parent=39 // pred_fallthru
        _
    $region40: #{attention_c_forward.2} parent=5 // pred_fallthru
      _
  $region6: #{attention_c_forward.2} parent=0 // loop_footer
    %s13 = sadd.s32 1, %s9
  $region7: #{attention_c_forward.2} parent=0 // loop_footer_branch
    %8 = sbr.rel target = $region3
  $region8: #{attention_c_forward.2} parent=0 // loop_exit
    _

// kernel: squeeze.9
$region0: #{squeeze.9}
  %s0 = inlined_call_operand.vmem [shape: f32[8,3,3], index: 0, kind: input, shape index: {}]
  %s1 = inlined_call_operand.vmem [shape: f32[8,9], index: 1, kind: output, shape index: {}]
  $region1: #{squeeze.9} parent=0
    #allocation0 [shape = 'u8[12288]{0}', space=vmem, size = 0x3000, scoped, tag = 'scoped mem for input reshape']
    %s3 = sshll.u32 1, 4
    %s4 = ssub.s32 %s3, 1
    %s5 = smul.addr 4, 2
    %s6 = scalar_lea.vmem %s0, %s5
    %v7 = vld [vmem:[%s6] sm:%s4]
    %s8 = scalar_lea.vmem [#allocation0], 16
    %9 = vst [vmem:[%s8] sm:%s4] %v7
    %s10 = scalar_lea.vmem %s0, 4
    %v11 = vld [vmem:[%s10] sm:%s4]
    %s12 = scalar_lea.vmem [#allocation0], 8
    %13 = vst [vmem:[%s12] sm:%s4] %v11
    %v14 = vld [vmem:[%s0] sm:%s4]
    %15 = vst [vmem:[#allocation0] sm:%s4] %v14
    %v16 = vld [vmem:[#allocation0] sm:$0x7]
    %vm17 = vcmask 64512
    %18 = vst.msk [vmem:[%s1] sm:$0x7] %vm17, %v16
    %s19 = scalar_lea.vmem [#allocation0], 8
    %v20 = vld [vmem:[%s19] sm:$0x7]
    %vm21 = vcmask 64512
    %s22 = scalar_lea.vmem %s1, 3
    %23 = vst.msk [vmem:[%s22] sm:$0x7] %vm21, %v20
    %s24 = scalar_lea.vmem [#allocation0], 16
    %v25 = vld [vmem:[%s24] sm:$0x7]
    %vm26 = vcmask 64512
    %s27 = scalar_lea.vmem %s1, 6
    %28 = vst.msk [vmem:[%s27] sm:$0x7] %vm26, %v25

// kernel: attention_c_forward.3
$region0: #{attention_c_forward.3}
  #allocation0 [shape = 'u32[]', space=smem, size = 0x4, offset = 0x4, fixed_abs, tag = 'smem constant byte address 0x4 - core index']
  #allocation1 [shape = 'u32[144,128]{1,0:T(1,128)}', space=vmem, size = 0x12000, scoped, tag = 'internal scratch']
  #allocation2 [shape = 'f32[4,480]{1,0:T(4,128)}', space=vmem, size = 0x2000, scoped, tag = 'scratch operand']
  #allocation3 [shape = 'f32[16,480]{1,0:T(8,128)}', space=vmem, size = 0x8000, scoped, tag = 'scratch operand']
  #allocation4 [shape = 'f32[4,480]{1,0:T(4,128)}', space=vmem, size = 0x2000, scoped, tag = 'scratch operand']
  #allocation5 [shape = 'f32[8,480]{1,0:T(8,128)}', space=vmem, size = 0x4000, scoped, tag = 'scratch operand']
  %s0 = inlined_call_operand.vmem [shape: f32[2,4,256], index: 0, kind: input, shape index: {}]
  %s1 = inlined_call_operand.vmem [shape: f32[1,360], index: 1, kind: input, shape index: {}]
  %s2 = inlined_call_operand.vmem [shape: f32[25,16,4], index: 2, kind: input, shape index: {}]
  %s3 = inlined_call_operand.vmem [shape: f32[16,1], index: 3, kind: input, shape index: {}]
  %s4 = inlined_call_operand.vmem [shape: f32[9,4,16], index: 4, kind: input, shape index: {}]
  %s5 = inlined_call_operand.vmem [shape: f32[4,1], index: 5, kind: input, shape index: {}]
  %s6 = inlined_call_operand.vmem [shape: f32[8,4], index: 6, kind: input, shape index: {}]
  %s7 = inlined_call_operand.vmem [shape: f32[8,1], index: 7, kind: input, shape index: {}]
  %s8 = inlined_call_operand.vmem [shape: f32[8,9], index: 8, kind: input, shape index: {}]
  %s9 = inlined_call_operand.vmem [shape: f32[8,1], index: 9, kind: input, shape index: {}]
  %s10 = inlined_call_operand.vmem [shape: f32[4,9], index: 10, kind: input, shape index: {}]
  %s11 = inlined_call_operand.vmem [shape: f32[4,1], index: 11, kind: input, shape index: {}]
  %s12 = inlined_call_operand.vmem [shape: f32[2,1], index: 12, kind: input, shape index: {}]
  %s13 = inlined_call_operand.vmem [shape: f32[4,4], index: 13, kind: input, shape index: {}]
  %s14 = inlined_call_operand.vmem [shape: f32[4,1], index: 14, kind: input, shape index: {}]
  %s15 = inlined_call_operand.vmem [shape: f32[2,4,256], index: 15, kind: output, shape index: {}]
  %s16 = sld [smem:[#allocation0]]
  $region93: #{attention_c_forward.3} parent=0
    _
  %s18 = ssub.s32 1, %s16
  %s19 = scalar_select 0, %s18, %s16
  loop: start=0, step=1, limit=4
  $region2: #{attention_c_forward.3} parent=0 // loop_pre_header
    _
  $region3: #{attention_c_forward.3} parent=0 // loop_header
    %s21 = sphi 0, %s25
    %p22 = scmp.ge.s32.totalorder %s21, 4
    %s31 = sphi 0, %s33
    %s34 = sphi 0, %s31
    %s35 = sphi 0, %s34
    %s51 = sphi 0, %s35
    %s55 = sphi 0, %s55
    %s57 = sphi 0, %s55
    %s58 = sphi 0, %s57
    %s72 = sphi 0, %s58
    %s76 = sphi 0, %s76
    %s78 = sphi 0, %s76
    %s79 = sphi 0, %s78
    %s93 = sphi 0, %s79
    %s97 = sphi 0, %s97
    %s99 = sphi 0, %s97
    %s100 = sphi 0, %s99
    %s114 = sphi 0, %s100
    %s118 = sphi 0, %s118
    %s120 = sphi 0, %s118
    %s121 = sphi 0, %s120
    %s135 = sphi 0, %s121
    %s139 = sphi 0, %s139
    %s141 = sphi 0, %s139
    %s142 = sphi 0, %s141
    %s156 = sphi 0, %s142
    %s160 = sphi 0, %s160
    %s162 = sphi 0, %s160
    %s163 = sphi 0, %s162
    %s177 = sphi 0, %s163
    %s181 = sphi 0, %s181
    %s183 = sphi 0, %s181
    %s184 = sphi 0, %s183
    %s198 = sphi 0, %s184
    %s202 = sphi 0, %s202
    %s204 = sphi 0, %s202
    %s205 = sphi 0, %s204
    %s219 = sphi 0, %s205
    %s223 = sphi 0, %s223
    %s225 = sphi 0, %s223
    %s226 = sphi 0, %s225
    %s240 = sphi 0, %s226
    %s244 = sphi 0, %s244
    %s246 = sphi 0, %s244
    %s247 = sphi 0, %s246
    %s261 = sphi 0, %s247
    %s265 = sphi 0, %s265
    %s267 = sphi 0, %s265
    %s268 = sphi 0, %s267
    %s282 = sphi 0, %s268
    %s286 = sphi 0, %s286
    %s288 = sphi 0, %s286
    %s289 = sphi 0, %s288
    %s303 = sphi 0, %s289
    %s307 = sphi 0, %s307
    %s309 = sphi 0, %s307
    %s310 = sphi 0, %s309
    %s324 = sphi 0, %s310
    %s328 = sphi 0, %s328
    %s330 = sphi 0, %s328
    %s331 = sphi 0, %s330
    %s345 = sphi 0, %s331
    %s351 = sphi 0, %s353
    %s354 = sphi 0, %s351
    %s355 = sphi 0, %s354
    %s371 = sphi 0, %s355
  $region4: #{attention_c_forward.3} parent=0 // loop_header_branch
    %24 = sbr.rel (%p22) target = $region8
  $region5: #{attention_c_forward.3} parent=0 // loop_body
    %s26 = ssub.s32 %s21, 1
    %s27 = ssub.s32 %s21, 2
    %s28 = sadd.s32 %s21, 1
    %s29 = ssub.s32 %s21, %s28
    %p30 = scmp.eq.s32.totalorder %s29, 0
    %s32 = sadd.s32 %s31, 1
    %s33 = scalar_select %p30, %s31, %s32
    %p36 = pneg %p30
    %p37 = scmp.eq.s32.totalorder %s21, 1
    %p38 = por %p36, %p37
    %p39 = scmp.ne.s32.totalorder %s31, %s34
    %p40 = scmp.eq.s32.totalorder %s21, 0
    %p41 = por %p39, %p40
    %p42 = scmp.ne.s32.totalorder %s31, %s34
    %p43 = scmp.eq.s32.totalorder %s26, 1
    %p44 = por %p42, %p43
    %p45 = scmp.ne.s32.totalorder %s34, %s35
    %p46 = scmp.eq.s32.totalorder %s26, 0
    %p47 = por %p45, %p46
    %p48 = scmp.ne.s32.totalorder %s34, %s35
    %p49 = scmp.eq.s32.totalorder %s27, 1
    %p50 = por %p48, %p49
    %p52 = scmp.ne.s32.totalorder %s35, %s51
    %p53 = scmp.eq.s32.totalorder %s27, 0
    %p54 = por %p52, %p53
    %s56 = sadd.s32 %s55, 1
    %p59 = scmp.eq.s32.totalorder %s21, 1
    %p60 = scmp.ne.s32.totalorder %s55, %s57
    %p61 = scmp.eq.s32.totalorder %s21, 0
    %p62 = por %p60, %p61
    %p63 = scmp.ne.s32.totalorder %s55, %s57
    %p64 = scmp.eq.s32.totalorder %s26, 1
    %p65 = por %p63, %p64
    %p66 = scmp.ne.s32.totalorder %s57, %s58
    %p67 = scmp.eq.s32.totalorder %s26, 0
    %p68 = por %p66, %p67
    %p69 = scmp.ne.s32.totalorder %s57, %s58
    %p70 = scmp.eq.s32.totalorder %s27, 1
    %p71 = por %p69, %p70
    %p73 = scmp.ne.s32.totalorder %s58, %s72
    %p74 = scmp.eq.s32.totalorder %s27, 0
    %p75 = por %p73, %p74
    %s77 = sadd.s32 %s76, 1
    %p80 = scmp.eq.s32.totalorder %s21, 1
    %p81 = scmp.ne.s32.totalorder %s76, %s78
    %p82 = scmp.eq.s32.totalorder %s21, 0
    %p83 = por %p81, %p82
    %p84 = scmp.ne.s32.totalorder %s76, %s78
    %p85 = scmp.eq.s32.totalorder %s26, 1
    %p86 = por %p84, %p85
    %p87 = scmp.ne.s32.totalorder %s78, %s79
    %p88 = scmp.eq.s32.totalorder %s26, 0
    %p89 = por %p87, %p88
    %p90 = scmp.ne.s32.totalorder %s78, %s79
    %p91 = scmp.eq.s32.totalorder %s27, 1
    %p92 = por %p90, %p91
    %p94 = scmp.ne.s32.totalorder %s79, %s93
    %p95 = scmp.eq.s32.totalorder %s27, 0
    %p96 = por %p94, %p95
    %s98 = sadd.s32 %s97, 1
    %p101 = scmp.eq.s32.totalorder %s21, 1
    %p102 = scmp.ne.s32.totalorder %s97, %s99
    %p103 = scmp.eq.s32.totalorder %s21, 0
    %p104 = por %p102, %p103
    %p105 = scmp.ne.s32.totalorder %s97, %s99
    %p106 = scmp.eq.s32.totalorder %s26, 1
    %p107 = por %p105, %p106
    %p108 = scmp.ne.s32.totalorder %s99, %s100
    %p109 = scmp.eq.s32.totalorder %s26, 0
    %p110 = por %p108, %p109
    %p111 = scmp.ne.s32.totalorder %s99, %s100
    %p112 = scmp.eq.s32.totalorder %s27, 1
    %p113 = por %p111, %p112
    %p115 = scmp.ne.s32.totalorder %s100, %s114
    %p116 = scmp.eq.s32.totalorder %s27, 0
    %p117 = por %p115, %p116
    %s119 = sadd.s32 %s118, 1
    %p122 = scmp.eq.s32.totalorder %s21, 1
    %p123 = scmp.ne.s32.totalorder %s118, %s120
    %p124 = scmp.eq.s32.totalorder %s21, 0
    %p125 = por %p123, %p124
    %p126 = scmp.ne.s32.totalorder %s118, %s120
    %p127 = scmp.eq.s32.totalorder %s26, 1
    %p128 = por %p126, %p127
    %p129 = scmp.ne.s32.totalorder %s120, %s121
    %p130 = scmp.eq.s32.totalorder %s26, 0
    %p131 = por %p129, %p130
    %p132 = scmp.ne.s32.totalorder %s120, %s121
    %p133 = scmp.eq.s32.totalorder %s27, 1
    %p134 = por %p132, %p133
    %p136 = scmp.ne.s32.totalorder %s121, %s135
    %p137 = scmp.eq.s32.totalorder %s27, 0
    %p138 = por %p136, %p137
    %s140 = sadd.s32 %s139, 1
    %p143 = scmp.eq.s32.totalorder %s21, 1
    %p144 = scmp.ne.s32.totalorder %s139, %s141
    %p145 = scmp.eq.s32.totalorder %s21, 0
    %p146 = por %p144, %p145
    %p147 = scmp.ne.s32.totalorder %s139, %s141
    %p148 = scmp.eq.s32.totalorder %s26, 1
    %p149 = por %p147, %p148
    %p150 = scmp.ne.s32.totalorder %s141, %s142
    %p151 = scmp.eq.s32.totalorder %s26, 0
    %p152 = por %p150, %p151
    %p153 = scmp.ne.s32.totalorder %s141, %s142
    %p154 = scmp.eq.s32.totalorder %s27, 1
    %p155 = por %p153, %p154
    %p157 = scmp.ne.s32.totalorder %s142, %s156
    %p158 = scmp.eq.s32.totalorder %s27, 0
    %p159 = por %p157, %p158
    %s161 = sadd.s32 %s160, 1
    %p164 = scmp.eq.s32.totalorder %s21, 1
    %p165 = scmp.ne.s32.totalorder %s160, %s162
    %p166 = scmp.eq.s32.totalorder %s21, 0
    %p167 = por %p165, %p166
    %p168 = scmp.ne.s32.totalorder %s160, %s162
    %p169 = scmp.eq.s32.totalorder %s26, 1
    %p170 = por %p168, %p169
    %p171 = scmp.ne.s32.totalorder %s162, %s163
    %p172 = scmp.eq.s32.totalorder %s26, 0
    %p173 = por %p171, %p172
    %p174 = scmp.ne.s32.totalorder %s162, %s163
    %p175 = scmp.eq.s32.totalorder %s27, 1
    %p176 = por %p174, %p175
    %p178 = scmp.ne.s32.totalorder %s163, %s177
    %p179 = scmp.eq.s32.totalorder %s27, 0
    %p180 = por %p178, %p179
    %s182 = sadd.s32 %s181, 1
    %p185 = scmp.eq.s32.totalorder %s21, 1
    %p186 = scmp.ne.s32.totalorder %s181, %s183
    %p187 = scmp.eq.s32.totalorder %s21, 0
    %p188 = por %p186, %p187
    %p189 = scmp.ne.s32.totalorder %s181, %s183
    %p190 = scmp.eq.s32.totalorder %s26, 1
    %p191 = por %p189, %p190
    %p192 = scmp.ne.s32.totalorder %s183, %s184
    %p193 = scmp.eq.s32.totalorder %s26, 0
    %p194 = por %p192, %p193
    %p195 = scmp.ne.s32.totalorder %s183, %s184
    %p196 = scmp.eq.s32.totalorder %s27, 1
    %p197 = por %p195, %p196
    %p199 = scmp.ne.s32.totalorder %s184, %s198
    %p200 = scmp.eq.s32.totalorder %s27, 0
    %p201 = por %p199, %p200
    %s203 = sadd.s32 %s202, 1
    %p206 = scmp.eq.s32.totalorder %s21, 1
    %p207 = scmp.ne.s32.totalorder %s202, %s204
    %p208 = scmp.eq.s32.totalorder %s21, 0
    %p209 = por %p207, %p208
    %p210 = scmp.ne.s32.totalorder %s202, %s204
    %p211 = scmp.eq.s32.totalorder %s26, 1
    %p212 = por %p210, %p211
    %p213 = scmp.ne.s32.totalorder %s204, %s205
    %p214 = scmp.eq.s32.totalorder %s26, 0
    %p215 = por %p213, %p214
    %p216 = scmp.ne.s32.totalorder %s204, %s205
    %p217 = scmp.eq.s32.totalorder %s27, 1
    %p218 = por %p216, %p217
    %p220 = scmp.ne.s32.totalorder %s205, %s219
    %p221 = scmp.eq.s32.totalorder %s27, 0
    %p222 = por %p220, %p221
    %s224 = sadd.s32 %s223, 1
    %p227 = scmp.eq.s32.totalorder %s21, 1
    %p228 = scmp.ne.s32.totalorder %s223, %s225
    %p229 = scmp.eq.s32.totalorder %s21, 0
    %p230 = por %p228, %p229
    %p231 = scmp.ne.s32.totalorder %s223, %s225
    %p232 = scmp.eq.s32.totalorder %s26, 1
    %p233 = por %p231, %p232
    %p234 = scmp.ne.s32.totalorder %s225, %s226
    %p235 = scmp.eq.s32.totalorder %s26, 0
    %p236 = por %p234, %p235
    %p237 = scmp.ne.s32.totalorder %s225, %s226
    %p238 = scmp.eq.s32.totalorder %s27, 1
    %p239 = por %p237, %p238
    %p241 = scmp.ne.s32.totalorder %s226, %s240
    %p242 = scmp.eq.s32.totalorder %s27, 0
    %p243 = por %p241, %p242
    %s245 = sadd.s32 %s244, 1
    %p248 = scmp.eq.s32.totalorder %s21, 1
    %p249 = scmp.ne.s32.totalorder %s244, %s246
    %p250 = scmp.eq.s32.totalorder %s21, 0
    %p251 = por %p249, %p250
    %p252 = scmp.ne.s32.totalorder %s244, %s246
    %p253 = scmp.eq.s32.totalorder %s26, 1
    %p254 = por %p252, %p253
    %p255 = scmp.ne.s32.totalorder %s246, %s247
    %p256 = scmp.eq.s32.totalorder %s26, 0
    %p257 = por %p255, %p256
    %p258 = scmp.ne.s32.totalorder %s246, %s247
    %p259 = scmp.eq.s32.totalorder %s27, 1
    %p260 = por %p258, %p259
    %p262 = scmp.ne.s32.totalorder %s247, %s261
    %p263 = scmp.eq.s32.totalorder %s27, 0
    %p264 = por %p262, %p263
    %s266 = sadd.s32 %s265, 1
    %p269 = scmp.eq.s32.totalorder %s21, 1
    %p270 = scmp.ne.s32.totalorder %s265, %s267
    %p271 = scmp.eq.s32.totalorder %s21, 0
    %p272 = por %p270, %p271
    %p273 = scmp.ne.s32.totalorder %s265, %s267
    %p274 = scmp.eq.s32.totalorder %s26, 1
    %p275 = por %p273, %p274
    %p276 = scmp.ne.s32.totalorder %s267, %s268
    %p277 = scmp.eq.s32.totalorder %s26, 0
    %p278 = por %p276, %p277
    %p279 = scmp.ne.s32.totalorder %s267, %s268
    %p280 = scmp.eq.s32.totalorder %s27, 1
    %p281 = por %p279, %p280
    %p283 = scmp.ne.s32.totalorder %s268, %s282
    %p284 = scmp.eq.s32.totalorder %s27, 0
    %p285 = por %p283, %p284
    %s287 = sadd.s32 %s286, 1
    %p290 = scmp.eq.s32.totalorder %s21, 1
    %p291 = scmp.ne.s32.totalorder %s286, %s288
    %p292 = scmp.eq.s32.totalorder %s21, 0
    %p293 = por %p291, %p292
    %p294 = scmp.ne.s32.totalorder %s286, %s288
    %p295 = scmp.eq.s32.totalorder %s26, 1
    %p296 = por %p294, %p295
    %p297 = scmp.ne.s32.totalorder %s288, %s289
    %p298 = scmp.eq.s32.totalorder %s26, 0
    %p299 = por %p297, %p298
    %p300 = scmp.ne.s32.totalorder %s288, %s289
    %p301 = scmp.eq.s32.totalorder %s27, 1
    %p302 = por %p300, %p301
    %p304 = scmp.ne.s32.totalorder %s289, %s303
    %p305 = scmp.eq.s32.totalorder %s27, 0
    %p306 = por %p304, %p305
    %s308 = sadd.s32 %s307, 1
    %p311 = scmp.eq.s32.totalorder %s21, 1
    %p312 = scmp.ne.s32.totalorder %s307, %s309
    %p313 = scmp.eq.s32.totalorder %s21, 0
    %p314 = por %p312, %p313
    %p315 = scmp.ne.s32.totalorder %s307, %s309
    %p316 = scmp.eq.s32.totalorder %s26, 1
    %p317 = por %p315, %p316
    %p318 = scmp.ne.s32.totalorder %s309, %s310
    %p319 = scmp.eq.s32.totalorder %s26, 0
    %p320 = por %p318, %p319
    %p321 = scmp.ne.s32.totalorder %s309, %s310
    %p322 = scmp.eq.s32.totalorder %s27, 1
    %p323 = por %p321, %p322
    %p325 = scmp.ne.s32.totalorder %s310, %s324
    %p326 = scmp.eq.s32.totalorder %s27, 0
    %p327 = por %p325, %p326
    %s329 = sadd.s32 %s328, 1
    %p332 = scmp.eq.s32.totalorder %s21, 1
    %p333 = scmp.ne.s32.totalorder %s328, %s330
    %p334 = scmp.eq.s32.totalorder %s21, 0
    %p335 = por %p333, %p334
    %p336 = scmp.ne.s32.totalorder %s328, %s330
    %p337 = scmp.eq.s32.totalorder %s26, 1
    %p338 = por %p336, %p337
    %p339 = scmp.ne.s32.totalorder %s330, %s331
    %p340 = scmp.eq.s32.totalorder %s26, 0
    %p341 = por %p339, %p340
    %p342 = scmp.ne.s32.totalorder %s330, %s331
    %p343 = scmp.eq.s32.totalorder %s27, 1
    %p344 = por %p342, %p343
    %p346 = scmp.ne.s32.totalorder %s331, %s345
    %p347 = scmp.eq.s32.totalorder %s27, 0
    %p348 = por %p346, %p347
    %s349 = ssub.s32 %s21, %s28
    %p350 = scmp.eq.s32.totalorder %s349, 0
    %s352 = sadd.s32 %s351, 1
    %s353 = scalar_select %p350, %s351, %s352
    %p356 = pneg %p350
    %p357 = scmp.eq.s32.totalorder %s21, 1
    %p358 = por %p356, %p357
    %p359 = scmp.ne.s32.totalorder %s351, %s354
    %p360 = scmp.eq.s32.totalorder %s21, 0
    %p361 = por %p359, %p360
    %p362 = scmp.ne.s32.totalorder %s351, %s354
    %p363 = scmp.eq.s32.totalorder %s26, 1
    %p364 = por %p362, %p363
    %p365 = scmp.ne.s32.totalorder %s354, %s355
    %p366 = scmp.eq.s32.totalorder %s26, 0
    %p367 = por %p365, %p366
    %p368 = scmp.ne.s32.totalorder %s354, %s355
    %p369 = scmp.eq.s32.totalorder %s27, 1
    %p370 = por %p368, %p369
    %p372 = scmp.ne.s32.totalorder %s355, %s371
    %p373 = scmp.eq.s32.totalorder %s27, 0
    %p374 = por %p372, %p373
    %p375 = scmp.le.s32.totalorder 1, %s21
    %p376 = scmp.lt.s32.totalorder %s21, 3
    %p377 = pnand %p375, %p376
    %p378 = pneg %p377
    // Predicated region
    $region9: #{attention_c_forward.3} parent=5 // pred_check
      _
    $region10: #{attention_c_forward.3} parent=5 // pred_check_branch
      %380 = sbr.rel (%p377) target = $region12
    $region11: #{attention_c_forward.3} parent=5 // pred_region
      %s381 = ssub.s32 %s21, 1
      // Predicated region
      $region13: #{attention_c_forward.3} parent=11 // pred_check
        %p382 = pneg %p68
      $region14: #{attention_c_forward.3} parent=11 // pred_check_branch
        %384 = sbr.rel (%p382) target = $region16
      $region15: #{attention_c_forward.3} parent=11 // pred_region
        _
      $region16: #{attention_c_forward.3} parent=11 // pred_fallthru
        _
      // Predicated region
      $region17: #{attention_c_forward.3} parent=11 // pred_check
        %p385 = pneg %p89
      $region18: #{attention_c_forward.3} parent=11 // pred_check_branch
        %387 = sbr.rel (%p385) target = $region20
      $region19: #{attention_c_forward.3} parent=11 // pred_region
        _
      $region20: #{attention_c_forward.3} parent=11 // pred_fallthru
        _
      // Predicated region
      $region21: #{attention_c_forward.3} parent=11 // pred_check
        %p388 = pneg %p110
      $region22: #{attention_c_forward.3} parent=11 // pred_check_branch
        %390 = sbr.rel (%p388) target = $region24
      $region23: #{attention_c_forward.3} parent=11 // pred_region
        _
      $region24: #{attention_c_forward.3} parent=11 // pred_fallthru
        _
      // Predicated region
      $region25: #{attention_c_forward.3} parent=11 // pred_check
        %p391 = pneg %p131
      $region26: #{attention_c_forward.3} parent=11 // pred_check_branch
        %393 = sbr.rel (%p391) target = $region28
      $region27: #{attention_c_forward.3} parent=11 // pred_region
        _
      $region28: #{attention_c_forward.3} parent=11 // pred_fallthru
        _
      // Predicated region
      $region29: #{attention_c_forward.3} parent=11 // pred_check
        %p394 = pneg %p152
      $region30: #{attention_c_forward.3} parent=11 // pred_check_branch
        %396 = sbr.rel (%p394) target = $region32
      $region31: #{attention_c_forward.3} parent=11 // pred_region
        _
      $region32: #{attention_c_forward.3} parent=11 // pred_fallthru
        _
      // Predicated region
      $region33: #{attention_c_forward.3} parent=11 // pred_check
        %p397 = pneg %p173
      $region34: #{attention_c_forward.3} parent=11 // pred_check_branch
        %399 = sbr.rel (%p397) target = $region36
      $region35: #{attention_c_forward.3} parent=11 // pred_region
        _
      $region36: #{attention_c_forward.3} parent=11 // pred_fallthru
        _
      // Predicated region
      $region37: #{attention_c_forward.3} parent=11 // pred_check
        %p400 = pneg %p194
      $region38: #{attention_c_forward.3} parent=11 // pred_check_branch
        %402 = sbr.rel (%p400) target = $region40
      $region39: #{attention_c_forward.3} parent=11 // pred_region
        _
      $region40: #{attention_c_forward.3} parent=11 // pred_fallthru
        _
      // Predicated region
      $region41: #{attention_c_forward.3} parent=11 // pred_check
        %p403 = pneg %p215
      $region42: #{attention_c_forward.3} parent=11 // pred_check_branch
        %405 = sbr.rel (%p403) target = $region44
      $region43: #{attention_c_forward.3} parent=11 // pred_region
        _
      $region44: #{attention_c_forward.3} parent=11 // pred_fallthru
        _
      // Predicated region
      $region45: #{attention_c_forward.3} parent=11 // pred_check
        %p406 = pneg %p236
      $region46: #{attention_c_forward.3} parent=11 // pred_check_branch
        %408 = sbr.rel (%p406) target = $region48
      $region47: #{attention_c_forward.3} parent=11 // pred_region
        _
      $region48: #{attention_c_forward.3} parent=11 // pred_fallthru
        _
      // Predicated region
      $region49: #{attention_c_forward.3} parent=11 // pred_check
        %p409 = pneg %p257
      $region50: #{attention_c_forward.3} parent=11 // pred_check_branch
        %411 = sbr.rel (%p409) target = $region52
      $region51: #{attention_c_forward.3} parent=11 // pred_region
        _
      $region52: #{attention_c_forward.3} parent=11 // pred_fallthru
        _
      // Predicated region
      $region53: #{attention_c_forward.3} parent=11 // pred_check
        %p412 = pneg %p278
      $region54: #{attention_c_forward.3} parent=11 // pred_check_branch
        %414 = sbr.rel (%p412) target = $region56
      $region55: #{attention_c_forward.3} parent=11 // pred_region
        _
      $region56: #{attention_c_forward.3} parent=11 // pred_fallthru
        _
      // Predicated region
      $region57: #{attention_c_forward.3} parent=11 // pred_check
        %p415 = pneg %p299
      $region58: #{attention_c_forward.3} parent=11 // pred_check_branch
        %417 = sbr.rel (%p415) target = $region60
      $region59: #{attention_c_forward.3} parent=11 // pred_region
        _
      $region60: #{attention_c_forward.3} parent=11 // pred_fallthru
        _
      // Predicated region
      $region61: #{attention_c_forward.3} parent=11 // pred_check
        %p418 = pneg %p320
      $region62: #{attention_c_forward.3} parent=11 // pred_check_branch
        %420 = sbr.rel (%p418) target = $region64
      $region63: #{attention_c_forward.3} parent=11 // pred_region
        _
      $region64: #{attention_c_forward.3} parent=11 // pred_fallthru
        _
      // Predicated region
      $region65: #{attention_c_forward.3} parent=11 // pred_check
        %p421 = pneg %p341
      $region66: #{attention_c_forward.3} parent=11 // pred_check_branch
        %423 = sbr.rel (%p421) target = $region68
      $region67: #{attention_c_forward.3} parent=11 // pred_region
        _
      $region68: #{attention_c_forward.3} parent=11 // pred_fallthru
        _
    $region12: #{attention_c_forward.3} parent=5 // pred_fallthru
      _
    %p424 = scmp.lt.s32.totalorder %s21, 2
    // Predicated region
    $region69: #{attention_c_forward.3} parent=5 // pred_check
      %p425 = pneg %p424
    $region70: #{attention_c_forward.3} parent=5 // pred_check_branch
      %427 = sbr.rel (%p425) target = $region72
    $region71: #{attention_c_forward.3} parent=5 // pred_region
      // Predicated region
      $region73: #{attention_c_forward.3} parent=71 // pred_check
        %p428 = pneg %p41
      $region74: #{attention_c_forward.3} parent=71 // pred_check_branch
        %430 = sbr.rel (%p428) target = $region76
      $region75: #{attention_c_forward.3} parent=71 // pred_region
        %p431 = scmp.lt.s32.totalorder %s21, 1
        %s432 = scalar_select %p431, %s21, 1
        %s433 = smul.addr %s432, 2
        %s434 = smul.addr %s433, 4
        %s435 = scalar_lea.vmem %s0, %s434
      $region76: #{attention_c_forward.3} parent=71 // pred_fallthru
        _
    $region72: #{attention_c_forward.3} parent=5 // pred_fallthru
      _
    %p436 = scmp.le.s32.totalorder 1, %s21
    %p437 = scmp.lt.s32.totalorder %s21, 3
    %p438 = pnand %p436, %p437
    %p439 = pneg %p438
    // Predicated region
    $region77: #{attention_c_forward.3} parent=5 // pred_check
      _
    $region78: #{attention_c_forward.3} parent=5 // pred_check_branch
      %441 = sbr.rel (%p438) target = $region80
    $region79: #{attention_c_forward.3} parent=5 // pred_region
      %s442 = ssub.s32 %s21, 1
      %p443 = scmp.lt.s32.totalorder %s26, 1
      %s444 = scalar_select %p443, %s26, 1
      %s445 = smul.addr %s444, 2
      %s446 = smul.addr %s445, 4
      %s447 = scalar_lea.vmem %s0, %s446
      %p448 = pneg %p47
      %p449 = pneg %p44
      %p450 = pneg %p68
      %p451 = pneg %p65
      %p452 = pneg %p89
      %p453 = pneg %p86
      %p454 = pneg %p110
      %p455 = pneg %p107
      %p456 = pneg %p131
      %p457 = pneg %p128
      %p458 = pneg %p152
      %p459 = pneg %p149
      %p460 = pneg %p173
      %p461 = pneg %p170
      %p462 = pneg %p194
      %p463 = pneg %p191
      %p464 = pneg %p215
      %p465 = pneg %p212
      %p466 = pneg %p236
      %p467 = pneg %p233
      %p468 = pneg %p257
      %p469 = pneg %p254
      %p470 = pneg %p278
      %p471 = pneg %p275
      %p472 = pneg %p299
      %p473 = pneg %p296
      %p474 = pneg %p320
      %p475 = pneg %p317
      %p476 = pneg %p341
      %p477 = pneg %p338
      %p478 = pneg %p367
      %p479 = pneg %p364
      %p480 = scmp.lt.s32.totalorder %s26, 1
      %s481 = scalar_select %p480, %s26, 1
      %s482 = smul.addr %s481, 2
      %s483 = smul.addr %s482, 4
      %s484 = scalar_lea.vmem %s15, %s483
      %p485 = scmp.lt.s32.totalorder %s26, 1
      %s486 = scalar_select %p485, %s26, 1
      %s487 = smul.addr %s486, 2
      %s488 = smul.addr %s487, 4
      %s489 = scalar_lea.vmem %s0, %s488
      %p490 = scmp.lt.s32.totalorder %s26, 1
      %s491 = scalar_select %p490, %s26, 1
      %s492 = smul.addr %s491, 2
      %s493 = smul.addr %s492, 4
      %s494 = scalar_lea.vmem %s15, %s493
      %v495 = vld [vmem:[%s1] sm:$0x7]
      %v496 = vld [vmem:[%s489] sm:$0xff]
      %vm497 = vcmask 650240
      %498 = vst.msk [vmem:[#allocation2] sm:$0xf] %vm497, 0.0
      %vm499 = vcmask 781440
      %500 = vst.msk [vmem:[#allocation2 + $0xc] sm:$0xf] %vm499, 0.0
      %502 = vrot.lane.b32.xlu0 %v496, 2
      %v503 = vpop.permute.xlu0 %502
      %vm505 = vcmask 15360
      %v506 = vsel %vm505, 0.0, %v503
      %vm507 = vcmask 146432
      %v508 = vsel %vm507, %v506, 0.0
      %510 = vrot.lane.b32.xlu0 %v508, 80
      %v511 = vpop.permute.xlu0 %510
      %vm513 = vcmask 814720
      %514 = vst.msk [vmem:[#allocation2] sm:$0xf] %vm513, %v511
      %515 = vrot.lane.b32.xlu0 %v496, 114
      %v516 = vpop.permute.xlu0 %515
      %v518 = vsel %vm505, 0.0, %v516
      %v519 = vsel %vm507, %v518, 0.0
      %521 = vrot.lane.b32.xlu0 %v519, 100
      %v522 = vpop.permute.xlu0 %521
      %vm524 = vcmask 978720
      %525 = vst.msk [vmem:[#allocation2] sm:$0xf] %vm524, %v522
      %526 = vrot.lane.b32.xlu0 %v496, 98
      %v527 = vpop.permute.xlu0 %526
      %v529 = vsel %vm505, 0.0, %v527
      %v530 = vsel %vm507, %v529, 0.0
      %532 = vrot.lane.b32.xlu0 %v530, 120
      %v533 = vpop.permute.xlu0 %532
      %v534 = vrot.slane %v533, 4
      %vm535 = vcmask 982016
      %v536 = vsel %vm535, %v534, %v533
      %vm538 = vcmask 1044416
      %vm539 = vcmask 97284
      %vm540 = vmor %vm539, %vm538
      %541 = vst.msk [vmem:[#allocation2] sm:$0xff] %vm540, %v536
      %542 = vrot.lane.b32.xlu0 %v496, 82
      %v543 = vpop.permute.xlu0 %542
      %v545 = vsel %vm505, 0.0, %v543
      %v546 = vsel %vm507, %v545, 0.0
      %548 = vrot.lane.b32.xlu0 %v546, 12
      %v549 = vpop.permute.xlu0 %548
      %vm551 = vcmask 257120
      %552 = vst.msk [vmem:[#allocation2 + $0x4] sm:$0xf] %vm551, %v549
      %553 = vrot.lane.b32.xlu0 %v496, 66
      %v554 = vpop.permute.xlu0 %553
      %v556 = vsel %vm505, 0.0, %v554
      %v557 = vsel %vm507, %v556, 0.0
      %559 = vrot.lane.b32.xlu0 %v557, 32
      %v560 = vpop.permute.xlu0 %559
      %vm562 = vcmask 421120
      %563 = vst.msk [vmem:[#allocation2 + $0x4] sm:$0xf] %vm562, %v560
      %564 = vrot.lane.b32.xlu0 %v496, 50
      %v565 = vpop.permute.xlu0 %564
      %v567 = vsel %vm505, 0.0, %v565
      %v568 = vsel %vm507, %v567, 0.0
      %570 = vrot.lane.b32.xlu0 %v568, 52
      %v571 = vpop.permute.xlu0 %570
      %vm573 = vcmask 585120
      %574 = vst.msk [vmem:[#allocation2 + $0x4] sm:$0xf] %vm573, %v571
      %575 = vrot.lane.b32.xlu0 %v496, 34
      %v576 = vpop.permute.xlu0 %575
      %v578 = vsel %vm505, 0.0, %v576
      %v579 = vsel %vm507, %v578, 0.0
      %581 = vrot.lane.b32.xlu0 %v579, 72
      %v582 = vpop.permute.xlu0 %581
      %vm584 = vcmask 749120
      %585 = vst.msk [vmem:[#allocation2 + $0x4] sm:$0xf] %vm584, %v582
      %586 = vrot.lane.b32.xlu0 %v496, 18
      %v587 = vpop.permute.xlu0 %586
      %v589 = vsel %vm505, 0.0, %v587
      %v590 = vsel %vm507, %v589, 0.0
      %592 = vrot.lane.b32.xlu0 %v590, 92
      %v593 = vpop.permute.xlu0 %592
      %vm595 = vcmask 913120
      %596 = vst.msk [vmem:[#allocation2 + $0x4] sm:$0xf] %vm595, %v593
      %v597 = vcombine.high %v496, %v496
      %598 = vrot.lane.b32.xlu0 %v597, 2
      %v599 = vpop.permute.xlu0 %598
      %v601 = vsel %vm505, 0.0, %v599
      %v602 = vsel %vm507, %v601, 0.0
      %604 = vrot.lane.b32.xlu0 %v602, 112
      %v605 = vpop.permute.xlu0 %604
      %v606 = vrot.slane %v605, 4
      %vm607 = vcmask 916480
      %v608 = vsel %vm607, %v606, %v605
      %vm610 = vcmask 1044352
      %vm611 = vcmask 31748
      %vm612 = vmor %vm611, %vm610
      %613 = vst.msk [vmem:[#allocation2 + $0x4] sm:$0xff] %vm612, %v608
      %614 = vrot.lane.b32.xlu0 %v597, 114
      %v615 = vpop.permute.xlu0 %614
      %v617 = vsel %vm505, 0.0, %v615
      %v618 = vsel %vm507, %v617, 0.0
      %620 = vrot.lane.b32.xlu0 %v618, 4
      %v621 = vpop.permute.xlu0 %620
      %vm623 = vcmask 191520
      %624 = vst.msk [vmem:[#allocation2 + $0x8] sm:$0xf] %vm623, %v621
      %625 = vrot.lane.b32.xlu0 %v597, 98
      %v626 = vpop.permute.xlu0 %625
      %v628 = vsel %vm505, 0.0, %v626
      %v629 = vsel %vm507, %v628, 0.0
      %631 = vrot.lane.b32.xlu0 %v629, 24
      %v632 = vpop.permute.xlu0 %631
      %vm634 = vcmask 355520
      %635 = vst.msk [vmem:[#allocation2 + $0x8] sm:$0xf] %vm634, %v632
      %636 = vrot.lane.b32.xlu0 %v597, 82
      %v637 = vpop.permute.xlu0 %636
      %v639 = vsel %vm505, 0.0, %v637
      %v640 = vsel %vm507, %v639, 0.0
      %642 = vrot.lane.b32.xlu0 %v640, 44
      %v643 = vpop.permute.xlu0 %642
      %vm645 = vcmask 519520
      %646 = vst.msk [vmem:[#allocation2 + $0x8] sm:$0xf] %vm645, %v643
      %647 = vrot.lane.b32.xlu0 %v597, 66
      %v648 = vpop.permute.xlu0 %647
      %v650 = vsel %vm505, 0.0, %v648
      %v651 = vsel %vm507, %v650, 0.0
      %653 = vrot.lane.b32.xlu0 %v651, 64
      %v654 = vpop.permute.xlu0 %653
      %vm656 = vcmask 683520
      %657 = vst.msk [vmem:[#allocation2 + $0x8] sm:$0xf] %vm656, %v654
      %658 = vrot.lane.b32.xlu0 %v597, 50
      %v659 = vpop.permute.xlu0 %658
      %v661 = vsel %vm505, 0.0, %v659
      %v662 = vsel %vm507, %v661, 0.0
      %664 = vrot.lane.b32.xlu0 %v662, 84
      %v665 = vpop.permute.xlu0 %664
      %vm667 = vcmask 847520
      %668 = vst.msk [vmem:[#allocation2 + $0x8] sm:$0xf] %vm667, %v665
      %669 = vrot.lane.b32.xlu0 %v597, 34
      %v670 = vpop.permute.xlu0 %669
      %v672 = vsel %vm505, 0.0, %v670
      %v673 = vsel %vm507, %v672, 0.0
      %675 = vrot.lane.b32.xlu0 %v673, 104
      %v676 = vpop.permute.xlu0 %675
      %vm678 = vcmask 1011520
      %679 = vst.msk [vmem:[#allocation2 + $0x8] sm:$0xf] %vm678, %v676
      %680 = vrot.lane.b32.xlu0 %v597, 18
      %v681 = vpop.permute.xlu0 %680
      %v683 = vsel %vm505, 0.0, %v681
      %v684 = vsel %vm507, %v683, 0.0
      %686 = vrot.lane.b32.xlu0 %v684, 124
      %v687 = vpop.permute.xlu0 %686
      %v688 = vrot.slane %v687, 4
      %vm689 = vcmask 1014784
      %v690 = vsel %vm689, %v688, %v687
      %vm692 = vcmask 1044448
      %vm693 = vcmask 130052
      %vm694 = vmor %vm693, %vm692
      %695 = vst.msk [vmem:[#allocation2 + $0x8] sm:$0xff] %vm694, %v690
      %v696 = vld [vmem:[#allocation2] sm:$0xff]
      %v697 = vld [vmem:[#allocation2 + $0x8] sm:$0xff]
      %v698 = vld [vmem:[%s2] sm:$0xff]
      %v699 = vld [vmem:[%s2 + $0x8] sm:$0xff]
      %s700 = scalar_lea.vmem %s2, 16
      %v701 = vld [vmem:[%s700] sm:$0xff]
      %v702 = vld [vmem:[%s700 + $0x8] sm:$0xff]
      %v705 = vcombine.high %v696, %v696
      %706 = vrot.lane.b32.xlu0 %v696, 109
      %v707 = vpop.permute.xlu0 %706
      %708 = vrot.lane.b32.xlu0 %v705, 109
      %v709 = vpop.permute.xlu0 %708
      %710 = vrot.lane.b32.xlu0 %v697, 109
      %v711 = vpop.permute.xlu0 %710
      %vm712 = vcmask 891904
      %v713 = vsel %vm712, %v707, %v709
      %v714 = vsel %vm712, %v709, %v711
      %vm715 = vcmask 31744
      %v717 = vsel %vm715, %v701, 0
      %v720 = vsel %vm715, %v702, 0
      %vm722 = vcmask 1043456
      %v723 = vsel %vm722, %v713, 0
      %v725 = vsel %vm722, %v714, 0
      %v727 = vsel %vm722, %v711, 0
      %729 = vmatprep.subr.mxu0 0.0
      %730 = vmatpush1.msra.mxu0 0.0
      %731 = vmatprep.subr.mxu0 0.0
      %732 = vmatpush1.msra.mxu0 0.0
      %733 = vmatprep.subr.mxu0 0.0
      %734 = vmatpush1.msra.mxu0 0.0
      %735 = vmatprep.subr.mxu0 0.0
      %736 = vmatpush1.msra.mxu0 0.0
      %737 = vmatprep.subr.mxu0 0.0
      %738 = vmatpush1.msra.mxu0 0.0
      %739 = vmatprep.subr.mxu0 0.0
      %740 = vmatpush1.msra.mxu0 0.0
      %741 = vmatprep.subr.mxu0 0.0
      %742 = vmatpush1.msra.mxu0 0.0
      %743 = vmatprep.subr.mxu0 0.0
      %744 = vmatpush1.msra.mxu0 0.0
      %745 = vmatprep.subr.mxu0 0.0
      %746 = vmatpush1.msra.mxu0 0.0
      %747 = vmatprep.subr.mxu0 0.0
      %748 = vmatpush1.msra.mxu0 0.0
      %749 = vmatprep.subr.mxu0 0.0
      %750 = vmatpush1.msra.mxu0 0.0
      %751 = vmatprep.subr.mxu0 0.0
      %752 = vmatpush1.msra.mxu0 0.0
      %753 = vmatprep.subr.mxu0 0.0
      %754 = vmatpush1.msra.mxu0 0.0
      %755 = vmatprep.subr.mxu0 0.0
      %756 = vmatpush1.msra.mxu0 0.0
      %757 = vmatprep.subr.mxu0 0.0
      %758 = vmatpush1.msra.mxu0 0.0
      %759 = vmatprep.subr.mxu0 %v725
      %760 = vmatpush1.msra.mxu0 %v723
      %761 = vmatprep.subr.mxu0 0.0
      %762 = vmatpush2.msra.mxu0 0.0
      %763 = vmatprep.subr.mxu0 0.0
      %764 = vmatpush2.msra.mxu0 0.0
      %765 = vmatprep.subr.mxu0 0.0
      %766 = vmatpush2.msra.mxu0 0.0
      %767 = vmatprep.subr.mxu0 0.0
      %768 = vmatpush2.msra.mxu0 0.0
      %769 = vmatprep.subr.mxu0 0.0
      %770 = vmatpush2.msra.mxu0 0.0
      %771 = vmatprep.subr.mxu0 0.0
      %772 = vmatpush2.msra.mxu0 0.0
      %773 = vmatprep.subr.mxu0 0.0
      %774 = vmatpush2.msra.mxu0 0.0
      %775 = vmatprep.subr.mxu0 0.0
      %776 = vmatpush2.msra.mxu0 0.0
      %777 = vmatprep.subr.mxu0 0.0
      %778 = vmatpush2.msra.mxu0 0.0
      %779 = vmatprep.subr.mxu0 0.0
      %780 = vmatpush2.msra.mxu0 0.0
      %781 = vmatprep.subr.mxu0 0.0
      %782 = vmatpush2.msra.mxu0 0.0
      %783 = vmatprep.subr.mxu0 0.0
      %784 = vmatpush2.msra.mxu0 0.0
      %785 = vmatprep.subr.mxu0 0.0
      %786 = vmatpush2.msra.mxu0 0.0
      %787 = vmatprep.subr.mxu0 0.0
      %788 = vmatpush2.msra.mxu0 0.0
      %789 = vmatprep.subr.mxu0 0.0
      %790 = vmatpush2.msra.mxu0 0.0
      %791 = vmatprep.subr.mxu0 0.0
      %792 = vmatpush2.msra.mxu0 0.0
      %793 = vmatprep.mubr.f32.mxu0 0.0
      %794 = vmatmul.mubr.f32.gmra.mxu0 %v717
      %v795 = vpop.f32.mrf.mxu0
      %v796 = vadd.f32 0.0, %v795
      %v797 = vpop.f32.mrf.mxu0
      %v798 = vadd.f32 0.0, %v797
      %799 = vmatprep.mubr.f32.mxu0 0.0
      %800 = vmatmul.mubr.f32.gmra.mxu0 %v720
      %v801 = vpop.f32.mrf.mxu0
      %v802 = vadd.f32 0.0, %v801
      %v803 = vpop.f32.mrf.mxu0
      %v804 = vadd.f32 0.0, %v803
      %805 = vdwg.mxu0
      %806 = vmatprep.subr.mxu0 0.0
      %807 = vmatpush1.msra.mxu0 0.0
      %808 = vmatprep.subr.mxu0 0.0
      %809 = vmatpush1.msra.mxu0 0.0
      %810 = vmatprep.subr.mxu0 0.0
      %811 = vmatpush1.msra.mxu0 0.0
      %812 = vmatprep.subr.mxu0 0.0
      %813 = vmatpush1.msra.mxu0 0.0
      %814 = vmatprep.subr.mxu0 0.0
      %815 = vmatpush1.msra.mxu0 0.0
      %816 = vmatprep.subr.mxu0 0.0
      %817 = vmatpush1.msra.mxu0 0.0
      %818 = vmatprep.subr.mxu0 0.0
      %819 = vmatpush1.msra.mxu0 0.0
      %820 = vmatprep.subr.mxu0 0.0
      %821 = vmatpush1.msra.mxu0 0.0
      %822 = vmatprep.subr.mxu0 0.0
      %823 = vmatpush1.msra.mxu0 0.0
      %824 = vmatprep.subr.mxu0 0.0
      %825 = vmatpush1.msra.mxu0 0.0
      %826 = vmatprep.subr.mxu0 0.0
      %827 = vmatpush1.msra.mxu0 0.0
      %828 = vmatprep.subr.mxu0 0.0
      %829 = vmatpush1.msra.mxu0 0.0
      %830 = vmatprep.subr.mxu0 0.0
      %831 = vmatpush1.msra.mxu0 0.0
      %832 = vmatprep.subr.mxu0 0.0
      %833 = vmatpush1.msra.mxu0 0.0
      %834 = vmatprep.subr.mxu0 0.0
      %835 = vmatpush1.msra.mxu0 0.0
      %836 = vmatprep.subr.mxu0 0.0
      %837 = vmatpush1.msra.mxu0 %v727
      %838 = vmatprep.subr.mxu0 0.0
      %839 = vmatpush2.msra.mxu0 0.0
      %840 = vmatprep.subr.mxu0 0.0
      %841 = vmatpush2.msra.mxu0 0.0
      %842 = vmatprep.subr.mxu0 0.0
      %843 = vmatpush2.msra.mxu0 0.0
      %844 = vmatprep.subr.mxu0 0.0
      %845 = vmatpush2.msra.mxu0 0.0
      %846 = vmatprep.subr.mxu0 0.0
      %847 = vmatpush2.msra.mxu0 0.0
      %848 = vmatprep.subr.mxu0 0.0
      %849 = vmatpush2.msra.mxu0 0.0
      %850 = vmatprep.subr.mxu0 0.0
      %851 = vmatpush2.msra.mxu0 0.0
      %852 = vmatprep.subr.mxu0 0.0
      %853 = vmatpush2.msra.mxu0 0.0
      %854 = vmatprep.subr.mxu0 0.0
      %855 = vmatpush2.msra.mxu0 0.0
      %856 = vmatprep.subr.mxu0 0.0
      %857 = vmatpush2.msra.mxu0 0.0
      %858 = vmatprep.subr.mxu0 0.0
      %859 = vmatpush2.msra.mxu0 0.0
      %860 = vmatprep.subr.mxu0 0.0
      %861 = vmatpush2.msra.mxu0 0.0
      %862 = vmatprep.subr.mxu0 0.0
      %863 = vmatpush2.msra.mxu0 0.0
      %864 = vmatprep.subr.mxu0 0.0
      %865 = vmatpush2.msra.mxu0 0.0
      %866 = vmatprep.subr.mxu0 0.0
      %867 = vmatpush2.msra.mxu0 0.0
      %868 = vmatprep.subr.mxu0 0.0
      %869 = vmatpush2.msra.mxu0 0.0
      %870 = vmatprep.mubr.f32.mxu0 0.0
      %871 = vmatmul.mubr.f32.gmra.mxu0 %v717
      %v872 = vpop.f32.mrf.mxu0
      %v873 = vadd.f32 0.0, %v872
      %v874 = vpop.f32.mrf.mxu0
      %875 = vmatprep.mubr.f32.mxu0 0.0
      %876 = vmatmul.mubr.f32.gmra.mxu0 %v720
      %v877 = vpop.f32.mrf.mxu0
      %v878 = vadd.f32 0.0, %v877
      %v879 = vpop.f32.mrf.mxu0
      %880 = vdwg.mxu0
      %881 = vrot.lane.b32.xlu0 %v696, 110
      %v882 = vpop.permute.xlu0 %881
      %883 = vrot.lane.b32.xlu0 %v705, 110
      %v884 = vpop.permute.xlu0 %883
      %885 = vrot.lane.b32.xlu0 %v697, 110
      %v886 = vpop.permute.xlu0 %885
      %vm887 = vcmask 900096
      %v888 = vsel %vm887, %v882, %v884
      %v889 = vsel %vm887, %v884, %v886
      %v891 = vsel %vm715, %v698, 0
      %v894 = vsel %vm715, %v699, 0
      %v896 = vsel %vm722, %v888, 0
      %v898 = vsel %vm722, %v889, 0
      %v900 = vsel %vm722, %v886, 0
      %902 = vmatprep.subr.mxu0 0.0
      %903 = vmatpush1.msra.mxu0 0.0
      %904 = vmatprep.subr.mxu0 0.0
      %905 = vmatpush1.msra.mxu0 0.0
      %906 = vmatprep.subr.mxu0 0.0
      %907 = vmatpush1.msra.mxu0 0.0
      %908 = vmatprep.subr.mxu0 0.0
      %909 = vmatpush1.msra.mxu0 0.0
      %910 = vmatprep.subr.mxu0 0.0
      %911 = vmatpush1.msra.mxu0 0.0
      %912 = vmatprep.subr.mxu0 0.0
      %913 = vmatpush1.msra.mxu0 0.0
      %914 = vmatprep.subr.mxu0 0.0
      %915 = vmatpush1.msra.mxu0 0.0
      %916 = vmatprep.subr.mxu0 0.0
      %917 = vmatpush1.msra.mxu0 0.0
      %918 = vmatprep.subr.mxu0 0.0
      %919 = vmatpush1.msra.mxu0 0.0
      %920 = vmatprep.subr.mxu0 0.0
      %921 = vmatpush1.msra.mxu0 0.0
      %922 = vmatprep.subr.mxu0 0.0
      %923 = vmatpush1.msra.mxu0 0.0
      %924 = vmatprep.subr.mxu0 0.0
      %925 = vmatpush1.msra.mxu0 0.0
      %926 = vmatprep.subr.mxu0 0.0
      %927 = vmatpush1.msra.mxu0 0.0
      %928 = vmatprep.subr.mxu0 0.0
      %929 = vmatpush1.msra.mxu0 0.0
      %930 = vmatprep.subr.mxu0 0.0
      %931 = vmatpush1.msra.mxu0 0.0
      %932 = vmatprep.subr.mxu0 %v898
      %933 = vmatpush1.msra.mxu0 %v896
      %934 = vmatprep.subr.mxu0 0.0
      %935 = vmatpush2.msra.mxu0 0.0
      %936 = vmatprep.subr.mxu0 0.0
      %937 = vmatpush2.msra.mxu0 0.0
      %938 = vmatprep.subr.mxu0 0.0
      %939 = vmatpush2.msra.mxu0 0.0
      %940 = vmatprep.subr.mxu0 0.0
      %941 = vmatpush2.msra.mxu0 0.0
      %942 = vmatprep.subr.mxu0 0.0
      %943 = vmatpush2.msra.mxu0 0.0
      %944 = vmatprep.subr.mxu0 0.0
      %945 = vmatpush2.msra.mxu0 0.0
      %946 = vmatprep.subr.mxu0 0.0
      %947 = vmatpush2.msra.mxu0 0.0
      %948 = vmatprep.subr.mxu0 0.0
      %949 = vmatpush2.msra.mxu0 0.0
      %950 = vmatprep.subr.mxu0 0.0
      %951 = vmatpush2.msra.mxu0 0.0
      %952 = vmatprep.subr.mxu0 0.0
      %953 = vmatpush2.msra.mxu0 0.0
      %954 = vmatprep.subr.mxu0 0.0
      %955 = vmatpush2.msra.mxu0 0.0
      %956 = vmatprep.subr.mxu0 0.0
      %957 = vmatpush2.msra.mxu0 0.0
      %958 = vmatprep.subr.mxu0 0.0
      %959 = vmatpush2.msra.mxu0 0.0
      %960 = vmatprep.subr.mxu0 0.0
      %961 = vmatpush2.msra.mxu0 0.0
      %962 = vmatprep.subr.mxu0 0.0
      %963 = vmatpush2.msra.mxu0 0.0
      %964 = vmatprep.subr.mxu0 0.0
      %965 = vmatpush2.msra.mxu0 0.0
      %966 = vmatprep.mubr.f32.mxu0 0.0
      %967 = vmatmul.mubr.f32.gmra.mxu0 %v891
      %v968 = vpop.f32.mrf.mxu0
      %v969 = vadd.f32 %v796, %v968
      %v970 = vpop.f32.mrf.mxu0
      %v971 = vadd.f32 %v798, %v970
      %972 = vmatprep.mubr.f32.mxu0 0.0
      %973 = vmatmul.mubr.f32.gmra.mxu0 %v894
      %v974 = vpop.f32.mrf.mxu0
      %v975 = vadd.f32 %v802, %v974
      %v976 = vpop.f32.mrf.mxu0
      %v977 = vadd.f32 %v804, %v976
      %978 = vdwg.mxu0
      %979 = vmatprep.subr.mxu0 0.0
      %980 = vmatpush1.msra.mxu0 0.0
      %981 = vmatprep.subr.mxu0 0.0
      %982 = vmatpush1.msra.mxu0 0.0
      %983 = vmatprep.subr.mxu0 0.0
      %984 = vmatpush1.msra.mxu0 0.0
      %985 = vmatprep.subr.mxu0 0.0
      %986 = vmatpush1.msra.mxu0 0.0
      %987 = vmatprep.subr.mxu0 0.0
      %988 = vmatpush1.msra.mxu0 0.0
      %989 = vmatprep.subr.mxu0 0.0
      %990 = vmatpush1.msra.mxu0 0.0
      %991 = vmatprep.subr.mxu0 0.0
      %992 = vmatpush1.msra.mxu0 0.0
      %993 = vmatprep.subr.mxu0 0.0
      %994 = vmatpush1.msra.mxu0 0.0
      %995 = vmatprep.subr.mxu0 0.0
      %996 = vmatpush1.msra.mxu0 0.0
      %997 = vmatprep.subr.mxu0 0.0
      %998 = vmatpush1.msra.mxu0 0.0
      %999 = vmatprep.subr.mxu0 0.0
      %1000 = vmatpush1.msra.mxu0 0.0
      %1001 = vmatprep.subr.mxu0 0.0
      %1002 = vmatpush1.msra.mxu0 0.0
      %1003 = vmatprep.subr.mxu0 0.0
      %1004 = vmatpush1.msra.mxu0 0.0
      %1005 = vmatprep.subr.mxu0 0.0
      %1006 = vmatpush1.msra.mxu0 0.0
      %1007 = vmatprep.subr.mxu0 0.0
      %1008 = vmatpush1.msra.mxu0 0.0
      %1009 = vmatprep.subr.mxu0 0.0
      %1010 = vmatpush1.msra.mxu0 %v900
      %1011 = vmatprep.subr.mxu0 0.0
      %1012 = vmatpush2.msra.mxu0 0.0
      %1013 = vmatprep.subr.mxu0 0.0
      %1014 = vmatpush2.msra.mxu0 0.0
      %1015 = vmatprep.subr.mxu0 0.0
      %1016 = vmatpush2.msra.mxu0 0.0
      %1017 = vmatprep.subr.mxu0 0.0
      %1018 = vmatpush2.msra.mxu0 0.0
      %1019 = vmatprep.subr.mxu0 0.0
      %1020 = vmatpush2.msra.mxu0 0.0
      %1021 = vmatprep.subr.mxu0 0.0
      %1022 = vmatpush2.msra.mxu0 0.0
      %1023 = vmatprep.subr.mxu0 0.0
      %1024 = vmatpush2.msra.mxu0 0.0
      %1025 = vmatprep.subr.mxu0 0.0
      %1026 = vmatpush2.msra.mxu0 0.0
      %1027 = vmatprep.subr.mxu0 0.0
      %1028 = vmatpush2.msra.mxu0 0.0
      %1029 = vmatprep.subr.mxu0 0.0
      %1030 = vmatpush2.msra.mxu0 0.0
      %1031 = vmatprep.subr.mxu0 0.0
      %1032 = vmatpush2.msra.mxu0 0.0
      %1033 = vmatprep.subr.mxu0 0.0
      %1034 = vmatpush2.msra.mxu0 0.0
      %1035 = vmatprep.subr.mxu0 0.0
      %1036 = vmatpush2.msra.mxu0 0.0
      %1037 = vmatprep.subr.mxu0 0.0
      %1038 = vmatpush2.msra.mxu0 0.0
      %1039 = vmatprep.subr.mxu0 0.0
      %1040 = vmatpush2.msra.mxu0 0.0
      %1041 = vmatprep.subr.mxu0 0.0
      %1042 = vmatpush2.msra.mxu0 0.0
      %1043 = vmatprep.mubr.f32.mxu0 0.0
      %1044 = vmatmul.mubr.f32.gmra.mxu0 %v891
      %v1045 = vpop.f32.mrf.mxu0
      %v1046 = vadd.f32 %v873, %v1045
      %v1047 = vpop.f32.mrf.mxu0
      %1048 = vmatprep.mubr.f32.mxu0 0.0
      %1049 = vmatmul.mubr.f32.gmra.mxu0 %v894
      %v1050 = vpop.f32.mrf.mxu0
      %v1051 = vadd.f32 %v878, %v1050
      %v1052 = vpop.f32.mrf.mxu0
      %1053 = vdwg.mxu0
      %s1054 = scalar_lea.vmem %s2, 32
      %v1055 = vld [vmem:[%s1054] sm:$0xff]
      %v1056 = vld [vmem:[%s1054 + $0x8] sm:$0xff]
      %1057 = vrot.lane.b32.xlu0 %v696, 108
      %v1058 = vpop.permute.xlu0 %1057
      %1059 = vrot.lane.b32.xlu0 %v705, 108
      %v1060 = vpop.permute.xlu0 %1059
      %1061 = vrot.lane.b32.xlu0 %v697, 108
      %v1062 = vpop.permute.xlu0 %1061
      %vm1063 = vcmask 883712
      %v1064 = vsel %vm1063, %v1058, %v1060
      %v1065 = vsel %vm1063, %v1060, %v1062
      %v1067 = vsel %vm715, %v1055, 0
      %v1070 = vsel %vm715, %v1056, 0
      %v1072 = vsel %vm722, %v1064, 0
      %v1074 = vsel %vm722, %v1065, 0
      %v1076 = vsel %vm722, %v1062, 0
      %1078 = vmatprep.subr.mxu0 0.0
      %1079 = vmatpush1.msra.mxu0 0.0
      %1080 = vmatprep.subr.mxu0 0.0
      %1081 = vmatpush1.msra.mxu0 0.0
      %1082 = vmatprep.subr.mxu0 0.0
      %1083 = vmatpush1.msra.mxu0 0.0
      %1084 = vmatprep.subr.mxu0 0.0
      %1085 = vmatpush1.msra.mxu0 0.0
      %1086 = vmatprep.subr.mxu0 0.0
      %1087 = vmatpush1.msra.mxu0 0.0
      %1088 = vmatprep.subr.mxu0 0.0
      %1089 = vmatpush1.msra.mxu0 0.0
      %1090 = vmatprep.subr.mxu0 0.0
      %1091 = vmatpush1.msra.mxu0 0.0
      %1092 = vmatprep.subr.mxu0 0.0
      %1093 = vmatpush1.msra.mxu0 0.0
      %1094 = vmatprep.subr.mxu0 0.0
      %1095 = vmatpush1.msra.mxu0 0.0
      %1096 = vmatprep.subr.mxu0 0.0
      %1097 = vmatpush1.msra.mxu0 0.0
      %1098 = vmatprep.subr.mxu0 0.0
      %1099 = vmatpush1.msra.mxu0 0.0
      %1100 = vmatprep.subr.mxu0 0.0
      %1101 = vmatpush1.msra.mxu0 0.0
      %1102 = vmatprep.subr.mxu0 0.0
      %1103 = vmatpush1.msra.mxu0 0.0
      %1104 = vmatprep.subr.mxu0 0.0
      %1105 = vmatpush1.msra.mxu0 0.0
      %1106 = vmatprep.subr.mxu0 0.0
      %1107 = vmatpush1.msra.mxu0 0.0
      %1108 = vmatprep.subr.mxu0 %v1074
      %1109 = vmatpush1.msra.mxu0 %v1072
      %1110 = vmatprep.subr.mxu0 0.0
      %1111 = vmatpush2.msra.mxu0 0.0
      %1112 = vmatprep.subr.mxu0 0.0
      %1113 = vmatpush2.msra.mxu0 0.0
      %1114 = vmatprep.subr.mxu0 0.0
      %1115 = vmatpush2.msra.mxu0 0.0
      %1116 = vmatprep.subr.mxu0 0.0
      %1117 = vmatpush2.msra.mxu0 0.0
      %1118 = vmatprep.subr.mxu0 0.0
      %1119 = vmatpush2.msra.mxu0 0.0
      %1120 = vmatprep.subr.mxu0 0.0
      %1121 = vmatpush2.msra.mxu0 0.0
      %1122 = vmatprep.subr.mxu0 0.0
      %1123 = vmatpush2.msra.mxu0 0.0
      %1124 = vmatprep.subr.mxu0 0.0
      %1125 = vmatpush2.msra.mxu0 0.0
      %1126 = vmatprep.subr.mxu0 0.0
      %1127 = vmatpush2.msra.mxu0 0.0
      %1128 = vmatprep.subr.mxu0 0.0
      %1129 = vmatpush2.msra.mxu0 0.0
      %1130 = vmatprep.subr.mxu0 0.0
      %1131 = vmatpush2.msra.mxu0 0.0
      %1132 = vmatprep.subr.mxu0 0.0
      %1133 = vmatpush2.msra.mxu0 0.0
      %1134 = vmatprep.subr.mxu0 0.0
      %1135 = vmatpush2.msra.mxu0 0.0
      %1136 = vmatprep.subr.mxu0 0.0
      %1137 = vmatpush2.msra.mxu0 0.0
      %1138 = vmatprep.subr.mxu0 0.0
      %1139 = vmatpush2.msra.mxu0 0.0
      %1140 = vmatprep.subr.mxu0 0.0
      %1141 = vmatpush2.msra.mxu0 0.0
      %1142 = vmatprep.mubr.f32.mxu0 0.0
      %1143 = vmatmul.mubr.f32.gmra.mxu0 %v1067
      %v1144 = vpop.f32.mrf.mxu0
      %v1145 = vadd.f32 0.0, %v1144
      %v1146 = vpop.f32.mrf.mxu0
      %v1147 = vadd.f32 0.0, %v1146
      %1148 = vmatprep.mubr.f32.mxu0 0.0
      %1149 = vmatmul.mubr.f32.gmra.mxu0 %v1070
      %v1150 = vpop.f32.mrf.mxu0
      %v1151 = vadd.f32 0.0, %v1150
      %v1152 = vpop.f32.mrf.mxu0
      %v1153 = vadd.f32 0.0, %v1152
      %1154 = vdwg.mxu0
      %1155 = vmatprep.subr.mxu0 0.0
      %1156 = vmatpush1.msra.mxu0 0.0
      %1157 = vmatprep.subr.mxu0 0.0
      %1158 = vmatpush1.msra.mxu0 0.0
      %1159 = vmatprep.subr.mxu0 0.0
      %1160 = vmatpush1.msra.mxu0 0.0
      %1161 = vmatprep.subr.mxu0 0.0
      %1162 = vmatpush1.msra.mxu0 0.0
      %1163 = vmatprep.subr.mxu0 0.0
      %1164 = vmatpush1.msra.mxu0 0.0
      %1165 = vmatprep.subr.mxu0 0.0
      %1166 = vmatpush1.msra.mxu0 0.0
      %1167 = vmatprep.subr.mxu0 0.0
      %1168 = vmatpush1.msra.mxu0 0.0
      %1169 = vmatprep.subr.mxu0 0.0
      %1170 = vmatpush1.msra.mxu0 0.0
      %1171 = vmatprep.subr.mxu0 0.0
      %1172 = vmatpush1.msra.mxu0 0.0
      %1173 = vmatprep.subr.mxu0 0.0
      %1174 = vmatpush1.msra.mxu0 0.0
      %1175 = vmatprep.subr.mxu0 0.0
      %1176 = vmatpush1.msra.mxu0 0.0
      %1177 = vmatprep.subr.mxu0 0.0
      %1178 = vmatpush1.msra.mxu0 0.0
      %1179 = vmatprep.subr.mxu0 0.0
      %1180 = vmatpush1.msra.mxu0 0.0
      %1181 = vmatprep.subr.mxu0 0.0
      %1182 = vmatpush1.msra.mxu0 0.0
      %1183 = vmatprep.subr.mxu0 0.0
      %1184 = vmatpush1.msra.mxu0 0.0
      %1185 = vmatprep.subr.mxu0 0.0
      %1186 = vmatpush1.msra.mxu0 %v1076
      %1187 = vmatprep.subr.mxu0 0.0
      %1188 = vmatpush2.msra.mxu0 0.0
      %1189 = vmatprep.subr.mxu0 0.0
      %1190 = vmatpush2.msra.mxu0 0.0
      %1191 = vmatprep.subr.mxu0 0.0
      %1192 = vmatpush2.msra.mxu0 0.0
      %1193 = vmatprep.subr.mxu0 0.0
      %1194 = vmatpush2.msra.mxu0 0.0
      %1195 = vmatprep.subr.mxu0 0.0
      %1196 = vmatpush2.msra.mxu0 0.0
      %1197 = vmatprep.subr.mxu0 0.0
      %1198 = vmatpush2.msra.mxu0 0.0
      %1199 = vmatprep.subr.mxu0 0.0
      %1200 = vmatpush2.msra.mxu0 0.0
      %1201 = vmatprep.subr.mxu0 0.0
      %1202 = vmatpush2.msra.mxu0 0.0
      %1203 = vmatprep.subr.mxu0 0.0
      %1204 = vmatpush2.msra.mxu0 0.0
      %1205 = vmatprep.subr.mxu0 0.0
      %1206 = vmatpush2.msra.mxu0 0.0
      %1207 = vmatprep.subr.mxu0 0.0
      %1208 = vmatpush2.msra.mxu0 0.0
      %1209 = vmatprep.subr.mxu0 0.0
      %1210 = vmatpush2.msra.mxu0 0.0
      %1211 = vmatprep.subr.mxu0 0.0
      %1212 = vmatpush2.msra.mxu0 0.0
      %1213 = vmatprep.subr.mxu0 0.0
      %1214 = vmatpush2.msra.mxu0 0.0
      %1215 = vmatprep.subr.mxu0 0.0
      %1216 = vmatpush2.msra.mxu0 0.0
      %1217 = vmatprep.subr.mxu0 0.0
      %1218 = vmatpush2.msra.mxu0 0.0
      %1219 = vmatprep.mubr.f32.mxu0 0.0
      %1220 = vmatmul.mubr.f32.gmra.mxu0 %v1067
      %v1221 = vpop.f32.mrf.mxu0
      %v1222 = vadd.f32 0.0, %v1221
      %v1223 = vpop.f32.mrf.mxu0
      %1224 = vmatprep.mubr.f32.mxu0 0.0
      %1225 = vmatmul.mubr.f32.gmra.mxu0 %v1070
      %v1226 = vpop.f32.mrf.mxu0
      %v1227 = vadd.f32 0.0, %v1226
      %v1228 = vpop.f32.mrf.mxu0
      %1229 = vdwg.mxu0
      %v1230 = vadd.f32 %v969, %v1145
      %v1231 = vadd.f32 %v971, %v1147
      %v1232 = vadd.f32 %v1046, %v1222
      %v1233 = vadd.f32 %v975, %v1151
      %v1234 = vadd.f32 %v977, %v1153
      %v1235 = vadd.f32 %v1051, %v1227
      %s1236 = scalar_lea.vmem %s2, 48
      %v1237 = vld [vmem:[%s1236] sm:$0xff]
      %v1238 = vld [vmem:[%s1236 + $0x8] sm:$0xff]
      %1239 = vrot.lane.b32.xlu0 %v696, 107
      %v1240 = vpop.permute.xlu0 %1239
      %1241 = vrot.lane.b32.xlu0 %v705, 107
      %v1242 = vpop.permute.xlu0 %1241
      %1243 = vrot.lane.b32.xlu0 %v697, 107
      %v1244 = vpop.permute.xlu0 %1243
      %vm1245 = vcmask 875520
      %v1246 = vsel %vm1245, %v1240, %v1242
      %v1247 = vsel %vm1245, %v1242, %v1244
      %v1249 = vsel %vm715, %v1237, 0
      %v1252 = vsel %vm715, %v1238, 0
      %v1254 = vsel %vm722, %v1246, 0
      %v1256 = vsel %vm722, %v1247, 0
      %v1258 = vsel %vm722, %v1244, 0
      %1260 = vmatprep.subr.mxu0 0.0
      %1261 = vmatpush1.msra.mxu0 0.0
      %1262 = vmatprep.subr.mxu0 0.0
      %1263 = vmatpush1.msra.mxu0 0.0
      %1264 = vmatprep.subr.mxu0 0.0
      %1265 = vmatpush1.msra.mxu0 0.0
      %1266 = vmatprep.subr.mxu0 0.0
      %1267 = vmatpush1.msra.mxu0 0.0
      %1268 = vmatprep.subr.mxu0 0.0
      %1269 = vmatpush1.msra.mxu0 0.0
      %1270 = vmatprep.subr.mxu0 0.0
      %1271 = vmatpush1.msra.mxu0 0.0
      %1272 = vmatprep.subr.mxu0 0.0
      %1273 = vmatpush1.msra.mxu0 0.0
      %1274 = vmatprep.subr.mxu0 0.0
      %1275 = vmatpush1.msra.mxu0 0.0
      %1276 = vmatprep.subr.mxu0 0.0
      %1277 = vmatpush1.msra.mxu0 0.0
      %1278 = vmatprep.subr.mxu0 0.0
      %1279 = vmatpush1.msra.mxu0 0.0
      %1280 = vmatprep.subr.mxu0 0.0
      %1281 = vmatpush1.msra.mxu0 0.0
      %1282 = vmatprep.subr.mxu0 0.0
      %1283 = vmatpush1.msra.mxu0 0.0
      %1284 = vmatprep.subr.mxu0 0.0
      %1285 = vmatpush1.msra.mxu0 0.0
      %1286 = vmatprep.subr.mxu0 0.0
      %1287 = vmatpush1.msra.mxu0 0.0
      %1288 = vmatprep.subr.mxu0 0.0
      %1289 = vmatpush1.msra.mxu0 0.0
      %1290 = vmatprep.subr.mxu0 %v1256
      %1291 = vmatpush1.msra.mxu0 %v1254
      %1292 = vmatprep.subr.mxu0 0.0
      %1293 = vmatpush2.msra.mxu0 0.0
      %1294 = vmatprep.subr.mxu0 0.0
      %1295 = vmatpush2.msra.mxu0 0.0
      %1296 = vmatprep.subr.mxu0 0.0
      %1297 = vmatpush2.msra.mxu0 0.0
      %1298 = vmatprep.subr.mxu0 0.0
      %1299 = vmatpush2.msra.mxu0 0.0
      %1300 = vmatprep.subr.mxu0 0.0
      %1301 = vmatpush2.msra.mxu0 0.0
      %1302 = vmatprep.subr.mxu0 0.0
      %1303 = vmatpush2.msra.mxu0 0.0
      %1304 = vmatprep.subr.mxu0 0.0
      %1305 = vmatpush2.msra.mxu0 0.0
      %1306 = vmatprep.subr.mxu0 0.0
      %1307 = vmatpush2.msra.mxu0 0.0
      %1308 = vmatprep.subr.mxu0 0.0
      %1309 = vmatpush2.msra.mxu0 0.0
      %1310 = vmatprep.subr.mxu0 0.0
      %1311 = vmatpush2.msra.mxu0 0.0
      %1312 = vmatprep.subr.mxu0 0.0
      %1313 = vmatpush2.msra.mxu0 0.0
      %1314 = vmatprep.subr.mxu0 0.0
      %1315 = vmatpush2.msra.mxu0 0.0
      %1316 = vmatprep.subr.mxu0 0.0
      %1317 = vmatpush2.msra.mxu0 0.0
      %1318 = vmatprep.subr.mxu0 0.0
      %1319 = vmatpush2.msra.mxu0 0.0
      %1320 = vmatprep.subr.mxu0 0.0
      %1321 = vmatpush2.msra.mxu0 0.0
      %1322 = vmatprep.subr.mxu0 0.0
      %1323 = vmatpush2.msra.mxu0 0.0
      %1324 = vmatprep.mubr.f32.mxu0 0.0
      %1325 = vmatmul.mubr.f32.gmra.mxu0 %v1249
      %v1326 = vpop.f32.mrf.mxu0
      %v1327 = vadd.f32 0.0, %v1326
      %v1328 = vpop.f32.mrf.mxu0
      %v1329 = vadd.f32 0.0, %v1328
      %1330 = vmatprep.mubr.f32.mxu0 0.0
      %1331 = vmatmul.mubr.f32.gmra.mxu0 %v1252
      %v1332 = vpop.f32.mrf.mxu0
      %v1333 = vadd.f32 0.0, %v1332
      %v1334 = vpop.f32.mrf.mxu0
      %v1335 = vadd.f32 0.0, %v1334
      %1336 = vdwg.mxu0
      %1337 = vmatprep.subr.mxu0 0.0
      %1338 = vmatpush1.msra.mxu0 0.0
      %1339 = vmatprep.subr.mxu0 0.0
      %1340 = vmatpush1.msra.mxu0 0.0
      %1341 = vmatprep.subr.mxu0 0.0
      %1342 = vmatpush1.msra.mxu0 0.0
      %1343 = vmatprep.subr.mxu0 0.0
      %1344 = vmatpush1.msra.mxu0 0.0
      %1345 = vmatprep.subr.mxu0 0.0
      %1346 = vmatpush1.msra.mxu0 0.0
      %1347 = vmatprep.subr.mxu0 0.0
      %1348 = vmatpush1.msra.mxu0 0.0
      %1349 = vmatprep.subr.mxu0 0.0
      %1350 = vmatpush1.msra.mxu0 0.0
      %1351 = vmatprep.subr.mxu0 0.0
      %1352 = vmatpush1.msra.mxu0 0.0
      %1353 = vmatprep.subr.mxu0 0.0
      %1354 = vmatpush1.msra.mxu0 0.0
      %1355 = vmatprep.subr.mxu0 0.0
      %1356 = vmatpush1.msra.mxu0 0.0
      %1357 = vmatprep.subr.mxu0 0.0
      %1358 = vmatpush1.msra.mxu0 0.0
      %1359 = vmatprep.subr.mxu0 0.0
      %1360 = vmatpush1.msra.mxu0 0.0
      %1361 = vmatprep.subr.mxu0 0.0
      %1362 = vmatpush1.msra.mxu0 0.0
      %1363 = vmatprep.subr.mxu0 0.0
      %1364 = vmatpush1.msra.mxu0 0.0
      %1365 = vmatprep.subr.mxu0 0.0
      %1366 = vmatpush1.msra.mxu0 0.0
      %1367 = vmatprep.subr.mxu0 0.0
      %1368 = vmatpush1.msra.mxu0 %v1258
      %1369 = vmatprep.subr.mxu0 0.0
      %1370 = vmatpush2.msra.mxu0 0.0
      %1371 = vmatprep.subr.mxu0 0.0
      %1372 = vmatpush2.msra.mxu0 0.0
      %1373 = vmatprep.subr.mxu0 0.0
      %1374 = vmatpush2.msra.mxu0 0.0
      %1375 = vmatprep.subr.mxu0 0.0
      %1376 = vmatpush2.msra.mxu0 0.0
      %1377 = vmatprep.subr.mxu0 0.0
      %1378 = vmatpush2.msra.mxu0 0.0
      %1379 = vmatprep.subr.mxu0 0.0
      %1380 = vmatpush2.msra.mxu0 0.0
      %1381 = vmatprep.subr.mxu0 0.0
      %1382 = vmatpush2.msra.mxu0 0.0
      %1383 = vmatprep.subr.mxu0 0.0
      %1384 = vmatpush2.msra.mxu0 0.0
      %1385 = vmatprep.subr.mxu0 0.0
      %1386 = vmatpush2.msra.mxu0 0.0
      %1387 = vmatprep.subr.mxu0 0.0
      %1388 = vmatpush2.msra.mxu0 0.0
      %1389 = vmatprep.subr.mxu0 0.0
      %1390 = vmatpush2.msra.mxu0 0.0
      %1391 = vmatprep.subr.mxu0 0.0
      %1392 = vmatpush2.msra.mxu0 0.0
      %1393 = vmatprep.subr.mxu0 0.0
      %1394 = vmatpush2.msra.mxu0 0.0
      %1395 = vmatprep.subr.mxu0 0.0
      %1396 = vmatpush2.msra.mxu0 0.0
      %1397 = vmatprep.subr.mxu0 0.0
      %1398 = vmatpush2.msra.mxu0 0.0
      %1399 = vmatprep.subr.mxu0 0.0
      %1400 = vmatpush2.msra.mxu0 0.0
      %1401 = vmatprep.mubr.f32.mxu0 0.0
      %1402 = vmatmul.mubr.f32.gmra.mxu0 %v1249
      %v1403 = vpop.f32.mrf.mxu0
      %v1404 = vadd.f32 0.0, %v1403
      %v1405 = vpop.f32.mrf.mxu0
      %1406 = vmatprep.mubr.f32.mxu0 0.0
      %1407 = vmatmul.mubr.f32.gmra.mxu0 %v1252
      %v1408 = vpop.f32.mrf.mxu0
      %v1409 = vadd.f32 0.0, %v1408
      %v1410 = vpop.f32.mrf.mxu0
      %1411 = vdwg.mxu0
      %v1412 = vadd.f32 %v1230, %v1327
      %v1413 = vadd.f32 %v1231, %v1329
      %v1414 = vadd.f32 %v1232, %v1404
      %v1415 = vadd.f32 %v1233, %v1333
      %v1416 = vadd.f32 %v1234, %v1335
      %v1417 = vadd.f32 %v1235, %v1409
      %s1418 = scalar_lea.vmem %s2, 64
      %v1419 = vld [vmem:[%s1418] sm:$0xff]
      %v1420 = vld [vmem:[%s1418 + $0x8] sm:$0xff]
      %1421 = vrot.lane.b32.xlu0 %v696, 106
      %v1422 = vpop.permute.xlu0 %1421
      %1423 = vrot.lane.b32.xlu0 %v705, 106
      %v1424 = vpop.permute.xlu0 %1423
      %1425 = vrot.lane.b32.xlu0 %v697, 106
      %v1426 = vpop.permute.xlu0 %1425
      %vm1427 = vcmask 867328
      %v1428 = vsel %vm1427, %v1422, %v1424
      %v1429 = vsel %vm1427, %v1424, %v1426
      %v1431 = vsel %vm715, %v1419, 0
      %v1434 = vsel %vm715, %v1420, 0
      %v1436 = vsel %vm722, %v1428, 0
      %v1438 = vsel %vm722, %v1429, 0
      %v1440 = vsel %vm722, %v1426, 0
      %1442 = vmatprep.subr.mxu0 0.0
      %1443 = vmatpush1.msra.mxu0 0.0
      %1444 = vmatprep.subr.mxu0 0.0
      %1445 = vmatpush1.msra.mxu0 0.0
      %1446 = vmatprep.subr.mxu0 0.0
      %1447 = vmatpush1.msra.mxu0 0.0
      %1448 = vmatprep.subr.mxu0 0.0
      %1449 = vmatpush1.msra.mxu0 0.0
      %1450 = vmatprep.subr.mxu0 0.0
      %1451 = vmatpush1.msra.mxu0 0.0
      %1452 = vmatprep.subr.mxu0 0.0
      %1453 = vmatpush1.msra.mxu0 0.0
      %1454 = vmatprep.subr.mxu0 0.0
      %1455 = vmatpush1.msra.mxu0 0.0
      %1456 = vmatprep.subr.mxu0 0.0
      %1457 = vmatpush1.msra.mxu0 0.0
      %1458 = vmatprep.subr.mxu0 0.0
      %1459 = vmatpush1.msra.mxu0 0.0
      %1460 = vmatprep.subr.mxu0 0.0
      %1461 = vmatpush1.msra.mxu0 0.0
      %1462 = vmatprep.subr.mxu0 0.0
      %1463 = vmatpush1.msra.mxu0 0.0
      %1464 = vmatprep.subr.mxu0 0.0
      %1465 = vmatpush1.msra.mxu0 0.0
      %1466 = vmatprep.subr.mxu0 0.0
      %1467 = vmatpush1.msra.mxu0 0.0
      %1468 = vmatprep.subr.mxu0 0.0
      %1469 = vmatpush1.msra.mxu0 0.0
      %1470 = vmatprep.subr.mxu0 0.0
      %1471 = vmatpush1.msra.mxu0 0.0
      %1472 = vmatprep.subr.mxu0 %v1438
      %1473 = vmatpush1.msra.mxu0 %v1436
      %1474 = vmatprep.subr.mxu0 0.0
      %1475 = vmatpush2.msra.mxu0 0.0
      %1476 = vmatprep.subr.mxu0 0.0
      %1477 = vmatpush2.msra.mxu0 0.0
      %1478 = vmatprep.subr.mxu0 0.0
      %1479 = vmatpush2.msra.mxu0 0.0
      %1480 = vmatprep.subr.mxu0 0.0
      %1481 = vmatpush2.msra.mxu0 0.0
      %1482 = vmatprep.subr.mxu0 0.0
      %1483 = vmatpush2.msra.mxu0 0.0
      %1484 = vmatprep.subr.mxu0 0.0
      %1485 = vmatpush2.msra.mxu0 0.0
      %1486 = vmatprep.subr.mxu0 0.0
      %1487 = vmatpush2.msra.mxu0 0.0
      %1488 = vmatprep.subr.mxu0 0.0
      %1489 = vmatpush2.msra.mxu0 0.0
      %1490 = vmatprep.subr.mxu0 0.0
      %1491 = vmatpush2.msra.mxu0 0.0
      %1492 = vmatprep.subr.mxu0 0.0
      %1493 = vmatpush2.msra.mxu0 0.0
      %1494 = vmatprep.subr.mxu0 0.0
      %1495 = vmatpush2.msra.mxu0 0.0
      %1496 = vmatprep.subr.mxu0 0.0
      %1497 = vmatpush2.msra.mxu0 0.0
      %1498 = vmatprep.subr.mxu0 0.0
      %1499 = vmatpush2.msra.mxu0 0.0
      %1500 = vmatprep.subr.mxu0 0.0
      %1501 = vmatpush2.msra.mxu0 0.0
      %1502 = vmatprep.subr.mxu0 0.0
      %1503 = vmatpush2.msra.mxu0 0.0
      %1504 = vmatprep.subr.mxu0 0.0
      %1505 = vmatpush2.msra.mxu0 0.0
      %1506 = vmatprep.mubr.f32.mxu0 0.0
      %1507 = vmatmul.mubr.f32.gmra.mxu0 %v1431
      %v1508 = vpop.f32.mrf.mxu0
      %v1509 = vadd.f32 0.0, %v1508
      %v1510 = vpop.f32.mrf.mxu0
      %v1511 = vadd.f32 0.0, %v1510
      %1512 = vmatprep.mubr.f32.mxu0 0.0
      %1513 = vmatmul.mubr.f32.gmra.mxu0 %v1434
      %v1514 = vpop.f32.mrf.mxu0
      %v1515 = vadd.f32 0.0, %v1514
      %v1516 = vpop.f32.mrf.mxu0
      %v1517 = vadd.f32 0.0, %v1516
      %1518 = vdwg.mxu0
      %1519 = vmatprep.subr.mxu0 0.0
      %1520 = vmatpush1.msra.mxu0 0.0
      %1521 = vmatprep.subr.mxu0 0.0
      %1522 = vmatpush1.msra.mxu0 0.0
      %1523 = vmatprep.subr.mxu0 0.0
      %1524 = vmatpush1.msra.mxu0 0.0
      %1525 = vmatprep.subr.mxu0 0.0
      %1526 = vmatpush1.msra.mxu0 0.0
      %1527 = vmatprep.subr.mxu0 0.0
      %1528 = vmatpush1.msra.mxu0 0.0
      %1529 = vmatprep.subr.mxu0 0.0
      %1530 = vmatpush1.msra.mxu0 0.0
      %1531 = vmatprep.subr.mxu0 0.0
      %1532 = vmatpush1.msra.mxu0 0.0
      %1533 = vmatprep.subr.mxu0 0.0
      %1534 = vmatpush1.msra.mxu0 0.0
      %1535 = vmatprep.subr.mxu0 0.0
      %1536 = vmatpush1.msra.mxu0 0.0
      %1537 = vmatprep.subr.mxu0 0.0
      %1538 = vmatpush1.msra.mxu0 0.0
      %1539 = vmatprep.subr.mxu0 0.0
      %1540 = vmatpush1.msra.mxu0 0.0
      %1541 = vmatprep.subr.mxu0 0.0
      %1542 = vmatpush1.msra.mxu0 0.0
      %1543 = vmatprep.subr.mxu0 0.0
      %1544 = vmatpush1.msra.mxu0 0.0
      %1545 = vmatprep.subr.mxu0 0.0
      %1546 = vmatpush1.msra.mxu0 0.0
      %1547 = vmatprep.subr.mxu0 0.0
      %1548 = vmatpush1.msra.mxu0 0.0
      %1549 = vmatprep.subr.mxu0 0.0
      %1550 = vmatpush1.msra.mxu0 %v1440
      %1551 = vmatprep.subr.mxu0 0.0
      %1552 = vmatpush2.msra.mxu0 0.0
      %1553 = vmatprep.subr.mxu0 0.0
      %1554 = vmatpush2.msra.mxu0 0.0
      %1555 = vmatprep.subr.mxu0 0.0
      %1556 = vmatpush2.msra.mxu0 0.0
      %1557 = vmatprep.subr.mxu0 0.0
      %1558 = vmatpush2.msra.mxu0 0.0
      %1559 = vmatprep.subr.mxu0 0.0
      %1560 = vmatpush2.msra.mxu0 0.0
      %1561 = vmatprep.subr.mxu0 0.0
      %1562 = vmatpush2.msra.mxu0 0.0
      %1563 = vmatprep.subr.mxu0 0.0
      %1564 = vmatpush2.msra.mxu0 0.0
      %1565 = vmatprep.subr.mxu0 0.0
      %1566 = vmatpush2.msra.mxu0 0.0
      %1567 = vmatprep.subr.mxu0 0.0
      %1568 = vmatpush2.msra.mxu0 0.0
      %1569 = vmatprep.subr.mxu0 0.0
      %1570 = vmatpush2.msra.mxu0 0.0
      %1571 = vmatprep.subr.mxu0 0.0
      %1572 = vmatpush2.msra.mxu0 0.0
      %1573 = vmatprep.subr.mxu0 0.0
      %1574 = vmatpush2.msra.mxu0 0.0
      %1575 = vmatprep.subr.mxu0 0.0
      %1576 = vmatpush2.msra.mxu0 0.0
      %1577 = vmatprep.subr.mxu0 0.0
      %1578 = vmatpush2.msra.mxu0 0.0
      %1579 = vmatprep.subr.mxu0 0.0
      %1580 = vmatpush2.msra.mxu0 0.0
      %1581 = vmatprep.subr.mxu0 0.0
      %1582 = vmatpush2.msra.mxu0 0.0
      %1583 = vmatprep.mubr.f32.mxu0 0.0
      %1584 = vmatmul.mubr.f32.gmra.mxu0 %v1431
      %v1585 = vpop.f32.mrf.mxu0
      %v1586 = vadd.f32 0.0, %v1585
      %v1587 = vpop.f32.mrf.mxu0
      %1588 = vmatprep.mubr.f32.mxu0 0.0
      %1589 = vmatmul.mubr.f32.gmra.mxu0 %v1434
      %v1590 = vpop.f32.mrf.mxu0
      %v1591 = vadd.f32 0.0, %v1590
      %v1592 = vpop.f32.mrf.mxu0
      %1593 = vdwg.mxu0
      %v1594 = vadd.f32 %v1412, %v1509
      %v1595 = vadd.f32 %v1413, %v1511
      %v1596 = vadd.f32 %v1414, %v1586
      %v1597 = vadd.f32 %v1415, %v1515
      %v1598 = vadd.f32 %v1416, %v1517
      %v1599 = vadd.f32 %v1417, %v1591
      %s1600 = scalar_lea.vmem %s2, 80
      %v1601 = vld [vmem:[%s1600] sm:$0xff]
      %v1602 = vld [vmem:[%s1600 + $0x8] sm:$0xff]
      %v1603 = vcombine.high %v697, %v697
      %1604 = vrot.lane.b32.xlu0 %v696, 90
      %v1605 = vpop.permute.xlu0 %1604
      %1606 = vrot.lane.b32.xlu0 %v705, 90
      %v1607 = vpop.permute.xlu0 %1606
      %1608 = vrot.lane.b32.xlu0 %v697, 90
      %v1609 = vpop.permute.xlu0 %1608
      %1610 = vrot.lane.b32.xlu0 %v1603, 90
      %v1611 = vpop.permute.xlu0 %1610
      %vm1612 = vcmask 736256
      %v1613 = vsel %vm1612, %v1605, %v1607
      %v1614 = vsel %vm1612, %v1607, %v1609
      %v1615 = vsel %vm1612, %v1609, %v1611
      %v1617 = vsel %vm715, %v1601, 0
      %v1620 = vsel %vm715, %v1602, 0
      %v1622 = vsel %vm722, %v1613, 0
      %v1624 = vsel %vm722, %v1614, 0
      %v1626 = vsel %vm722, %v1615, 0
      %1628 = vmatprep.subr.mxu0 0.0
      %1629 = vmatpush1.msra.mxu0 0.0
      %1630 = vmatprep.subr.mxu0 0.0
      %1631 = vmatpush1.msra.mxu0 0.0
      %1632 = vmatprep.subr.mxu0 0.0
      %1633 = vmatpush1.msra.mxu0 0.0
      %1634 = vmatprep.subr.mxu0 0.0
      %1635 = vmatpush1.msra.mxu0 0.0
      %1636 = vmatprep.subr.mxu0 0.0
      %1637 = vmatpush1.msra.mxu0 0.0
      %1638 = vmatprep.subr.mxu0 0.0
      %1639 = vmatpush1.msra.mxu0 0.0
      %1640 = vmatprep.subr.mxu0 0.0
      %1641 = vmatpush1.msra.mxu0 0.0
      %1642 = vmatprep.subr.mxu0 0.0
      %1643 = vmatpush1.msra.mxu0 0.0
      %1644 = vmatprep.subr.mxu0 0.0
      %1645 = vmatpush1.msra.mxu0 0.0
      %1646 = vmatprep.subr.mxu0 0.0
      %1647 = vmatpush1.msra.mxu0 0.0
      %1648 = vmatprep.subr.mxu0 0.0
      %1649 = vmatpush1.msra.mxu0 0.0
      %1650 = vmatprep.subr.mxu0 0.0
      %1651 = vmatpush1.msra.mxu0 0.0
      %1652 = vmatprep.subr.mxu0 0.0
      %1653 = vmatpush1.msra.mxu0 0.0
      %1654 = vmatprep.subr.mxu0 0.0
      %1655 = vmatpush1.msra.mxu0 0.0
      %1656 = vmatprep.subr.mxu0 0.0
      %1657 = vmatpush1.msra.mxu0 0.0
      %1658 = vmatprep.subr.mxu0 %v1624
      %1659 = vmatpush1.msra.mxu0 %v1622
      %1660 = vmatprep.subr.mxu0 0.0
      %1661 = vmatpush2.msra.mxu0 0.0
      %1662 = vmatprep.subr.mxu0 0.0
      %1663 = vmatpush2.msra.mxu0 0.0
      %1664 = vmatprep.subr.mxu0 0.0
      %1665 = vmatpush2.msra.mxu0 0.0
      %1666 = vmatprep.subr.mxu0 0.0
      %1667 = vmatpush2.msra.mxu0 0.0
      %1668 = vmatprep.subr.mxu0 0.0
      %1669 = vmatpush2.msra.mxu0 0.0
      %1670 = vmatprep.subr.mxu0 0.0
      %1671 = vmatpush2.msra.mxu0 0.0
      %1672 = vmatprep.subr.mxu0 0.0
      %1673 = vmatpush2.msra.mxu0 0.0
      %1674 = vmatprep.subr.mxu0 0.0
      %1675 = vmatpush2.msra.mxu0 0.0
      %1676 = vmatprep.subr.mxu0 0.0
      %1677 = vmatpush2.msra.mxu0 0.0
      %1678 = vmatprep.subr.mxu0 0.0
      %1679 = vmatpush2.msra.mxu0 0.0
      %1680 = vmatprep.subr.mxu0 0.0
      %1681 = vmatpush2.msra.mxu0 0.0
      %1682 = vmatprep.subr.mxu0 0.0
      %1683 = vmatpush2.msra.mxu0 0.0
      %1684 = vmatprep.subr.mxu0 0.0
      %1685 = vmatpush2.msra.mxu0 0.0
      %1686 = vmatprep.subr.mxu0 0.0
      %1687 = vmatpush2.msra.mxu0 0.0
      %1688 = vmatprep.subr.mxu0 0.0
      %1689 = vmatpush2.msra.mxu0 0.0
      %1690 = vmatprep.subr.mxu0 0.0
      %1691 = vmatpush2.msra.mxu0 0.0
      %1692 = vmatprep.mubr.f32.mxu0 0.0
      %1693 = vmatmul.mubr.f32.gmra.mxu0 %v1617
      %v1694 = vpop.f32.mrf.mxu0
      %v1695 = vadd.f32 0.0, %v1694
      %v1696 = vpop.f32.mrf.mxu0
      %v1697 = vadd.f32 0.0, %v1696
      %1698 = vmatprep.mubr.f32.mxu0 0.0
      %1699 = vmatmul.mubr.f32.gmra.mxu0 %v1620
      %v1700 = vpop.f32.mrf.mxu0
      %v1701 = vadd.f32 0.0, %v1700
      %v1702 = vpop.f32.mrf.mxu0
      %v1703 = vadd.f32 0.0, %v1702
      %1704 = vdwg.mxu0
      %1705 = vmatprep.subr.mxu0 0.0
      %1706 = vmatpush1.msra.mxu0 0.0
      %1707 = vmatprep.subr.mxu0 0.0
      %1708 = vmatpush1.msra.mxu0 0.0
      %1709 = vmatprep.subr.mxu0 0.0
      %1710 = vmatpush1.msra.mxu0 0.0
      %1711 = vmatprep.subr.mxu0 0.0
      %1712 = vmatpush1.msra.mxu0 0.0
      %1713 = vmatprep.subr.mxu0 0.0
      %1714 = vmatpush1.msra.mxu0 0.0
      %1715 = vmatprep.subr.mxu0 0.0
      %1716 = vmatpush1.msra.mxu0 0.0
      %1717 = vmatprep.subr.mxu0 0.0
      %1718 = vmatpush1.msra.mxu0 0.0
      %1719 = vmatprep.subr.mxu0 0.0
      %1720 = vmatpush1.msra.mxu0 0.0
      %1721 = vmatprep.subr.mxu0 0.0
      %1722 = vmatpush1.msra.mxu0 0.0
      %1723 = vmatprep.subr.mxu0 0.0
      %1724 = vmatpush1.msra.mxu0 0.0
      %1725 = vmatprep.subr.mxu0 0.0
      %1726 = vmatpush1.msra.mxu0 0.0
      %1727 = vmatprep.subr.mxu0 0.0
      %1728 = vmatpush1.msra.mxu0 0.0
      %1729 = vmatprep.subr.mxu0 0.0
      %1730 = vmatpush1.msra.mxu0 0.0
      %1731 = vmatprep.subr.mxu0 0.0
      %1732 = vmatpush1.msra.mxu0 0.0
      %1733 = vmatprep.subr.mxu0 0.0
      %1734 = vmatpush1.msra.mxu0 0.0
      %1735 = vmatprep.subr.mxu0 0.0
      %1736 = vmatpush1.msra.mxu0 %v1626
      %1737 = vmatprep.subr.mxu0 0.0
      %1738 = vmatpush2.msra.mxu0 0.0
      %1739 = vmatprep.subr.mxu0 0.0
      %1740 = vmatpush2.msra.mxu0 0.0
      %1741 = vmatprep.subr.mxu0 0.0
      %1742 = vmatpush2.msra.mxu0 0.0
      %1743 = vmatprep.subr.mxu0 0.0
      %1744 = vmatpush2.msra.mxu0 0.0
      %1745 = vmatprep.subr.mxu0 0.0
      %1746 = vmatpush2.msra.mxu0 0.0
      %1747 = vmatprep.subr.mxu0 0.0
      %1748 = vmatpush2.msra.mxu0 0.0
      %1749 = vmatprep.subr.mxu0 0.0
      %1750 = vmatpush2.msra.mxu0 0.0
      %1751 = vmatprep.subr.mxu0 0.0
      %1752 = vmatpush2.msra.mxu0 0.0
      %1753 = vmatprep.subr.mxu0 0.0
      %1754 = vmatpush2.msra.mxu0 0.0
      %1755 = vmatprep.subr.mxu0 0.0
      %1756 = vmatpush2.msra.mxu0 0.0
      %1757 = vmatprep.subr.mxu0 0.0
      %1758 = vmatpush2.msra.mxu0 0.0
      %1759 = vmatprep.subr.mxu0 0.0
      %1760 = vmatpush2.msra.mxu0 0.0
      %1761 = vmatprep.subr.mxu0 0.0
      %1762 = vmatpush2.msra.mxu0 0.0
      %1763 = vmatprep.subr.mxu0 0.0
      %1764 = vmatpush2.msra.mxu0 0.0
      %1765 = vmatprep.subr.mxu0 0.0
      %1766 = vmatpush2.msra.mxu0 0.0
      %1767 = vmatprep.subr.mxu0 0.0
      %1768 = vmatpush2.msra.mxu0 0.0
      %1769 = vmatprep.mubr.f32.mxu0 0.0
      %1770 = vmatmul.mubr.f32.gmra.mxu0 %v1617
      %v1771 = vpop.f32.mrf.mxu0
      %v1772 = vadd.f32 0.0, %v1771
      %v1773 = vpop.f32.mrf.mxu0
      %1774 = vmatprep.mubr.f32.mxu0 0.0
      %1775 = vmatmul.mubr.f32.gmra.mxu0 %v1620
      %v1776 = vpop.f32.mrf.mxu0
      %v1777 = vadd.f32 0.0, %v1776
      %v1778 = vpop.f32.mrf.mxu0
      %1779 = vdwg.mxu0
      %v1780 = vadd.f32 %v1594, %v1695
      %v1781 = vadd.f32 %v1595, %v1697
      %v1782 = vadd.f32 %v1596, %v1772
      %v1783 = vadd.f32 %v1597, %v1701
      %v1784 = vadd.f32 %v1598, %v1703
      %v1785 = vadd.f32 %v1599, %v1777
      %s1786 = scalar_lea.vmem %s2, 96
      %v1787 = vld [vmem:[%s1786] sm:$0xff]
      %v1788 = vld [vmem:[%s1786 + $0x8] sm:$0xff]
      %1789 = vrot.lane.b32.xlu0 %v696, 89
      %v1790 = vpop.permute.xlu0 %1789
      %1791 = vrot.lane.b32.xlu0 %v705, 89
      %v1792 = vpop.permute.xlu0 %1791
      %1793 = vrot.lane.b32.xlu0 %v697, 89
      %v1794 = vpop.permute.xlu0 %1793
      %1795 = vrot.lane.b32.xlu0 %v1603, 89
      %v1796 = vpop.permute.xlu0 %1795
      %vm1797 = vcmask 728064
      %v1798 = vsel %vm1797, %v1790, %v1792
      %v1799 = vsel %vm1797, %v1792, %v1794
      %v1800 = vsel %vm1797, %v1794, %v1796
      %v1802 = vsel %vm715, %v1787, 0
      %v1805 = vsel %vm715, %v1788, 0
      %v1807 = vsel %vm722, %v1798, 0
      %v1809 = vsel %vm722, %v1799, 0
      %v1811 = vsel %vm722, %v1800, 0
      %1813 = vmatprep.subr.mxu0 0.0
      %1814 = vmatpush1.msra.mxu0 0.0
      %1815 = vmatprep.subr.mxu0 0.0
      %1816 = vmatpush1.msra.mxu0 0.0
      %1817 = vmatprep.subr.mxu0 0.0
      %1818 = vmatpush1.msra.mxu0 0.0
      %1819 = vmatprep.subr.mxu0 0.0
      %1820 = vmatpush1.msra.mxu0 0.0
      %1821 = vmatprep.subr.mxu0 0.0
      %1822 = vmatpush1.msra.mxu0 0.0
      %1823 = vmatprep.subr.mxu0 0.0
      %1824 = vmatpush1.msra.mxu0 0.0
      %1825 = vmatprep.subr.mxu0 0.0
      %1826 = vmatpush1.msra.mxu0 0.0
      %1827 = vmatprep.subr.mxu0 0.0
      %1828 = vmatpush1.msra.mxu0 0.0
      %1829 = vmatprep.subr.mxu0 0.0
      %1830 = vmatpush1.msra.mxu0 0.0
      %1831 = vmatprep.subr.mxu0 0.0
      %1832 = vmatpush1.msra.mxu0 0.0
      %1833 = vmatprep.subr.mxu0 0.0
      %1834 = vmatpush1.msra.mxu0 0.0
      %1835 = vmatprep.subr.mxu0 0.0
      %1836 = vmatpush1.msra.mxu0 0.0
      %1837 = vmatprep.subr.mxu0 0.0
      %1838 = vmatpush1.msra.mxu0 0.0
      %1839 = vmatprep.subr.mxu0 0.0
      %1840 = vmatpush1.msra.mxu0 0.0
      %1841 = vmatprep.subr.mxu0 0.0
      %1842 = vmatpush1.msra.mxu0 0.0
      %1843 = vmatprep.subr.mxu0 %v1809
      %1844 = vmatpush1.msra.mxu0 %v1807
      %1845 = vmatprep.subr.mxu0 0.0
      %1846 = vmatpush2.msra.mxu0 0.0
      %1847 = vmatprep.subr.mxu0 0.0
      %1848 = vmatpush2.msra.mxu0 0.0
      %1849 = vmatprep.subr.mxu0 0.0
      %1850 = vmatpush2.msra.mxu0 0.0
      %1851 = vmatprep.subr.mxu0 0.0
      %1852 = vmatpush2.msra.mxu0 0.0
      %1853 = vmatprep.subr.mxu0 0.0
      %1854 = vmatpush2.msra.mxu0 0.0
      %1855 = vmatprep.subr.mxu0 0.0
      %1856 = vmatpush2.msra.mxu0 0.0
      %1857 = vmatprep.subr.mxu0 0.0
      %1858 = vmatpush2.msra.mxu0 0.0
      %1859 = vmatprep.subr.mxu0 0.0
      %1860 = vmatpush2.msra.mxu0 0.0
      %1861 = vmatprep.subr.mxu0 0.0
      %1862 = vmatpush2.msra.mxu0 0.0
      %1863 = vmatprep.subr.mxu0 0.0
      %1864 = vmatpush2.msra.mxu0 0.0
      %1865 = vmatprep.subr.mxu0 0.0
      %1866 = vmatpush2.msra.mxu0 0.0
      %1867 = vmatprep.subr.mxu0 0.0
      %1868 = vmatpush2.msra.mxu0 0.0
      %1869 = vmatprep.subr.mxu0 0.0
      %1870 = vmatpush2.msra.mxu0 0.0
      %1871 = vmatprep.subr.mxu0 0.0
      %1872 = vmatpush2.msra.mxu0 0.0
      %1873 = vmatprep.subr.mxu0 0.0
      %1874 = vmatpush2.msra.mxu0 0.0
      %1875 = vmatprep.subr.mxu0 0.0
      %1876 = vmatpush2.msra.mxu0 0.0
      %1877 = vmatprep.mubr.f32.mxu0 0.0
      %1878 = vmatmul.mubr.f32.gmra.mxu0 %v1802
      %v1879 = vpop.f32.mrf.mxu0
      %v1880 = vadd.f32 0.0, %v1879
      %v1881 = vpop.f32.mrf.mxu0
      %v1882 = vadd.f32 0.0, %v1881
      %1883 = vmatprep.mubr.f32.mxu0 0.0
      %1884 = vmatmul.mubr.f32.gmra.mxu0 %v1805
      %v1885 = vpop.f32.mrf.mxu0
      %v1886 = vadd.f32 0.0, %v1885
      %v1887 = vpop.f32.mrf.mxu0
      %v1888 = vadd.f32 0.0, %v1887
      %1889 = vdwg.mxu0
      %1890 = vmatprep.subr.mxu0 0.0
      %1891 = vmatpush1.msra.mxu0 0.0
      %1892 = vmatprep.subr.mxu0 0.0
      %1893 = vmatpush1.msra.mxu0 0.0
      %1894 = vmatprep.subr.mxu0 0.0
      %1895 = vmatpush1.msra.mxu0 0.0
      %1896 = vmatprep.subr.mxu0 0.0
      %1897 = vmatpush1.msra.mxu0 0.0
      %1898 = vmatprep.subr.mxu0 0.0
      %1899 = vmatpush1.msra.mxu0 0.0
      %1900 = vmatprep.subr.mxu0 0.0
      %1901 = vmatpush1.msra.mxu0 0.0
      %1902 = vmatprep.subr.mxu0 0.0
      %1903 = vmatpush1.msra.mxu0 0.0
      %1904 = vmatprep.subr.mxu0 0.0
      %1905 = vmatpush1.msra.mxu0 0.0
      %1906 = vmatprep.subr.mxu0 0.0
      %1907 = vmatpush1.msra.mxu0 0.0
      %1908 = vmatprep.subr.mxu0 0.0
      %1909 = vmatpush1.msra.mxu0 0.0
      %1910 = vmatprep.subr.mxu0 0.0
      %1911 = vmatpush1.msra.mxu0 0.0
      %1912 = vmatprep.subr.mxu0 0.0
      %1913 = vmatpush1.msra.mxu0 0.0
      %1914 = vmatprep.subr.mxu0 0.0
      %1915 = vmatpush1.msra.mxu0 0.0
      %1916 = vmatprep.subr.mxu0 0.0
      %1917 = vmatpush1.msra.mxu0 0.0
      %1918 = vmatprep.subr.mxu0 0.0
      %1919 = vmatpush1.msra.mxu0 0.0
      %1920 = vmatprep.subr.mxu0 0.0
      %1921 = vmatpush1.msra.mxu0 %v1811
      %1922 = vmatprep.subr.mxu0 0.0
      %1923 = vmatpush2.msra.mxu0 0.0
      %1924 = vmatprep.subr.mxu0 0.0
      %1925 = vmatpush2.msra.mxu0 0.0
      %1926 = vmatprep.subr.mxu0 0.0
      %1927 = vmatpush2.msra.mxu0 0.0
      %1928 = vmatprep.subr.mxu0 0.0
      %1929 = vmatpush2.msra.mxu0 0.0
      %1930 = vmatprep.subr.mxu0 0.0
      %1931 = vmatpush2.msra.mxu0 0.0
      %1932 = vmatprep.subr.mxu0 0.0
      %1933 = vmatpush2.msra.mxu0 0.0
      %1934 = vmatprep.subr.mxu0 0.0
      %1935 = vmatpush2.msra.mxu0 0.0
      %1936 = vmatprep.subr.mxu0 0.0
      %1937 = vmatpush2.msra.mxu0 0.0
      %1938 = vmatprep.subr.mxu0 0.0
      %1939 = vmatpush2.msra.mxu0 0.0
      %1940 = vmatprep.subr.mxu0 0.0
      %1941 = vmatpush2.msra.mxu0 0.0
      %1942 = vmatprep.subr.mxu0 0.0
      %1943 = vmatpush2.msra.mxu0 0.0
      %1944 = vmatprep.subr.mxu0 0.0
      %1945 = vmatpush2.msra.mxu0 0.0
      %1946 = vmatprep.subr.mxu0 0.0
      %1947 = vmatpush2.msra.mxu0 0.0
      %1948 = vmatprep.subr.mxu0 0.0
      %1949 = vmatpush2.msra.mxu0 0.0
      %1950 = vmatprep.subr.mxu0 0.0
      %1951 = vmatpush2.msra.mxu0 0.0
      %1952 = vmatprep.subr.mxu0 0.0
      %1953 = vmatpush2.msra.mxu0 0.0
      %1954 = vmatprep.mubr.f32.mxu0 0.0
      %1955 = vmatmul.mubr.f32.gmra.mxu0 %v1802
      %v1956 = vpop.f32.mrf.mxu0
      %v1957 = vadd.f32 0.0, %v1956
      %v1958 = vpop.f32.mrf.mxu0
      %1959 = vmatprep.mubr.f32.mxu0 0.0
      %1960 = vmatmul.mubr.f32.gmra.mxu0 %v1805
      %v1961 = vpop.f32.mrf.mxu0
      %v1962 = vadd.f32 0.0, %v1961
      %v1963 = vpop.f32.mrf.mxu0
      %1964 = vdwg.mxu0
      %v1965 = vadd.f32 %v1780, %v1880
      %v1966 = vadd.f32 %v1781, %v1882
      %v1967 = vadd.f32 %v1782, %v1957
      %v1968 = vadd.f32 %v1783, %v1886
      %v1969 = vadd.f32 %v1784, %v1888
      %v1970 = vadd.f32 %v1785, %v1962
      %s1971 = scalar_lea.vmem %s2, 112
      %v1972 = vld [vmem:[%s1971] sm:$0xff]
      %v1973 = vld [vmem:[%s1971 + $0x8] sm:$0xff]
      %1974 = vrot.lane.b32.xlu0 %v696, 88
      %v1975 = vpop.permute.xlu0 %1974
      %1976 = vrot.lane.b32.xlu0 %v705, 88
      %v1977 = vpop.permute.xlu0 %1976
      %1978 = vrot.lane.b32.xlu0 %v697, 88
      %v1979 = vpop.permute.xlu0 %1978
      %1980 = vrot.lane.b32.xlu0 %v1603, 88
      %v1981 = vpop.permute.xlu0 %1980
      %vm1982 = vcmask 719872
      %v1983 = vsel %vm1982, %v1975, %v1977
      %v1984 = vsel %vm1982, %v1977, %v1979
      %v1985 = vsel %vm1982, %v1979, %v1981
      %v1987 = vsel %vm715, %v1972, 0
      %v1990 = vsel %vm715, %v1973, 0
      %v1992 = vsel %vm722, %v1983, 0
      %v1994 = vsel %vm722, %v1984, 0
      %v1996 = vsel %vm722, %v1985, 0
      %1998 = vmatprep.subr.mxu0 0.0
      %1999 = vmatpush1.msra.mxu0 0.0
      %2000 = vmatprep.subr.mxu0 0.0
      %2001 = vmatpush1.msra.mxu0 0.0
      %2002 = vmatprep.subr.mxu0 0.0
      %2003 = vmatpush1.msra.mxu0 0.0
      %2004 = vmatprep.subr.mxu0 0.0
      %2005 = vmatpush1.msra.mxu0 0.0
      %2006 = vmatprep.subr.mxu0 0.0
      %2007 = vmatpush1.msra.mxu0 0.0
      %2008 = vmatprep.subr.mxu0 0.0
      %2009 = vmatpush1.msra.mxu0 0.0
      %2010 = vmatprep.subr.mxu0 0.0
      %2011 = vmatpush1.msra.mxu0 0.0
      %2012 = vmatprep.subr.mxu0 0.0
      %2013 = vmatpush1.msra.mxu0 0.0
      %2014 = vmatprep.subr.mxu0 0.0
      %2015 = vmatpush1.msra.mxu0 0.0
      %2016 = vmatprep.subr.mxu0 0.0
      %2017 = vmatpush1.msra.mxu0 0.0
      %2018 = vmatprep.subr.mxu0 0.0
      %2019 = vmatpush1.msra.mxu0 0.0
      %2020 = vmatprep.subr.mxu0 0.0
      %2021 = vmatpush1.msra.mxu0 0.0
      %2022 = vmatprep.subr.mxu0 0.0
      %2023 = vmatpush1.msra.mxu0 0.0
      %2024 = vmatprep.subr.mxu0 0.0
      %2025 = vmatpush1.msra.mxu0 0.0
      %2026 = vmatprep.subr.mxu0 0.0
      %2027 = vmatpush1.msra.mxu0 0.0
      %2028 = vmatprep.subr.mxu0 %v1994
      %2029 = vmatpush1.msra.mxu0 %v1992
      %2030 = vmatprep.subr.mxu0 0.0
      %2031 = vmatpush2.msra.mxu0 0.0
      %2032 = vmatprep.subr.mxu0 0.0
      %2033 = vmatpush2.msra.mxu0 0.0
      %2034 = vmatprep.subr.mxu0 0.0
      %2035 = vmatpush2.msra.mxu0 0.0
      %2036 = vmatprep.subr.mxu0 0.0
      %2037 = vmatpush2.msra.mxu0 0.0
      %2038 = vmatprep.subr.mxu0 0.0
      %2039 = vmatpush2.msra.mxu0 0.0
      %2040 = vmatprep.subr.mxu0 0.0
      %2041 = vmatpush2.msra.mxu0 0.0
      %2042 = vmatprep.subr.mxu0 0.0
      %2043 = vmatpush2.msra.mxu0 0.0
      %2044 = vmatprep.subr.mxu0 0.0
      %2045 = vmatpush2.msra.mxu0 0.0
      %2046 = vmatprep.subr.mxu0 0.0
      %2047 = vmatpush2.msra.mxu0 0.0
      %2048 = vmatprep.subr.mxu0 0.0
      %2049 = vmatpush2.msra.mxu0 0.0
      %2050 = vmatprep.subr.mxu0 0.0
      %2051 = vmatpush2.msra.mxu0 0.0
      %2052 = vmatprep.subr.mxu0 0.0
      %2053 = vmatpush2.msra.mxu0 0.0
      %2054 = vmatprep.subr.mxu0 0.0
      %2055 = vmatpush2.msra.mxu0 0.0
      %2056 = vmatprep.subr.mxu0 0.0
      %2057 = vmatpush2.msra.mxu0 0.0
      %2058 = vmatprep.subr.mxu0 0.0
      %2059 = vmatpush2.msra.mxu0 0.0
      %2060 = vmatprep.subr.mxu0 0.0
      %2061 = vmatpush2.msra.mxu0 0.0
      %2062 = vmatprep.mubr.f32.mxu0 0.0
      %2063 = vmatmul.mubr.f32.gmra.mxu0 %v1987
      %v2064 = vpop.f32.mrf.mxu0
      %v2065 = vadd.f32 0.0, %v2064
      %v2066 = vpop.f32.mrf.mxu0
      %v2067 = vadd.f32 0.0, %v2066
      %2068 = vmatprep.mubr.f32.mxu0 0.0
      %2069 = vmatmul.mubr.f32.gmra.mxu0 %v1990
      %v2070 = vpop.f32.mrf.mxu0
      %v2071 = vadd.f32 0.0, %v2070
      %v2072 = vpop.f32.mrf.mxu0
      %v2073 = vadd.f32 0.0, %v2072
      %2074 = vdwg.mxu0
      %2075 = vmatprep.subr.mxu0 0.0
      %2076 = vmatpush1.msra.mxu0 0.0
      %2077 = vmatprep.subr.mxu0 0.0
      %2078 = vmatpush1.msra.mxu0 0.0
      %2079 = vmatprep.subr.mxu0 0.0
      %2080 = vmatpush1.msra.mxu0 0.0
      %2081 = vmatprep.subr.mxu0 0.0
      %2082 = vmatpush1.msra.mxu0 0.0
      %2083 = vmatprep.subr.mxu0 0.0
      %2084 = vmatpush1.msra.mxu0 0.0
      %2085 = vmatprep.subr.mxu0 0.0
      %2086 = vmatpush1.msra.mxu0 0.0
      %2087 = vmatprep.subr.mxu0 0.0
      %2088 = vmatpush1.msra.mxu0 0.0
      %2089 = vmatprep.subr.mxu0 0.0
      %2090 = vmatpush1.msra.mxu0 0.0
      %2091 = vmatprep.subr.mxu0 0.0
      %2092 = vmatpush1.msra.mxu0 0.0
      %2093 = vmatprep.subr.mxu0 0.0
      %2094 = vmatpush1.msra.mxu0 0.0
      %2095 = vmatprep.subr.mxu0 0.0
      %2096 = vmatpush1.msra.mxu0 0.0
      %2097 = vmatprep.subr.mxu0 0.0
      %2098 = vmatpush1.msra.mxu0 0.0
      %2099 = vmatprep.subr.mxu0 0.0
      %2100 = vmatpush1.msra.mxu0 0.0
      %2101 = vmatprep.subr.mxu0 0.0
      %2102 = vmatpush1.msra.mxu0 0.0
      %2103 = vmatprep.subr.mxu0 0.0
      %2104 = vmatpush1.msra.mxu0 0.0
      %2105 = vmatprep.subr.mxu0 0.0
      %2106 = vmatpush1.msra.mxu0 %v1996
      %2107 = vmatprep.subr.mxu0 0.0
      %2108 = vmatpush2.msra.mxu0 0.0
      %2109 = vmatprep.subr.mxu0 0.0
      %2110 = vmatpush2.msra.mxu0 0.0
      %2111 = vmatprep.subr.mxu0 0.0
      %2112 = vmatpush2.msra.mxu0 0.0
      %2113 = vmatprep.subr.mxu0 0.0
      %2114 = vmatpush2.msra.mxu0 0.0
      %2115 = vmatprep.subr.mxu0 0.0
      %2116 = vmatpush2.msra.mxu0 0.0
      %2117 = vmatprep.subr.mxu0 0.0
      %2118 = vmatpush2.msra.mxu0 0.0
      %2119 = vmatprep.subr.mxu0 0.0
      %2120 = vmatpush2.msra.mxu0 0.0
      %2121 = vmatprep.subr.mxu0 0.0
      %2122 = vmatpush2.msra.mxu0 0.0
      %2123 = vmatprep.subr.mxu0 0.0
      %2124 = vmatpush2.msra.mxu0 0.0
      %2125 = vmatprep.subr.mxu0 0.0
      %2126 = vmatpush2.msra.mxu0 0.0
      %2127 = vmatprep.subr.mxu0 0.0
      %2128 = vmatpush2.msra.mxu0 0.0
      %2129 = vmatprep.subr.mxu0 0.0
      %2130 = vmatpush2.msra.mxu0 0.0
      %2131 = vmatprep.subr.mxu0 0.0
      %2132 = vmatpush2.msra.mxu0 0.0
      %2133 = vmatprep.subr.mxu0 0.0
      %2134 = vmatpush2.msra.mxu0 0.0
      %2135 = vmatprep.subr.mxu0 0.0
      %2136 = vmatpush2.msra.mxu0 0.0
      %2137 = vmatprep.subr.mxu0 0.0
      %2138 = vmatpush2.msra.mxu0 0.0
      %2139 = vmatprep.mubr.f32.mxu0 0.0
      %2140 = vmatmul.mubr.f32.gmra.mxu0 %v1987
      %v2141 = vpop.f32.mrf.mxu0
      %v2142 = vadd.f32 0.0, %v2141
      %v2143 = vpop.f32.mrf.mxu0
      %2144 = vmatprep.mubr.f32.mxu0 0.0
      %2145 = vmatmul.mubr.f32.gmra.mxu0 %v1990
      %v2146 = vpop.f32.mrf.mxu0
      %v2147 = vadd.f32 0.0, %v2146
      %v2148 = vpop.f32.mrf.mxu0
      %2149 = vdwg.mxu0
      %v2150 = vadd.f32 %v1965, %v2065
      %v2151 = vadd.f32 %v1966, %v2067
      %v2152 = vadd.f32 %v1967, %v2142
      %v2153 = vadd.f32 %v1968, %v2071
      %v2154 = vadd.f32 %v1969, %v2073
      %v2155 = vadd.f32 %v1970, %v2147
      %s2156 = scalar_lea.vmem %s2, 128
      %v2157 = vld [vmem:[%s2156] sm:$0xff]
      %v2158 = vld [vmem:[%s2156 + $0x8] sm:$0xff]
      %2159 = vrot.lane.b32.xlu0 %v696, 87
      %v2160 = vpop.permute.xlu0 %2159
      %2161 = vrot.lane.b32.xlu0 %v705, 87
      %v2162 = vpop.permute.xlu0 %2161
      %2163 = vrot.lane.b32.xlu0 %v697, 87
      %v2164 = vpop.permute.xlu0 %2163
      %2165 = vrot.lane.b32.xlu0 %v1603, 87
      %v2166 = vpop.permute.xlu0 %2165
      %vm2167 = vcmask 711680
      %v2168 = vsel %vm2167, %v2160, %v2162
      %v2169 = vsel %vm2167, %v2162, %v2164
      %v2170 = vsel %vm2167, %v2164, %v2166
      %v2172 = vsel %vm715, %v2157, 0
      %v2175 = vsel %vm715, %v2158, 0
      %v2177 = vsel %vm722, %v2168, 0
      %v2179 = vsel %vm722, %v2169, 0
      %v2181 = vsel %vm722, %v2170, 0
      %2183 = vmatprep.subr.mxu0 0.0
      %2184 = vmatpush1.msra.mxu0 0.0
      %2185 = vmatprep.subr.mxu0 0.0
      %2186 = vmatpush1.msra.mxu0 0.0
      %2187 = vmatprep.subr.mxu0 0.0
      %2188 = vmatpush1.msra.mxu0 0.0
      %2189 = vmatprep.subr.mxu0 0.0
      %2190 = vmatpush1.msra.mxu0 0.0
      %2191 = vmatprep.subr.mxu0 0.0
      %2192 = vmatpush1.msra.mxu0 0.0
      %2193 = vmatprep.subr.mxu0 0.0
      %2194 = vmatpush1.msra.mxu0 0.0
      %2195 = vmatprep.subr.mxu0 0.0
      %2196 = vmatpush1.msra.mxu0 0.0
      %2197 = vmatprep.subr.mxu0 0.0
      %2198 = vmatpush1.msra.mxu0 0.0
      %2199 = vmatprep.subr.mxu0 0.0
      %2200 = vmatpush1.msra.mxu0 0.0
      %2201 = vmatprep.subr.mxu0 0.0
      %2202 = vmatpush1.msra.mxu0 0.0
      %2203 = vmatprep.subr.mxu0 0.0
      %2204 = vmatpush1.msra.mxu0 0.0
      %2205 = vmatprep.subr.mxu0 0.0
      %2206 = vmatpush1.msra.mxu0 0.0
      %2207 = vmatprep.subr.mxu0 0.0
      %2208 = vmatpush1.msra.mxu0 0.0
      %2209 = vmatprep.subr.mxu0 0.0
      %2210 = vmatpush1.msra.mxu0 0.0
      %2211 = vmatprep.subr.mxu0 0.0
      %2212 = vmatpush1.msra.mxu0 0.0
      %2213 = vmatprep.subr.mxu0 %v2179
      %2214 = vmatpush1.msra.mxu0 %v2177
      %2215 = vmatprep.subr.mxu0 0.0
      %2216 = vmatpush2.msra.mxu0 0.0
      %2217 = vmatprep.subr.mxu0 0.0
      %2218 = vmatpush2.msra.mxu0 0.0
      %2219 = vmatprep.subr.mxu0 0.0
      %2220 = vmatpush2.msra.mxu0 0.0
      %2221 = vmatprep.subr.mxu0 0.0
      %2222 = vmatpush2.msra.mxu0 0.0
      %2223 = vmatprep.subr.mxu0 0.0
      %2224 = vmatpush2.msra.mxu0 0.0
      %2225 = vmatprep.subr.mxu0 0.0
      %2226 = vmatpush2.msra.mxu0 0.0
      %2227 = vmatprep.subr.mxu0 0.0
      %2228 = vmatpush2.msra.mxu0 0.0
      %2229 = vmatprep.subr.mxu0 0.0
      %2230 = vmatpush2.msra.mxu0 0.0
      %2231 = vmatprep.subr.mxu0 0.0
      %2232 = vmatpush2.msra.mxu0 0.0
      %2233 = vmatprep.subr.mxu0 0.0
      %2234 = vmatpush2.msra.mxu0 0.0
      %2235 = vmatprep.subr.mxu0 0.0
      %2236 = vmatpush2.msra.mxu0 0.0
      %2237 = vmatprep.subr.mxu0 0.0
      %2238 = vmatpush2.msra.mxu0 0.0
      %2239 = vmatprep.subr.mxu0 0.0
      %2240 = vmatpush2.msra.mxu0 0.0
      %2241 = vmatprep.subr.mxu0 0.0
      %2242 = vmatpush2.msra.mxu0 0.0
      %2243 = vmatprep.subr.mxu0 0.0
      %2244 = vmatpush2.msra.mxu0 0.0
      %2245 = vmatprep.subr.mxu0 0.0
      %2246 = vmatpush2.msra.mxu0 0.0
      %2247 = vmatprep.mubr.f32.mxu0 0.0
      %2248 = vmatmul.mubr.f32.gmra.mxu0 %v2172
      %v2249 = vpop.f32.mrf.mxu0
      %v2250 = vadd.f32 0.0, %v2249
      %v2251 = vpop.f32.mrf.mxu0
      %v2252 = vadd.f32 0.0, %v2251
      %2253 = vmatprep.mubr.f32.mxu0 0.0
      %2254 = vmatmul.mubr.f32.gmra.mxu0 %v2175
      %v2255 = vpop.f32.mrf.mxu0
      %v2256 = vadd.f32 0.0, %v2255
      %v2257 = vpop.f32.mrf.mxu0
      %v2258 = vadd.f32 0.0, %v2257
      %2259 = vdwg.mxu0
      %2260 = vmatprep.subr.mxu0 0.0
      %2261 = vmatpush1.msra.mxu0 0.0
      %2262 = vmatprep.subr.mxu0 0.0
      %2263 = vmatpush1.msra.mxu0 0.0
      %2264 = vmatprep.subr.mxu0 0.0
      %2265 = vmatpush1.msra.mxu0 0.0
      %2266 = vmatprep.subr.mxu0 0.0
      %2267 = vmatpush1.msra.mxu0 0.0
      %2268 = vmatprep.subr.mxu0 0.0
      %2269 = vmatpush1.msra.mxu0 0.0
      %2270 = vmatprep.subr.mxu0 0.0
      %2271 = vmatpush1.msra.mxu0 0.0
      %2272 = vmatprep.subr.mxu0 0.0
      %2273 = vmatpush1.msra.mxu0 0.0
      %2274 = vmatprep.subr.mxu0 0.0
      %2275 = vmatpush1.msra.mxu0 0.0
      %2276 = vmatprep.subr.mxu0 0.0
      %2277 = vmatpush1.msra.mxu0 0.0
      %2278 = vmatprep.subr.mxu0 0.0
      %2279 = vmatpush1.msra.mxu0 0.0
      %2280 = vmatprep.subr.mxu0 0.0
      %2281 = vmatpush1.msra.mxu0 0.0
      %2282 = vmatprep.subr.mxu0 0.0
      %2283 = vmatpush1.msra.mxu0 0.0
      %2284 = vmatprep.subr.mxu0 0.0
      %2285 = vmatpush1.msra.mxu0 0.0
      %2286 = vmatprep.subr.mxu0 0.0
      %2287 = vmatpush1.msra.mxu0 0.0
      %2288 = vmatprep.subr.mxu0 0.0
      %2289 = vmatpush1.msra.mxu0 0.0
      %2290 = vmatprep.subr.mxu0 0.0
      %2291 = vmatpush1.msra.mxu0 %v2181
      %2292 = vmatprep.subr.mxu0 0.0
      %2293 = vmatpush2.msra.mxu0 0.0
      %2294 = vmatprep.subr.mxu0 0.0
      %2295 = vmatpush2.msra.mxu0 0.0
      %2296 = vmatprep.subr.mxu0 0.0
      %2297 = vmatpush2.msra.mxu0 0.0
      %2298 = vmatprep.subr.mxu0 0.0
      %2299 = vmatpush2.msra.mxu0 0.0
      %2300 = vmatprep.subr.mxu0 0.0
      %2301 = vmatpush2.msra.mxu0 0.0
      %2302 = vmatprep.subr.mxu0 0.0
      %2303 = vmatpush2.msra.mxu0 0.0
      %2304 = vmatprep.subr.mxu0 0.0
      %2305 = vmatpush2.msra.mxu0 0.0
      %2306 = vmatprep.subr.mxu0 0.0
      %2307 = vmatpush2.msra.mxu0 0.0
      %2308 = vmatprep.subr.mxu0 0.0
      %2309 = vmatpush2.msra.mxu0 0.0
      %2310 = vmatprep.subr.mxu0 0.0
      %2311 = vmatpush2.msra.mxu0 0.0
      %2312 = vmatprep.subr.mxu0 0.0
      %2313 = vmatpush2.msra.mxu0 0.0
      %2314 = vmatprep.subr.mxu0 0.0
      %2315 = vmatpush2.msra.mxu0 0.0
      %2316 = vmatprep.subr.mxu0 0.0
      %2317 = vmatpush2.msra.mxu0 0.0
      %2318 = vmatprep.subr.mxu0 0.0
      %2319 = vmatpush2.msra.mxu0 0.0
      %2320 = vmatprep.subr.mxu0 0.0
      %2321 = vmatpush2.msra.mxu0 0.0
      %2322 = vmatprep.subr.mxu0 0.0
      %2323 = vmatpush2.msra.mxu0 0.0
      %2324 = vmatprep.mubr.f32.mxu0 0.0
      %2325 = vmatmul.mubr.f32.gmra.mxu0 %v2172
      %v2326 = vpop.f32.mrf.mxu0
      %v2327 = vadd.f32 0.0, %v2326
      %v2328 = vpop.f32.mrf.mxu0
      %2329 = vmatprep.mubr.f32.mxu0 0.0
      %2330 = vmatmul.mubr.f32.gmra.mxu0 %v2175
      %v2331 = vpop.f32.mrf.mxu0
      %v2332 = vadd.f32 0.0, %v2331
      %v2333 = vpop.f32.mrf.mxu0
      %2334 = vdwg.mxu0
      %v2335 = vadd.f32 %v2150, %v2250
      %v2336 = vadd.f32 %v2151, %v2252
      %v2337 = vadd.f32 %v2152, %v2327
      %v2338 = vadd.f32 %v2153, %v2256
      %v2339 = vadd.f32 %v2154, %v2258
      %v2340 = vadd.f32 %v2155, %v2332
      %s2341 = scalar_lea.vmem %s2, 144
      %v2342 = vld [vmem:[%s2341] sm:$0xff]
      %v2343 = vld [vmem:[%s2341 + $0x8] sm:$0xff]
      %2344 = vrot.lane.b32.xlu0 %v696, 86
      %v2345 = vpop.permute.xlu0 %2344
      %2346 = vrot.lane.b32.xlu0 %v705, 86
      %v2347 = vpop.permute.xlu0 %2346
      %2348 = vrot.lane.b32.xlu0 %v697, 86
      %v2349 = vpop.permute.xlu0 %2348
      %2350 = vrot.lane.b32.xlu0 %v1603, 86
      %v2351 = vpop.permute.xlu0 %2350
      %vm2352 = vcmask 703488
      %v2353 = vsel %vm2352, %v2345, %v2347
      %v2354 = vsel %vm2352, %v2347, %v2349
      %v2355 = vsel %vm2352, %v2349, %v2351
      %v2357 = vsel %vm715, %v2342, 0
      %v2360 = vsel %vm715, %v2343, 0
      %v2362 = vsel %vm722, %v2353, 0
      %v2364 = vsel %vm722, %v2354, 0
      %v2366 = vsel %vm722, %v2355, 0
      %2368 = vmatprep.subr.mxu0 0.0
      %2369 = vmatpush1.msra.mxu0 0.0
      %2370 = vmatprep.subr.mxu0 0.0
      %2371 = vmatpush1.msra.mxu0 0.0
      %2372 = vmatprep.subr.mxu0 0.0
      %2373 = vmatpush1.msra.mxu0 0.0
      %2374 = vmatprep.subr.mxu0 0.0
      %2375 = vmatpush1.msra.mxu0 0.0
      %2376 = vmatprep.subr.mxu0 0.0
      %2377 = vmatpush1.msra.mxu0 0.0
      %2378 = vmatprep.subr.mxu0 0.0
      %2379 = vmatpush1.msra.mxu0 0.0
      %2380 = vmatprep.subr.mxu0 0.0
      %2381 = vmatpush1.msra.mxu0 0.0
      %2382 = vmatprep.subr.mxu0 0.0
      %2383 = vmatpush1.msra.mxu0 0.0
      %2384 = vmatprep.subr.mxu0 0.0
      %2385 = vmatpush1.msra.mxu0 0.0
      %2386 = vmatprep.subr.mxu0 0.0
      %2387 = vmatpush1.msra.mxu0 0.0
      %2388 = vmatprep.subr.mxu0 0.0
      %2389 = vmatpush1.msra.mxu0 0.0
      %2390 = vmatprep.subr.mxu0 0.0
      %2391 = vmatpush1.msra.mxu0 0.0
      %2392 = vmatprep.subr.mxu0 0.0
      %2393 = vmatpush1.msra.mxu0 0.0
      %2394 = vmatprep.subr.mxu0 0.0
      %2395 = vmatpush1.msra.mxu0 0.0
      %2396 = vmatprep.subr.mxu0 0.0
      %2397 = vmatpush1.msra.mxu0 0.0
      %2398 = vmatprep.subr.mxu0 %v2364
      %2399 = vmatpush1.msra.mxu0 %v2362
      %2400 = vmatprep.subr.mxu0 0.0
      %2401 = vmatpush2.msra.mxu0 0.0
      %2402 = vmatprep.subr.mxu0 0.0
      %2403 = vmatpush2.msra.mxu0 0.0
      %2404 = vmatprep.subr.mxu0 0.0
      %2405 = vmatpush2.msra.mxu0 0.0
      %2406 = vmatprep.subr.mxu0 0.0
      %2407 = vmatpush2.msra.mxu0 0.0
      %2408 = vmatprep.subr.mxu0 0.0
      %2409 = vmatpush2.msra.mxu0 0.0
      %2410 = vmatprep.subr.mxu0 0.0
      %2411 = vmatpush2.msra.mxu0 0.0
      %2412 = vmatprep.subr.mxu0 0.0
      %2413 = vmatpush2.msra.mxu0 0.0
      %2414 = vmatprep.subr.mxu0 0.0
      %2415 = vmatpush2.msra.mxu0 0.0
      %2416 = vmatprep.subr.mxu0 0.0
      %2417 = vmatpush2.msra.mxu0 0.0
      %2418 = vmatprep.subr.mxu0 0.0
      %2419 = vmatpush2.msra.mxu0 0.0
      %2420 = vmatprep.subr.mxu0 0.0
      %2421 = vmatpush2.msra.mxu0 0.0
      %2422 = vmatprep.subr.mxu0 0.0
      %2423 = vmatpush2.msra.mxu0 0.0
      %2424 = vmatprep.subr.mxu0 0.0
      %2425 = vmatpush2.msra.mxu0 0.0
      %2426 = vmatprep.subr.mxu0 0.0
      %2427 = vmatpush2.msra.mxu0 0.0
      %2428 = vmatprep.subr.mxu0 0.0
      %2429 = vmatpush2.msra.mxu0 0.0
      %2430 = vmatprep.subr.mxu0 0.0
      %2431 = vmatpush2.msra.mxu0 0.0
      %2432 = vmatprep.mubr.f32.mxu0 0.0
      %2433 = vmatmul.mubr.f32.gmra.mxu0 %v2357
      %v2434 = vpop.f32.mrf.mxu0
      %v2435 = vadd.f32 0.0, %v2434
      %v2436 = vpop.f32.mrf.mxu0
      %v2437 = vadd.f32 0.0, %v2436
      %2438 = vmatprep.mubr.f32.mxu0 0.0
      %2439 = vmatmul.mubr.f32.gmra.mxu0 %v2360
      %v2440 = vpop.f32.mrf.mxu0
      %v2441 = vadd.f32 0.0, %v2440
      %v2442 = vpop.f32.mrf.mxu0
      %v2443 = vadd.f32 0.0, %v2442
      %2444 = vdwg.mxu0
      %2445 = vmatprep.subr.mxu0 0.0
      %2446 = vmatpush1.msra.mxu0 0.0
      %2447 = vmatprep.subr.mxu0 0.0
      %2448 = vmatpush1.msra.mxu0 0.0
      %2449 = vmatprep.subr.mxu0 0.0
      %2450 = vmatpush1.msra.mxu0 0.0
      %2451 = vmatprep.subr.mxu0 0.0
      %2452 = vmatpush1.msra.mxu0 0.0
      %2453 = vmatprep.subr.mxu0 0.0
      %2454 = vmatpush1.msra.mxu0 0.0
      %2455 = vmatprep.subr.mxu0 0.0
      %2456 = vmatpush1.msra.mxu0 0.0
      %2457 = vmatprep.subr.mxu0 0.0
      %2458 = vmatpush1.msra.mxu0 0.0
      %2459 = vmatprep.subr.mxu0 0.0
      %2460 = vmatpush1.msra.mxu0 0.0
      %2461 = vmatprep.subr.mxu0 0.0
      %2462 = vmatpush1.msra.mxu0 0.0
      %2463 = vmatprep.subr.mxu0 0.0
      %2464 = vmatpush1.msra.mxu0 0.0
      %2465 = vmatprep.subr.mxu0 0.0
      %2466 = vmatpush1.msra.mxu0 0.0
      %2467 = vmatprep.subr.mxu0 0.0
      %2468 = vmatpush1.msra.mxu0 0.0
      %2469 = vmatprep.subr.mxu0 0.0
      %2470 = vmatpush1.msra.mxu0 0.0
      %2471 = vmatprep.subr.mxu0 0.0
      %2472 = vmatpush1.msra.mxu0 0.0
      %2473 = vmatprep.subr.mxu0 0.0
      %2474 = vmatpush1.msra.mxu0 0.0
      %2475 = vmatprep.subr.mxu0 0.0
      %2476 = vmatpush1.msra.mxu0 %v2366
      %2477 = vmatprep.subr.mxu0 0.0
      %2478 = vmatpush2.msra.mxu0 0.0
      %2479 = vmatprep.subr.mxu0 0.0
      %2480 = vmatpush2.msra.mxu0 0.0
      %2481 = vmatprep.subr.mxu0 0.0
      %2482 = vmatpush2.msra.mxu0 0.0
      %2483 = vmatprep.subr.mxu0 0.0
      %2484 = vmatpush2.msra.mxu0 0.0
      %2485 = vmatprep.subr.mxu0 0.0
      %2486 = vmatpush2.msra.mxu0 0.0
      %2487 = vmatprep.subr.mxu0 0.0
      %2488 = vmatpush2.msra.mxu0 0.0
      %2489 = vmatprep.subr.mxu0 0.0
      %2490 = vmatpush2.msra.mxu0 0.0
      %2491 = vmatprep.subr.mxu0 0.0
      %2492 = vmatpush2.msra.mxu0 0.0
      %2493 = vmatprep.subr.mxu0 0.0
      %2494 = vmatpush2.msra.mxu0 0.0
      %2495 = vmatprep.subr.mxu0 0.0
      %2496 = vmatpush2.msra.mxu0 0.0
      %2497 = vmatprep.subr.mxu0 0.0
      %2498 = vmatpush2.msra.mxu0 0.0
      %2499 = vmatprep.subr.mxu0 0.0
      %2500 = vmatpush2.msra.mxu0 0.0
      %2501 = vmatprep.subr.mxu0 0.0
      %2502 = vmatpush2.msra.mxu0 0.0
      %2503 = vmatprep.subr.mxu0 0.0
      %2504 = vmatpush2.msra.mxu0 0.0
      %2505 = vmatprep.subr.mxu0 0.0
      %2506 = vmatpush2.msra.mxu0 0.0
      %2507 = vmatprep.subr.mxu0 0.0
      %2508 = vmatpush2.msra.mxu0 0.0
      %2509 = vmatprep.mubr.f32.mxu0 0.0
      %2510 = vmatmul.mubr.f32.gmra.mxu0 %v2357
      %v2511 = vpop.f32.mrf.mxu0
      %v2512 = vadd.f32 0.0, %v2511
      %v2513 = vpop.f32.mrf.mxu0
      %2514 = vmatprep.mubr.f32.mxu0 0.0
      %2515 = vmatmul.mubr.f32.gmra.mxu0 %v2360
      %v2516 = vpop.f32.mrf.mxu0
      %v2517 = vadd.f32 0.0, %v2516
      %v2518 = vpop.f32.mrf.mxu0
      %2519 = vdwg.mxu0
      %v2520 = vadd.f32 %v2335, %v2435
      %v2521 = vadd.f32 %v2336, %v2437
      %v2522 = vadd.f32 %v2337, %v2512
      %v2523 = vadd.f32 %v2338, %v2441
      %v2524 = vadd.f32 %v2339, %v2443
      %v2525 = vadd.f32 %v2340, %v2517
      %s2526 = scalar_lea.vmem %s2, 160
      %v2527 = vld [vmem:[%s2526] sm:$0xff]
      %v2528 = vld [vmem:[%s2526 + $0x8] sm:$0xff]
      %2529 = vrot.lane.b32.xlu0 %v696, 70
      %v2530 = vpop.permute.xlu0 %2529
      %2531 = vrot.lane.b32.xlu0 %v705, 70
      %v2532 = vpop.permute.xlu0 %2531
      %2533 = vrot.lane.b32.xlu0 %v697, 70
      %v2534 = vpop.permute.xlu0 %2533
      %2535 = vrot.lane.b32.xlu0 %v1603, 70
      %v2536 = vpop.permute.xlu0 %2535
      %vm2537 = vcmask 572416
      %v2538 = vsel %vm2537, %v2530, %v2532
      %v2539 = vsel %vm2537, %v2532, %v2534
      %v2540 = vsel %vm2537, %v2534, %v2536
      %v2542 = vsel %vm715, %v2527, 0
      %v2545 = vsel %vm715, %v2528, 0
      %v2547 = vsel %vm722, %v2538, 0
      %v2549 = vsel %vm722, %v2539, 0
      %v2551 = vsel %vm722, %v2540, 0
      %2553 = vmatprep.subr.mxu0 0.0
      %2554 = vmatpush1.msra.mxu0 0.0
      %2555 = vmatprep.subr.mxu0 0.0
      %2556 = vmatpush1.msra.mxu0 0.0
      %2557 = vmatprep.subr.mxu0 0.0
      %2558 = vmatpush1.msra.mxu0 0.0
      %2559 = vmatprep.subr.mxu0 0.0
      %2560 = vmatpush1.msra.mxu0 0.0
      %2561 = vmatprep.subr.mxu0 0.0
      %2562 = vmatpush1.msra.mxu0 0.0
      %2563 = vmatprep.subr.mxu0 0.0
      %2564 = vmatpush1.msra.mxu0 0.0
      %2565 = vmatprep.subr.mxu0 0.0
      %2566 = vmatpush1.msra.mxu0 0.0
      %2567 = vmatprep.subr.mxu0 0.0
      %2568 = vmatpush1.msra.mxu0 0.0
      %2569 = vmatprep.subr.mxu0 0.0
      %2570 = vmatpush1.msra.mxu0 0.0
      %2571 = vmatprep.subr.mxu0 0.0
      %2572 = vmatpush1.msra.mxu0 0.0
      %2573 = vmatprep.subr.mxu0 0.0
      %2574 = vmatpush1.msra.mxu0 0.0
      %2575 = vmatprep.subr.mxu0 0.0
      %2576 = vmatpush1.msra.mxu0 0.0
      %2577 = vmatprep.subr.mxu0 0.0
      %2578 = vmatpush1.msra.mxu0 0.0
      %2579 = vmatprep.subr.mxu0 0.0
      %2580 = vmatpush1.msra.mxu0 0.0
      %2581 = vmatprep.subr.mxu0 0.0
      %2582 = vmatpush1.msra.mxu0 0.0
      %2583 = vmatprep.subr.mxu0 %v2549
      %2584 = vmatpush1.msra.mxu0 %v2547
      %2585 = vmatprep.subr.mxu0 0.0
      %2586 = vmatpush2.msra.mxu0 0.0
      %2587 = vmatprep.subr.mxu0 0.0
      %2588 = vmatpush2.msra.mxu0 0.0
      %2589 = vmatprep.subr.mxu0 0.0
      %2590 = vmatpush2.msra.mxu0 0.0
      %2591 = vmatprep.subr.mxu0 0.0
      %2592 = vmatpush2.msra.mxu0 0.0
      %2593 = vmatprep.subr.mxu0 0.0
      %2594 = vmatpush2.msra.mxu0 0.0
      %2595 = vmatprep.subr.mxu0 0.0
      %2596 = vmatpush2.msra.mxu0 0.0
      %2597 = vmatprep.subr.mxu0 0.0
      %2598 = vmatpush2.msra.mxu0 0.0
      %2599 = vmatprep.subr.mxu0 0.0
      %2600 = vmatpush2.msra.mxu0 0.0
      %2601 = vmatprep.subr.mxu0 0.0
      %2602 = vmatpush2.msra.mxu0 0.0
      %2603 = vmatprep.subr.mxu0 0.0
      %2604 = vmatpush2.msra.mxu0 0.0
      %2605 = vmatprep.subr.mxu0 0.0
      %2606 = vmatpush2.msra.mxu0 0.0
      %2607 = vmatprep.subr.mxu0 0.0
      %2608 = vmatpush2.msra.mxu0 0.0
      %2609 = vmatprep.subr.mxu0 0.0
      %2610 = vmatpush2.msra.mxu0 0.0
      %2611 = vmatprep.subr.mxu0 0.0
      %2612 = vmatpush2.msra.mxu0 0.0
      %2613 = vmatprep.subr.mxu0 0.0
      %2614 = vmatpush2.msra.mxu0 0.0
      %2615 = vmatprep.subr.mxu0 0.0
      %2616 = vmatpush2.msra.mxu0 0.0
      %2617 = vmatprep.mubr.f32.mxu0 0.0
      %2618 = vmatmul.mubr.f32.gmra.mxu0 %v2542
      %v2619 = vpop.f32.mrf.mxu0
      %v2620 = vadd.f32 0.0, %v2619
      %v2621 = vpop.f32.mrf.mxu0
      %v2622 = vadd.f32 0.0, %v2621
      %2623 = vmatprep.mubr.f32.mxu0 0.0
      %2624 = vmatmul.mubr.f32.gmra.mxu0 %v2545
      %v2625 = vpop.f32.mrf.mxu0
      %v2626 = vadd.f32 0.0, %v2625
      %v2627 = vpop.f32.mrf.mxu0
      %v2628 = vadd.f32 0.0, %v2627
      %2629 = vdwg.mxu0
      %2630 = vmatprep.subr.mxu0 0.0
      %2631 = vmatpush1.msra.mxu0 0.0
      %2632 = vmatprep.subr.mxu0 0.0
      %2633 = vmatpush1.msra.mxu0 0.0
      %2634 = vmatprep.subr.mxu0 0.0
      %2635 = vmatpush1.msra.mxu0 0.0
      %2636 = vmatprep.subr.mxu0 0.0
      %2637 = vmatpush1.msra.mxu0 0.0
      %2638 = vmatprep.subr.mxu0 0.0
      %2639 = vmatpush1.msra.mxu0 0.0
      %2640 = vmatprep.subr.mxu0 0.0
      %2641 = vmatpush1.msra.mxu0 0.0
      %2642 = vmatprep.subr.mxu0 0.0
      %2643 = vmatpush1.msra.mxu0 0.0
      %2644 = vmatprep.subr.mxu0 0.0
      %2645 = vmatpush1.msra.mxu0 0.0
      %2646 = vmatprep.subr.mxu0 0.0
      %2647 = vmatpush1.msra.mxu0 0.0
      %2648 = vmatprep.subr.mxu0 0.0
      %2649 = vmatpush1.msra.mxu0 0.0
      %2650 = vmatprep.subr.mxu0 0.0
      %2651 = vmatpush1.msra.mxu0 0.0
      %2652 = vmatprep.subr.mxu0 0.0
      %2653 = vmatpush1.msra.mxu0 0.0
      %2654 = vmatprep.subr.mxu0 0.0
      %2655 = vmatpush1.msra.mxu0 0.0
      %2656 = vmatprep.subr.mxu0 0.0
      %2657 = vmatpush1.msra.mxu0 0.0
      %2658 = vmatprep.subr.mxu0 0.0
      %2659 = vmatpush1.msra.mxu0 0.0
      %2660 = vmatprep.subr.mxu0 0.0
      %2661 = vmatpush1.msra.mxu0 %v2551
      %2662 = vmatprep.subr.mxu0 0.0
      %2663 = vmatpush2.msra.mxu0 0.0
      %2664 = vmatprep.subr.mxu0 0.0
      %2665 = vmatpush2.msra.mxu0 0.0
      %2666 = vmatprep.subr.mxu0 0.0
      %2667 = vmatpush2.msra.mxu0 0.0
      %2668 = vmatprep.subr.mxu0 0.0
      %2669 = vmatpush2.msra.mxu0 0.0
      %2670 = vmatprep.subr.mxu0 0.0
      %2671 = vmatpush2.msra.mxu0 0.0
      %2672 = vmatprep.subr.mxu0 0.0
      %2673 = vmatpush2.msra.mxu0 0.0
      %2674 = vmatprep.subr.mxu0 0.0
      %2675 = vmatpush2.msra.mxu0 0.0
      %2676 = vmatprep.subr.mxu0 0.0
      %2677 = vmatpush2.msra.mxu0 0.0
      %2678 = vmatprep.subr.mxu0 0.0
      %2679 = vmatpush2.msra.mxu0 0.0
      %2680 = vmatprep.subr.mxu0 0.0
      %2681 = vmatpush2.msra.mxu0 0.0
      %2682 = vmatprep.subr.mxu0 0.0
      %2683 = vmatpush2.msra.mxu0 0.0
      %2684 = vmatprep.subr.mxu0 0.0
      %2685 = vmatpush2.msra.mxu0 0.0
      %2686 = vmatprep.subr.mxu0 0.0
      %2687 = vmatpush2.msra.mxu0 0.0
      %2688 = vmatprep.subr.mxu0 0.0
      %2689 = vmatpush2.msra.mxu0 0.0
      %2690 = vmatprep.subr.mxu0 0.0
      %2691 = vmatpush2.msra.mxu0 0.0
      %2692 = vmatprep.subr.mxu0 0.0
      %2693 = vmatpush2.msra.mxu0 0.0
      %2694 = vmatprep.mubr.f32.mxu0 0.0
      %2695 = vmatmul.mubr.f32.gmra.mxu0 %v2542
      %v2696 = vpop.f32.mrf.mxu0
      %v2697 = vadd.f32 0.0, %v2696
      %v2698 = vpop.f32.mrf.mxu0
      %2699 = vmatprep.mubr.f32.mxu0 0.0
      %2700 = vmatmul.mubr.f32.gmra.mxu0 %v2545
      %v2701 = vpop.f32.mrf.mxu0
      %v2702 = vadd.f32 0.0, %v2701
      %v2703 = vpop.f32.mrf.mxu0
      %2704 = vdwg.mxu0
      %v2705 = vadd.f32 %v2520, %v2620
      %v2706 = vadd.f32 %v2521, %v2622
      %v2707 = vadd.f32 %v2522, %v2697
      %v2708 = vadd.f32 %v2523, %v2626
      %v2709 = vadd.f32 %v2524, %v2628
      %v2710 = vadd.f32 %v2525, %v2702
      %s2711 = scalar_lea.vmem %s2, 176
      %v2712 = vld [vmem:[%s2711] sm:$0xff]
      %v2713 = vld [vmem:[%s2711 + $0x8] sm:$0xff]
      %2714 = vrot.lane.b32.xlu0 %v696, 69
      %v2715 = vpop.permute.xlu0 %2714
      %2716 = vrot.lane.b32.xlu0 %v705, 69
      %v2717 = vpop.permute.xlu0 %2716
      %2718 = vrot.lane.b32.xlu0 %v697, 69
      %v2719 = vpop.permute.xlu0 %2718
      %2720 = vrot.lane.b32.xlu0 %v1603, 69
      %v2721 = vpop.permute.xlu0 %2720
      %vm2722 = vcmask 564224
      %v2723 = vsel %vm2722, %v2715, %v2717
      %v2724 = vsel %vm2722, %v2717, %v2719
      %v2725 = vsel %vm2722, %v2719, %v2721
      %v2727 = vsel %vm715, %v2712, 0
      %v2730 = vsel %vm715, %v2713, 0
      %v2732 = vsel %vm722, %v2723, 0
      %v2734 = vsel %vm722, %v2724, 0
      %v2736 = vsel %vm722, %v2725, 0
      %2738 = vmatprep.subr.mxu0 0.0
      %2739 = vmatpush1.msra.mxu0 0.0
      %2740 = vmatprep.subr.mxu0 0.0
      %2741 = vmatpush1.msra.mxu0 0.0
      %2742 = vmatprep.subr.mxu0 0.0
      %2743 = vmatpush1.msra.mxu0 0.0
      %2744 = vmatprep.subr.mxu0 0.0
      %2745 = vmatpush1.msra.mxu0 0.0
      %2746 = vmatprep.subr.mxu0 0.0
      %2747 = vmatpush1.msra.mxu0 0.0
      %2748 = vmatprep.subr.mxu0 0.0
      %2749 = vmatpush1.msra.mxu0 0.0
      %2750 = vmatprep.subr.mxu0 0.0
      %2751 = vmatpush1.msra.mxu0 0.0
      %2752 = vmatprep.subr.mxu0 0.0
      %2753 = vmatpush1.msra.mxu0 0.0
      %2754 = vmatprep.subr.mxu0 0.0
      %2755 = vmatpush1.msra.mxu0 0.0
      %2756 = vmatprep.subr.mxu0 0.0
      %2757 = vmatpush1.msra.mxu0 0.0
      %2758 = vmatprep.subr.mxu0 0.0
      %2759 = vmatpush1.msra.mxu0 0.0
      %2760 = vmatprep.subr.mxu0 0.0
      %2761 = vmatpush1.msra.mxu0 0.0
      %2762 = vmatprep.subr.mxu0 0.0
      %2763 = vmatpush1.msra.mxu0 0.0
      %2764 = vmatprep.subr.mxu0 0.0
      %2765 = vmatpush1.msra.mxu0 0.0
      %2766 = vmatprep.subr.mxu0 0.0
      %2767 = vmatpush1.msra.mxu0 0.0
      %2768 = vmatprep.subr.mxu0 %v2734
      %2769 = vmatpush1.msra.mxu0 %v2732
      %2770 = vmatprep.subr.mxu0 0.0
      %2771 = vmatpush2.msra.mxu0 0.0
      %2772 = vmatprep.subr.mxu0 0.0
      %2773 = vmatpush2.msra.mxu0 0.0
      %2774 = vmatprep.subr.mxu0 0.0
      %2775 = vmatpush2.msra.mxu0 0.0
      %2776 = vmatprep.subr.mxu0 0.0
      %2777 = vmatpush2.msra.mxu0 0.0
      %2778 = vmatprep.subr.mxu0 0.0
      %2779 = vmatpush2.msra.mxu0 0.0
      %2780 = vmatprep.subr.mxu0 0.0
      %2781 = vmatpush2.msra.mxu0 0.0
      %2782 = vmatprep.subr.mxu0 0.0
      %2783 = vmatpush2.msra.mxu0 0.0
      %2784 = vmatprep.subr.mxu0 0.0
      %2785 = vmatpush2.msra.mxu0 0.0
      %2786 = vmatprep.subr.mxu0 0.0
      %2787 = vmatpush2.msra.mxu0 0.0
      %2788 = vmatprep.subr.mxu0 0.0
      %2789 = vmatpush2.msra.mxu0 0.0
      %2790 = vmatprep.subr.mxu0 0.0
      %2791 = vmatpush2.msra.mxu0 0.0
      %2792 = vmatprep.subr.mxu0 0.0
      %2793 = vmatpush2.msra.mxu0 0.0
      %2794 = vmatprep.subr.mxu0 0.0
      %2795 = vmatpush2.msra.mxu0 0.0
      %2796 = vmatprep.subr.mxu0 0.0
      %2797 = vmatpush2.msra.mxu0 0.0
      %2798 = vmatprep.subr.mxu0 0.0
      %2799 = vmatpush2.msra.mxu0 0.0
      %2800 = vmatprep.subr.mxu0 0.0
      %2801 = vmatpush2.msra.mxu0 0.0
      %2802 = vmatprep.mubr.f32.mxu0 0.0
      %2803 = vmatmul.mubr.f32.gmra.mxu0 %v2727
      %v2804 = vpop.f32.mrf.mxu0
      %v2805 = vadd.f32 0.0, %v2804
      %v2806 = vpop.f32.mrf.mxu0
      %v2807 = vadd.f32 0.0, %v2806
      %2808 = vmatprep.mubr.f32.mxu0 0.0
      %2809 = vmatmul.mubr.f32.gmra.mxu0 %v2730
      %v2810 = vpop.f32.mrf.mxu0
      %v2811 = vadd.f32 0.0, %v2810
      %v2812 = vpop.f32.mrf.mxu0
      %v2813 = vadd.f32 0.0, %v2812
      %2814 = vdwg.mxu0
      %2815 = vmatprep.subr.mxu0 0.0
      %2816 = vmatpush1.msra.mxu0 0.0
      %2817 = vmatprep.subr.mxu0 0.0
      %2818 = vmatpush1.msra.mxu0 0.0
      %2819 = vmatprep.subr.mxu0 0.0
      %2820 = vmatpush1.msra.mxu0 0.0
      %2821 = vmatprep.subr.mxu0 0.0
      %2822 = vmatpush1.msra.mxu0 0.0
      %2823 = vmatprep.subr.mxu0 0.0
      %2824 = vmatpush1.msra.mxu0 0.0
      %2825 = vmatprep.subr.mxu0 0.0
      %2826 = vmatpush1.msra.mxu0 0.0
      %2827 = vmatprep.subr.mxu0 0.0
      %2828 = vmatpush1.msra.mxu0 0.0
      %2829 = vmatprep.subr.mxu0 0.0
      %2830 = vmatpush1.msra.mxu0 0.0
      %2831 = vmatprep.subr.mxu0 0.0
      %2832 = vmatpush1.msra.mxu0 0.0
      %2833 = vmatprep.subr.mxu0 0.0
      %2834 = vmatpush1.msra.mxu0 0.0
      %2835 = vmatprep.subr.mxu0 0.0
      %2836 = vmatpush1.msra.mxu0 0.0
      %2837 = vmatprep.subr.mxu0 0.0
      %2838 = vmatpush1.msra.mxu0 0.0
      %2839 = vmatprep.subr.mxu0 0.0
      %2840 = vmatpush1.msra.mxu0 0.0
      %2841 = vmatprep.subr.mxu0 0.0
      %2842 = vmatpush1.msra.mxu0 0.0
      %2843 = vmatprep.subr.mxu0 0.0
      %2844 = vmatpush1.msra.mxu0 0.0
      %2845 = vmatprep.subr.mxu0 0.0
      %2846 = vmatpush1.msra.mxu0 %v2736
      %2847 = vmatprep.subr.mxu0 0.0
      %2848 = vmatpush2.msra.mxu0 0.0
      %2849 = vmatprep.subr.mxu0 0.0
      %2850 = vmatpush2.msra.mxu0 0.0
      %2851 = vmatprep.subr.mxu0 0.0
      %2852 = vmatpush2.msra.mxu0 0.0
      %2853 = vmatprep.subr.mxu0 0.0
      %2854 = vmatpush2.msra.mxu0 0.0
      %2855 = vmatprep.subr.mxu0 0.0
      %2856 = vmatpush2.msra.mxu0 0.0
      %2857 = vmatprep.subr.mxu0 0.0
      %2858 = vmatpush2.msra.mxu0 0.0
      %2859 = vmatprep.subr.mxu0 0.0
      %2860 = vmatpush2.msra.mxu0 0.0
      %2861 = vmatprep.subr.mxu0 0.0
      %2862 = vmatpush2.msra.mxu0 0.0
      %2863 = vmatprep.subr.mxu0 0.0
      %2864 = vmatpush2.msra.mxu0 0.0
      %2865 = vmatprep.subr.mxu0 0.0
      %2866 = vmatpush2.msra.mxu0 0.0
      %2867 = vmatprep.subr.mxu0 0.0
      %2868 = vmatpush2.msra.mxu0 0.0
      %2869 = vmatprep.subr.mxu0 0.0
      %2870 = vmatpush2.msra.mxu0 0.0
      %2871 = vmatprep.subr.mxu0 0.0
      %2872 = vmatpush2.msra.mxu0 0.0
      %2873 = vmatprep.subr.mxu0 0.0
      %2874 = vmatpush2.msra.mxu0 0.0
      %2875 = vmatprep.subr.mxu0 0.0
      %2876 = vmatpush2.msra.mxu0 0.0
      %2877 = vmatprep.subr.mxu0 0.0
      %2878 = vmatpush2.msra.mxu0 0.0
      %2879 = vmatprep.mubr.f32.mxu0 0.0
      %2880 = vmatmul.mubr.f32.gmra.mxu0 %v2727
      %v2881 = vpop.f32.mrf.mxu0
      %v2882 = vadd.f32 0.0, %v2881
      %v2883 = vpop.f32.mrf.mxu0
      %2884 = vmatprep.mubr.f32.mxu0 0.0
      %2885 = vmatmul.mubr.f32.gmra.mxu0 %v2730
      %v2886 = vpop.f32.mrf.mxu0
      %v2887 = vadd.f32 0.0, %v2886
      %v2888 = vpop.f32.mrf.mxu0
      %2889 = vdwg.mxu0
      %v2890 = vadd.f32 %v2705, %v2805
      %v2891 = vadd.f32 %v2706, %v2807
      %v2892 = vadd.f32 %v2707, %v2882
      %v2893 = vadd.f32 %v2708, %v2811
      %v2894 = vadd.f32 %v2709, %v2813
      %v2895 = vadd.f32 %v2710, %v2887
      %s2896 = scalar_lea.vmem %s2, 192
      %v2897 = vld [vmem:[%s2896] sm:$0xff]
      %v2898 = vld [vmem:[%s2896 + $0x8] sm:$0xff]
      %2899 = vrot.lane.b32.xlu0 %v696, 68
      %v2900 = vpop.permute.xlu0 %2899
      %2901 = vrot.lane.b32.xlu0 %v705, 68
      %v2902 = vpop.permute.xlu0 %2901
      %2903 = vrot.lane.b32.xlu0 %v697, 68
      %v2904 = vpop.permute.xlu0 %2903
      %2905 = vrot.lane.b32.xlu0 %v1603, 68
      %v2906 = vpop.permute.xlu0 %2905
      %vm2907 = vcmask 556032
      %v2908 = vsel %vm2907, %v2900, %v2902
      %v2909 = vsel %vm2907, %v2902, %v2904
      %v2910 = vsel %vm2907, %v2904, %v2906
      %v2912 = vsel %vm715, %v2897, 0
      %v2915 = vsel %vm715, %v2898, 0
      %v2917 = vsel %vm722, %v2908, 0
      %v2919 = vsel %vm722, %v2909, 0
      %v2921 = vsel %vm722, %v2910, 0
      %2923 = vmatprep.subr.mxu0 0.0
      %2924 = vmatpush1.msra.mxu0 0.0
      %2925 = vmatprep.subr.mxu0 0.0
      %2926 = vmatpush1.msra.mxu0 0.0
      %2927 = vmatprep.subr.mxu0 0.0
      %2928 = vmatpush1.msra.mxu0 0.0
      %2929 = vmatprep.subr.mxu0 0.0
      %2930 = vmatpush1.msra.mxu0 0.0
      %2931 = vmatprep.subr.mxu0 0.0
      %2932 = vmatpush1.msra.mxu0 0.0
      %2933 = vmatprep.subr.mxu0 0.0
      %2934 = vmatpush1.msra.mxu0 0.0
      %2935 = vmatprep.subr.mxu0 0.0
      %2936 = vmatpush1.msra.mxu0 0.0
      %2937 = vmatprep.subr.mxu0 0.0
      %2938 = vmatpush1.msra.mxu0 0.0
      %2939 = vmatprep.subr.mxu0 0.0
      %2940 = vmatpush1.msra.mxu0 0.0
      %2941 = vmatprep.subr.mxu0 0.0
      %2942 = vmatpush1.msra.mxu0 0.0
      %2943 = vmatprep.subr.mxu0 0.0
      %2944 = vmatpush1.msra.mxu0 0.0
      %2945 = vmatprep.subr.mxu0 0.0
      %2946 = vmatpush1.msra.mxu0 0.0
      %2947 = vmatprep.subr.mxu0 0.0
      %2948 = vmatpush1.msra.mxu0 0.0
      %2949 = vmatprep.subr.mxu0 0.0
      %2950 = vmatpush1.msra.mxu0 0.0
      %2951 = vmatprep.subr.mxu0 0.0
      %2952 = vmatpush1.msra.mxu0 0.0
      %2953 = vmatprep.subr.mxu0 %v2919
      %2954 = vmatpush1.msra.mxu0 %v2917
      %2955 = vmatprep.subr.mxu0 0.0
      %2956 = vmatpush2.msra.mxu0 0.0
      %2957 = vmatprep.subr.mxu0 0.0
      %2958 = vmatpush2.msra.mxu0 0.0
      %2959 = vmatprep.subr.mxu0 0.0
      %2960 = vmatpush2.msra.mxu0 0.0
      %2961 = vmatprep.subr.mxu0 0.0
      %2962 = vmatpush2.msra.mxu0 0.0
      %2963 = vmatprep.subr.mxu0 0.0
      %2964 = vmatpush2.msra.mxu0 0.0
      %2965 = vmatprep.subr.mxu0 0.0
      %2966 = vmatpush2.msra.mxu0 0.0
      %2967 = vmatprep.subr.mxu0 0.0
      %2968 = vmatpush2.msra.mxu0 0.0
      %2969 = vmatprep.subr.mxu0 0.0
      %2970 = vmatpush2.msra.mxu0 0.0
      %2971 = vmatprep.subr.mxu0 0.0
      %2972 = vmatpush2.msra.mxu0 0.0
      %2973 = vmatprep.subr.mxu0 0.0
      %2974 = vmatpush2.msra.mxu0 0.0
      %2975 = vmatprep.subr.mxu0 0.0
      %2976 = vmatpush2.msra.mxu0 0.0
      %2977 = vmatprep.subr.mxu0 0.0
      %2978 = vmatpush2.msra.mxu0 0.0
      %2979 = vmatprep.subr.mxu0 0.0
      %2980 = vmatpush2.msra.mxu0 0.0
      %2981 = vmatprep.subr.mxu0 0.0
      %2982 = vmatpush2.msra.mxu0 0.0
      %2983 = vmatprep.subr.mxu0 0.0
      %2984 = vmatpush2.msra.mxu0 0.0
      %2985 = vmatprep.subr.mxu0 0.0
      %2986 = vmatpush2.msra.mxu0 0.0
      %2987 = vmatprep.mubr.f32.mxu0 0.0
      %2988 = vmatmul.mubr.f32.gmra.mxu0 %v2912
      %v2989 = vpop.f32.mrf.mxu0
      %v2990 = vadd.f32 0.0, %v2989
      %v2991 = vpop.f32.mrf.mxu0
      %v2992 = vadd.f32 0.0, %v2991
      %2993 = vmatprep.mubr.f32.mxu0 0.0
      %2994 = vmatmul.mubr.f32.gmra.mxu0 %v2915
      %v2995 = vpop.f32.mrf.mxu0
      %v2996 = vadd.f32 0.0, %v2995
      %v2997 = vpop.f32.mrf.mxu0
      %v2998 = vadd.f32 0.0, %v2997
      %2999 = vdwg.mxu0
      %3000 = vmatprep.subr.mxu0 0.0
      %3001 = vmatpush1.msra.mxu0 0.0
      %3002 = vmatprep.subr.mxu0 0.0
      %3003 = vmatpush1.msra.mxu0 0.0
      %3004 = vmatprep.subr.mxu0 0.0
      %3005 = vmatpush1.msra.mxu0 0.0
      %3006 = vmatprep.subr.mxu0 0.0
      %3007 = vmatpush1.msra.mxu0 0.0
      %3008 = vmatprep.subr.mxu0 0.0
      %3009 = vmatpush1.msra.mxu0 0.0
      %3010 = vmatprep.subr.mxu0 0.0
      %3011 = vmatpush1.msra.mxu0 0.0
      %3012 = vmatprep.subr.mxu0 0.0
      %3013 = vmatpush1.msra.mxu0 0.0
      %3014 = vmatprep.subr.mxu0 0.0
      %3015 = vmatpush1.msra.mxu0 0.0
      %3016 = vmatprep.subr.mxu0 0.0
      %3017 = vmatpush1.msra.mxu0 0.0
      %3018 = vmatprep.subr.mxu0 0.0
      %3019 = vmatpush1.msra.mxu0 0.0
      %3020 = vmatprep.subr.mxu0 0.0
      %3021 = vmatpush1.msra.mxu0 0.0
      %3022 = vmatprep.subr.mxu0 0.0
      %3023 = vmatpush1.msra.mxu0 0.0
      %3024 = vmatprep.subr.mxu0 0.0
      %3025 = vmatpush1.msra.mxu0 0.0
      %3026 = vmatprep.subr.mxu0 0.0
      %3027 = vmatpush1.msra.mxu0 0.0
      %3028 = vmatprep.subr.mxu0 0.0
      %3029 = vmatpush1.msra.mxu0 0.0
      %3030 = vmatprep.subr.mxu0 0.0
      %3031 = vmatpush1.msra.mxu0 %v2921
      %3032 = vmatprep.subr.mxu0 0.0
      %3033 = vmatpush2.msra.mxu0 0.0
      %3034 = vmatprep.subr.mxu0 0.0
      %3035 = vmatpush2.msra.mxu0 0.0
      %3036 = vmatprep.subr.mxu0 0.0
      %3037 = vmatpush2.msra.mxu0 0.0
      %3038 = vmatprep.subr.mxu0 0.0
      %3039 = vmatpush2.msra.mxu0 0.0
      %3040 = vmatprep.subr.mxu0 0.0
      %3041 = vmatpush2.msra.mxu0 0.0
      %3042 = vmatprep.subr.mxu0 0.0
      %3043 = vmatpush2.msra.mxu0 0.0
      %3044 = vmatprep.subr.mxu0 0.0
      %3045 = vmatpush2.msra.mxu0 0.0
      %3046 = vmatprep.subr.mxu0 0.0
      %3047 = vmatpush2.msra.mxu0 0.0
      %3048 = vmatprep.subr.mxu0 0.0
      %3049 = vmatpush2.msra.mxu0 0.0
      %3050 = vmatprep.subr.mxu0 0.0
      %3051 = vmatpush2.msra.mxu0 0.0
      %3052 = vmatprep.subr.mxu0 0.0
      %3053 = vmatpush2.msra.mxu0 0.0
      %3054 = vmatprep.subr.mxu0 0.0
      %3055 = vmatpush2.msra.mxu0 0.0
      %3056 = vmatprep.subr.mxu0 0.0
      %3057 = vmatpush2.msra.mxu0 0.0
      %3058 = vmatprep.subr.mxu0 0.0
      %3059 = vmatpush2.msra.mxu0 0.0
      %3060 = vmatprep.subr.mxu0 0.0
      %3061 = vmatpush2.msra.mxu0 0.0
      %3062 = vmatprep.subr.mxu0 0.0
      %3063 = vmatpush2.msra.mxu0 0.0
      %3064 = vmatprep.mubr.f32.mxu0 0.0
      %3065 = vmatmul.mubr.f32.gmra.mxu0 %v2912
      %v3066 = vpop.f32.mrf.mxu0
      %v3067 = vadd.f32 0.0, %v3066
      %v3068 = vpop.f32.mrf.mxu0
      %3069 = vmatprep.mubr.f32.mxu0 0.0
      %3070 = vmatmul.mubr.f32.gmra.mxu0 %v2915
      %v3071 = vpop.f32.mrf.mxu0
      %v3072 = vadd.f32 0.0, %v3071
      %v3073 = vpop.f32.mrf.mxu0
      %3074 = vdwg.mxu0
      %v3075 = vadd.f32 %v2890, %v2990
      %v3076 = vadd.f32 %v2891, %v2992
      %v3077 = vadd.f32 %v2892, %v3067
      %v3078 = vadd.f32 %v2893, %v2996
      %v3079 = vadd.f32 %v2894, %v2998
      %v3080 = vadd.f32 %v2895, %v3072
      %s3081 = scalar_lea.vmem %s2, 208
      %v3082 = vld [vmem:[%s3081] sm:$0xff]
      %v3083 = vld [vmem:[%s3081 + $0x8] sm:$0xff]
      %3084 = vrot.lane.b32.xlu0 %v696, 67
      %v3085 = vpop.permute.xlu0 %3084
      %3086 = vrot.lane.b32.xlu0 %v705, 67
      %v3087 = vpop.permute.xlu0 %3086
      %3088 = vrot.lane.b32.xlu0 %v697, 67
      %v3089 = vpop.permute.xlu0 %3088
      %3090 = vrot.lane.b32.xlu0 %v1603, 67
      %v3091 = vpop.permute.xlu0 %3090
      %vm3092 = vcmask 547840
      %v3093 = vsel %vm3092, %v3085, %v3087
      %v3094 = vsel %vm3092, %v3087, %v3089
      %v3095 = vsel %vm3092, %v3089, %v3091
      %v3097 = vsel %vm715, %v3082, 0
      %v3100 = vsel %vm715, %v3083, 0
      %v3102 = vsel %vm722, %v3093, 0
      %v3104 = vsel %vm722, %v3094, 0
      %v3106 = vsel %vm722, %v3095, 0
      %3108 = vmatprep.subr.mxu0 0.0
      %3109 = vmatpush1.msra.mxu0 0.0
      %3110 = vmatprep.subr.mxu0 0.0
      %3111 = vmatpush1.msra.mxu0 0.0
      %3112 = vmatprep.subr.mxu0 0.0
      %3113 = vmatpush1.msra.mxu0 0.0
      %3114 = vmatprep.subr.mxu0 0.0
      %3115 = vmatpush1.msra.mxu0 0.0
      %3116 = vmatprep.subr.mxu0 0.0
      %3117 = vmatpush1.msra.mxu0 0.0
      %3118 = vmatprep.subr.mxu0 0.0
      %3119 = vmatpush1.msra.mxu0 0.0
      %3120 = vmatprep.subr.mxu0 0.0
      %3121 = vmatpush1.msra.mxu0 0.0
      %3122 = vmatprep.subr.mxu0 0.0
      %3123 = vmatpush1.msra.mxu0 0.0
      %3124 = vmatprep.subr.mxu0 0.0
      %3125 = vmatpush1.msra.mxu0 0.0
      %3126 = vmatprep.subr.mxu0 0.0
      %3127 = vmatpush1.msra.mxu0 0.0
      %3128 = vmatprep.subr.mxu0 0.0
      %3129 = vmatpush1.msra.mxu0 0.0
      %3130 = vmatprep.subr.mxu0 0.0
      %3131 = vmatpush1.msra.mxu0 0.0
      %3132 = vmatprep.subr.mxu0 0.0
      %3133 = vmatpush1.msra.mxu0 0.0
      %3134 = vmatprep.subr.mxu0 0.0
      %3135 = vmatpush1.msra.mxu0 0.0
      %3136 = vmatprep.subr.mxu0 0.0
      %3137 = vmatpush1.msra.mxu0 0.0
      %3138 = vmatprep.subr.mxu0 %v3104
      %3139 = vmatpush1.msra.mxu0 %v3102
      %3140 = vmatprep.subr.mxu0 0.0
      %3141 = vmatpush2.msra.mxu0 0.0
      %3142 = vmatprep.subr.mxu0 0.0
      %3143 = vmatpush2.msra.mxu0 0.0
      %3144 = vmatprep.subr.mxu0 0.0
      %3145 = vmatpush2.msra.mxu0 0.0
      %3146 = vmatprep.subr.mxu0 0.0
      %3147 = vmatpush2.msra.mxu0 0.0
      %3148 = vmatprep.subr.mxu0 0.0
      %3149 = vmatpush2.msra.mxu0 0.0
      %3150 = vmatprep.subr.mxu0 0.0
      %3151 = vmatpush2.msra.mxu0 0.0
      %3152 = vmatprep.subr.mxu0 0.0
      %3153 = vmatpush2.msra.mxu0 0.0
      %3154 = vmatprep.subr.mxu0 0.0
      %3155 = vmatpush2.msra.mxu0 0.0
      %3156 = vmatprep.subr.mxu0 0.0
      %3157 = vmatpush2.msra.mxu0 0.0
      %3158 = vmatprep.subr.mxu0 0.0
      %3159 = vmatpush2.msra.mxu0 0.0
      %3160 = vmatprep.subr.mxu0 0.0
      %3161 = vmatpush2.msra.mxu0 0.0
      %3162 = vmatprep.subr.mxu0 0.0
      %3163 = vmatpush2.msra.mxu0 0.0
      %3164 = vmatprep.subr.mxu0 0.0
      %3165 = vmatpush2.msra.mxu0 0.0
      %3166 = vmatprep.subr.mxu0 0.0
      %3167 = vmatpush2.msra.mxu0 0.0
      %3168 = vmatprep.subr.mxu0 0.0
      %3169 = vmatpush2.msra.mxu0 0.0
      %3170 = vmatprep.subr.mxu0 0.0
      %3171 = vmatpush2.msra.mxu0 0.0
      %3172 = vmatprep.mubr.f32.mxu0 0.0
      %3173 = vmatmul.mubr.f32.gmra.mxu0 %v3097
      %v3174 = vpop.f32.mrf.mxu0
      %v3175 = vadd.f32 0.0, %v3174
      %v3176 = vpop.f32.mrf.mxu0
      %v3177 = vadd.f32 0.0, %v3176
      %3178 = vmatprep.mubr.f32.mxu0 0.0
      %3179 = vmatmul.mubr.f32.gmra.mxu0 %v3100
      %v3180 = vpop.f32.mrf.mxu0
      %v3181 = vadd.f32 0.0, %v3180
      %v3182 = vpop.f32.mrf.mxu0
      %v3183 = vadd.f32 0.0, %v3182
      %3184 = vdwg.mxu0
      %3185 = vmatprep.subr.mxu0 0.0
      %3186 = vmatpush1.msra.mxu0 0.0
      %3187 = vmatprep.subr.mxu0 0.0
      %3188 = vmatpush1.msra.mxu0 0.0
      %3189 = vmatprep.subr.mxu0 0.0
      %3190 = vmatpush1.msra.mxu0 0.0
      %3191 = vmatprep.subr.mxu0 0.0
      %3192 = vmatpush1.msra.mxu0 0.0
      %3193 = vmatprep.subr.mxu0 0.0
      %3194 = vmatpush1.msra.mxu0 0.0
      %3195 = vmatprep.subr.mxu0 0.0
      %3196 = vmatpush1.msra.mxu0 0.0
      %3197 = vmatprep.subr.mxu0 0.0
      %3198 = vmatpush1.msra.mxu0 0.0
      %3199 = vmatprep.subr.mxu0 0.0
      %3200 = vmatpush1.msra.mxu0 0.0
      %3201 = vmatprep.subr.mxu0 0.0
      %3202 = vmatpush1.msra.mxu0 0.0
      %3203 = vmatprep.subr.mxu0 0.0
      %3204 = vmatpush1.msra.mxu0 0.0
      %3205 = vmatprep.subr.mxu0 0.0
      %3206 = vmatpush1.msra.mxu0 0.0
      %3207 = vmatprep.subr.mxu0 0.0
      %3208 = vmatpush1.msra.mxu0 0.0
      %3209 = vmatprep.subr.mxu0 0.0
      %3210 = vmatpush1.msra.mxu0 0.0
      %3211 = vmatprep.subr.mxu0 0.0
      %3212 = vmatpush1.msra.mxu0 0.0
      %3213 = vmatprep.subr.mxu0 0.0
      %3214 = vmatpush1.msra.mxu0 0.0
      %3215 = vmatprep.subr.mxu0 0.0
      %3216 = vmatpush1.msra.mxu0 %v3106
      %3217 = vmatprep.subr.mxu0 0.0
      %3218 = vmatpush2.msra.mxu0 0.0
      %3219 = vmatprep.subr.mxu0 0.0
      %3220 = vmatpush2.msra.mxu0 0.0
      %3221 = vmatprep.subr.mxu0 0.0
      %3222 = vmatpush2.msra.mxu0 0.0
      %3223 = vmatprep.subr.mxu0 0.0
      %3224 = vmatpush2.msra.mxu0 0.0
      %3225 = vmatprep.subr.mxu0 0.0
      %3226 = vmatpush2.msra.mxu0 0.0
      %3227 = vmatprep.subr.mxu0 0.0
      %3228 = vmatpush2.msra.mxu0 0.0
      %3229 = vmatprep.subr.mxu0 0.0
      %3230 = vmatpush2.msra.mxu0 0.0
      %3231 = vmatprep.subr.mxu0 0.0
      %3232 = vmatpush2.msra.mxu0 0.0
      %3233 = vmatprep.subr.mxu0 0.0
      %3234 = vmatpush2.msra.mxu0 0.0
      %3235 = vmatprep.subr.mxu0 0.0
      %3236 = vmatpush2.msra.mxu0 0.0
      %3237 = vmatprep.subr.mxu0 0.0
      %3238 = vmatpush2.msra.mxu0 0.0
      %3239 = vmatprep.subr.mxu0 0.0
      %3240 = vmatpush2.msra.mxu0 0.0
      %3241 = vmatprep.subr.mxu0 0.0
      %3242 = vmatpush2.msra.mxu0 0.0
      %3243 = vmatprep.subr.mxu0 0.0
      %3244 = vmatpush2.msra.mxu0 0.0
      %3245 = vmatprep.subr.mxu0 0.0
      %3246 = vmatpush2.msra.mxu0 0.0
      %3247 = vmatprep.subr.mxu0 0.0
      %3248 = vmatpush2.msra.mxu0 0.0
      %3249 = vmatprep.mubr.f32.mxu0 0.0
      %3250 = vmatmul.mubr.f32.gmra.mxu0 %v3097
      %v3251 = vpop.f32.mrf.mxu0
      %v3252 = vadd.f32 0.0, %v3251
      %v3253 = vpop.f32.mrf.mxu0
      %3254 = vmatprep.mubr.f32.mxu0 0.0
      %3255 = vmatmul.mubr.f32.gmra.mxu0 %v3100
      %v3256 = vpop.f32.mrf.mxu0
      %v3257 = vadd.f32 0.0, %v3256
      %v3258 = vpop.f32.mrf.mxu0
      %3259 = vdwg.mxu0
      %v3260 = vadd.f32 %v3075, %v3175
      %v3261 = vadd.f32 %v3076, %v3177
      %v3262 = vadd.f32 %v3077, %v3252
      %v3263 = vadd.f32 %v3078, %v3181
      %v3264 = vadd.f32 %v3079, %v3183
      %v3265 = vadd.f32 %v3080, %v3257
      %s3266 = scalar_lea.vmem %s2, 224
      %v3267 = vld [vmem:[%s3266] sm:$0xff]
      %v3268 = vld [vmem:[%s3266 + $0x8] sm:$0xff]
      %3269 = vrot.lane.b32.xlu0 %v696, 66
      %v3270 = vpop.permute.xlu0 %3269
      %3271 = vrot.lane.b32.xlu0 %v705, 66
      %v3272 = vpop.permute.xlu0 %3271
      %3273 = vrot.lane.b32.xlu0 %v697, 66
      %v3274 = vpop.permute.xlu0 %3273
      %3275 = vrot.lane.b32.xlu0 %v1603, 66
      %v3276 = vpop.permute.xlu0 %3275
      %vm3277 = vcmask 539648
      %v3278 = vsel %vm3277, %v3270, %v3272
      %v3279 = vsel %vm3277, %v3272, %v3274
      %v3280 = vsel %vm3277, %v3274, %v3276
      %v3282 = vsel %vm715, %v3267, 0
      %v3285 = vsel %vm715, %v3268, 0
      %v3287 = vsel %vm722, %v3278, 0
      %v3289 = vsel %vm722, %v3279, 0
      %v3291 = vsel %vm722, %v3280, 0
      %3293 = vmatprep.subr.mxu0 0.0
      %3294 = vmatpush1.msra.mxu0 0.0
      %3295 = vmatprep.subr.mxu0 0.0
      %3296 = vmatpush1.msra.mxu0 0.0
      %3297 = vmatprep.subr.mxu0 0.0
      %3298 = vmatpush1.msra.mxu0 0.0
      %3299 = vmatprep.subr.mxu0 0.0
      %3300 = vmatpush1.msra.mxu0 0.0
      %3301 = vmatprep.subr.mxu0 0.0
      %3302 = vmatpush1.msra.mxu0 0.0
      %3303 = vmatprep.subr.mxu0 0.0
      %3304 = vmatpush1.msra.mxu0 0.0
      %3305 = vmatprep.subr.mxu0 0.0
      %3306 = vmatpush1.msra.mxu0 0.0
      %3307 = vmatprep.subr.mxu0 0.0
      %3308 = vmatpush1.msra.mxu0 0.0
      %3309 = vmatprep.subr.mxu0 0.0
      %3310 = vmatpush1.msra.mxu0 0.0
      %3311 = vmatprep.subr.mxu0 0.0
      %3312 = vmatpush1.msra.mxu0 0.0
      %3313 = vmatprep.subr.mxu0 0.0
      %3314 = vmatpush1.msra.mxu0 0.0
      %3315 = vmatprep.subr.mxu0 0.0
      %3316 = vmatpush1.msra.mxu0 0.0
      %3317 = vmatprep.subr.mxu0 0.0
      %3318 = vmatpush1.msra.mxu0 0.0
      %3319 = vmatprep.subr.mxu0 0.0
      %3320 = vmatpush1.msra.mxu0 0.0
      %3321 = vmatprep.subr.mxu0 0.0
      %3322 = vmatpush1.msra.mxu0 0.0
      %3323 = vmatprep.subr.mxu0 %v3289
      %3324 = vmatpush1.msra.mxu0 %v3287
      %3325 = vmatprep.subr.mxu0 0.0
      %3326 = vmatpush2.msra.mxu0 0.0
      %3327 = vmatprep.subr.mxu0 0.0
      %3328 = vmatpush2.msra.mxu0 0.0
      %3329 = vmatprep.subr.mxu0 0.0
      %3330 = vmatpush2.msra.mxu0 0.0
      %3331 = vmatprep.subr.mxu0 0.0
      %3332 = vmatpush2.msra.mxu0 0.0
      %3333 = vmatprep.subr.mxu0 0.0
      %3334 = vmatpush2.msra.mxu0 0.0
      %3335 = vmatprep.subr.mxu0 0.0
      %3336 = vmatpush2.msra.mxu0 0.0
      %3337 = vmatprep.subr.mxu0 0.0
      %3338 = vmatpush2.msra.mxu0 0.0
      %3339 = vmatprep.subr.mxu0 0.0
      %3340 = vmatpush2.msra.mxu0 0.0
      %3341 = vmatprep.subr.mxu0 0.0
      %3342 = vmatpush2.msra.mxu0 0.0
      %3343 = vmatprep.subr.mxu0 0.0
      %3344 = vmatpush2.msra.mxu0 0.0
      %3345 = vmatprep.subr.mxu0 0.0
      %3346 = vmatpush2.msra.mxu0 0.0
      %3347 = vmatprep.subr.mxu0 0.0
      %3348 = vmatpush2.msra.mxu0 0.0
      %3349 = vmatprep.subr.mxu0 0.0
      %3350 = vmatpush2.msra.mxu0 0.0
      %3351 = vmatprep.subr.mxu0 0.0
      %3352 = vmatpush2.msra.mxu0 0.0
      %3353 = vmatprep.subr.mxu0 0.0
      %3354 = vmatpush2.msra.mxu0 0.0
      %3355 = vmatprep.subr.mxu0 0.0
      %3356 = vmatpush2.msra.mxu0 0.0
      %3357 = vmatprep.mubr.f32.mxu0 0.0
      %3358 = vmatmul.mubr.f32.gmra.mxu0 %v3282
      %v3359 = vpop.f32.mrf.mxu0
      %v3360 = vadd.f32 0.0, %v3359
      %v3361 = vpop.f32.mrf.mxu0
      %v3362 = vadd.f32 0.0, %v3361
      %3363 = vmatprep.mubr.f32.mxu0 0.0
      %3364 = vmatmul.mubr.f32.gmra.mxu0 %v3285
      %v3365 = vpop.f32.mrf.mxu0
      %v3366 = vadd.f32 0.0, %v3365
      %v3367 = vpop.f32.mrf.mxu0
      %v3368 = vadd.f32 0.0, %v3367
      %3369 = vdwg.mxu0
      %3370 = vmatprep.subr.mxu0 0.0
      %3371 = vmatpush1.msra.mxu0 0.0
      %3372 = vmatprep.subr.mxu0 0.0
      %3373 = vmatpush1.msra.mxu0 0.0
      %3374 = vmatprep.subr.mxu0 0.0
      %3375 = vmatpush1.msra.mxu0 0.0
      %3376 = vmatprep.subr.mxu0 0.0
      %3377 = vmatpush1.msra.mxu0 0.0
      %3378 = vmatprep.subr.mxu0 0.0
      %3379 = vmatpush1.msra.mxu0 0.0
      %3380 = vmatprep.subr.mxu0 0.0
      %3381 = vmatpush1.msra.mxu0 0.0
      %3382 = vmatprep.subr.mxu0 0.0
      %3383 = vmatpush1.msra.mxu0 0.0
      %3384 = vmatprep.subr.mxu0 0.0
      %3385 = vmatpush1.msra.mxu0 0.0
      %3386 = vmatprep.subr.mxu0 0.0
      %3387 = vmatpush1.msra.mxu0 0.0
      %3388 = vmatprep.subr.mxu0 0.0
      %3389 = vmatpush1.msra.mxu0 0.0
      %3390 = vmatprep.subr.mxu0 0.0
      %3391 = vmatpush1.msra.mxu0 0.0
      %3392 = vmatprep.subr.mxu0 0.0
      %3393 = vmatpush1.msra.mxu0 0.0
      %3394 = vmatprep.subr.mxu0 0.0
      %3395 = vmatpush1.msra.mxu0 0.0
      %3396 = vmatprep.subr.mxu0 0.0
      %3397 = vmatpush1.msra.mxu0 0.0
      %3398 = vmatprep.subr.mxu0 0.0
      %3399 = vmatpush1.msra.mxu0 0.0
      %3400 = vmatprep.subr.mxu0 0.0
      %3401 = vmatpush1.msra.mxu0 %v3291
      %3402 = vmatprep.subr.mxu0 0.0
      %3403 = vmatpush2.msra.mxu0 0.0
      %3404 = vmatprep.subr.mxu0 0.0
      %3405 = vmatpush2.msra.mxu0 0.0
      %3406 = vmatprep.subr.mxu0 0.0
      %3407 = vmatpush2.msra.mxu0 0.0
      %3408 = vmatprep.subr.mxu0 0.0
      %3409 = vmatpush2.msra.mxu0 0.0
      %3410 = vmatprep.subr.mxu0 0.0
      %3411 = vmatpush2.msra.mxu0 0.0
      %3412 = vmatprep.subr.mxu0 0.0
      %3413 = vmatpush2.msra.mxu0 0.0
      %3414 = vmatprep.subr.mxu0 0.0
      %3415 = vmatpush2.msra.mxu0 0.0
      %3416 = vmatprep.subr.mxu0 0.0
      %3417 = vmatpush2.msra.mxu0 0.0
      %3418 = vmatprep.subr.mxu0 0.0
      %3419 = vmatpush2.msra.mxu0 0.0
      %3420 = vmatprep.subr.mxu0 0.0
      %3421 = vmatpush2.msra.mxu0 0.0
      %3422 = vmatprep.subr.mxu0 0.0
      %3423 = vmatpush2.msra.mxu0 0.0
      %3424 = vmatprep.subr.mxu0 0.0
      %3425 = vmatpush2.msra.mxu0 0.0
      %3426 = vmatprep.subr.mxu0 0.0
      %3427 = vmatpush2.msra.mxu0 0.0
      %3428 = vmatprep.subr.mxu0 0.0
      %3429 = vmatpush2.msra.mxu0 0.0
      %3430 = vmatprep.subr.mxu0 0.0
      %3431 = vmatpush2.msra.mxu0 0.0
      %3432 = vmatprep.subr.mxu0 0.0
      %3433 = vmatpush2.msra.mxu0 0.0
      %3434 = vmatprep.mubr.f32.mxu0 0.0
      %3435 = vmatmul.mubr.f32.gmra.mxu0 %v3282
      %v3436 = vpop.f32.mrf.mxu0
      %v3437 = vadd.f32 0.0, %v3436
      %v3438 = vpop.f32.mrf.mxu0
      %3439 = vmatprep.mubr.f32.mxu0 0.0
      %3440 = vmatmul.mubr.f32.gmra.mxu0 %v3285
      %v3441 = vpop.f32.mrf.mxu0
      %v3442 = vadd.f32 0.0, %v3441
      %v3443 = vpop.f32.mrf.mxu0
      %3444 = vdwg.mxu0
      %v3445 = vadd.f32 %v3260, %v3360
      %v3446 = vadd.f32 %v3261, %v3362
      %v3447 = vadd.f32 %v3262, %v3437
      %v3448 = vadd.f32 %v3263, %v3366
      %v3449 = vadd.f32 %v3264, %v3368
      %v3450 = vadd.f32 %v3265, %v3442
      %s3451 = scalar_lea.vmem %s2, 240
      %v3452 = vld [vmem:[%s3451] sm:$0xff]
      %v3453 = vld [vmem:[%s3451 + $0x8] sm:$0xff]
      %3454 = vrot.lane.b32.xlu0 %v696, 50
      %v3455 = vpop.permute.xlu0 %3454
      %3456 = vrot.lane.b32.xlu0 %v705, 50
      %v3457 = vpop.permute.xlu0 %3456
      %3458 = vrot.lane.b32.xlu0 %v697, 50
      %v3459 = vpop.permute.xlu0 %3458
      %3460 = vrot.lane.b32.xlu0 %v1603, 50
      %v3461 = vpop.permute.xlu0 %3460
      %vm3462 = vcmask 408576
      %v3463 = vsel %vm3462, %v3455, %v3457
      %v3464 = vsel %vm3462, %v3457, %v3459
      %v3465 = vsel %vm3462, %v3459, %v3461
      %v3467 = vsel %vm715, %v3452, 0
      %v3470 = vsel %vm715, %v3453, 0
      %v3472 = vsel %vm722, %v3463, 0
      %v3474 = vsel %vm722, %v3464, 0
      %v3476 = vsel %vm722, %v3465, 0
      %3478 = vmatprep.subr.mxu0 0.0
      %3479 = vmatpush1.msra.mxu0 0.0
      %3480 = vmatprep.subr.mxu0 0.0
      %3481 = vmatpush1.msra.mxu0 0.0
      %3482 = vmatprep.subr.mxu0 0.0
      %3483 = vmatpush1.msra.mxu0 0.0
      %3484 = vmatprep.subr.mxu0 0.0
      %3485 = vmatpush1.msra.mxu0 0.0
      %3486 = vmatprep.subr.mxu0 0.0
      %3487 = vmatpush1.msra.mxu0 0.0
      %3488 = vmatprep.subr.mxu0 0.0
      %3489 = vmatpush1.msra.mxu0 0.0
      %3490 = vmatprep.subr.mxu0 0.0
      %3491 = vmatpush1.msra.mxu0 0.0
      %3492 = vmatprep.subr.mxu0 0.0
      %3493 = vmatpush1.msra.mxu0 0.0
      %3494 = vmatprep.subr.mxu0 0.0
      %3495 = vmatpush1.msra.mxu0 0.0
      %3496 = vmatprep.subr.mxu0 0.0
      %3497 = vmatpush1.msra.mxu0 0.0
      %3498 = vmatprep.subr.mxu0 0.0
      %3499 = vmatpush1.msra.mxu0 0.0
      %3500 = vmatprep.subr.mxu0 0.0
      %3501 = vmatpush1.msra.mxu0 0.0
      %3502 = vmatprep.subr.mxu0 0.0
      %3503 = vmatpush1.msra.mxu0 0.0
      %3504 = vmatprep.subr.mxu0 0.0
      %3505 = vmatpush1.msra.mxu0 0.0
      %3506 = vmatprep.subr.mxu0 0.0
      %3507 = vmatpush1.msra.mxu0 0.0
      %3508 = vmatprep.subr.mxu0 %v3474
      %3509 = vmatpush1.msra.mxu0 %v3472
      %3510 = vmatprep.subr.mxu0 0.0
      %3511 = vmatpush2.msra.mxu0 0.0
      %3512 = vmatprep.subr.mxu0 0.0
      %3513 = vmatpush2.msra.mxu0 0.0
      %3514 = vmatprep.subr.mxu0 0.0
      %3515 = vmatpush2.msra.mxu0 0.0
      %3516 = vmatprep.subr.mxu0 0.0
      %3517 = vmatpush2.msra.mxu0 0.0
      %3518 = vmatprep.subr.mxu0 0.0
      %3519 = vmatpush2.msra.mxu0 0.0
      %3520 = vmatprep.subr.mxu0 0.0
      %3521 = vmatpush2.msra.mxu0 0.0
      %3522 = vmatprep.subr.mxu0 0.0
      %3523 = vmatpush2.msra.mxu0 0.0
      %3524 = vmatprep.subr.mxu0 0.0
      %3525 = vmatpush2.msra.mxu0 0.0
      %3526 = vmatprep.subr.mxu0 0.0
      %3527 = vmatpush2.msra.mxu0 0.0
      %3528 = vmatprep.subr.mxu0 0.0
      %3529 = vmatpush2.msra.mxu0 0.0
      %3530 = vmatprep.subr.mxu0 0.0
      %3531 = vmatpush2.msra.mxu0 0.0
      %3532 = vmatprep.subr.mxu0 0.0
      %3533 = vmatpush2.msra.mxu0 0.0
      %3534 = vmatprep.subr.mxu0 0.0
      %3535 = vmatpush2.msra.mxu0 0.0
      %3536 = vmatprep.subr.mxu0 0.0
      %3537 = vmatpush2.msra.mxu0 0.0
      %3538 = vmatprep.subr.mxu0 0.0
      %3539 = vmatpush2.msra.mxu0 0.0
      %3540 = vmatprep.subr.mxu0 0.0
      %3541 = vmatpush2.msra.mxu0 0.0
      %3542 = vmatprep.mubr.f32.mxu0 0.0
      %3543 = vmatmul.mubr.f32.gmra.mxu0 %v3467
      %v3544 = vpop.f32.mrf.mxu0
      %v3545 = vadd.f32 0.0, %v3544
      %v3546 = vpop.f32.mrf.mxu0
      %v3547 = vadd.f32 0.0, %v3546
      %3548 = vmatprep.mubr.f32.mxu0 0.0
      %3549 = vmatmul.mubr.f32.gmra.mxu0 %v3470
      %v3550 = vpop.f32.mrf.mxu0
      %v3551 = vadd.f32 0.0, %v3550
      %v3552 = vpop.f32.mrf.mxu0
      %v3553 = vadd.f32 0.0, %v3552
      %3554 = vdwg.mxu0
      %3555 = vmatprep.subr.mxu0 0.0
      %3556 = vmatpush1.msra.mxu0 0.0
      %3557 = vmatprep.subr.mxu0 0.0
      %3558 = vmatpush1.msra.mxu0 0.0
      %3559 = vmatprep.subr.mxu0 0.0
      %3560 = vmatpush1.msra.mxu0 0.0
      %3561 = vmatprep.subr.mxu0 0.0
      %3562 = vmatpush1.msra.mxu0 0.0
      %3563 = vmatprep.subr.mxu0 0.0
      %3564 = vmatpush1.msra.mxu0 0.0
      %3565 = vmatprep.subr.mxu0 0.0
      %3566 = vmatpush1.msra.mxu0 0.0
      %3567 = vmatprep.subr.mxu0 0.0
      %3568 = vmatpush1.msra.mxu0 0.0
      %3569 = vmatprep.subr.mxu0 0.0
      %3570 = vmatpush1.msra.mxu0 0.0
      %3571 = vmatprep.subr.mxu0 0.0
      %3572 = vmatpush1.msra.mxu0 0.0
      %3573 = vmatprep.subr.mxu0 0.0
      %3574 = vmatpush1.msra.mxu0 0.0
      %3575 = vmatprep.subr.mxu0 0.0
      %3576 = vmatpush1.msra.mxu0 0.0
      %3577 = vmatprep.subr.mxu0 0.0
      %3578 = vmatpush1.msra.mxu0 0.0
      %3579 = vmatprep.subr.mxu0 0.0
      %3580 = vmatpush1.msra.mxu0 0.0
      %3581 = vmatprep.subr.mxu0 0.0
      %3582 = vmatpush1.msra.mxu0 0.0
      %3583 = vmatprep.subr.mxu0 0.0
      %3584 = vmatpush1.msra.mxu0 0.0
      %3585 = vmatprep.subr.mxu0 0.0
      %3586 = vmatpush1.msra.mxu0 %v3476
      %3587 = vmatprep.subr.mxu0 0.0
      %3588 = vmatpush2.msra.mxu0 0.0
      %3589 = vmatprep.subr.mxu0 0.0
      %3590 = vmatpush2.msra.mxu0 0.0
      %3591 = vmatprep.subr.mxu0 0.0
      %3592 = vmatpush2.msra.mxu0 0.0
      %3593 = vmatprep.subr.mxu0 0.0
      %3594 = vmatpush2.msra.mxu0 0.0
      %3595 = vmatprep.subr.mxu0 0.0
      %3596 = vmatpush2.msra.mxu0 0.0
      %3597 = vmatprep.subr.mxu0 0.0
      %3598 = vmatpush2.msra.mxu0 0.0
      %3599 = vmatprep.subr.mxu0 0.0
      %3600 = vmatpush2.msra.mxu0 0.0
      %3601 = vmatprep.subr.mxu0 0.0
      %3602 = vmatpush2.msra.mxu0 0.0
      %3603 = vmatprep.subr.mxu0 0.0
      %3604 = vmatpush2.msra.mxu0 0.0
      %3605 = vmatprep.subr.mxu0 0.0
      %3606 = vmatpush2.msra.mxu0 0.0
      %3607 = vmatprep.subr.mxu0 0.0
      %3608 = vmatpush2.msra.mxu0 0.0
      %3609 = vmatprep.subr.mxu0 0.0
      %3610 = vmatpush2.msra.mxu0 0.0
      %3611 = vmatprep.subr.mxu0 0.0
      %3612 = vmatpush2.msra.mxu0 0.0
      %3613 = vmatprep.subr.mxu0 0.0
      %3614 = vmatpush2.msra.mxu0 0.0
      %3615 = vmatprep.subr.mxu0 0.0
      %3616 = vmatpush2.msra.mxu0 0.0
      %3617 = vmatprep.subr.mxu0 0.0
      %3618 = vmatpush2.msra.mxu0 0.0
      %3619 = vmatprep.mubr.f32.mxu0 0.0
      %3620 = vmatmul.mubr.f32.gmra.mxu0 %v3467
      %v3621 = vpop.f32.mrf.mxu0
      %v3622 = vadd.f32 0.0, %v3621
      %v3623 = vpop.f32.mrf.mxu0
      %3624 = vmatprep.mubr.f32.mxu0 0.0
      %3625 = vmatmul.mubr.f32.gmra.mxu0 %v3470
      %v3626 = vpop.f32.mrf.mxu0
      %v3627 = vadd.f32 0.0, %v3626
      %v3628 = vpop.f32.mrf.mxu0
      %3629 = vdwg.mxu0
      %v3630 = vadd.f32 %v3445, %v3545
      %v3631 = vadd.f32 %v3446, %v3547
      %v3632 = vadd.f32 %v3447, %v3622
      %v3633 = vadd.f32 %v3448, %v3551
      %v3634 = vadd.f32 %v3449, %v3553
      %v3635 = vadd.f32 %v3450, %v3627
      %s3636 = scalar_lea.vmem %s2, 256
      %v3637 = vld [vmem:[%s3636] sm:$0xff]
      %v3638 = vld [vmem:[%s3636 + $0x8] sm:$0xff]
      %3639 = vrot.lane.b32.xlu0 %v696, 49
      %v3640 = vpop.permute.xlu0 %3639
      %3641 = vrot.lane.b32.xlu0 %v705, 49
      %v3642 = vpop.permute.xlu0 %3641
      %3643 = vrot.lane.b32.xlu0 %v697, 49
      %v3644 = vpop.permute.xlu0 %3643
      %3645 = vrot.lane.b32.xlu0 %v1603, 49
      %v3646 = vpop.permute.xlu0 %3645
      %vm3647 = vcmask 400384
      %v3648 = vsel %vm3647, %v3640, %v3642
      %v3649 = vsel %vm3647, %v3642, %v3644
      %v3650 = vsel %vm3647, %v3644, %v3646
      %v3652 = vsel %vm715, %v3637, 0
      %v3655 = vsel %vm715, %v3638, 0
      %v3657 = vsel %vm722, %v3648, 0
      %v3659 = vsel %vm722, %v3649, 0
      %v3661 = vsel %vm722, %v3650, 0
      %3663 = vmatprep.subr.mxu0 0.0
      %3664 = vmatpush1.msra.mxu0 0.0
      %3665 = vmatprep.subr.mxu0 0.0
      %3666 = vmatpush1.msra.mxu0 0.0
      %3667 = vmatprep.subr.mxu0 0.0
      %3668 = vmatpush1.msra.mxu0 0.0
      %3669 = vmatprep.subr.mxu0 0.0
      %3670 = vmatpush1.msra.mxu0 0.0
      %3671 = vmatprep.subr.mxu0 0.0
      %3672 = vmatpush1.msra.mxu0 0.0
      %3673 = vmatprep.subr.mxu0 0.0
      %3674 = vmatpush1.msra.mxu0 0.0
      %3675 = vmatprep.subr.mxu0 0.0
      %3676 = vmatpush1.msra.mxu0 0.0
      %3677 = vmatprep.subr.mxu0 0.0
      %3678 = vmatpush1.msra.mxu0 0.0
      %3679 = vmatprep.subr.mxu0 0.0
      %3680 = vmatpush1.msra.mxu0 0.0
      %3681 = vmatprep.subr.mxu0 0.0
      %3682 = vmatpush1.msra.mxu0 0.0
      %3683 = vmatprep.subr.mxu0 0.0
      %3684 = vmatpush1.msra.mxu0 0.0
      %3685 = vmatprep.subr.mxu0 0.0
      %3686 = vmatpush1.msra.mxu0 0.0
      %3687 = vmatprep.subr.mxu0 0.0
      %3688 = vmatpush1.msra.mxu0 0.0
      %3689 = vmatprep.subr.mxu0 0.0
      %3690 = vmatpush1.msra.mxu0 0.0
      %3691 = vmatprep.subr.mxu0 0.0
      %3692 = vmatpush1.msra.mxu0 0.0
      %3693 = vmatprep.subr.mxu0 %v3659
      %3694 = vmatpush1.msra.mxu0 %v3657
      %3695 = vmatprep.subr.mxu0 0.0
      %3696 = vmatpush2.msra.mxu0 0.0
      %3697 = vmatprep.subr.mxu0 0.0
      %3698 = vmatpush2.msra.mxu0 0.0
      %3699 = vmatprep.subr.mxu0 0.0
      %3700 = vmatpush2.msra.mxu0 0.0
      %3701 = vmatprep.subr.mxu0 0.0
      %3702 = vmatpush2.msra.mxu0 0.0
      %3703 = vmatprep.subr.mxu0 0.0
      %3704 = vmatpush2.msra.mxu0 0.0
      %3705 = vmatprep.subr.mxu0 0.0
      %3706 = vmatpush2.msra.mxu0 0.0
      %3707 = vmatprep.subr.mxu0 0.0
      %3708 = vmatpush2.msra.mxu0 0.0
      %3709 = vmatprep.subr.mxu0 0.0
      %3710 = vmatpush2.msra.mxu0 0.0
      %3711 = vmatprep.subr.mxu0 0.0
      %3712 = vmatpush2.msra.mxu0 0.0
      %3713 = vmatprep.subr.mxu0 0.0
      %3714 = vmatpush2.msra.mxu0 0.0
      %3715 = vmatprep.subr.mxu0 0.0
      %3716 = vmatpush2.msra.mxu0 0.0
      %3717 = vmatprep.subr.mxu0 0.0
      %3718 = vmatpush2.msra.mxu0 0.0
      %3719 = vmatprep.subr.mxu0 0.0
      %3720 = vmatpush2.msra.mxu0 0.0
      %3721 = vmatprep.subr.mxu0 0.0
      %3722 = vmatpush2.msra.mxu0 0.0
      %3723 = vmatprep.subr.mxu0 0.0
      %3724 = vmatpush2.msra.mxu0 0.0
      %3725 = vmatprep.subr.mxu0 0.0
      %3726 = vmatpush2.msra.mxu0 0.0
      %3727 = vmatprep.mubr.f32.mxu0 0.0
      %3728 = vmatmul.mubr.f32.gmra.mxu0 %v3652
      %v3729 = vpop.f32.mrf.mxu0
      %v3730 = vadd.f32 0.0, %v3729
      %v3731 = vpop.f32.mrf.mxu0
      %v3732 = vadd.f32 0.0, %v3731
      %3733 = vmatprep.mubr.f32.mxu0 0.0
      %3734 = vmatmul.mubr.f32.gmra.mxu0 %v3655
      %v3735 = vpop.f32.mrf.mxu0
      %v3736 = vadd.f32 0.0, %v3735
      %v3737 = vpop.f32.mrf.mxu0
      %v3738 = vadd.f32 0.0, %v3737
      %3739 = vdwg.mxu0
      %3740 = vmatprep.subr.mxu0 0.0
      %3741 = vmatpush1.msra.mxu0 0.0
      %3742 = vmatprep.subr.mxu0 0.0
      %3743 = vmatpush1.msra.mxu0 0.0
      %3744 = vmatprep.subr.mxu0 0.0
      %3745 = vmatpush1.msra.mxu0 0.0
      %3746 = vmatprep.subr.mxu0 0.0
      %3747 = vmatpush1.msra.mxu0 0.0
      %3748 = vmatprep.subr.mxu0 0.0
      %3749 = vmatpush1.msra.mxu0 0.0
      %3750 = vmatprep.subr.mxu0 0.0
      %3751 = vmatpush1.msra.mxu0 0.0
      %3752 = vmatprep.subr.mxu0 0.0
      %3753 = vmatpush1.msra.mxu0 0.0
      %3754 = vmatprep.subr.mxu0 0.0
      %3755 = vmatpush1.msra.mxu0 0.0
      %3756 = vmatprep.subr.mxu0 0.0
      %3757 = vmatpush1.msra.mxu0 0.0
      %3758 = vmatprep.subr.mxu0 0.0
      %3759 = vmatpush1.msra.mxu0 0.0
      %3760 = vmatprep.subr.mxu0 0.0
      %3761 = vmatpush1.msra.mxu0 0.0
      %3762 = vmatprep.subr.mxu0 0.0
      %3763 = vmatpush1.msra.mxu0 0.0
      %3764 = vmatprep.subr.mxu0 0.0
      %3765 = vmatpush1.msra.mxu0 0.0
      %3766 = vmatprep.subr.mxu0 0.0
      %3767 = vmatpush1.msra.mxu0 0.0
      %3768 = vmatprep.subr.mxu0 0.0
      %3769 = vmatpush1.msra.mxu0 0.0
      %3770 = vmatprep.subr.mxu0 0.0
      %3771 = vmatpush1.msra.mxu0 %v3661
      %3772 = vmatprep.subr.mxu0 0.0
      %3773 = vmatpush2.msra.mxu0 0.0
      %3774 = vmatprep.subr.mxu0 0.0
      %3775 = vmatpush2.msra.mxu0 0.0
      %3776 = vmatprep.subr.mxu0 0.0
      %3777 = vmatpush2.msra.mxu0 0.0
      %3778 = vmatprep.subr.mxu0 0.0
      %3779 = vmatpush2.msra.mxu0 0.0
      %3780 = vmatprep.subr.mxu0 0.0
      %3781 = vmatpush2.msra.mxu0 0.0
      %3782 = vmatprep.subr.mxu0 0.0
      %3783 = vmatpush2.msra.mxu0 0.0
      %3784 = vmatprep.subr.mxu0 0.0
      %3785 = vmatpush2.msra.mxu0 0.0
      %3786 = vmatprep.subr.mxu0 0.0
      %3787 = vmatpush2.msra.mxu0 0.0
      %3788 = vmatprep.subr.mxu0 0.0
      %3789 = vmatpush2.msra.mxu0 0.0
      %3790 = vmatprep.subr.mxu0 0.0
      %3791 = vmatpush2.msra.mxu0 0.0
      %3792 = vmatprep.subr.mxu0 0.0
      %3793 = vmatpush2.msra.mxu0 0.0
      %3794 = vmatprep.subr.mxu0 0.0
      %3795 = vmatpush2.msra.mxu0 0.0
      %3796 = vmatprep.subr.mxu0 0.0
      %3797 = vmatpush2.msra.mxu0 0.0
      %3798 = vmatprep.subr.mxu0 0.0
      %3799 = vmatpush2.msra.mxu0 0.0
      %3800 = vmatprep.subr.mxu0 0.0
      %3801 = vmatpush2.msra.mxu0 0.0
      %3802 = vmatprep.subr.mxu0 0.0
      %3803 = vmatpush2.msra.mxu0 0.0
      %3804 = vmatprep.mubr.f32.mxu0 0.0
      %3805 = vmatmul.mubr.f32.gmra.mxu0 %v3652
      %v3806 = vpop.f32.mrf.mxu0
      %v3807 = vadd.f32 0.0, %v3806
      %v3808 = vpop.f32.mrf.mxu0
      %3809 = vmatprep.mubr.f32.mxu0 0.0
      %3810 = vmatmul.mubr.f32.gmra.mxu0 %v3655
      %v3811 = vpop.f32.mrf.mxu0
      %v3812 = vadd.f32 0.0, %v3811
      %v3813 = vpop.f32.mrf.mxu0
      %3814 = vdwg.mxu0
      %v3815 = vadd.f32 %v3630, %v3730
      %v3816 = vadd.f32 %v3631, %v3732
      %v3817 = vadd.f32 %v3632, %v3807
      %v3818 = vadd.f32 %v3633, %v3736
      %v3819 = vadd.f32 %v3634, %v3738
      %v3820 = vadd.f32 %v3635, %v3812
      %s3821 = scalar_lea.vmem %s2, 272
      %v3822 = vld [vmem:[%s3821] sm:$0xff]
      %v3823 = vld [vmem:[%s3821 + $0x8] sm:$0xff]
      %3824 = vrot.lane.b32.xlu0 %v696, 48
      %v3825 = vpop.permute.xlu0 %3824
      %3826 = vrot.lane.b32.xlu0 %v705, 48
      %v3827 = vpop.permute.xlu0 %3826
      %3828 = vrot.lane.b32.xlu0 %v697, 48
      %v3829 = vpop.permute.xlu0 %3828
      %3830 = vrot.lane.b32.xlu0 %v1603, 48
      %v3831 = vpop.permute.xlu0 %3830
      %vm3832 = vcmask 392192
      %v3833 = vsel %vm3832, %v3825, %v3827
      %v3834 = vsel %vm3832, %v3827, %v3829
      %v3835 = vsel %vm3832, %v3829, %v3831
      %v3837 = vsel %vm715, %v3822, 0
      %v3840 = vsel %vm715, %v3823, 0
      %v3842 = vsel %vm722, %v3833, 0
      %v3844 = vsel %vm722, %v3834, 0
      %v3846 = vsel %vm722, %v3835, 0
      %3848 = vmatprep.subr.mxu0 0.0
      %3849 = vmatpush1.msra.mxu0 0.0
      %3850 = vmatprep.subr.mxu0 0.0
      %3851 = vmatpush1.msra.mxu0 0.0
      %3852 = vmatprep.subr.mxu0 0.0
      %3853 = vmatpush1.msra.mxu0 0.0
      %3854 = vmatprep.subr.mxu0 0.0
      %3855 = vmatpush1.msra.mxu0 0.0
      %3856 = vmatprep.subr.mxu0 0.0
      %3857 = vmatpush1.msra.mxu0 0.0
      %3858 = vmatprep.subr.mxu0 0.0
      %3859 = vmatpush1.msra.mxu0 0.0
      %3860 = vmatprep.subr.mxu0 0.0
      %3861 = vmatpush1.msra.mxu0 0.0
      %3862 = vmatprep.subr.mxu0 0.0
      %3863 = vmatpush1.msra.mxu0 0.0
      %3864 = vmatprep.subr.mxu0 0.0
      %3865 = vmatpush1.msra.mxu0 0.0
      %3866 = vmatprep.subr.mxu0 0.0
      %3867 = vmatpush1.msra.mxu0 0.0
      %3868 = vmatprep.subr.mxu0 0.0
      %3869 = vmatpush1.msra.mxu0 0.0
      %3870 = vmatprep.subr.mxu0 0.0
      %3871 = vmatpush1.msra.mxu0 0.0
      %3872 = vmatprep.subr.mxu0 0.0
      %3873 = vmatpush1.msra.mxu0 0.0
      %3874 = vmatprep.subr.mxu0 0.0
      %3875 = vmatpush1.msra.mxu0 0.0
      %3876 = vmatprep.subr.mxu0 0.0
      %3877 = vmatpush1.msra.mxu0 0.0
      %3878 = vmatprep.subr.mxu0 %v3844
      %3879 = vmatpush1.msra.mxu0 %v3842
      %3880 = vmatprep.subr.mxu0 0.0
      %3881 = vmatpush2.msra.mxu0 0.0
      %3882 = vmatprep.subr.mxu0 0.0
      %3883 = vmatpush2.msra.mxu0 0.0
      %3884 = vmatprep.subr.mxu0 0.0
      %3885 = vmatpush2.msra.mxu0 0.0
      %3886 = vmatprep.subr.mxu0 0.0
      %3887 = vmatpush2.msra.mxu0 0.0
      %3888 = vmatprep.subr.mxu0 0.0
      %3889 = vmatpush2.msra.mxu0 0.0
      %3890 = vmatprep.subr.mxu0 0.0
      %3891 = vmatpush2.msra.mxu0 0.0
      %3892 = vmatprep.subr.mxu0 0.0
      %3893 = vmatpush2.msra.mxu0 0.0
      %3894 = vmatprep.subr.mxu0 0.0
      %3895 = vmatpush2.msra.mxu0 0.0
      %3896 = vmatprep.subr.mxu0 0.0
      %3897 = vmatpush2.msra.mxu0 0.0
      %3898 = vmatprep.subr.mxu0 0.0
      %3899 = vmatpush2.msra.mxu0 0.0
      %3900 = vmatprep.subr.mxu0 0.0
      %3901 = vmatpush2.msra.mxu0 0.0
      %3902 = vmatprep.subr.mxu0 0.0
      %3903 = vmatpush2.msra.mxu0 0.0
      %3904 = vmatprep.subr.mxu0 0.0
      %3905 = vmatpush2.msra.mxu0 0.0
      %3906 = vmatprep.subr.mxu0 0.0
      %3907 = vmatpush2.msra.mxu0 0.0
      %3908 = vmatprep.subr.mxu0 0.0
      %3909 = vmatpush2.msra.mxu0 0.0
      %3910 = vmatprep.subr.mxu0 0.0
      %3911 = vmatpush2.msra.mxu0 0.0
      %3912 = vmatprep.mubr.f32.mxu0 0.0
      %3913 = vmatmul.mubr.f32.gmra.mxu0 %v3837
      %v3914 = vpop.f32.mrf.mxu0
      %v3915 = vadd.f32 0.0, %v3914
      %v3916 = vpop.f32.mrf.mxu0
      %v3917 = vadd.f32 0.0, %v3916
      %3918 = vmatprep.mubr.f32.mxu0 0.0
      %3919 = vmatmul.mubr.f32.gmra.mxu0 %v3840
      %v3920 = vpop.f32.mrf.mxu0
      %v3921 = vadd.f32 0.0, %v3920
      %v3922 = vpop.f32.mrf.mxu0
      %v3923 = vadd.f32 0.0, %v3922
      %3924 = vdwg.mxu0
      %3925 = vmatprep.subr.mxu0 0.0
      %3926 = vmatpush1.msra.mxu0 0.0
      %3927 = vmatprep.subr.mxu0 0.0
      %3928 = vmatpush1.msra.mxu0 0.0
      %3929 = vmatprep.subr.mxu0 0.0
      %3930 = vmatpush1.msra.mxu0 0.0
      %3931 = vmatprep.subr.mxu0 0.0
      %3932 = vmatpush1.msra.mxu0 0.0
      %3933 = vmatprep.subr.mxu0 0.0
      %3934 = vmatpush1.msra.mxu0 0.0
      %3935 = vmatprep.subr.mxu0 0.0
      %3936 = vmatpush1.msra.mxu0 0.0
      %3937 = vmatprep.subr.mxu0 0.0
      %3938 = vmatpush1.msra.mxu0 0.0
      %3939 = vmatprep.subr.mxu0 0.0
      %3940 = vmatpush1.msra.mxu0 0.0
      %3941 = vmatprep.subr.mxu0 0.0
      %3942 = vmatpush1.msra.mxu0 0.0
      %3943 = vmatprep.subr.mxu0 0.0
      %3944 = vmatpush1.msra.mxu0 0.0
      %3945 = vmatprep.subr.mxu0 0.0
      %3946 = vmatpush1.msra.mxu0 0.0
      %3947 = vmatprep.subr.mxu0 0.0
      %3948 = vmatpush1.msra.mxu0 0.0
      %3949 = vmatprep.subr.mxu0 0.0
      %3950 = vmatpush1.msra.mxu0 0.0
      %3951 = vmatprep.subr.mxu0 0.0
      %3952 = vmatpush1.msra.mxu0 0.0
      %3953 = vmatprep.subr.mxu0 0.0
      %3954 = vmatpush1.msra.mxu0 0.0
      %3955 = vmatprep.subr.mxu0 0.0
      %3956 = vmatpush1.msra.mxu0 %v3846
      %3957 = vmatprep.subr.mxu0 0.0
      %3958 = vmatpush2.msra.mxu0 0.0
      %3959 = vmatprep.subr.mxu0 0.0
      %3960 = vmatpush2.msra.mxu0 0.0
      %3961 = vmatprep.subr.mxu0 0.0
      %3962 = vmatpush2.msra.mxu0 0.0
      %3963 = vmatprep.subr.mxu0 0.0
      %3964 = vmatpush2.msra.mxu0 0.0
      %3965 = vmatprep.subr.mxu0 0.0
      %3966 = vmatpush2.msra.mxu0 0.0
      %3967 = vmatprep.subr.mxu0 0.0
      %3968 = vmatpush2.msra.mxu0 0.0
      %3969 = vmatprep.subr.mxu0 0.0
      %3970 = vmatpush2.msra.mxu0 0.0
      %3971 = vmatprep.subr.mxu0 0.0
      %3972 = vmatpush2.msra.mxu0 0.0
      %3973 = vmatprep.subr.mxu0 0.0
      %3974 = vmatpush2.msra.mxu0 0.0
      %3975 = vmatprep.subr.mxu0 0.0
      %3976 = vmatpush2.msra.mxu0 0.0
      %3977 = vmatprep.subr.mxu0 0.0
      %3978 = vmatpush2.msra.mxu0 0.0
      %3979 = vmatprep.subr.mxu0 0.0
      %3980 = vmatpush2.msra.mxu0 0.0
      %3981 = vmatprep.subr.mxu0 0.0
      %3982 = vmatpush2.msra.mxu0 0.0
      %3983 = vmatprep.subr.mxu0 0.0
      %3984 = vmatpush2.msra.mxu0 0.0
      %3985 = vmatprep.subr.mxu0 0.0
      %3986 = vmatpush2.msra.mxu0 0.0
      %3987 = vmatprep.subr.mxu0 0.0
      %3988 = vmatpush2.msra.mxu0 0.0
      %3989 = vmatprep.mubr.f32.mxu0 0.0
      %3990 = vmatmul.mubr.f32.gmra.mxu0 %v3837
      %v3991 = vpop.f32.mrf.mxu0
      %v3992 = vadd.f32 0.0, %v3991
      %v3993 = vpop.f32.mrf.mxu0
      %3994 = vmatprep.mubr.f32.mxu0 0.0
      %3995 = vmatmul.mubr.f32.gmra.mxu0 %v3840
      %v3996 = vpop.f32.mrf.mxu0
      %v3997 = vadd.f32 0.0, %v3996
      %v3998 = vpop.f32.mrf.mxu0
      %3999 = vdwg.mxu0
      %v4000 = vadd.f32 %v3815, %v3915
      %v4001 = vadd.f32 %v3816, %v3917
      %v4002 = vadd.f32 %v3817, %v3992
      %v4003 = vadd.f32 %v3818, %v3921
      %v4004 = vadd.f32 %v3819, %v3923
      %v4005 = vadd.f32 %v3820, %v3997
      %s4006 = scalar_lea.vmem %s2, 288
      %v4007 = vld [vmem:[%s4006] sm:$0xff]
      %v4008 = vld [vmem:[%s4006 + $0x8] sm:$0xff]
      %4009 = vrot.lane.b32.xlu0 %v696, 47
      %v4010 = vpop.permute.xlu0 %4009
      %4011 = vrot.lane.b32.xlu0 %v705, 47
      %v4012 = vpop.permute.xlu0 %4011
      %4013 = vrot.lane.b32.xlu0 %v697, 47
      %v4014 = vpop.permute.xlu0 %4013
      %4015 = vrot.lane.b32.xlu0 %v1603, 47
      %v4016 = vpop.permute.xlu0 %4015
      %vm4017 = vcmask 384000
      %v4018 = vsel %vm4017, %v4010, %v4012
      %v4019 = vsel %vm4017, %v4012, %v4014
      %v4020 = vsel %vm4017, %v4014, %v4016
      %v4022 = vsel %vm715, %v4007, 0
      %v4025 = vsel %vm715, %v4008, 0
      %v4027 = vsel %vm722, %v4018, 0
      %v4029 = vsel %vm722, %v4019, 0
      %v4031 = vsel %vm722, %v4020, 0
      %4033 = vmatprep.subr.mxu0 0.0
      %4034 = vmatpush1.msra.mxu0 0.0
      %4035 = vmatprep.subr.mxu0 0.0
      %4036 = vmatpush1.msra.mxu0 0.0
      %4037 = vmatprep.subr.mxu0 0.0
      %4038 = vmatpush1.msra.mxu0 0.0
      %4039 = vmatprep.subr.mxu0 0.0
      %4040 = vmatpush1.msra.mxu0 0.0
      %4041 = vmatprep.subr.mxu0 0.0
      %4042 = vmatpush1.msra.mxu0 0.0
      %4043 = vmatprep.subr.mxu0 0.0
      %4044 = vmatpush1.msra.mxu0 0.0
      %4045 = vmatprep.subr.mxu0 0.0
      %4046 = vmatpush1.msra.mxu0 0.0
      %4047 = vmatprep.subr.mxu0 0.0
      %4048 = vmatpush1.msra.mxu0 0.0
      %4049 = vmatprep.subr.mxu0 0.0
      %4050 = vmatpush1.msra.mxu0 0.0
      %4051 = vmatprep.subr.mxu0 0.0
      %4052 = vmatpush1.msra.mxu0 0.0
      %4053 = vmatprep.subr.mxu0 0.0
      %4054 = vmatpush1.msra.mxu0 0.0
      %4055 = vmatprep.subr.mxu0 0.0
      %4056 = vmatpush1.msra.mxu0 0.0
      %4057 = vmatprep.subr.mxu0 0.0
      %4058 = vmatpush1.msra.mxu0 0.0
      %4059 = vmatprep.subr.mxu0 0.0
      %4060 = vmatpush1.msra.mxu0 0.0
      %4061 = vmatprep.subr.mxu0 0.0
      %4062 = vmatpush1.msra.mxu0 0.0
      %4063 = vmatprep.subr.mxu0 %v4029
      %4064 = vmatpush1.msra.mxu0 %v4027
      %4065 = vmatprep.subr.mxu0 0.0
      %4066 = vmatpush2.msra.mxu0 0.0
      %4067 = vmatprep.subr.mxu0 0.0
      %4068 = vmatpush2.msra.mxu0 0.0
      %4069 = vmatprep.subr.mxu0 0.0
      %4070 = vmatpush2.msra.mxu0 0.0
      %4071 = vmatprep.subr.mxu0 0.0
      %4072 = vmatpush2.msra.mxu0 0.0
      %4073 = vmatprep.subr.mxu0 0.0
      %4074 = vmatpush2.msra.mxu0 0.0
      %4075 = vmatprep.subr.mxu0 0.0
      %4076 = vmatpush2.msra.mxu0 0.0
      %4077 = vmatprep.subr.mxu0 0.0
      %4078 = vmatpush2.msra.mxu0 0.0
      %4079 = vmatprep.subr.mxu0 0.0
      %4080 = vmatpush2.msra.mxu0 0.0
      %4081 = vmatprep.subr.mxu0 0.0
      %4082 = vmatpush2.msra.mxu0 0.0
      %4083 = vmatprep.subr.mxu0 0.0
      %4084 = vmatpush2.msra.mxu0 0.0
      %4085 = vmatprep.subr.mxu0 0.0
      %4086 = vmatpush2.msra.mxu0 0.0
      %4087 = vmatprep.subr.mxu0 0.0
      %4088 = vmatpush2.msra.mxu0 0.0
      %4089 = vmatprep.subr.mxu0 0.0
      %4090 = vmatpush2.msra.mxu0 0.0
      %4091 = vmatprep.subr.mxu0 0.0
      %4092 = vmatpush2.msra.mxu0 0.0
      %4093 = vmatprep.subr.mxu0 0.0
      %4094 = vmatpush2.msra.mxu0 0.0
      %4095 = vmatprep.subr.mxu0 0.0
      %4096 = vmatpush2.msra.mxu0 0.0
      %4097 = vmatprep.mubr.f32.mxu0 0.0
      %4098 = vmatmul.mubr.f32.gmra.mxu0 %v4022
      %v4099 = vpop.f32.mrf.mxu0
      %v4100 = vadd.f32 0.0, %v4099
      %v4101 = vpop.f32.mrf.mxu0
      %v4102 = vadd.f32 0.0, %v4101
      %4103 = vmatprep.mubr.f32.mxu0 0.0
      %4104 = vmatmul.mubr.f32.gmra.mxu0 %v4025
      %v4105 = vpop.f32.mrf.mxu0
      %v4106 = vadd.f32 0.0, %v4105
      %v4107 = vpop.f32.mrf.mxu0
      %v4108 = vadd.f32 0.0, %v4107
      %4109 = vdwg.mxu0
      %4110 = vmatprep.subr.mxu0 0.0
      %4111 = vmatpush1.msra.mxu0 0.0
      %4112 = vmatprep.subr.mxu0 0.0
      %4113 = vmatpush1.msra.mxu0 0.0
      %4114 = vmatprep.subr.mxu0 0.0
      %4115 = vmatpush1.msra.mxu0 0.0
      %4116 = vmatprep.subr.mxu0 0.0
      %4117 = vmatpush1.msra.mxu0 0.0
      %4118 = vmatprep.subr.mxu0 0.0
      %4119 = vmatpush1.msra.mxu0 0.0
      %4120 = vmatprep.subr.mxu0 0.0
      %4121 = vmatpush1.msra.mxu0 0.0
      %4122 = vmatprep.subr.mxu0 0.0
      %4123 = vmatpush1.msra.mxu0 0.0
      %4124 = vmatprep.subr.mxu0 0.0
      %4125 = vmatpush1.msra.mxu0 0.0
      %4126 = vmatprep.subr.mxu0 0.0
      %4127 = vmatpush1.msra.mxu0 0.0
      %4128 = vmatprep.subr.mxu0 0.0
      %4129 = vmatpush1.msra.mxu0 0.0
      %4130 = vmatprep.subr.mxu0 0.0
      %4131 = vmatpush1.msra.mxu0 0.0
      %4132 = vmatprep.subr.mxu0 0.0
      %4133 = vmatpush1.msra.mxu0 0.0
      %4134 = vmatprep.subr.mxu0 0.0
      %4135 = vmatpush1.msra.mxu0 0.0
      %4136 = vmatprep.subr.mxu0 0.0
      %4137 = vmatpush1.msra.mxu0 0.0
      %4138 = vmatprep.subr.mxu0 0.0
      %4139 = vmatpush1.msra.mxu0 0.0
      %4140 = vmatprep.subr.mxu0 0.0
      %4141 = vmatpush1.msra.mxu0 %v4031
      %4142 = vmatprep.subr.mxu0 0.0
      %4143 = vmatpush2.msra.mxu0 0.0
      %4144 = vmatprep.subr.mxu0 0.0
      %4145 = vmatpush2.msra.mxu0 0.0
      %4146 = vmatprep.subr.mxu0 0.0
      %4147 = vmatpush2.msra.mxu0 0.0
      %4148 = vmatprep.subr.mxu0 0.0
      %4149 = vmatpush2.msra.mxu0 0.0
      %4150 = vmatprep.subr.mxu0 0.0
      %4151 = vmatpush2.msra.mxu0 0.0
      %4152 = vmatprep.subr.mxu0 0.0
      %4153 = vmatpush2.msra.mxu0 0.0
      %4154 = vmatprep.subr.mxu0 0.0
      %4155 = vmatpush2.msra.mxu0 0.0
      %4156 = vmatprep.subr.mxu0 0.0
      %4157 = vmatpush2.msra.mxu0 0.0
      %4158 = vmatprep.subr.mxu0 0.0
      %4159 = vmatpush2.msra.mxu0 0.0
      %4160 = vmatprep.subr.mxu0 0.0
      %4161 = vmatpush2.msra.mxu0 0.0
      %4162 = vmatprep.subr.mxu0 0.0
      %4163 = vmatpush2.msra.mxu0 0.0
      %4164 = vmatprep.subr.mxu0 0.0
      %4165 = vmatpush2.msra.mxu0 0.0
      %4166 = vmatprep.subr.mxu0 0.0
      %4167 = vmatpush2.msra.mxu0 0.0
      %4168 = vmatprep.subr.mxu0 0.0
      %4169 = vmatpush2.msra.mxu0 0.0
      %4170 = vmatprep.subr.mxu0 0.0
      %4171 = vmatpush2.msra.mxu0 0.0
      %4172 = vmatprep.subr.mxu0 0.0
      %4173 = vmatpush2.msra.mxu0 0.0
      %4174 = vmatprep.mubr.f32.mxu0 0.0
      %4175 = vmatmul.mubr.f32.gmra.mxu0 %v4022
      %v4176 = vpop.f32.mrf.mxu0
      %v4177 = vadd.f32 0.0, %v4176
      %v4178 = vpop.f32.mrf.mxu0
      %4179 = vmatprep.mubr.f32.mxu0 0.0
      %4180 = vmatmul.mubr.f32.gmra.mxu0 %v4025
      %v4181 = vpop.f32.mrf.mxu0
      %v4182 = vadd.f32 0.0, %v4181
      %v4183 = vpop.f32.mrf.mxu0
      %4184 = vdwg.mxu0
      %v4185 = vadd.f32 %v4000, %v4100
      %v4186 = vadd.f32 %v4001, %v4102
      %v4187 = vadd.f32 %v4002, %v4177
      %v4188 = vadd.f32 %v4003, %v4106
      %v4189 = vadd.f32 %v4004, %v4108
      %v4190 = vadd.f32 %v4005, %v4182
      %s4191 = scalar_lea.vmem %s2, 304
      %v4192 = vld [vmem:[%s4191] sm:$0xff]
      %v4193 = vld [vmem:[%s4191 + $0x8] sm:$0xff]
      %4194 = vrot.lane.b32.xlu0 %v696, 46
      %v4195 = vpop.permute.xlu0 %4194
      %4196 = vrot.lane.b32.xlu0 %v705, 46
      %v4197 = vpop.permute.xlu0 %4196
      %4198 = vrot.lane.b32.xlu0 %v697, 46
      %v4199 = vpop.permute.xlu0 %4198
      %4200 = vrot.lane.b32.xlu0 %v1603, 46
      %v4201 = vpop.permute.xlu0 %4200
      %vm4202 = vcmask 375808
      %v4203 = vsel %vm4202, %v4195, %v4197
      %v4204 = vsel %vm4202, %v4197, %v4199
      %v4205 = vsel %vm4202, %v4199, %v4201
      %v4207 = vsel %vm715, %v4192, 0
      %v4210 = vsel %vm715, %v4193, 0
      %v4212 = vsel %vm722, %v4203, 0
      %v4214 = vsel %vm722, %v4204, 0
      %v4216 = vsel %vm722, %v4205, 0
      %4218 = vmatprep.subr.mxu0 0.0
      %4219 = vmatpush1.msra.mxu0 0.0
      %4220 = vmatprep.subr.mxu0 0.0
      %4221 = vmatpush1.msra.mxu0 0.0
      %4222 = vmatprep.subr.mxu0 0.0
      %4223 = vmatpush1.msra.mxu0 0.0
      %4224 = vmatprep.subr.mxu0 0.0
      %4225 = vmatpush1.msra.mxu0 0.0
      %4226 = vmatprep.subr.mxu0 0.0
      %4227 = vmatpush1.msra.mxu0 0.0
      %4228 = vmatprep.subr.mxu0 0.0
      %4229 = vmatpush1.msra.mxu0 0.0
      %4230 = vmatprep.subr.mxu0 0.0
      %4231 = vmatpush1.msra.mxu0 0.0
      %4232 = vmatprep.subr.mxu0 0.0
      %4233 = vmatpush1.msra.mxu0 0.0
      %4234 = vmatprep.subr.mxu0 0.0
      %4235 = vmatpush1.msra.mxu0 0.0
      %4236 = vmatprep.subr.mxu0 0.0
      %4237 = vmatpush1.msra.mxu0 0.0
      %4238 = vmatprep.subr.mxu0 0.0
      %4239 = vmatpush1.msra.mxu0 0.0
      %4240 = vmatprep.subr.mxu0 0.0
      %4241 = vmatpush1.msra.mxu0 0.0
      %4242 = vmatprep.subr.mxu0 0.0
      %4243 = vmatpush1.msra.mxu0 0.0
      %4244 = vmatprep.subr.mxu0 0.0
      %4245 = vmatpush1.msra.mxu0 0.0
      %4246 = vmatprep.subr.mxu0 0.0
      %4247 = vmatpush1.msra.mxu0 0.0
      %4248 = vmatprep.subr.mxu0 %v4214
      %4249 = vmatpush1.msra.mxu0 %v4212
      %4250 = vmatprep.subr.mxu0 0.0
      %4251 = vmatpush2.msra.mxu0 0.0
      %4252 = vmatprep.subr.mxu0 0.0
      %4253 = vmatpush2.msra.mxu0 0.0
      %4254 = vmatprep.subr.mxu0 0.0
      %4255 = vmatpush2.msra.mxu0 0.0
      %4256 = vmatprep.subr.mxu0 0.0
      %4257 = vmatpush2.msra.mxu0 0.0
      %4258 = vmatprep.subr.mxu0 0.0
      %4259 = vmatpush2.msra.mxu0 0.0
      %4260 = vmatprep.subr.mxu0 0.0
      %4261 = vmatpush2.msra.mxu0 0.0
      %4262 = vmatprep.subr.mxu0 0.0
      %4263 = vmatpush2.msra.mxu0 0.0
      %4264 = vmatprep.subr.mxu0 0.0
      %4265 = vmatpush2.msra.mxu0 0.0
      %4266 = vmatprep.subr.mxu0 0.0
      %4267 = vmatpush2.msra.mxu0 0.0
      %4268 = vmatprep.subr.mxu0 0.0
      %4269 = vmatpush2.msra.mxu0 0.0
      %4270 = vmatprep.subr.mxu0 0.0
      %4271 = vmatpush2.msra.mxu0 0.0
      %4272 = vmatprep.subr.mxu0 0.0
      %4273 = vmatpush2.msra.mxu0 0.0
      %4274 = vmatprep.subr.mxu0 0.0
      %4275 = vmatpush2.msra.mxu0 0.0
      %4276 = vmatprep.subr.mxu0 0.0
      %4277 = vmatpush2.msra.mxu0 0.0
      %4278 = vmatprep.subr.mxu0 0.0
      %4279 = vmatpush2.msra.mxu0 0.0
      %4280 = vmatprep.subr.mxu0 0.0
      %4281 = vmatpush2.msra.mxu0 0.0
      %4282 = vmatprep.mubr.f32.mxu0 0.0
      %4283 = vmatmul.mubr.f32.gmra.mxu0 %v4207
      %v4284 = vpop.f32.mrf.mxu0
      %v4285 = vadd.f32 0.0, %v4284
      %v4286 = vpop.f32.mrf.mxu0
      %v4287 = vadd.f32 0.0, %v4286
      %4288 = vmatprep.mubr.f32.mxu0 0.0
      %4289 = vmatmul.mubr.f32.gmra.mxu0 %v4210
      %v4290 = vpop.f32.mrf.mxu0
      %v4291 = vadd.f32 0.0, %v4290
      %v4292 = vpop.f32.mrf.mxu0
      %v4293 = vadd.f32 0.0, %v4292
      %4294 = vdwg.mxu0
      %4295 = vmatprep.subr.mxu0 0.0
      %4296 = vmatpush1.msra.mxu0 0.0
      %4297 = vmatprep.subr.mxu0 0.0
      %4298 = vmatpush1.msra.mxu0 0.0
      %4299 = vmatprep.subr.mxu0 0.0
      %4300 = vmatpush1.msra.mxu0 0.0
      %4301 = vmatprep.subr.mxu0 0.0
      %4302 = vmatpush1.msra.mxu0 0.0
      %4303 = vmatprep.subr.mxu0 0.0
      %4304 = vmatpush1.msra.mxu0 0.0
      %4305 = vmatprep.subr.mxu0 0.0
      %4306 = vmatpush1.msra.mxu0 0.0
      %4307 = vmatprep.subr.mxu0 0.0
      %4308 = vmatpush1.msra.mxu0 0.0
      %4309 = vmatprep.subr.mxu0 0.0
      %4310 = vmatpush1.msra.mxu0 0.0
      %4311 = vmatprep.subr.mxu0 0.0
      %4312 = vmatpush1.msra.mxu0 0.0
      %4313 = vmatprep.subr.mxu0 0.0
      %4314 = vmatpush1.msra.mxu0 0.0
      %4315 = vmatprep.subr.mxu0 0.0
      %4316 = vmatpush1.msra.mxu0 0.0
      %4317 = vmatprep.subr.mxu0 0.0
      %4318 = vmatpush1.msra.mxu0 0.0
      %4319 = vmatprep.subr.mxu0 0.0
      %4320 = vmatpush1.msra.mxu0 0.0
      %4321 = vmatprep.subr.mxu0 0.0
      %4322 = vmatpush1.msra.mxu0 0.0
      %4323 = vmatprep.subr.mxu0 0.0
      %4324 = vmatpush1.msra.mxu0 0.0
      %4325 = vmatprep.subr.mxu0 0.0
      %4326 = vmatpush1.msra.mxu0 %v4216
      %4327 = vmatprep.subr.mxu0 0.0
      %4328 = vmatpush2.msra.mxu0 0.0
      %4329 = vmatprep.subr.mxu0 0.0
      %4330 = vmatpush2.msra.mxu0 0.0
      %4331 = vmatprep.subr.mxu0 0.0
      %4332 = vmatpush2.msra.mxu0 0.0
      %4333 = vmatprep.subr.mxu0 0.0
      %4334 = vmatpush2.msra.mxu0 0.0
      %4335 = vmatprep.subr.mxu0 0.0
      %4336 = vmatpush2.msra.mxu0 0.0
      %4337 = vmatprep.subr.mxu0 0.0
      %4338 = vmatpush2.msra.mxu0 0.0
      %4339 = vmatprep.subr.mxu0 0.0
      %4340 = vmatpush2.msra.mxu0 0.0
      %4341 = vmatprep.subr.mxu0 0.0
      %4342 = vmatpush2.msra.mxu0 0.0
      %4343 = vmatprep.subr.mxu0 0.0
      %4344 = vmatpush2.msra.mxu0 0.0
      %4345 = vmatprep.subr.mxu0 0.0
      %4346 = vmatpush2.msra.mxu0 0.0
      %4347 = vmatprep.subr.mxu0 0.0
      %4348 = vmatpush2.msra.mxu0 0.0
      %4349 = vmatprep.subr.mxu0 0.0
      %4350 = vmatpush2.msra.mxu0 0.0
      %4351 = vmatprep.subr.mxu0 0.0
      %4352 = vmatpush2.msra.mxu0 0.0
      %4353 = vmatprep.subr.mxu0 0.0
      %4354 = vmatpush2.msra.mxu0 0.0
      %4355 = vmatprep.subr.mxu0 0.0
      %4356 = vmatpush2.msra.mxu0 0.0
      %4357 = vmatprep.subr.mxu0 0.0
      %4358 = vmatpush2.msra.mxu0 0.0
      %4359 = vmatprep.mubr.f32.mxu0 0.0
      %4360 = vmatmul.mubr.f32.gmra.mxu0 %v4207
      %v4361 = vpop.f32.mrf.mxu0
      %v4362 = vadd.f32 0.0, %v4361
      %v4363 = vpop.f32.mrf.mxu0
      %4364 = vmatprep.mubr.f32.mxu0 0.0
      %4365 = vmatmul.mubr.f32.gmra.mxu0 %v4210
      %v4366 = vpop.f32.mrf.mxu0
      %v4367 = vadd.f32 0.0, %v4366
      %v4368 = vpop.f32.mrf.mxu0
      %4369 = vdwg.mxu0
      %v4370 = vadd.f32 %v4185, %v4285
      %v4371 = vadd.f32 %v4186, %v4287
      %v4372 = vadd.f32 %v4187, %v4362
      %v4373 = vadd.f32 %v4188, %v4291
      %v4374 = vadd.f32 %v4189, %v4293
      %v4375 = vadd.f32 %v4190, %v4367
      %s4376 = scalar_lea.vmem %s2, 320
      %v4377 = vld [vmem:[%s4376] sm:$0xff]
      %v4378 = vld [vmem:[%s4376 + $0x8] sm:$0xff]
      %4379 = vrot.lane.b32.xlu0 %v696, 30
      %v4380 = vpop.permute.xlu0 %4379
      %4381 = vrot.lane.b32.xlu0 %v705, 30
      %v4382 = vpop.permute.xlu0 %4381
      %4383 = vrot.lane.b32.xlu0 %v697, 30
      %v4384 = vpop.permute.xlu0 %4383
      %4385 = vrot.lane.b32.xlu0 %v1603, 30
      %v4386 = vpop.permute.xlu0 %4385
      %vm4387 = vcmask 244736
      %v4388 = vsel %vm4387, %v4380, %v4382
      %v4389 = vsel %vm4387, %v4382, %v4384
      %v4390 = vsel %vm4387, %v4384, %v4386
      %v4392 = vsel %vm715, %v4377, 0
      %v4395 = vsel %vm715, %v4378, 0
      %v4397 = vsel %vm722, %v4388, 0
      %v4399 = vsel %vm722, %v4389, 0
      %v4401 = vsel %vm722, %v4390, 0
      %4403 = vmatprep.subr.mxu0 0.0
      %4404 = vmatpush1.msra.mxu0 0.0
      %4405 = vmatprep.subr.mxu0 0.0
      %4406 = vmatpush1.msra.mxu0 0.0
      %4407 = vmatprep.subr.mxu0 0.0
      %4408 = vmatpush1.msra.mxu0 0.0
      %4409 = vmatprep.subr.mxu0 0.0
      %4410 = vmatpush1.msra.mxu0 0.0
      %4411 = vmatprep.subr.mxu0 0.0
      %4412 = vmatpush1.msra.mxu0 0.0
      %4413 = vmatprep.subr.mxu0 0.0
      %4414 = vmatpush1.msra.mxu0 0.0
      %4415 = vmatprep.subr.mxu0 0.0
      %4416 = vmatpush1.msra.mxu0 0.0
      %4417 = vmatprep.subr.mxu0 0.0
      %4418 = vmatpush1.msra.mxu0 0.0
      %4419 = vmatprep.subr.mxu0 0.0
      %4420 = vmatpush1.msra.mxu0 0.0
      %4421 = vmatprep.subr.mxu0 0.0
      %4422 = vmatpush1.msra.mxu0 0.0
      %4423 = vmatprep.subr.mxu0 0.0
      %4424 = vmatpush1.msra.mxu0 0.0
      %4425 = vmatprep.subr.mxu0 0.0
      %4426 = vmatpush1.msra.mxu0 0.0
      %4427 = vmatprep.subr.mxu0 0.0
      %4428 = vmatpush1.msra.mxu0 0.0
      %4429 = vmatprep.subr.mxu0 0.0
      %4430 = vmatpush1.msra.mxu0 0.0
      %4431 = vmatprep.subr.mxu0 0.0
      %4432 = vmatpush1.msra.mxu0 0.0
      %4433 = vmatprep.subr.mxu0 %v4399
      %4434 = vmatpush1.msra.mxu0 %v4397
      %4435 = vmatprep.subr.mxu0 0.0
      %4436 = vmatpush2.msra.mxu0 0.0
      %4437 = vmatprep.subr.mxu0 0.0
      %4438 = vmatpush2.msra.mxu0 0.0
      %4439 = vmatprep.subr.mxu0 0.0
      %4440 = vmatpush2.msra.mxu0 0.0
      %4441 = vmatprep.subr.mxu0 0.0
      %4442 = vmatpush2.msra.mxu0 0.0
      %4443 = vmatprep.subr.mxu0 0.0
      %4444 = vmatpush2.msra.mxu0 0.0
      %4445 = vmatprep.subr.mxu0 0.0
      %4446 = vmatpush2.msra.mxu0 0.0
      %4447 = vmatprep.subr.mxu0 0.0
      %4448 = vmatpush2.msra.mxu0 0.0
      %4449 = vmatprep.subr.mxu0 0.0
      %4450 = vmatpush2.msra.mxu0 0.0
      %4451 = vmatprep.subr.mxu0 0.0
      %4452 = vmatpush2.msra.mxu0 0.0
      %4453 = vmatprep.subr.mxu0 0.0
      %4454 = vmatpush2.msra.mxu0 0.0
      %4455 = vmatprep.subr.mxu0 0.0
      %4456 = vmatpush2.msra.mxu0 0.0
      %4457 = vmatprep.subr.mxu0 0.0
      %4458 = vmatpush2.msra.mxu0 0.0
      %4459 = vmatprep.subr.mxu0 0.0
      %4460 = vmatpush2.msra.mxu0 0.0
      %4461 = vmatprep.subr.mxu0 0.0
      %4462 = vmatpush2.msra.mxu0 0.0
      %4463 = vmatprep.subr.mxu0 0.0
      %4464 = vmatpush2.msra.mxu0 0.0
      %4465 = vmatprep.subr.mxu0 0.0
      %4466 = vmatpush2.msra.mxu0 0.0
      %4467 = vmatprep.mubr.f32.mxu0 0.0
      %4468 = vmatmul.mubr.f32.gmra.mxu0 %v4392
      %v4469 = vpop.f32.mrf.mxu0
      %v4470 = vadd.f32 0.0, %v4469
      %v4471 = vpop.f32.mrf.mxu0
      %v4472 = vadd.f32 0.0, %v4471
      %4473 = vmatprep.mubr.f32.mxu0 0.0
      %4474 = vmatmul.mubr.f32.gmra.mxu0 %v4395
      %v4475 = vpop.f32.mrf.mxu0
      %v4476 = vadd.f32 0.0, %v4475
      %v4477 = vpop.f32.mrf.mxu0
      %v4478 = vadd.f32 0.0, %v4477
      %4479 = vdwg.mxu0
      %4480 = vmatprep.subr.mxu0 0.0
      %4481 = vmatpush1.msra.mxu0 0.0
      %4482 = vmatprep.subr.mxu0 0.0
      %4483 = vmatpush1.msra.mxu0 0.0
      %4484 = vmatprep.subr.mxu0 0.0
      %4485 = vmatpush1.msra.mxu0 0.0
      %4486 = vmatprep.subr.mxu0 0.0
      %4487 = vmatpush1.msra.mxu0 0.0
      %4488 = vmatprep.subr.mxu0 0.0
      %4489 = vmatpush1.msra.mxu0 0.0
      %4490 = vmatprep.subr.mxu0 0.0
      %4491 = vmatpush1.msra.mxu0 0.0
      %4492 = vmatprep.subr.mxu0 0.0
      %4493 = vmatpush1.msra.mxu0 0.0
      %4494 = vmatprep.subr.mxu0 0.0
      %4495 = vmatpush1.msra.mxu0 0.0
      %4496 = vmatprep.subr.mxu0 0.0
      %4497 = vmatpush1.msra.mxu0 0.0
      %4498 = vmatprep.subr.mxu0 0.0
      %4499 = vmatpush1.msra.mxu0 0.0
      %4500 = vmatprep.subr.mxu0 0.0
      %4501 = vmatpush1.msra.mxu0 0.0
      %4502 = vmatprep.subr.mxu0 0.0
      %4503 = vmatpush1.msra.mxu0 0.0
      %4504 = vmatprep.subr.mxu0 0.0
      %4505 = vmatpush1.msra.mxu0 0.0
      %4506 = vmatprep.subr.mxu0 0.0
      %4507 = vmatpush1.msra.mxu0 0.0
      %4508 = vmatprep.subr.mxu0 0.0
      %4509 = vmatpush1.msra.mxu0 0.0
      %4510 = vmatprep.subr.mxu0 0.0
      %4511 = vmatpush1.msra.mxu0 %v4401
      %4512 = vmatprep.subr.mxu0 0.0
      %4513 = vmatpush2.msra.mxu0 0.0
      %4514 = vmatprep.subr.mxu0 0.0
      %4515 = vmatpush2.msra.mxu0 0.0
      %4516 = vmatprep.subr.mxu0 0.0
      %4517 = vmatpush2.msra.mxu0 0.0
      %4518 = vmatprep.subr.mxu0 0.0
      %4519 = vmatpush2.msra.mxu0 0.0
      %4520 = vmatprep.subr.mxu0 0.0
      %4521 = vmatpush2.msra.mxu0 0.0
      %4522 = vmatprep.subr.mxu0 0.0
      %4523 = vmatpush2.msra.mxu0 0.0
      %4524 = vmatprep.subr.mxu0 0.0
      %4525 = vmatpush2.msra.mxu0 0.0
      %4526 = vmatprep.subr.mxu0 0.0
      %4527 = vmatpush2.msra.mxu0 0.0
      %4528 = vmatprep.subr.mxu0 0.0
      %4529 = vmatpush2.msra.mxu0 0.0
      %4530 = vmatprep.subr.mxu0 0.0
      %4531 = vmatpush2.msra.mxu0 0.0
      %4532 = vmatprep.subr.mxu0 0.0
      %4533 = vmatpush2.msra.mxu0 0.0
      %4534 = vmatprep.subr.mxu0 0.0
      %4535 = vmatpush2.msra.mxu0 0.0
      %4536 = vmatprep.subr.mxu0 0.0
      %4537 = vmatpush2.msra.mxu0 0.0
      %4538 = vmatprep.subr.mxu0 0.0
      %4539 = vmatpush2.msra.mxu0 0.0
      %4540 = vmatprep.subr.mxu0 0.0
      %4541 = vmatpush2.msra.mxu0 0.0
      %4542 = vmatprep.subr.mxu0 0.0
      %4543 = vmatpush2.msra.mxu0 0.0
      %4544 = vmatprep.mubr.f32.mxu0 0.0
      %4545 = vmatmul.mubr.f32.gmra.mxu0 %v4392
      %v4546 = vpop.f32.mrf.mxu0
      %v4547 = vadd.f32 0.0, %v4546
      %v4548 = vpop.f32.mrf.mxu0
      %4549 = vmatprep.mubr.f32.mxu0 0.0
      %4550 = vmatmul.mubr.f32.gmra.mxu0 %v4395
      %v4551 = vpop.f32.mrf.mxu0
      %v4552 = vadd.f32 0.0, %v4551
      %v4553 = vpop.f32.mrf.mxu0
      %4554 = vdwg.mxu0
      %v4555 = vadd.f32 %v4370, %v4470
      %v4556 = vadd.f32 %v4371, %v4472
      %v4557 = vadd.f32 %v4372, %v4547
      %v4558 = vadd.f32 %v4373, %v4476
      %v4559 = vadd.f32 %v4374, %v4478
      %v4560 = vadd.f32 %v4375, %v4552
      %s4561 = scalar_lea.vmem %s2, 336
      %v4562 = vld [vmem:[%s4561] sm:$0xff]
      %v4563 = vld [vmem:[%s4561 + $0x8] sm:$0xff]
      %4564 = vrot.lane.b32.xlu0 %v696, 29
      %v4565 = vpop.permute.xlu0 %4564
      %4566 = vrot.lane.b32.xlu0 %v705, 29
      %v4567 = vpop.permute.xlu0 %4566
      %4568 = vrot.lane.b32.xlu0 %v697, 29
      %v4569 = vpop.permute.xlu0 %4568
      %4570 = vrot.lane.b32.xlu0 %v1603, 29
      %v4571 = vpop.permute.xlu0 %4570
      %vm4572 = vcmask 236544
      %v4573 = vsel %vm4572, %v4565, %v4567
      %v4574 = vsel %vm4572, %v4567, %v4569
      %v4575 = vsel %vm4572, %v4569, %v4571
      %v4577 = vsel %vm715, %v4562, 0
      %v4580 = vsel %vm715, %v4563, 0
      %v4582 = vsel %vm722, %v4573, 0
      %v4584 = vsel %vm722, %v4574, 0
      %v4586 = vsel %vm722, %v4575, 0
      %4588 = vmatprep.subr.mxu0 0.0
      %4589 = vmatpush1.msra.mxu0 0.0
      %4590 = vmatprep.subr.mxu0 0.0
      %4591 = vmatpush1.msra.mxu0 0.0
      %4592 = vmatprep.subr.mxu0 0.0
      %4593 = vmatpush1.msra.mxu0 0.0
      %4594 = vmatprep.subr.mxu0 0.0
      %4595 = vmatpush1.msra.mxu0 0.0
      %4596 = vmatprep.subr.mxu0 0.0
      %4597 = vmatpush1.msra.mxu0 0.0
      %4598 = vmatprep.subr.mxu0 0.0
      %4599 = vmatpush1.msra.mxu0 0.0
      %4600 = vmatprep.subr.mxu0 0.0
      %4601 = vmatpush1.msra.mxu0 0.0
      %4602 = vmatprep.subr.mxu0 0.0
      %4603 = vmatpush1.msra.mxu0 0.0
      %4604 = vmatprep.subr.mxu0 0.0
      %4605 = vmatpush1.msra.mxu0 0.0
      %4606 = vmatprep.subr.mxu0 0.0
      %4607 = vmatpush1.msra.mxu0 0.0
      %4608 = vmatprep.subr.mxu0 0.0
      %4609 = vmatpush1.msra.mxu0 0.0
      %4610 = vmatprep.subr.mxu0 0.0
      %4611 = vmatpush1.msra.mxu0 0.0
      %4612 = vmatprep.subr.mxu0 0.0
      %4613 = vmatpush1.msra.mxu0 0.0
      %4614 = vmatprep.subr.mxu0 0.0
      %4615 = vmatpush1.msra.mxu0 0.0
      %4616 = vmatprep.subr.mxu0 0.0
      %4617 = vmatpush1.msra.mxu0 0.0
      %4618 = vmatprep.subr.mxu0 %v4584
      %4619 = vmatpush1.msra.mxu0 %v4582
      %4620 = vmatprep.subr.mxu0 0.0
      %4621 = vmatpush2.msra.mxu0 0.0
      %4622 = vmatprep.subr.mxu0 0.0
      %4623 = vmatpush2.msra.mxu0 0.0
      %4624 = vmatprep.subr.mxu0 0.0
      %4625 = vmatpush2.msra.mxu0 0.0
      %4626 = vmatprep.subr.mxu0 0.0
      %4627 = vmatpush2.msra.mxu0 0.0
      %4628 = vmatprep.subr.mxu0 0.0
      %4629 = vmatpush2.msra.mxu0 0.0
      %4630 = vmatprep.subr.mxu0 0.0
      %4631 = vmatpush2.msra.mxu0 0.0
      %4632 = vmatprep.subr.mxu0 0.0
      %4633 = vmatpush2.msra.mxu0 0.0
      %4634 = vmatprep.subr.mxu0 0.0
      %4635 = vmatpush2.msra.mxu0 0.0
      %4636 = vmatprep.subr.mxu0 0.0
      %4637 = vmatpush2.msra.mxu0 0.0
      %4638 = vmatprep.subr.mxu0 0.0
      %4639 = vmatpush2.msra.mxu0 0.0
      %4640 = vmatprep.subr.mxu0 0.0
      %4641 = vmatpush2.msra.mxu0 0.0
      %4642 = vmatprep.subr.mxu0 0.0
      %4643 = vmatpush2.msra.mxu0 0.0
      %4644 = vmatprep.subr.mxu0 0.0
      %4645 = vmatpush2.msra.mxu0 0.0
      %4646 = vmatprep.subr.mxu0 0.0
      %4647 = vmatpush2.msra.mxu0 0.0
      %4648 = vmatprep.subr.mxu0 0.0
      %4649 = vmatpush2.msra.mxu0 0.0
      %4650 = vmatprep.subr.mxu0 0.0
      %4651 = vmatpush2.msra.mxu0 0.0
      %4652 = vmatprep.mubr.f32.mxu0 0.0
      %4653 = vmatmul.mubr.f32.gmra.mxu0 %v4577
      %v4654 = vpop.f32.mrf.mxu0
      %v4655 = vadd.f32 0.0, %v4654
      %v4656 = vpop.f32.mrf.mxu0
      %v4657 = vadd.f32 0.0, %v4656
      %4658 = vmatprep.mubr.f32.mxu0 0.0
      %4659 = vmatmul.mubr.f32.gmra.mxu0 %v4580
      %v4660 = vpop.f32.mrf.mxu0
      %v4661 = vadd.f32 0.0, %v4660
      %v4662 = vpop.f32.mrf.mxu0
      %v4663 = vadd.f32 0.0, %v4662
      %4664 = vdwg.mxu0
      %4665 = vmatprep.subr.mxu0 0.0
      %4666 = vmatpush1.msra.mxu0 0.0
      %4667 = vmatprep.subr.mxu0 0.0
      %4668 = vmatpush1.msra.mxu0 0.0
      %4669 = vmatprep.subr.mxu0 0.0
      %4670 = vmatpush1.msra.mxu0 0.0
      %4671 = vmatprep.subr.mxu0 0.0
      %4672 = vmatpush1.msra.mxu0 0.0
      %4673 = vmatprep.subr.mxu0 0.0
      %4674 = vmatpush1.msra.mxu0 0.0
      %4675 = vmatprep.subr.mxu0 0.0
      %4676 = vmatpush1.msra.mxu0 0.0
      %4677 = vmatprep.subr.mxu0 0.0
      %4678 = vmatpush1.msra.mxu0 0.0
      %4679 = vmatprep.subr.mxu0 0.0
      %4680 = vmatpush1.msra.mxu0 0.0
      %4681 = vmatprep.subr.mxu0 0.0
      %4682 = vmatpush1.msra.mxu0 0.0
      %4683 = vmatprep.subr.mxu0 0.0
      %4684 = vmatpush1.msra.mxu0 0.0
      %4685 = vmatprep.subr.mxu0 0.0
      %4686 = vmatpush1.msra.mxu0 0.0
      %4687 = vmatprep.subr.mxu0 0.0
      %4688 = vmatpush1.msra.mxu0 0.0
      %4689 = vmatprep.subr.mxu0 0.0
      %4690 = vmatpush1.msra.mxu0 0.0
      %4691 = vmatprep.subr.mxu0 0.0
      %4692 = vmatpush1.msra.mxu0 0.0
      %4693 = vmatprep.subr.mxu0 0.0
      %4694 = vmatpush1.msra.mxu0 0.0
      %4695 = vmatprep.subr.mxu0 0.0
      %4696 = vmatpush1.msra.mxu0 %v4586
      %4697 = vmatprep.subr.mxu0 0.0
      %4698 = vmatpush2.msra.mxu0 0.0
      %4699 = vmatprep.subr.mxu0 0.0
      %4700 = vmatpush2.msra.mxu0 0.0
      %4701 = vmatprep.subr.mxu0 0.0
      %4702 = vmatpush2.msra.mxu0 0.0
      %4703 = vmatprep.subr.mxu0 0.0
      %4704 = vmatpush2.msra.mxu0 0.0
      %4705 = vmatprep.subr.mxu0 0.0
      %4706 = vmatpush2.msra.mxu0 0.0
      %4707 = vmatprep.subr.mxu0 0.0
      %4708 = vmatpush2.msra.mxu0 0.0
      %4709 = vmatprep.subr.mxu0 0.0
      %4710 = vmatpush2.msra.mxu0 0.0
      %4711 = vmatprep.subr.mxu0 0.0
      %4712 = vmatpush2.msra.mxu0 0.0
      %4713 = vmatprep.subr.mxu0 0.0
      %4714 = vmatpush2.msra.mxu0 0.0
      %4715 = vmatprep.subr.mxu0 0.0
      %4716 = vmatpush2.msra.mxu0 0.0
      %4717 = vmatprep.subr.mxu0 0.0
      %4718 = vmatpush2.msra.mxu0 0.0
      %4719 = vmatprep.subr.mxu0 0.0
      %4720 = vmatpush2.msra.mxu0 0.0
      %4721 = vmatprep.subr.mxu0 0.0
      %4722 = vmatpush2.msra.mxu0 0.0
      %4723 = vmatprep.subr.mxu0 0.0
      %4724 = vmatpush2.msra.mxu0 0.0
      %4725 = vmatprep.subr.mxu0 0.0
      %4726 = vmatpush2.msra.mxu0 0.0
      %4727 = vmatprep.subr.mxu0 0.0
      %4728 = vmatpush2.msra.mxu0 0.0
      %4729 = vmatprep.mubr.f32.mxu0 0.0
      %4730 = vmatmul.mubr.f32.gmra.mxu0 %v4577
      %v4731 = vpop.f32.mrf.mxu0
      %v4732 = vadd.f32 0.0, %v4731
      %v4733 = vpop.f32.mrf.mxu0
      %4734 = vmatprep.mubr.f32.mxu0 0.0
      %4735 = vmatmul.mubr.f32.gmra.mxu0 %v4580
      %v4736 = vpop.f32.mrf.mxu0
      %v4737 = vadd.f32 0.0, %v4736
      %v4738 = vpop.f32.mrf.mxu0
      %4739 = vdwg.mxu0
      %v4740 = vadd.f32 %v4555, %v4655
      %v4741 = vadd.f32 %v4556, %v4657
      %v4742 = vadd.f32 %v4557, %v4732
      %v4743 = vadd.f32 %v4558, %v4661
      %v4744 = vadd.f32 %v4559, %v4663
      %v4745 = vadd.f32 %v4560, %v4737
      %s4746 = scalar_lea.vmem %s2, 352
      %v4747 = vld [vmem:[%s4746] sm:$0xff]
      %v4748 = vld [vmem:[%s4746 + $0x8] sm:$0xff]
      %4749 = vrot.lane.b32.xlu0 %v696, 28
      %v4750 = vpop.permute.xlu0 %4749
      %4751 = vrot.lane.b32.xlu0 %v705, 28
      %v4752 = vpop.permute.xlu0 %4751
      %4753 = vrot.lane.b32.xlu0 %v697, 28
      %v4754 = vpop.permute.xlu0 %4753
      %4755 = vrot.lane.b32.xlu0 %v1603, 28
      %v4756 = vpop.permute.xlu0 %4755
      %vm4757 = vcmask 228352
      %v4758 = vsel %vm4757, %v4750, %v4752
      %v4759 = vsel %vm4757, %v4752, %v4754
      %v4760 = vsel %vm4757, %v4754, %v4756
      %v4762 = vsel %vm715, %v4747, 0
      %v4765 = vsel %vm715, %v4748, 0
      %v4767 = vsel %vm722, %v4758, 0
      %v4769 = vsel %vm722, %v4759, 0
      %v4771 = vsel %vm722, %v4760, 0
      %4773 = vmatprep.subr.mxu0 0.0
      %4774 = vmatpush1.msra.mxu0 0.0
      %4775 = vmatprep.subr.mxu0 0.0
      %4776 = vmatpush1.msra.mxu0 0.0
      %4777 = vmatprep.subr.mxu0 0.0
      %4778 = vmatpush1.msra.mxu0 0.0
      %4779 = vmatprep.subr.mxu0 0.0
      %4780 = vmatpush1.msra.mxu0 0.0
      %4781 = vmatprep.subr.mxu0 0.0
      %4782 = vmatpush1.msra.mxu0 0.0
      %4783 = vmatprep.subr.mxu0 0.0
      %4784 = vmatpush1.msra.mxu0 0.0
      %4785 = vmatprep.subr.mxu0 0.0
      %4786 = vmatpush1.msra.mxu0 0.0
      %4787 = vmatprep.subr.mxu0 0.0
      %4788 = vmatpush1.msra.mxu0 0.0
      %4789 = vmatprep.subr.mxu0 0.0
      %4790 = vmatpush1.msra.mxu0 0.0
      %4791 = vmatprep.subr.mxu0 0.0
      %4792 = vmatpush1.msra.mxu0 0.0
      %4793 = vmatprep.subr.mxu0 0.0
      %4794 = vmatpush1.msra.mxu0 0.0
      %4795 = vmatprep.subr.mxu0 0.0
      %4796 = vmatpush1.msra.mxu0 0.0
      %4797 = vmatprep.subr.mxu0 0.0
      %4798 = vmatpush1.msra.mxu0 0.0
      %4799 = vmatprep.subr.mxu0 0.0
      %4800 = vmatpush1.msra.mxu0 0.0
      %4801 = vmatprep.subr.mxu0 0.0
      %4802 = vmatpush1.msra.mxu0 0.0
      %4803 = vmatprep.subr.mxu0 %v4769
      %4804 = vmatpush1.msra.mxu0 %v4767
      %4805 = vmatprep.subr.mxu0 0.0
      %4806 = vmatpush2.msra.mxu0 0.0
      %4807 = vmatprep.subr.mxu0 0.0
      %4808 = vmatpush2.msra.mxu0 0.0
      %4809 = vmatprep.subr.mxu0 0.0
      %4810 = vmatpush2.msra.mxu0 0.0
      %4811 = vmatprep.subr.mxu0 0.0
      %4812 = vmatpush2.msra.mxu0 0.0
      %4813 = vmatprep.subr.mxu0 0.0
      %4814 = vmatpush2.msra.mxu0 0.0
      %4815 = vmatprep.subr.mxu0 0.0
      %4816 = vmatpush2.msra.mxu0 0.0
      %4817 = vmatprep.subr.mxu0 0.0
      %4818 = vmatpush2.msra.mxu0 0.0
      %4819 = vmatprep.subr.mxu0 0.0
      %4820 = vmatpush2.msra.mxu0 0.0
      %4821 = vmatprep.subr.mxu0 0.0
      %4822 = vmatpush2.msra.mxu0 0.0
      %4823 = vmatprep.subr.mxu0 0.0
      %4824 = vmatpush2.msra.mxu0 0.0
      %4825 = vmatprep.subr.mxu0 0.0
      %4826 = vmatpush2.msra.mxu0 0.0
      %4827 = vmatprep.subr.mxu0 0.0
      %4828 = vmatpush2.msra.mxu0 0.0
      %4829 = vmatprep.subr.mxu0 0.0
      %4830 = vmatpush2.msra.mxu0 0.0
      %4831 = vmatprep.subr.mxu0 0.0
      %4832 = vmatpush2.msra.mxu0 0.0
      %4833 = vmatprep.subr.mxu0 0.0
      %4834 = vmatpush2.msra.mxu0 0.0
      %4835 = vmatprep.subr.mxu0 0.0
      %4836 = vmatpush2.msra.mxu0 0.0
      %4837 = vmatprep.mubr.f32.mxu0 0.0
      %4838 = vmatmul.mubr.f32.gmra.mxu0 %v4762
      %v4839 = vpop.f32.mrf.mxu0
      %v4840 = vadd.f32 0.0, %v4839
      %v4841 = vpop.f32.mrf.mxu0
      %v4842 = vadd.f32 0.0, %v4841
      %4843 = vmatprep.mubr.f32.mxu0 0.0
      %4844 = vmatmul.mubr.f32.gmra.mxu0 %v4765
      %v4845 = vpop.f32.mrf.mxu0
      %v4846 = vadd.f32 0.0, %v4845
      %v4847 = vpop.f32.mrf.mxu0
      %v4848 = vadd.f32 0.0, %v4847
      %4849 = vdwg.mxu0
      %4850 = vmatprep.subr.mxu0 0.0
      %4851 = vmatpush1.msra.mxu0 0.0
      %4852 = vmatprep.subr.mxu0 0.0
      %4853 = vmatpush1.msra.mxu0 0.0
      %4854 = vmatprep.subr.mxu0 0.0
      %4855 = vmatpush1.msra.mxu0 0.0
      %4856 = vmatprep.subr.mxu0 0.0
      %4857 = vmatpush1.msra.mxu0 0.0
      %4858 = vmatprep.subr.mxu0 0.0
      %4859 = vmatpush1.msra.mxu0 0.0
      %4860 = vmatprep.subr.mxu0 0.0
      %4861 = vmatpush1.msra.mxu0 0.0
      %4862 = vmatprep.subr.mxu0 0.0
      %4863 = vmatpush1.msra.mxu0 0.0
      %4864 = vmatprep.subr.mxu0 0.0
      %4865 = vmatpush1.msra.mxu0 0.0
      %4866 = vmatprep.subr.mxu0 0.0
      %4867 = vmatpush1.msra.mxu0 0.0
      %4868 = vmatprep.subr.mxu0 0.0
      %4869 = vmatpush1.msra.mxu0 0.0
      %4870 = vmatprep.subr.mxu0 0.0
      %4871 = vmatpush1.msra.mxu0 0.0
      %4872 = vmatprep.subr.mxu0 0.0
      %4873 = vmatpush1.msra.mxu0 0.0
      %4874 = vmatprep.subr.mxu0 0.0
      %4875 = vmatpush1.msra.mxu0 0.0
      %4876 = vmatprep.subr.mxu0 0.0
      %4877 = vmatpush1.msra.mxu0 0.0
      %4878 = vmatprep.subr.mxu0 0.0
      %4879 = vmatpush1.msra.mxu0 0.0
      %4880 = vmatprep.subr.mxu0 0.0
      %4881 = vmatpush1.msra.mxu0 %v4771
      %4882 = vmatprep.subr.mxu0 0.0
      %4883 = vmatpush2.msra.mxu0 0.0
      %4884 = vmatprep.subr.mxu0 0.0
      %4885 = vmatpush2.msra.mxu0 0.0
      %4886 = vmatprep.subr.mxu0 0.0
      %4887 = vmatpush2.msra.mxu0 0.0
      %4888 = vmatprep.subr.mxu0 0.0
      %4889 = vmatpush2.msra.mxu0 0.0
      %4890 = vmatprep.subr.mxu0 0.0
      %4891 = vmatpush2.msra.mxu0 0.0
      %4892 = vmatprep.subr.mxu0 0.0
      %4893 = vmatpush2.msra.mxu0 0.0
      %4894 = vmatprep.subr.mxu0 0.0
      %4895 = vmatpush2.msra.mxu0 0.0
      %4896 = vmatprep.subr.mxu0 0.0
      %4897 = vmatpush2.msra.mxu0 0.0
      %4898 = vmatprep.subr.mxu0 0.0
      %4899 = vmatpush2.msra.mxu0 0.0
      %4900 = vmatprep.subr.mxu0 0.0
      %4901 = vmatpush2.msra.mxu0 0.0
      %4902 = vmatprep.subr.mxu0 0.0
      %4903 = vmatpush2.msra.mxu0 0.0
      %4904 = vmatprep.subr.mxu0 0.0
      %4905 = vmatpush2.msra.mxu0 0.0
      %4906 = vmatprep.subr.mxu0 0.0
      %4907 = vmatpush2.msra.mxu0 0.0
      %4908 = vmatprep.subr.mxu0 0.0
      %4909 = vmatpush2.msra.mxu0 0.0
      %4910 = vmatprep.subr.mxu0 0.0
      %4911 = vmatpush2.msra.mxu0 0.0
      %4912 = vmatprep.subr.mxu0 0.0
      %4913 = vmatpush2.msra.mxu0 0.0
      %4914 = vmatprep.mubr.f32.mxu0 0.0
      %4915 = vmatmul.mubr.f32.gmra.mxu0 %v4762
      %v4916 = vpop.f32.mrf.mxu0
      %v4917 = vadd.f32 0.0, %v4916
      %v4918 = vpop.f32.mrf.mxu0
      %4919 = vmatprep.mubr.f32.mxu0 0.0
      %4920 = vmatmul.mubr.f32.gmra.mxu0 %v4765
      %v4921 = vpop.f32.mrf.mxu0
      %v4922 = vadd.f32 0.0, %v4921
      %v4923 = vpop.f32.mrf.mxu0
      %4924 = vdwg.mxu0
      %v4925 = vadd.f32 %v4740, %v4840
      %v4926 = vadd.f32 %v4741, %v4842
      %v4927 = vadd.f32 %v4742, %v4917
      %v4928 = vadd.f32 %v4743, %v4846
      %v4929 = vadd.f32 %v4744, %v4848
      %v4930 = vadd.f32 %v4745, %v4922
      %s4931 = scalar_lea.vmem %s2, 368
      %v4932 = vld [vmem:[%s4931] sm:$0xff]
      %v4933 = vld [vmem:[%s4931 + $0x8] sm:$0xff]
      %4934 = vrot.lane.b32.xlu0 %v696, 27
      %v4935 = vpop.permute.xlu0 %4934
      %4936 = vrot.lane.b32.xlu0 %v705, 27
      %v4937 = vpop.permute.xlu0 %4936
      %4938 = vrot.lane.b32.xlu0 %v697, 27
      %v4939 = vpop.permute.xlu0 %4938
      %4940 = vrot.lane.b32.xlu0 %v1603, 27
      %v4941 = vpop.permute.xlu0 %4940
      %vm4942 = vcmask 220160
      %v4943 = vsel %vm4942, %v4935, %v4937
      %v4944 = vsel %vm4942, %v4937, %v4939
      %v4945 = vsel %vm4942, %v4939, %v4941
      %v4947 = vsel %vm715, %v4932, 0
      %v4950 = vsel %vm715, %v4933, 0
      %v4952 = vsel %vm722, %v4943, 0
      %v4954 = vsel %vm722, %v4944, 0
      %v4956 = vsel %vm722, %v4945, 0
      %4958 = vmatprep.subr.mxu0 0.0
      %4959 = vmatpush1.msra.mxu0 0.0
      %4960 = vmatprep.subr.mxu0 0.0
      %4961 = vmatpush1.msra.mxu0 0.0
      %4962 = vmatprep.subr.mxu0 0.0
      %4963 = vmatpush1.msra.mxu0 0.0
      %4964 = vmatprep.subr.mxu0 0.0
      %4965 = vmatpush1.msra.mxu0 0.0
      %4966 = vmatprep.subr.mxu0 0.0
      %4967 = vmatpush1.msra.mxu0 0.0
      %4968 = vmatprep.subr.mxu0 0.0
      %4969 = vmatpush1.msra.mxu0 0.0
      %4970 = vmatprep.subr.mxu0 0.0
      %4971 = vmatpush1.msra.mxu0 0.0
      %4972 = vmatprep.subr.mxu0 0.0
      %4973 = vmatpush1.msra.mxu0 0.0
      %4974 = vmatprep.subr.mxu0 0.0
      %4975 = vmatpush1.msra.mxu0 0.0
      %4976 = vmatprep.subr.mxu0 0.0
      %4977 = vmatpush1.msra.mxu0 0.0
      %4978 = vmatprep.subr.mxu0 0.0
      %4979 = vmatpush1.msra.mxu0 0.0
      %4980 = vmatprep.subr.mxu0 0.0
      %4981 = vmatpush1.msra.mxu0 0.0
      %4982 = vmatprep.subr.mxu0 0.0
      %4983 = vmatpush1.msra.mxu0 0.0
      %4984 = vmatprep.subr.mxu0 0.0
      %4985 = vmatpush1.msra.mxu0 0.0
      %4986 = vmatprep.subr.mxu0 0.0
      %4987 = vmatpush1.msra.mxu0 0.0
      %4988 = vmatprep.subr.mxu0 %v4954
      %4989 = vmatpush1.msra.mxu0 %v4952
      %4990 = vmatprep.subr.mxu0 0.0
      %4991 = vmatpush2.msra.mxu0 0.0
      %4992 = vmatprep.subr.mxu0 0.0
      %4993 = vmatpush2.msra.mxu0 0.0
      %4994 = vmatprep.subr.mxu0 0.0
      %4995 = vmatpush2.msra.mxu0 0.0
      %4996 = vmatprep.subr.mxu0 0.0
      %4997 = vmatpush2.msra.mxu0 0.0
      %4998 = vmatprep.subr.mxu0 0.0
      %4999 = vmatpush2.msra.mxu0 0.0
      %5000 = vmatprep.subr.mxu0 0.0
      %5001 = vmatpush2.msra.mxu0 0.0
      %5002 = vmatprep.subr.mxu0 0.0
      %5003 = vmatpush2.msra.mxu0 0.0
      %5004 = vmatprep.subr.mxu0 0.0
      %5005 = vmatpush2.msra.mxu0 0.0
      %5006 = vmatprep.subr.mxu0 0.0
      %5007 = vmatpush2.msra.mxu0 0.0
      %5008 = vmatprep.subr.mxu0 0.0
      %5009 = vmatpush2.msra.mxu0 0.0
      %5010 = vmatprep.subr.mxu0 0.0
      %5011 = vmatpush2.msra.mxu0 0.0
      %5012 = vmatprep.subr.mxu0 0.0
      %5013 = vmatpush2.msra.mxu0 0.0
      %5014 = vmatprep.subr.mxu0 0.0
      %5015 = vmatpush2.msra.mxu0 0.0
      %5016 = vmatprep.subr.mxu0 0.0
      %5017 = vmatpush2.msra.mxu0 0.0
      %5018 = vmatprep.subr.mxu0 0.0
      %5019 = vmatpush2.msra.mxu0 0.0
      %5020 = vmatprep.subr.mxu0 0.0
      %5021 = vmatpush2.msra.mxu0 0.0
      %5022 = vmatprep.mubr.f32.mxu0 0.0
      %5023 = vmatmul.mubr.f32.gmra.mxu0 %v4947
      %v5024 = vpop.f32.mrf.mxu0
      %v5025 = vadd.f32 0.0, %v5024
      %v5026 = vpop.f32.mrf.mxu0
      %v5027 = vadd.f32 0.0, %v5026
      %5028 = vmatprep.mubr.f32.mxu0 0.0
      %5029 = vmatmul.mubr.f32.gmra.mxu0 %v4950
      %v5030 = vpop.f32.mrf.mxu0
      %v5031 = vadd.f32 0.0, %v5030
      %v5032 = vpop.f32.mrf.mxu0
      %v5033 = vadd.f32 0.0, %v5032
      %5034 = vdwg.mxu0
      %5035 = vmatprep.subr.mxu0 0.0
      %5036 = vmatpush1.msra.mxu0 0.0
      %5037 = vmatprep.subr.mxu0 0.0
      %5038 = vmatpush1.msra.mxu0 0.0
      %5039 = vmatprep.subr.mxu0 0.0
      %5040 = vmatpush1.msra.mxu0 0.0
      %5041 = vmatprep.subr.mxu0 0.0
      %5042 = vmatpush1.msra.mxu0 0.0
      %5043 = vmatprep.subr.mxu0 0.0
      %5044 = vmatpush1.msra.mxu0 0.0
      %5045 = vmatprep.subr.mxu0 0.0
      %5046 = vmatpush1.msra.mxu0 0.0
      %5047 = vmatprep.subr.mxu0 0.0
      %5048 = vmatpush1.msra.mxu0 0.0
      %5049 = vmatprep.subr.mxu0 0.0
      %5050 = vmatpush1.msra.mxu0 0.0
      %5051 = vmatprep.subr.mxu0 0.0
      %5052 = vmatpush1.msra.mxu0 0.0
      %5053 = vmatprep.subr.mxu0 0.0
      %5054 = vmatpush1.msra.mxu0 0.0
      %5055 = vmatprep.subr.mxu0 0.0
      %5056 = vmatpush1.msra.mxu0 0.0
      %5057 = vmatprep.subr.mxu0 0.0
      %5058 = vmatpush1.msra.mxu0 0.0
      %5059 = vmatprep.subr.mxu0 0.0
      %5060 = vmatpush1.msra.mxu0 0.0
      %5061 = vmatprep.subr.mxu0 0.0
      %5062 = vmatpush1.msra.mxu0 0.0
      %5063 = vmatprep.subr.mxu0 0.0
      %5064 = vmatpush1.msra.mxu0 0.0
      %5065 = vmatprep.subr.mxu0 0.0
      %5066 = vmatpush1.msra.mxu0 %v4956
      %5067 = vmatprep.subr.mxu0 0.0
      %5068 = vmatpush2.msra.mxu0 0.0
      %5069 = vmatprep.subr.mxu0 0.0
      %5070 = vmatpush2.msra.mxu0 0.0
      %5071 = vmatprep.subr.mxu0 0.0
      %5072 = vmatpush2.msra.mxu0 0.0
      %5073 = vmatprep.subr.mxu0 0.0
      %5074 = vmatpush2.msra.mxu0 0.0
      %5075 = vmatprep.subr.mxu0 0.0
      %5076 = vmatpush2.msra.mxu0 0.0
      %5077 = vmatprep.subr.mxu0 0.0
      %5078 = vmatpush2.msra.mxu0 0.0
      %5079 = vmatprep.subr.mxu0 0.0
      %5080 = vmatpush2.msra.mxu0 0.0
      %5081 = vmatprep.subr.mxu0 0.0
      %5082 = vmatpush2.msra.mxu0 0.0
      %5083 = vmatprep.subr.mxu0 0.0
      %5084 = vmatpush2.msra.mxu0 0.0
      %5085 = vmatprep.subr.mxu0 0.0
      %5086 = vmatpush2.msra.mxu0 0.0
      %5087 = vmatprep.subr.mxu0 0.0
      %5088 = vmatpush2.msra.mxu0 0.0
      %5089 = vmatprep.subr.mxu0 0.0
      %5090 = vmatpush2.msra.mxu0 0.0
      %5091 = vmatprep.subr.mxu0 0.0
      %5092 = vmatpush2.msra.mxu0 0.0
      %5093 = vmatprep.subr.mxu0 0.0
      %5094 = vmatpush2.msra.mxu0 0.0
      %5095 = vmatprep.subr.mxu0 0.0
      %5096 = vmatpush2.msra.mxu0 0.0
      %5097 = vmatprep.subr.mxu0 0.0
      %5098 = vmatpush2.msra.mxu0 0.0
      %5099 = vmatprep.mubr.f32.mxu0 0.0
      %5100 = vmatmul.mubr.f32.gmra.mxu0 %v4947
      %v5101 = vpop.f32.mrf.mxu0
      %v5102 = vadd.f32 0.0, %v5101
      %v5103 = vpop.f32.mrf.mxu0
      %5104 = vmatprep.mubr.f32.mxu0 0.0
      %5105 = vmatmul.mubr.f32.gmra.mxu0 %v4950
      %v5106 = vpop.f32.mrf.mxu0
      %v5107 = vadd.f32 0.0, %v5106
      %v5108 = vpop.f32.mrf.mxu0
      %5109 = vdwg.mxu0
      %v5110 = vadd.f32 %v4925, %v5025
      %v5111 = vadd.f32 %v4926, %v5027
      %v5112 = vadd.f32 %v4927, %v5102
      %v5113 = vadd.f32 %v4928, %v5031
      %v5114 = vadd.f32 %v4929, %v5033
      %v5115 = vadd.f32 %v4930, %v5107
      %s5116 = scalar_lea.vmem %s2, 384
      %v5117 = vld [vmem:[%s5116] sm:$0xff]
      %v5118 = vld [vmem:[%s5116 + $0x8] sm:$0xff]
      %5119 = vrot.lane.b32.xlu0 %v696, 26
      %v5120 = vpop.permute.xlu0 %5119
      %5121 = vrot.lane.b32.xlu0 %v705, 26
      %v5122 = vpop.permute.xlu0 %5121
      %5123 = vrot.lane.b32.xlu0 %v697, 26
      %v5124 = vpop.permute.xlu0 %5123
      %5125 = vrot.lane.b32.xlu0 %v1603, 26
      %v5126 = vpop.permute.xlu0 %5125
      %vm5127 = vcmask 211968
      %v5128 = vsel %vm5127, %v5120, %v5122
      %v5129 = vsel %vm5127, %v5122, %v5124
      %v5130 = vsel %vm5127, %v5124, %v5126
      %v5132 = vsel %vm715, %v5117, 0
      %v5135 = vsel %vm715, %v5118, 0
      %v5137 = vsel %vm722, %v5128, 0
      %v5139 = vsel %vm722, %v5129, 0
      %v5141 = vsel %vm722, %v5130, 0
      %5143 = vmatprep.subr.mxu0 0.0
      %5144 = vmatpush1.msra.mxu0 0.0
      %5145 = vmatprep.subr.mxu0 0.0
      %5146 = vmatpush1.msra.mxu0 0.0
      %5147 = vmatprep.subr.mxu0 0.0
      %5148 = vmatpush1.msra.mxu0 0.0
      %5149 = vmatprep.subr.mxu0 0.0
      %5150 = vmatpush1.msra.mxu0 0.0
      %5151 = vmatprep.subr.mxu0 0.0
      %5152 = vmatpush1.msra.mxu0 0.0
      %5153 = vmatprep.subr.mxu0 0.0
      %5154 = vmatpush1.msra.mxu0 0.0
      %5155 = vmatprep.subr.mxu0 0.0
      %5156 = vmatpush1.msra.mxu0 0.0
      %5157 = vmatprep.subr.mxu0 0.0
      %5158 = vmatpush1.msra.mxu0 0.0
      %5159 = vmatprep.subr.mxu0 0.0
      %5160 = vmatpush1.msra.mxu0 0.0
      %5161 = vmatprep.subr.mxu0 0.0
      %5162 = vmatpush1.msra.mxu0 0.0
      %5163 = vmatprep.subr.mxu0 0.0
      %5164 = vmatpush1.msra.mxu0 0.0
      %5165 = vmatprep.subr.mxu0 0.0
      %5166 = vmatpush1.msra.mxu0 0.0
      %5167 = vmatprep.subr.mxu0 0.0
      %5168 = vmatpush1.msra.mxu0 0.0
      %5169 = vmatprep.subr.mxu0 0.0
      %5170 = vmatpush1.msra.mxu0 0.0
      %5171 = vmatprep.subr.mxu0 0.0
      %5172 = vmatpush1.msra.mxu0 0.0
      %5173 = vmatprep.subr.mxu0 %v5139
      %5174 = vmatpush1.msra.mxu0 %v5137
      %5175 = vmatprep.subr.mxu0 0.0
      %5176 = vmatpush2.msra.mxu0 0.0
      %5177 = vmatprep.subr.mxu0 0.0
      %5178 = vmatpush2.msra.mxu0 0.0
      %5179 = vmatprep.subr.mxu0 0.0
      %5180 = vmatpush2.msra.mxu0 0.0
      %5181 = vmatprep.subr.mxu0 0.0
      %5182 = vmatpush2.msra.mxu0 0.0
      %5183 = vmatprep.subr.mxu0 0.0
      %5184 = vmatpush2.msra.mxu0 0.0
      %5185 = vmatprep.subr.mxu0 0.0
      %5186 = vmatpush2.msra.mxu0 0.0
      %5187 = vmatprep.subr.mxu0 0.0
      %5188 = vmatpush2.msra.mxu0 0.0
      %5189 = vmatprep.subr.mxu0 0.0
      %5190 = vmatpush2.msra.mxu0 0.0
      %5191 = vmatprep.subr.mxu0 0.0
      %5192 = vmatpush2.msra.mxu0 0.0
      %5193 = vmatprep.subr.mxu0 0.0
      %5194 = vmatpush2.msra.mxu0 0.0
      %5195 = vmatprep.subr.mxu0 0.0
      %5196 = vmatpush2.msra.mxu0 0.0
      %5197 = vmatprep.subr.mxu0 0.0
      %5198 = vmatpush2.msra.mxu0 0.0
      %5199 = vmatprep.subr.mxu0 0.0
      %5200 = vmatpush2.msra.mxu0 0.0
      %5201 = vmatprep.subr.mxu0 0.0
      %5202 = vmatpush2.msra.mxu0 0.0
      %5203 = vmatprep.subr.mxu0 0.0
      %5204 = vmatpush2.msra.mxu0 0.0
      %5205 = vmatprep.subr.mxu0 0.0
      %5206 = vmatpush2.msra.mxu0 0.0
      %5207 = vmatprep.mubr.f32.mxu0 0.0
      %5208 = vmatmul.mubr.f32.gmra.mxu0 %v5132
      %v5209 = vpop.f32.mrf.mxu0
      %v5210 = vadd.f32 0.0, %v5209
      %v5211 = vpop.f32.mrf.mxu0
      %v5212 = vadd.f32 0.0, %v5211
      %5213 = vmatprep.mubr.f32.mxu0 0.0
      %5214 = vmatmul.mubr.f32.gmra.mxu0 %v5135
      %v5215 = vpop.f32.mrf.mxu0
      %v5216 = vadd.f32 0.0, %v5215
      %v5217 = vpop.f32.mrf.mxu0
      %v5218 = vadd.f32 0.0, %v5217
      %5219 = vdwg.mxu0
      %5220 = vmatprep.subr.mxu0 0.0
      %5221 = vmatpush1.msra.mxu0 0.0
      %5222 = vmatprep.subr.mxu0 0.0
      %5223 = vmatpush1.msra.mxu0 0.0
      %5224 = vmatprep.subr.mxu0 0.0
      %5225 = vmatpush1.msra.mxu0 0.0
      %5226 = vmatprep.subr.mxu0 0.0
      %5227 = vmatpush1.msra.mxu0 0.0
      %5228 = vmatprep.subr.mxu0 0.0
      %5229 = vmatpush1.msra.mxu0 0.0
      %5230 = vmatprep.subr.mxu0 0.0
      %5231 = vmatpush1.msra.mxu0 0.0
      %5232 = vmatprep.subr.mxu0 0.0
      %5233 = vmatpush1.msra.mxu0 0.0
      %5234 = vmatprep.subr.mxu0 0.0
      %5235 = vmatpush1.msra.mxu0 0.0
      %5236 = vmatprep.subr.mxu0 0.0
      %5237 = vmatpush1.msra.mxu0 0.0
      %5238 = vmatprep.subr.mxu0 0.0
      %5239 = vmatpush1.msra.mxu0 0.0
      %5240 = vmatprep.subr.mxu0 0.0
      %5241 = vmatpush1.msra.mxu0 0.0
      %5242 = vmatprep.subr.mxu0 0.0
      %5243 = vmatpush1.msra.mxu0 0.0
      %5244 = vmatprep.subr.mxu0 0.0
      %5245 = vmatpush1.msra.mxu0 0.0
      %5246 = vmatprep.subr.mxu0 0.0
      %5247 = vmatpush1.msra.mxu0 0.0
      %5248 = vmatprep.subr.mxu0 0.0
      %5249 = vmatpush1.msra.mxu0 0.0
      %5250 = vmatprep.subr.mxu0 0.0
      %5251 = vmatpush1.msra.mxu0 %v5141
      %5252 = vmatprep.subr.mxu0 0.0
      %5253 = vmatpush2.msra.mxu0 0.0
      %5254 = vmatprep.subr.mxu0 0.0
      %5255 = vmatpush2.msra.mxu0 0.0
      %5256 = vmatprep.subr.mxu0 0.0
      %5257 = vmatpush2.msra.mxu0 0.0
      %5258 = vmatprep.subr.mxu0 0.0
      %5259 = vmatpush2.msra.mxu0 0.0
      %5260 = vmatprep.subr.mxu0 0.0
      %5261 = vmatpush2.msra.mxu0 0.0
      %5262 = vmatprep.subr.mxu0 0.0
      %5263 = vmatpush2.msra.mxu0 0.0
      %5264 = vmatprep.subr.mxu0 0.0
      %5265 = vmatpush2.msra.mxu0 0.0
      %5266 = vmatprep.subr.mxu0 0.0
      %5267 = vmatpush2.msra.mxu0 0.0
      %5268 = vmatprep.subr.mxu0 0.0
      %5269 = vmatpush2.msra.mxu0 0.0
      %5270 = vmatprep.subr.mxu0 0.0
      %5271 = vmatpush2.msra.mxu0 0.0
      %5272 = vmatprep.subr.mxu0 0.0
      %5273 = vmatpush2.msra.mxu0 0.0
      %5274 = vmatprep.subr.mxu0 0.0
      %5275 = vmatpush2.msra.mxu0 0.0
      %5276 = vmatprep.subr.mxu0 0.0
      %5277 = vmatpush2.msra.mxu0 0.0
      %5278 = vmatprep.subr.mxu0 0.0
      %5279 = vmatpush2.msra.mxu0 0.0
      %5280 = vmatprep.subr.mxu0 0.0
      %5281 = vmatpush2.msra.mxu0 0.0
      %5282 = vmatprep.subr.mxu0 0.0
      %5283 = vmatpush2.msra.mxu0 0.0
      %5284 = vmatprep.mubr.f32.mxu0 0.0
      %5285 = vmatmul.mubr.f32.gmra.mxu0 %v5132
      %v5286 = vpop.f32.mrf.mxu0
      %v5287 = vadd.f32 0.0, %v5286
      %v5288 = vpop.f32.mrf.mxu0
      %5289 = vmatprep.mubr.f32.mxu0 0.0
      %5290 = vmatmul.mubr.f32.gmra.mxu0 %v5135
      %v5291 = vpop.f32.mrf.mxu0
      %v5292 = vadd.f32 0.0, %v5291
      %v5293 = vpop.f32.mrf.mxu0
      %5294 = vdwg.mxu0
      %v5295 = vadd.f32 %v5110, %v5210
      %v5296 = vadd.f32 %v5111, %v5212
      %v5297 = vadd.f32 %v5112, %v5287
      %v5298 = vadd.f32 %v5113, %v5216
      %v5299 = vadd.f32 %v5114, %v5218
      %v5300 = vadd.f32 %v5115, %v5292
      %v5301 = vld [vmem:[%s3] sm:$0xff]
      %v5302 = vld [vmem:[%s3 + $0x8] sm:$0xff]
      %5304 = vset.pattern.permute.xlu0 0
      %5305 = vperm.xlu0 %5304, %v5301
      %v5306 = vpop.permute.xlu0 %5305
      %5309 = vset.pattern.permute.xlu0 0
      %5310 = vperm.xlu0 %5309, %v5302
      %v5311 = vpop.permute.xlu0 %5310
      %v5313 = vadd.f32 %v5295, %v5306
      %v5314 = vadd.f32 %v5296, %v5306
      %v5315 = vadd.f32 %v5297, %v5306
      %v5316 = vadd.f32 %v5298, %v5311
      %v5317 = vadd.f32 %v5299, %v5311
      %v5318 = vadd.f32 %v5300, %v5311
      %v5320 = vlaneseq
      %v5321 = vshrl.u32 %v5320, 7
      %v5322 = vsub.s32 0, %v5321
      %v5323 = vrot.slane %v495, %v5322
      %v5324 = vlaneseq
      %v5325 = vshrl.u32 %v5324, 7
      %v5326 = vsub.s32 1, %v5325
      %v5327 = vrot.slane %v495, %v5326
      %v5328 = vlaneseq
      %v5329 = vshrl.u32 %v5328, 7
      %v5330 = vsub.s32 2, %v5329
      %v5331 = vrot.slane %v495, %v5330
      %v5335 = vmul.f32 %v5313, %v5323
      %v5336 = vmul.f32 %v5314, %v5327
      %v5337 = vmul.f32 %v5315, %v5331
      %v5338 = vmul.f32 %v5316, %v5323
      %v5339 = vmul.f32 %v5317, %v5327
      %v5340 = vmul.f32 %v5318, %v5331
      %vm5341 = vcmask 490496
      %5342 = vst.msk [vmem:[#allocation3] sm:$0xff] %vm5341, 0.0
      %5343 = vst.msk [vmem:[#allocation3 + $0x20] sm:$0xff] %vm5341, 0.0
      %5350 = vrot.lane.b32.xlu0 %v5335, 60
      %v5351 = vpop.permute.xlu0 %5350
      %5352 = vrot.lane.b32.xlu0 %v5336, 60
      %v5353 = vpop.permute.xlu0 %5352
      %5354 = vrot.lane.b32.xlu0 %v5337, 60
      %v5355 = vpop.permute.xlu0 %5354
      %5356 = vrot.lane.b32.xlu0 %v5338, 60
      %v5357 = vpop.permute.xlu0 %5356
      %5358 = vrot.lane.b32.xlu0 %v5339, 60
      %v5359 = vpop.permute.xlu0 %5358
      %5360 = vrot.lane.b32.xlu0 %v5340, 60
      %v5361 = vpop.permute.xlu0 %5360
      %v5362 = vsel %vm5341, %v5351, %v5353
      %v5363 = vsel %vm5341, %v5353, %v5355
      %v5364 = vsel %vm5341, %v5357, %v5359
      %v5365 = vsel %vm5341, %v5359, %v5361
      %vm5374 = vcmask 1048032
      %5375 = vst.msk [vmem:[#allocation3] sm:$0xff] %vm5374, %v5351
      %5376 = vst [vmem:[#allocation3 + $0x8] sm:$0xff] %v5362
      %5377 = vst [vmem:[#allocation3 + $0x10] sm:$0xff] %v5363
      %vm5378 = vcmask 293888
      %5379 = vst.msk [vmem:[#allocation3 + $0x18] sm:$0xff] %vm5378, %v5355
      %5380 = vst.msk [vmem:[#allocation3 + $0x20] sm:$0xff] %vm5374, %v5357
      %5381 = vst [vmem:[#allocation3 + $0x28] sm:$0xff] %v5364
      %5382 = vst [vmem:[#allocation3 + $0x30] sm:$0xff] %v5365
      %5383 = vst.msk [vmem:[#allocation3 + $0x38] sm:$0xff] %vm5378, %v5361
      %vm5384 = vcmask 785696
      %5385 = vst.msk [vmem:[#allocation3 + $0x18] sm:$0xff] %vm5384, 0.0
      %5386 = vst.msk [vmem:[#allocation3 + $0x38] sm:$0xff] %vm5384, 0.0
      %v5387 = vld [vmem:[#allocation3] sm:$0xff]
      %v5388 = vld [vmem:[#allocation3 + $0x8] sm:$0xff]
      %v5389 = vld [vmem:[#allocation3 + $0x10] sm:$0xff]
      %v5390 = vld [vmem:[#allocation3 + $0x18] sm:$0xff]
      %v5391 = vld [vmem:[#allocation3 + $0x20] sm:$0xff]
      %v5392 = vld [vmem:[#allocation3 + $0x28] sm:$0xff]
      %v5393 = vld [vmem:[#allocation3 + $0x30] sm:$0xff]
      %v5394 = vld [vmem:[#allocation3 + $0x38] sm:$0xff]
      %v5395 = vld [vmem:[%s4] sm:$0xf]
      %s5396 = scalar_lea.vmem %s4, 4
      %v5397 = vld [vmem:[%s5396] sm:$0xf]
      %5406 = vrot.lane.b32.xlu0 %v5387, 88
      %v5407 = vpop.permute.xlu0 %5406
      %5408 = vrot.lane.b32.xlu0 %v5388, 88
      %v5409 = vpop.permute.xlu0 %5408
      %5410 = vrot.lane.b32.xlu0 %v5389, 88
      %v5411 = vpop.permute.xlu0 %5410
      %5412 = vrot.lane.b32.xlu0 %v5390, 88
      %v5413 = vpop.permute.xlu0 %5412
      %5414 = vrot.lane.b32.xlu0 %v5391, 88
      %v5415 = vpop.permute.xlu0 %5414
      %5416 = vrot.lane.b32.xlu0 %v5392, 88
      %v5417 = vpop.permute.xlu0 %5416
      %5418 = vrot.lane.b32.xlu0 %v5393, 88
      %v5419 = vpop.permute.xlu0 %5418
      %5420 = vrot.lane.b32.xlu0 %v5394, 88
      %v5421 = vpop.permute.xlu0 %5420
      %v5422 = vsel %vm1982, %v5407, %v5409
      %v5423 = vsel %vm1982, %v5409, %v5411
      %v5424 = vsel %vm1982, %v5411, %v5413
      %v5425 = vsel %vm1982, %v5415, %v5417
      %v5426 = vsel %vm1982, %v5417, %v5419
      %v5427 = vsel %vm1982, %v5419, %v5421
      %vm5434 = vcmask 130048
      %v5436 = vsel %vm5434, %v5397, 0
      %5438 = vmatprep.subr.mxu0 0.0
      %5439 = vmatpush1.msra.mxu0 0.0
      %5440 = vmatprep.subr.mxu0 0.0
      %5441 = vmatpush1.msra.mxu0 0.0
      %5442 = vmatprep.subr.mxu0 0.0
      %5443 = vmatpush1.msra.mxu0 0.0
      %5444 = vmatprep.subr.mxu0 0.0
      %5445 = vmatpush1.msra.mxu0 0.0
      %5446 = vmatprep.subr.mxu0 0.0
      %5447 = vmatpush1.msra.mxu0 0.0
      %5448 = vmatprep.subr.mxu0 0.0
      %5449 = vmatpush1.msra.mxu0 0.0
      %5450 = vmatprep.subr.mxu0 0.0
      %5451 = vmatpush1.msra.mxu0 0.0
      %5452 = vmatprep.subr.mxu0 0.0
      %5453 = vmatpush1.msra.mxu0 0.0
      %5454 = vmatprep.subr.mxu0 0.0
      %5455 = vmatpush1.msra.mxu0 0.0
      %5456 = vmatprep.subr.mxu0 0.0
      %5457 = vmatpush1.msra.mxu0 0.0
      %5458 = vmatprep.subr.mxu0 0.0
      %5459 = vmatpush1.msra.mxu0 0.0
      %5460 = vmatprep.subr.mxu0 0.0
      %5461 = vmatpush1.msra.mxu0 0.0
      %5462 = vmatprep.subr.mxu0 0.0
      %5463 = vmatpush1.msra.mxu0 0.0
      %5464 = vmatprep.subr.mxu0 0.0
      %5465 = vmatpush1.msra.mxu0 0.0
      %5466 = vmatprep.subr.mxu0 %v5426
      %5467 = vmatpush1.msra.mxu0 %v5425
      %5468 = vmatprep.subr.mxu0 %v5423
      %5469 = vmatpush1.msra.mxu0 %v5422
      %5470 = vmatprep.subr.mxu0 0.0
      %5471 = vmatpush2.msra.mxu0 0.0
      %5472 = vmatprep.subr.mxu0 0.0
      %5473 = vmatpush2.msra.mxu0 0.0
      %5474 = vmatprep.subr.mxu0 0.0
      %5475 = vmatpush2.msra.mxu0 0.0
      %5476 = vmatprep.subr.mxu0 0.0
      %5477 = vmatpush2.msra.mxu0 0.0
      %5478 = vmatprep.subr.mxu0 0.0
      %5479 = vmatpush2.msra.mxu0 0.0
      %5480 = vmatprep.subr.mxu0 0.0
      %5481 = vmatpush2.msra.mxu0 0.0
      %5482 = vmatprep.subr.mxu0 0.0
      %5483 = vmatpush2.msra.mxu0 0.0
      %5484 = vmatprep.subr.mxu0 0.0
      %5485 = vmatpush2.msra.mxu0 0.0
      %5486 = vmatprep.subr.mxu0 0.0
      %5487 = vmatpush2.msra.mxu0 0.0
      %5488 = vmatprep.subr.mxu0 0.0
      %5489 = vmatpush2.msra.mxu0 0.0
      %5490 = vmatprep.subr.mxu0 0.0
      %5491 = vmatpush2.msra.mxu0 0.0
      %5492 = vmatprep.subr.mxu0 0.0
      %5493 = vmatpush2.msra.mxu0 0.0
      %5494 = vmatprep.subr.mxu0 0.0
      %5495 = vmatpush2.msra.mxu0 0.0
      %5496 = vmatprep.subr.mxu0 0.0
      %5497 = vmatpush2.msra.mxu0 0.0
      %5498 = vmatprep.subr.mxu0 0.0
      %5499 = vmatpush2.msra.mxu0 0.0
      %5500 = vmatprep.subr.mxu0 0.0
      %5501 = vmatpush2.msra.mxu0 0.0
      %5502 = vmatprep.mubr.f32.mxu0 0.0
      %5503 = vmatmul.mubr.f32.gmra.mxu0 %v5436
      %v5504 = vpop.f32.mrf.mxu0
      %v5505 = vadd.f32 0.0, %v5504
      %v5506 = vpop.f32.mrf.mxu0
      %v5507 = vadd.f32 0.0, %v5506
      %5508 = vdwg.mxu0
      %5509 = vmatprep.subr.mxu0 0.0
      %5510 = vmatpush1.msra.mxu0 0.0
      %5511 = vmatprep.subr.mxu0 0.0
      %5512 = vmatpush1.msra.mxu0 0.0
      %5513 = vmatprep.subr.mxu0 0.0
      %5514 = vmatpush1.msra.mxu0 0.0
      %5515 = vmatprep.subr.mxu0 0.0
      %5516 = vmatpush1.msra.mxu0 0.0
      %5517 = vmatprep.subr.mxu0 0.0
      %5518 = vmatpush1.msra.mxu0 0.0
      %5519 = vmatprep.subr.mxu0 0.0
      %5520 = vmatpush1.msra.mxu0 0.0
      %5521 = vmatprep.subr.mxu0 0.0
      %5522 = vmatpush1.msra.mxu0 0.0
      %5523 = vmatprep.subr.mxu0 0.0
      %5524 = vmatpush1.msra.mxu0 0.0
      %5525 = vmatprep.subr.mxu0 0.0
      %5526 = vmatpush1.msra.mxu0 0.0
      %5527 = vmatprep.subr.mxu0 0.0
      %5528 = vmatpush1.msra.mxu0 0.0
      %5529 = vmatprep.subr.mxu0 0.0
      %5530 = vmatpush1.msra.mxu0 0.0
      %5531 = vmatprep.subr.mxu0 0.0
      %5532 = vmatpush1.msra.mxu0 0.0
      %5533 = vmatprep.subr.mxu0 0.0
      %5534 = vmatpush1.msra.mxu0 0.0
      %5535 = vmatprep.subr.mxu0 0.0
      %5536 = vmatpush1.msra.mxu0 0.0
      %5537 = vmatprep.subr.mxu0 0.0
      %5538 = vmatpush1.msra.mxu0 %v5427
      %5539 = vmatprep.subr.mxu0 0.0
      %5540 = vmatpush1.msra.mxu0 %v5424
      %5541 = vmatprep.subr.mxu0 0.0
      %5542 = vmatpush2.msra.mxu0 0.0
      %5543 = vmatprep.subr.mxu0 0.0
      %5544 = vmatpush2.msra.mxu0 0.0
      %5545 = vmatprep.subr.mxu0 0.0
      %5546 = vmatpush2.msra.mxu0 0.0
      %5547 = vmatprep.subr.mxu0 0.0
      %5548 = vmatpush2.msra.mxu0 0.0
      %5549 = vmatprep.subr.mxu0 0.0
      %5550 = vmatpush2.msra.mxu0 0.0
      %5551 = vmatprep.subr.mxu0 0.0
      %5552 = vmatpush2.msra.mxu0 0.0
      %5553 = vmatprep.subr.mxu0 0.0
      %5554 = vmatpush2.msra.mxu0 0.0
      %5555 = vmatprep.subr.mxu0 0.0
      %5556 = vmatpush2.msra.mxu0 0.0
      %5557 = vmatprep.subr.mxu0 0.0
      %5558 = vmatpush2.msra.mxu0 0.0
      %5559 = vmatprep.subr.mxu0 0.0
      %5560 = vmatpush2.msra.mxu0 0.0
      %5561 = vmatprep.subr.mxu0 0.0
      %5562 = vmatpush2.msra.mxu0 0.0
      %5563 = vmatprep.subr.mxu0 0.0
      %5564 = vmatpush2.msra.mxu0 0.0
      %5565 = vmatprep.subr.mxu0 0.0
      %5566 = vmatpush2.msra.mxu0 0.0
      %5567 = vmatprep.subr.mxu0 0.0
      %5568 = vmatpush2.msra.mxu0 0.0
      %5569 = vmatprep.subr.mxu0 0.0
      %5570 = vmatpush2.msra.mxu0 0.0
      %5571 = vmatprep.subr.mxu0 0.0
      %5572 = vmatpush2.msra.mxu0 0.0
      %5573 = vmatprep.mubr.f32.mxu0 0.0
      %5574 = vmatmul.mubr.f32.gmra.mxu0 %v5436
      %v5575 = vpop.f32.mrf.mxu0
      %v5576 = vadd.f32 0.0, %v5575
      %v5577 = vpop.f32.mrf.mxu0
      %5578 = vdwg.mxu0
      %5579 = vrot.lane.b32.xlu0 %v5387, 89
      %v5580 = vpop.permute.xlu0 %5579
      %5581 = vrot.lane.b32.xlu0 %v5388, 89
      %v5582 = vpop.permute.xlu0 %5581
      %5583 = vrot.lane.b32.xlu0 %v5389, 89
      %v5584 = vpop.permute.xlu0 %5583
      %5585 = vrot.lane.b32.xlu0 %v5390, 89
      %v5586 = vpop.permute.xlu0 %5585
      %5587 = vrot.lane.b32.xlu0 %v5391, 89
      %v5588 = vpop.permute.xlu0 %5587
      %5589 = vrot.lane.b32.xlu0 %v5392, 89
      %v5590 = vpop.permute.xlu0 %5589
      %5591 = vrot.lane.b32.xlu0 %v5393, 89
      %v5592 = vpop.permute.xlu0 %5591
      %5593 = vrot.lane.b32.xlu0 %v5394, 89
      %v5594 = vpop.permute.xlu0 %5593
      %v5595 = vsel %vm1797, %v5580, %v5582
      %v5596 = vsel %vm1797, %v5582, %v5584
      %v5597 = vsel %vm1797, %v5584, %v5586
      %v5598 = vsel %vm1797, %v5588, %v5590
      %v5599 = vsel %vm1797, %v5590, %v5592
      %v5600 = vsel %vm1797, %v5592, %v5594
      %v5608 = vsel %vm5434, %v5395, 0
      %5610 = vmatprep.subr.mxu0 0.0
      %5611 = vmatpush1.msra.mxu0 0.0
      %5612 = vmatprep.subr.mxu0 0.0
      %5613 = vmatpush1.msra.mxu0 0.0
      %5614 = vmatprep.subr.mxu0 0.0
      %5615 = vmatpush1.msra.mxu0 0.0
      %5616 = vmatprep.subr.mxu0 0.0
      %5617 = vmatpush1.msra.mxu0 0.0
      %5618 = vmatprep.subr.mxu0 0.0
      %5619 = vmatpush1.msra.mxu0 0.0
      %5620 = vmatprep.subr.mxu0 0.0
      %5621 = vmatpush1.msra.mxu0 0.0
      %5622 = vmatprep.subr.mxu0 0.0
      %5623 = vmatpush1.msra.mxu0 0.0
      %5624 = vmatprep.subr.mxu0 0.0
      %5625 = vmatpush1.msra.mxu0 0.0
      %5626 = vmatprep.subr.mxu0 0.0
      %5627 = vmatpush1.msra.mxu0 0.0
      %5628 = vmatprep.subr.mxu0 0.0
      %5629 = vmatpush1.msra.mxu0 0.0
      %5630 = vmatprep.subr.mxu0 0.0
      %5631 = vmatpush1.msra.mxu0 0.0
      %5632 = vmatprep.subr.mxu0 0.0
      %5633 = vmatpush1.msra.mxu0 0.0
      %5634 = vmatprep.subr.mxu0 0.0
      %5635 = vmatpush1.msra.mxu0 0.0
      %5636 = vmatprep.subr.mxu0 0.0
      %5637 = vmatpush1.msra.mxu0 0.0
      %5638 = vmatprep.subr.mxu0 %v5599
      %5639 = vmatpush1.msra.mxu0 %v5598
      %5640 = vmatprep.subr.mxu0 %v5596
      %5641 = vmatpush1.msra.mxu0 %v5595
      %5642 = vmatprep.subr.mxu0 0.0
      %5643 = vmatpush2.msra.mxu0 0.0
      %5644 = vmatprep.subr.mxu0 0.0
      %5645 = vmatpush2.msra.mxu0 0.0
      %5646 = vmatprep.subr.mxu0 0.0
      %5647 = vmatpush2.msra.mxu0 0.0
      %5648 = vmatprep.subr.mxu0 0.0
      %5649 = vmatpush2.msra.mxu0 0.0
      %5650 = vmatprep.subr.mxu0 0.0
      %5651 = vmatpush2.msra.mxu0 0.0
      %5652 = vmatprep.subr.mxu0 0.0
      %5653 = vmatpush2.msra.mxu0 0.0
      %5654 = vmatprep.subr.mxu0 0.0
      %5655 = vmatpush2.msra.mxu0 0.0
      %5656 = vmatprep.subr.mxu0 0.0
      %5657 = vmatpush2.msra.mxu0 0.0
      %5658 = vmatprep.subr.mxu0 0.0
      %5659 = vmatpush2.msra.mxu0 0.0
      %5660 = vmatprep.subr.mxu0 0.0
      %5661 = vmatpush2.msra.mxu0 0.0
      %5662 = vmatprep.subr.mxu0 0.0
      %5663 = vmatpush2.msra.mxu0 0.0
      %5664 = vmatprep.subr.mxu0 0.0
      %5665 = vmatpush2.msra.mxu0 0.0
      %5666 = vmatprep.subr.mxu0 0.0
      %5667 = vmatpush2.msra.mxu0 0.0
      %5668 = vmatprep.subr.mxu0 0.0
      %5669 = vmatpush2.msra.mxu0 0.0
      %5670 = vmatprep.subr.mxu0 0.0
      %5671 = vmatpush2.msra.mxu0 0.0
      %5672 = vmatprep.subr.mxu0 0.0
      %5673 = vmatpush2.msra.mxu0 0.0
      %5674 = vmatprep.mubr.f32.mxu0 0.0
      %5675 = vmatmul.mubr.f32.gmra.mxu0 %v5608
      %v5676 = vpop.f32.mrf.mxu0
      %v5677 = vadd.f32 %v5505, %v5676
      %v5678 = vpop.f32.mrf.mxu0
      %v5679 = vadd.f32 %v5507, %v5678
      %5680 = vdwg.mxu0
      %5681 = vmatprep.subr.mxu0 0.0
      %5682 = vmatpush1.msra.mxu0 0.0
      %5683 = vmatprep.subr.mxu0 0.0
      %5684 = vmatpush1.msra.mxu0 0.0
      %5685 = vmatprep.subr.mxu0 0.0
      %5686 = vmatpush1.msra.mxu0 0.0
      %5687 = vmatprep.subr.mxu0 0.0
      %5688 = vmatpush1.msra.mxu0 0.0
      %5689 = vmatprep.subr.mxu0 0.0
      %5690 = vmatpush1.msra.mxu0 0.0
      %5691 = vmatprep.subr.mxu0 0.0
      %5692 = vmatpush1.msra.mxu0 0.0
      %5693 = vmatprep.subr.mxu0 0.0
      %5694 = vmatpush1.msra.mxu0 0.0
      %5695 = vmatprep.subr.mxu0 0.0
      %5696 = vmatpush1.msra.mxu0 0.0
      %5697 = vmatprep.subr.mxu0 0.0
      %5698 = vmatpush1.msra.mxu0 0.0
      %5699 = vmatprep.subr.mxu0 0.0
      %5700 = vmatpush1.msra.mxu0 0.0
      %5701 = vmatprep.subr.mxu0 0.0
      %5702 = vmatpush1.msra.mxu0 0.0
      %5703 = vmatprep.subr.mxu0 0.0
      %5704 = vmatpush1.msra.mxu0 0.0
      %5705 = vmatprep.subr.mxu0 0.0
      %5706 = vmatpush1.msra.mxu0 0.0
      %5707 = vmatprep.subr.mxu0 0.0
      %5708 = vmatpush1.msra.mxu0 0.0
      %5709 = vmatprep.subr.mxu0 0.0
      %5710 = vmatpush1.msra.mxu0 %v5600
      %5711 = vmatprep.subr.mxu0 0.0
      %5712 = vmatpush1.msra.mxu0 %v5597
      %5713 = vmatprep.subr.mxu0 0.0
      %5714 = vmatpush2.msra.mxu0 0.0
      %5715 = vmatprep.subr.mxu0 0.0
      %5716 = vmatpush2.msra.mxu0 0.0
      %5717 = vmatprep.subr.mxu0 0.0
      %5718 = vmatpush2.msra.mxu0 0.0
      %5719 = vmatprep.subr.mxu0 0.0
      %5720 = vmatpush2.msra.mxu0 0.0
      %5721 = vmatprep.subr.mxu0 0.0
      %5722 = vmatpush2.msra.mxu0 0.0
      %5723 = vmatprep.subr.mxu0 0.0
      %5724 = vmatpush2.msra.mxu0 0.0
      %5725 = vmatprep.subr.mxu0 0.0
      %5726 = vmatpush2.msra.mxu0 0.0
      %5727 = vmatprep.subr.mxu0 0.0
      %5728 = vmatpush2.msra.mxu0 0.0
      %5729 = vmatprep.subr.mxu0 0.0
      %5730 = vmatpush2.msra.mxu0 0.0
      %5731 = vmatprep.subr.mxu0 0.0
      %5732 = vmatpush2.msra.mxu0 0.0
      %5733 = vmatprep.subr.mxu0 0.0
      %5734 = vmatpush2.msra.mxu0 0.0
      %5735 = vmatprep.subr.mxu0 0.0
      %5736 = vmatpush2.msra.mxu0 0.0
      %5737 = vmatprep.subr.mxu0 0.0
      %5738 = vmatpush2.msra.mxu0 0.0
      %5739 = vmatprep.subr.mxu0 0.0
      %5740 = vmatpush2.msra.mxu0 0.0
      %5741 = vmatprep.subr.mxu0 0.0
      %5742 = vmatpush2.msra.mxu0 0.0
      %5743 = vmatprep.subr.mxu0 0.0
      %5744 = vmatpush2.msra.mxu0 0.0
      %5745 = vmatprep.mubr.f32.mxu0 0.0
      %5746 = vmatmul.mubr.f32.gmra.mxu0 %v5608
      %v5747 = vpop.f32.mrf.mxu0
      %v5748 = vadd.f32 %v5576, %v5747
      %v5749 = vpop.f32.mrf.mxu0
      %5750 = vdwg.mxu0
      %s5751 = scalar_lea.vmem %s4, 8
      %v5752 = vld [vmem:[%s5751] sm:$0xf]
      %5753 = vrot.lane.b32.xlu0 %v5387, 87
      %v5754 = vpop.permute.xlu0 %5753
      %5755 = vrot.lane.b32.xlu0 %v5388, 87
      %v5756 = vpop.permute.xlu0 %5755
      %5757 = vrot.lane.b32.xlu0 %v5389, 87
      %v5758 = vpop.permute.xlu0 %5757
      %5759 = vrot.lane.b32.xlu0 %v5390, 87
      %v5760 = vpop.permute.xlu0 %5759
      %5761 = vrot.lane.b32.xlu0 %v5391, 87
      %v5762 = vpop.permute.xlu0 %5761
      %5763 = vrot.lane.b32.xlu0 %v5392, 87
      %v5764 = vpop.permute.xlu0 %5763
      %5765 = vrot.lane.b32.xlu0 %v5393, 87
      %v5766 = vpop.permute.xlu0 %5765
      %5767 = vrot.lane.b32.xlu0 %v5394, 87
      %v5768 = vpop.permute.xlu0 %5767
      %v5769 = vsel %vm2167, %v5754, %v5756
      %v5770 = vsel %vm2167, %v5756, %v5758
      %v5771 = vsel %vm2167, %v5758, %v5760
      %v5772 = vsel %vm2167, %v5762, %v5764
      %v5773 = vsel %vm2167, %v5764, %v5766
      %v5774 = vsel %vm2167, %v5766, %v5768
      %v5782 = vsel %vm5434, %v5752, 0
      %5784 = vmatprep.subr.mxu0 0.0
      %5785 = vmatpush1.msra.mxu0 0.0
      %5786 = vmatprep.subr.mxu0 0.0
      %5787 = vmatpush1.msra.mxu0 0.0
      %5788 = vmatprep.subr.mxu0 0.0
      %5789 = vmatpush1.msra.mxu0 0.0
      %5790 = vmatprep.subr.mxu0 0.0
      %5791 = vmatpush1.msra.mxu0 0.0
      %5792 = vmatprep.subr.mxu0 0.0
      %5793 = vmatpush1.msra.mxu0 0.0
      %5794 = vmatprep.subr.mxu0 0.0
      %5795 = vmatpush1.msra.mxu0 0.0
      %5796 = vmatprep.subr.mxu0 0.0
      %5797 = vmatpush1.msra.mxu0 0.0
      %5798 = vmatprep.subr.mxu0 0.0
      %5799 = vmatpush1.msra.mxu0 0.0
      %5800 = vmatprep.subr.mxu0 0.0
      %5801 = vmatpush1.msra.mxu0 0.0
      %5802 = vmatprep.subr.mxu0 0.0
      %5803 = vmatpush1.msra.mxu0 0.0
      %5804 = vmatprep.subr.mxu0 0.0
      %5805 = vmatpush1.msra.mxu0 0.0
      %5806 = vmatprep.subr.mxu0 0.0
      %5807 = vmatpush1.msra.mxu0 0.0
      %5808 = vmatprep.subr.mxu0 0.0
      %5809 = vmatpush1.msra.mxu0 0.0
      %5810 = vmatprep.subr.mxu0 0.0
      %5811 = vmatpush1.msra.mxu0 0.0
      %5812 = vmatprep.subr.mxu0 %v5773
      %5813 = vmatpush1.msra.mxu0 %v5772
      %5814 = vmatprep.subr.mxu0 %v5770
      %5815 = vmatpush1.msra.mxu0 %v5769
      %5816 = vmatprep.subr.mxu0 0.0
      %5817 = vmatpush2.msra.mxu0 0.0
      %5818 = vmatprep.subr.mxu0 0.0
      %5819 = vmatpush2.msra.mxu0 0.0
      %5820 = vmatprep.subr.mxu0 0.0
      %5821 = vmatpush2.msra.mxu0 0.0
      %5822 = vmatprep.subr.mxu0 0.0
      %5823 = vmatpush2.msra.mxu0 0.0
      %5824 = vmatprep.subr.mxu0 0.0
      %5825 = vmatpush2.msra.mxu0 0.0
      %5826 = vmatprep.subr.mxu0 0.0
      %5827 = vmatpush2.msra.mxu0 0.0
      %5828 = vmatprep.subr.mxu0 0.0
      %5829 = vmatpush2.msra.mxu0 0.0
      %5830 = vmatprep.subr.mxu0 0.0
      %5831 = vmatpush2.msra.mxu0 0.0
      %5832 = vmatprep.subr.mxu0 0.0
      %5833 = vmatpush2.msra.mxu0 0.0
      %5834 = vmatprep.subr.mxu0 0.0
      %5835 = vmatpush2.msra.mxu0 0.0
      %5836 = vmatprep.subr.mxu0 0.0
      %5837 = vmatpush2.msra.mxu0 0.0
      %5838 = vmatprep.subr.mxu0 0.0
      %5839 = vmatpush2.msra.mxu0 0.0
      %5840 = vmatprep.subr.mxu0 0.0
      %5841 = vmatpush2.msra.mxu0 0.0
      %5842 = vmatprep.subr.mxu0 0.0
      %5843 = vmatpush2.msra.mxu0 0.0
      %5844 = vmatprep.subr.mxu0 0.0
      %5845 = vmatpush2.msra.mxu0 0.0
      %5846 = vmatprep.subr.mxu0 0.0
      %5847 = vmatpush2.msra.mxu0 0.0
      %5848 = vmatprep.mubr.f32.mxu0 0.0
      %5849 = vmatmul.mubr.f32.gmra.mxu0 %v5782
      %v5850 = vpop.f32.mrf.mxu0
      %v5851 = vadd.f32 0.0, %v5850
      %v5852 = vpop.f32.mrf.mxu0
      %v5853 = vadd.f32 0.0, %v5852
      %5854 = vdwg.mxu0
      %5855 = vmatprep.subr.mxu0 0.0
      %5856 = vmatpush1.msra.mxu0 0.0
      %5857 = vmatprep.subr.mxu0 0.0
      %5858 = vmatpush1.msra.mxu0 0.0
      %5859 = vmatprep.subr.mxu0 0.0
      %5860 = vmatpush1.msra.mxu0 0.0
      %5861 = vmatprep.subr.mxu0 0.0
      %5862 = vmatpush1.msra.mxu0 0.0
      %5863 = vmatprep.subr.mxu0 0.0
      %5864 = vmatpush1.msra.mxu0 0.0
      %5865 = vmatprep.subr.mxu0 0.0
      %5866 = vmatpush1.msra.mxu0 0.0
      %5867 = vmatprep.subr.mxu0 0.0
      %5868 = vmatpush1.msra.mxu0 0.0
      %5869 = vmatprep.subr.mxu0 0.0
      %5870 = vmatpush1.msra.mxu0 0.0
      %5871 = vmatprep.subr.mxu0 0.0
      %5872 = vmatpush1.msra.mxu0 0.0
      %5873 = vmatprep.subr.mxu0 0.0
      %5874 = vmatpush1.msra.mxu0 0.0
      %5875 = vmatprep.subr.mxu0 0.0
      %5876 = vmatpush1.msra.mxu0 0.0
      %5877 = vmatprep.subr.mxu0 0.0
      %5878 = vmatpush1.msra.mxu0 0.0
      %5879 = vmatprep.subr.mxu0 0.0
      %5880 = vmatpush1.msra.mxu0 0.0
      %5881 = vmatprep.subr.mxu0 0.0
      %5882 = vmatpush1.msra.mxu0 0.0
      %5883 = vmatprep.subr.mxu0 0.0
      %5884 = vmatpush1.msra.mxu0 %v5774
      %5885 = vmatprep.subr.mxu0 0.0
      %5886 = vmatpush1.msra.mxu0 %v5771
      %5887 = vmatprep.subr.mxu0 0.0
      %5888 = vmatpush2.msra.mxu0 0.0
      %5889 = vmatprep.subr.mxu0 0.0
      %5890 = vmatpush2.msra.mxu0 0.0
      %5891 = vmatprep.subr.mxu0 0.0
      %5892 = vmatpush2.msra.mxu0 0.0
      %5893 = vmatprep.subr.mxu0 0.0
      %5894 = vmatpush2.msra.mxu0 0.0
      %5895 = vmatprep.subr.mxu0 0.0
      %5896 = vmatpush2.msra.mxu0 0.0
      %5897 = vmatprep.subr.mxu0 0.0
      %5898 = vmatpush2.msra.mxu0 0.0
      %5899 = vmatprep.subr.mxu0 0.0
      %5900 = vmatpush2.msra.mxu0 0.0
      %5901 = vmatprep.subr.mxu0 0.0
      %5902 = vmatpush2.msra.mxu0 0.0
      %5903 = vmatprep.subr.mxu0 0.0
      %5904 = vmatpush2.msra.mxu0 0.0
      %5905 = vmatprep.subr.mxu0 0.0
      %5906 = vmatpush2.msra.mxu0 0.0
      %5907 = vmatprep.subr.mxu0 0.0
      %5908 = vmatpush2.msra.mxu0 0.0
      %5909 = vmatprep.subr.mxu0 0.0
      %5910 = vmatpush2.msra.mxu0 0.0
      %5911 = vmatprep.subr.mxu0 0.0
      %5912 = vmatpush2.msra.mxu0 0.0
      %5913 = vmatprep.subr.mxu0 0.0
      %5914 = vmatpush2.msra.mxu0 0.0
      %5915 = vmatprep.subr.mxu0 0.0
      %5916 = vmatpush2.msra.mxu0 0.0
      %5917 = vmatprep.subr.mxu0 0.0
      %5918 = vmatpush2.msra.mxu0 0.0
      %5919 = vmatprep.mubr.f32.mxu0 0.0
      %5920 = vmatmul.mubr.f32.gmra.mxu0 %v5782
      %v5921 = vpop.f32.mrf.mxu0
      %v5922 = vadd.f32 0.0, %v5921
      %v5923 = vpop.f32.mrf.mxu0
      %5924 = vdwg.mxu0
      %v5925 = vadd.f32 %v5677, %v5851
      %v5926 = vadd.f32 %v5679, %v5853
      %v5927 = vadd.f32 %v5748, %v5922
      %s5928 = scalar_lea.vmem %s4, 12
      %v5929 = vld [vmem:[%s5928] sm:$0xf]
      %5930 = vrot.lane.b32.xlu0 %v5387, 69
      %v5931 = vpop.permute.xlu0 %5930
      %5932 = vrot.lane.b32.xlu0 %v5388, 69
      %v5933 = vpop.permute.xlu0 %5932
      %5934 = vrot.lane.b32.xlu0 %v5389, 69
      %v5935 = vpop.permute.xlu0 %5934
      %5936 = vrot.lane.b32.xlu0 %v5390, 69
      %v5937 = vpop.permute.xlu0 %5936
      %5938 = vrot.lane.b32.xlu0 %v5391, 69
      %v5939 = vpop.permute.xlu0 %5938
      %5940 = vrot.lane.b32.xlu0 %v5392, 69
      %v5941 = vpop.permute.xlu0 %5940
      %5942 = vrot.lane.b32.xlu0 %v5393, 69
      %v5943 = vpop.permute.xlu0 %5942
      %5944 = vrot.lane.b32.xlu0 %v5394, 69
      %v5945 = vpop.permute.xlu0 %5944
      %v5946 = vsel %vm2722, %v5931, %v5933
      %v5947 = vsel %vm2722, %v5933, %v5935
      %v5948 = vsel %vm2722, %v5935, %v5937
      %v5949 = vsel %vm2722, %v5939, %v5941
      %v5950 = vsel %vm2722, %v5941, %v5943
      %v5951 = vsel %vm2722, %v5943, %v5945
      %v5959 = vsel %vm5434, %v5929, 0
      %5961 = vmatprep.subr.mxu0 0.0
      %5962 = vmatpush1.msra.mxu0 0.0
      %5963 = vmatprep.subr.mxu0 0.0
      %5964 = vmatpush1.msra.mxu0 0.0
      %5965 = vmatprep.subr.mxu0 0.0
      %5966 = vmatpush1.msra.mxu0 0.0
      %5967 = vmatprep.subr.mxu0 0.0
      %5968 = vmatpush1.msra.mxu0 0.0
      %5969 = vmatprep.subr.mxu0 0.0
      %5970 = vmatpush1.msra.mxu0 0.0
      %5971 = vmatprep.subr.mxu0 0.0
      %5972 = vmatpush1.msra.mxu0 0.0
      %5973 = vmatprep.subr.mxu0 0.0
      %5974 = vmatpush1.msra.mxu0 0.0
      %5975 = vmatprep.subr.mxu0 0.0
      %5976 = vmatpush1.msra.mxu0 0.0
      %5977 = vmatprep.subr.mxu0 0.0
      %5978 = vmatpush1.msra.mxu0 0.0
      %5979 = vmatprep.subr.mxu0 0.0
      %5980 = vmatpush1.msra.mxu0 0.0
      %5981 = vmatprep.subr.mxu0 0.0
      %5982 = vmatpush1.msra.mxu0 0.0
      %5983 = vmatprep.subr.mxu0 0.0
      %5984 = vmatpush1.msra.mxu0 0.0
      %5985 = vmatprep.subr.mxu0 0.0
      %5986 = vmatpush1.msra.mxu0 0.0
      %5987 = vmatprep.subr.mxu0 0.0
      %5988 = vmatpush1.msra.mxu0 0.0
      %5989 = vmatprep.subr.mxu0 %v5950
      %5990 = vmatpush1.msra.mxu0 %v5949
      %5991 = vmatprep.subr.mxu0 %v5947
      %5992 = vmatpush1.msra.mxu0 %v5946
      %5993 = vmatprep.subr.mxu0 0.0
      %5994 = vmatpush2.msra.mxu0 0.0
      %5995 = vmatprep.subr.mxu0 0.0
      %5996 = vmatpush2.msra.mxu0 0.0
      %5997 = vmatprep.subr.mxu0 0.0
      %5998 = vmatpush2.msra.mxu0 0.0
      %5999 = vmatprep.subr.mxu0 0.0
      %6000 = vmatpush2.msra.mxu0 0.0
      %6001 = vmatprep.subr.mxu0 0.0
      %6002 = vmatpush2.msra.mxu0 0.0
      %6003 = vmatprep.subr.mxu0 0.0
      %6004 = vmatpush2.msra.mxu0 0.0
      %6005 = vmatprep.subr.mxu0 0.0
      %6006 = vmatpush2.msra.mxu0 0.0
      %6007 = vmatprep.subr.mxu0 0.0
      %6008 = vmatpush2.msra.mxu0 0.0
      %6009 = vmatprep.subr.mxu0 0.0
      %6010 = vmatpush2.msra.mxu0 0.0
      %6011 = vmatprep.subr.mxu0 0.0
      %6012 = vmatpush2.msra.mxu0 0.0
      %6013 = vmatprep.subr.mxu0 0.0
      %6014 = vmatpush2.msra.mxu0 0.0
      %6015 = vmatprep.subr.mxu0 0.0
      %6016 = vmatpush2.msra.mxu0 0.0
      %6017 = vmatprep.subr.mxu0 0.0
      %6018 = vmatpush2.msra.mxu0 0.0
      %6019 = vmatprep.subr.mxu0 0.0
      %6020 = vmatpush2.msra.mxu0 0.0
      %6021 = vmatprep.subr.mxu0 0.0
      %6022 = vmatpush2.msra.mxu0 0.0
      %6023 = vmatprep.subr.mxu0 0.0
      %6024 = vmatpush2.msra.mxu0 0.0
      %6025 = vmatprep.mubr.f32.mxu0 0.0
      %6026 = vmatmul.mubr.f32.gmra.mxu0 %v5959
      %v6027 = vpop.f32.mrf.mxu0
      %v6028 = vadd.f32 0.0, %v6027
      %v6029 = vpop.f32.mrf.mxu0
      %v6030 = vadd.f32 0.0, %v6029
      %6031 = vdwg.mxu0
      %6032 = vmatprep.subr.mxu0 0.0
      %6033 = vmatpush1.msra.mxu0 0.0
      %6034 = vmatprep.subr.mxu0 0.0
      %6035 = vmatpush1.msra.mxu0 0.0
      %6036 = vmatprep.subr.mxu0 0.0
      %6037 = vmatpush1.msra.mxu0 0.0
      %6038 = vmatprep.subr.mxu0 0.0
      %6039 = vmatpush1.msra.mxu0 0.0
      %6040 = vmatprep.subr.mxu0 0.0
      %6041 = vmatpush1.msra.mxu0 0.0
      %6042 = vmatprep.subr.mxu0 0.0
      %6043 = vmatpush1.msra.mxu0 0.0
      %6044 = vmatprep.subr.mxu0 0.0
      %6045 = vmatpush1.msra.mxu0 0.0
      %6046 = vmatprep.subr.mxu0 0.0
      %6047 = vmatpush1.msra.mxu0 0.0
      %6048 = vmatprep.subr.mxu0 0.0
      %6049 = vmatpush1.msra.mxu0 0.0
      %6050 = vmatprep.subr.mxu0 0.0
      %6051 = vmatpush1.msra.mxu0 0.0
      %6052 = vmatprep.subr.mxu0 0.0
      %6053 = vmatpush1.msra.mxu0 0.0
      %6054 = vmatprep.subr.mxu0 0.0
      %6055 = vmatpush1.msra.mxu0 0.0
      %6056 = vmatprep.subr.mxu0 0.0
      %6057 = vmatpush1.msra.mxu0 0.0
      %6058 = vmatprep.subr.mxu0 0.0
      %6059 = vmatpush1.msra.mxu0 0.0
      %6060 = vmatprep.subr.mxu0 0.0
      %6061 = vmatpush1.msra.mxu0 %v5951
      %6062 = vmatprep.subr.mxu0 0.0
      %6063 = vmatpush1.msra.mxu0 %v5948
      %6064 = vmatprep.subr.mxu0 0.0
      %6065 = vmatpush2.msra.mxu0 0.0
      %6066 = vmatprep.subr.mxu0 0.0
      %6067 = vmatpush2.msra.mxu0 0.0
      %6068 = vmatprep.subr.mxu0 0.0
      %6069 = vmatpush2.msra.mxu0 0.0
      %6070 = vmatprep.subr.mxu0 0.0
      %6071 = vmatpush2.msra.mxu0 0.0
      %6072 = vmatprep.subr.mxu0 0.0
      %6073 = vmatpush2.msra.mxu0 0.0
      %6074 = vmatprep.subr.mxu0 0.0
      %6075 = vmatpush2.msra.mxu0 0.0
      %6076 = vmatprep.subr.mxu0 0.0
      %6077 = vmatpush2.msra.mxu0 0.0
      %6078 = vmatprep.subr.mxu0 0.0
      %6079 = vmatpush2.msra.mxu0 0.0
      %6080 = vmatprep.subr.mxu0 0.0
      %6081 = vmatpush2.msra.mxu0 0.0
      %6082 = vmatprep.subr.mxu0 0.0
      %6083 = vmatpush2.msra.mxu0 0.0
      %6084 = vmatprep.subr.mxu0 0.0
      %6085 = vmatpush2.msra.mxu0 0.0
      %6086 = vmatprep.subr.mxu0 0.0
      %6087 = vmatpush2.msra.mxu0 0.0
      %6088 = vmatprep.subr.mxu0 0.0
      %6089 = vmatpush2.msra.mxu0 0.0
      %6090 = vmatprep.subr.mxu0 0.0
      %6091 = vmatpush2.msra.mxu0 0.0
      %6092 = vmatprep.subr.mxu0 0.0
      %6093 = vmatpush2.msra.mxu0 0.0
      %6094 = vmatprep.subr.mxu0 0.0
      %6095 = vmatpush2.msra.mxu0 0.0
      %6096 = vmatprep.mubr.f32.mxu0 0.0
      %6097 = vmatmul.mubr.f32.gmra.mxu0 %v5959
      %v6098 = vpop.f32.mrf.mxu0
      %v6099 = vadd.f32 0.0, %v6098
      %v6100 = vpop.f32.mrf.mxu0
      %6101 = vdwg.mxu0
      %v6102 = vadd.f32 %v5925, %v6028
      %v6103 = vadd.f32 %v5926, %v6030
      %v6104 = vadd.f32 %v5927, %v6099
      %s6105 = scalar_lea.vmem %s4, 16
      %v6106 = vld [vmem:[%s6105] sm:$0xf]
      %6107 = vrot.lane.b32.xlu0 %v5387, 68
      %v6108 = vpop.permute.xlu0 %6107
      %6109 = vrot.lane.b32.xlu0 %v5388, 68
      %v6110 = vpop.permute.xlu0 %6109
      %6111 = vrot.lane.b32.xlu0 %v5389, 68
      %v6112 = vpop.permute.xlu0 %6111
      %6113 = vrot.lane.b32.xlu0 %v5390, 68
      %v6114 = vpop.permute.xlu0 %6113
      %6115 = vrot.lane.b32.xlu0 %v5391, 68
      %v6116 = vpop.permute.xlu0 %6115
      %6117 = vrot.lane.b32.xlu0 %v5392, 68
      %v6118 = vpop.permute.xlu0 %6117
      %6119 = vrot.lane.b32.xlu0 %v5393, 68
      %v6120 = vpop.permute.xlu0 %6119
      %6121 = vrot.lane.b32.xlu0 %v5394, 68
      %v6122 = vpop.permute.xlu0 %6121
      %v6123 = vsel %vm2907, %v6108, %v6110
      %v6124 = vsel %vm2907, %v6110, %v6112
      %v6125 = vsel %vm2907, %v6112, %v6114
      %v6126 = vsel %vm2907, %v6116, %v6118
      %v6127 = vsel %vm2907, %v6118, %v6120
      %v6128 = vsel %vm2907, %v6120, %v6122
      %v6136 = vsel %vm5434, %v6106, 0
      %6138 = vmatprep.subr.mxu0 0.0
      %6139 = vmatpush1.msra.mxu0 0.0
      %6140 = vmatprep.subr.mxu0 0.0
      %6141 = vmatpush1.msra.mxu0 0.0
      %6142 = vmatprep.subr.mxu0 0.0
      %6143 = vmatpush1.msra.mxu0 0.0
      %6144 = vmatprep.subr.mxu0 0.0
      %6145 = vmatpush1.msra.mxu0 0.0
      %6146 = vmatprep.subr.mxu0 0.0
      %6147 = vmatpush1.msra.mxu0 0.0
      %6148 = vmatprep.subr.mxu0 0.0
      %6149 = vmatpush1.msra.mxu0 0.0
      %6150 = vmatprep.subr.mxu0 0.0
      %6151 = vmatpush1.msra.mxu0 0.0
      %6152 = vmatprep.subr.mxu0 0.0
      %6153 = vmatpush1.msra.mxu0 0.0
      %6154 = vmatprep.subr.mxu0 0.0
      %6155 = vmatpush1.msra.mxu0 0.0
      %6156 = vmatprep.subr.mxu0 0.0
      %6157 = vmatpush1.msra.mxu0 0.0
      %6158 = vmatprep.subr.mxu0 0.0
      %6159 = vmatpush1.msra.mxu0 0.0
      %6160 = vmatprep.subr.mxu0 0.0
      %6161 = vmatpush1.msra.mxu0 0.0
      %6162 = vmatprep.subr.mxu0 0.0
      %6163 = vmatpush1.msra.mxu0 0.0
      %6164 = vmatprep.subr.mxu0 0.0
      %6165 = vmatpush1.msra.mxu0 0.0
      %6166 = vmatprep.subr.mxu0 %v6127
      %6167 = vmatpush1.msra.mxu0 %v6126
      %6168 = vmatprep.subr.mxu0 %v6124
      %6169 = vmatpush1.msra.mxu0 %v6123
      %6170 = vmatprep.subr.mxu0 0.0
      %6171 = vmatpush2.msra.mxu0 0.0
      %6172 = vmatprep.subr.mxu0 0.0
      %6173 = vmatpush2.msra.mxu0 0.0
      %6174 = vmatprep.subr.mxu0 0.0
      %6175 = vmatpush2.msra.mxu0 0.0
      %6176 = vmatprep.subr.mxu0 0.0
      %6177 = vmatpush2.msra.mxu0 0.0
      %6178 = vmatprep.subr.mxu0 0.0
      %6179 = vmatpush2.msra.mxu0 0.0
      %6180 = vmatprep.subr.mxu0 0.0
      %6181 = vmatpush2.msra.mxu0 0.0
      %6182 = vmatprep.subr.mxu0 0.0
      %6183 = vmatpush2.msra.mxu0 0.0
      %6184 = vmatprep.subr.mxu0 0.0
      %6185 = vmatpush2.msra.mxu0 0.0
      %6186 = vmatprep.subr.mxu0 0.0
      %6187 = vmatpush2.msra.mxu0 0.0
      %6188 = vmatprep.subr.mxu0 0.0
      %6189 = vmatpush2.msra.mxu0 0.0
      %6190 = vmatprep.subr.mxu0 0.0
      %6191 = vmatpush2.msra.mxu0 0.0
      %6192 = vmatprep.subr.mxu0 0.0
      %6193 = vmatpush2.msra.mxu0 0.0
      %6194 = vmatprep.subr.mxu0 0.0
      %6195 = vmatpush2.msra.mxu0 0.0
      %6196 = vmatprep.subr.mxu0 0.0
      %6197 = vmatpush2.msra.mxu0 0.0
      %6198 = vmatprep.subr.mxu0 0.0
      %6199 = vmatpush2.msra.mxu0 0.0
      %6200 = vmatprep.subr.mxu0 0.0
      %6201 = vmatpush2.msra.mxu0 0.0
      %6202 = vmatprep.mubr.f32.mxu0 0.0
      %6203 = vmatmul.mubr.f32.gmra.mxu0 %v6136
      %v6204 = vpop.f32.mrf.mxu0
      %v6205 = vadd.f32 0.0, %v6204
      %v6206 = vpop.f32.mrf.mxu0
      %v6207 = vadd.f32 0.0, %v6206
      %6208 = vdwg.mxu0
      %6209 = vmatprep.subr.mxu0 0.0
      %6210 = vmatpush1.msra.mxu0 0.0
      %6211 = vmatprep.subr.mxu0 0.0
      %6212 = vmatpush1.msra.mxu0 0.0
      %6213 = vmatprep.subr.mxu0 0.0
      %6214 = vmatpush1.msra.mxu0 0.0
      %6215 = vmatprep.subr.mxu0 0.0
      %6216 = vmatpush1.msra.mxu0 0.0
      %6217 = vmatprep.subr.mxu0 0.0
      %6218 = vmatpush1.msra.mxu0 0.0
      %6219 = vmatprep.subr.mxu0 0.0
      %6220 = vmatpush1.msra.mxu0 0.0
      %6221 = vmatprep.subr.mxu0 0.0
      %6222 = vmatpush1.msra.mxu0 0.0
      %6223 = vmatprep.subr.mxu0 0.0
      %6224 = vmatpush1.msra.mxu0 0.0
      %6225 = vmatprep.subr.mxu0 0.0
      %6226 = vmatpush1.msra.mxu0 0.0
      %6227 = vmatprep.subr.mxu0 0.0
      %6228 = vmatpush1.msra.mxu0 0.0
      %6229 = vmatprep.subr.mxu0 0.0
      %6230 = vmatpush1.msra.mxu0 0.0
      %6231 = vmatprep.subr.mxu0 0.0
      %6232 = vmatpush1.msra.mxu0 0.0
      %6233 = vmatprep.subr.mxu0 0.0
      %6234 = vmatpush1.msra.mxu0 0.0
      %6235 = vmatprep.subr.mxu0 0.0
      %6236 = vmatpush1.msra.mxu0 0.0
      %6237 = vmatprep.subr.mxu0 0.0
      %6238 = vmatpush1.msra.mxu0 %v6128
      %6239 = vmatprep.subr.mxu0 0.0
      %6240 = vmatpush1.msra.mxu0 %v6125
      %6241 = vmatprep.subr.mxu0 0.0
      %6242 = vmatpush2.msra.mxu0 0.0
      %6243 = vmatprep.subr.mxu0 0.0
      %6244 = vmatpush2.msra.mxu0 0.0
      %6245 = vmatprep.subr.mxu0 0.0
      %6246 = vmatpush2.msra.mxu0 0.0
      %6247 = vmatprep.subr.mxu0 0.0
      %6248 = vmatpush2.msra.mxu0 0.0
      %6249 = vmatprep.subr.mxu0 0.0
      %6250 = vmatpush2.msra.mxu0 0.0
      %6251 = vmatprep.subr.mxu0 0.0
      %6252 = vmatpush2.msra.mxu0 0.0
      %6253 = vmatprep.subr.mxu0 0.0
      %6254 = vmatpush2.msra.mxu0 0.0
      %6255 = vmatprep.subr.mxu0 0.0
      %6256 = vmatpush2.msra.mxu0 0.0
      %6257 = vmatprep.subr.mxu0 0.0
      %6258 = vmatpush2.msra.mxu0 0.0
      %6259 = vmatprep.subr.mxu0 0.0
      %6260 = vmatpush2.msra.mxu0 0.0
      %6261 = vmatprep.subr.mxu0 0.0
      %6262 = vmatpush2.msra.mxu0 0.0
      %6263 = vmatprep.subr.mxu0 0.0
      %6264 = vmatpush2.msra.mxu0 0.0
      %6265 = vmatprep.subr.mxu0 0.0
      %6266 = vmatpush2.msra.mxu0 0.0
      %6267 = vmatprep.subr.mxu0 0.0
      %6268 = vmatpush2.msra.mxu0 0.0
      %6269 = vmatprep.subr.mxu0 0.0
      %6270 = vmatpush2.msra.mxu0 0.0
      %6271 = vmatprep.subr.mxu0 0.0
      %6272 = vmatpush2.msra.mxu0 0.0
      %6273 = vmatprep.mubr.f32.mxu0 0.0
      %6274 = vmatmul.mubr.f32.gmra.mxu0 %v6136
      %v6275 = vpop.f32.mrf.mxu0
      %v6276 = vadd.f32 0.0, %v6275
      %v6277 = vpop.f32.mrf.mxu0
      %6278 = vdwg.mxu0
      %v6279 = vadd.f32 %v6102, %v6205
      %v6280 = vadd.f32 %v6103, %v6207
      %v6281 = vadd.f32 %v6104, %v6276
      %s6282 = scalar_lea.vmem %s4, 20
      %v6283 = vld [vmem:[%s6282] sm:$0xf]
      %6284 = vrot.lane.b32.xlu0 %v5387, 67
      %v6285 = vpop.permute.xlu0 %6284
      %6286 = vrot.lane.b32.xlu0 %v5388, 67
      %v6287 = vpop.permute.xlu0 %6286
      %6288 = vrot.lane.b32.xlu0 %v5389, 67
      %v6289 = vpop.permute.xlu0 %6288
      %6290 = vrot.lane.b32.xlu0 %v5390, 67
      %v6291 = vpop.permute.xlu0 %6290
      %6292 = vrot.lane.b32.xlu0 %v5391, 67
      %v6293 = vpop.permute.xlu0 %6292
      %6294 = vrot.lane.b32.xlu0 %v5392, 67
      %v6295 = vpop.permute.xlu0 %6294
      %6296 = vrot.lane.b32.xlu0 %v5393, 67
      %v6297 = vpop.permute.xlu0 %6296
      %6298 = vrot.lane.b32.xlu0 %v5394, 67
      %v6299 = vpop.permute.xlu0 %6298
      %v6300 = vsel %vm3092, %v6285, %v6287
      %v6301 = vsel %vm3092, %v6287, %v6289
      %v6302 = vsel %vm3092, %v6289, %v6291
      %v6303 = vsel %vm3092, %v6293, %v6295
      %v6304 = vsel %vm3092, %v6295, %v6297
      %v6305 = vsel %vm3092, %v6297, %v6299
      %v6313 = vsel %vm5434, %v6283, 0
      %6315 = vmatprep.subr.mxu0 0.0
      %6316 = vmatpush1.msra.mxu0 0.0
      %6317 = vmatprep.subr.mxu0 0.0
      %6318 = vmatpush1.msra.mxu0 0.0
      %6319 = vmatprep.subr.mxu0 0.0
      %6320 = vmatpush1.msra.mxu0 0.0
      %6321 = vmatprep.subr.mxu0 0.0
      %6322 = vmatpush1.msra.mxu0 0.0
      %6323 = vmatprep.subr.mxu0 0.0
      %6324 = vmatpush1.msra.mxu0 0.0
      %6325 = vmatprep.subr.mxu0 0.0
      %6326 = vmatpush1.msra.mxu0 0.0
      %6327 = vmatprep.subr.mxu0 0.0
      %6328 = vmatpush1.msra.mxu0 0.0
      %6329 = vmatprep.subr.mxu0 0.0
      %6330 = vmatpush1.msra.mxu0 0.0
      %6331 = vmatprep.subr.mxu0 0.0
      %6332 = vmatpush1.msra.mxu0 0.0
      %6333 = vmatprep.subr.mxu0 0.0
      %6334 = vmatpush1.msra.mxu0 0.0
      %6335 = vmatprep.subr.mxu0 0.0
      %6336 = vmatpush1.msra.mxu0 0.0
      %6337 = vmatprep.subr.mxu0 0.0
      %6338 = vmatpush1.msra.mxu0 0.0
      %6339 = vmatprep.subr.mxu0 0.0
      %6340 = vmatpush1.msra.mxu0 0.0
      %6341 = vmatprep.subr.mxu0 0.0
      %6342 = vmatpush1.msra.mxu0 0.0
      %6343 = vmatprep.subr.mxu0 %v6304
      %6344 = vmatpush1.msra.mxu0 %v6303
      %6345 = vmatprep.subr.mxu0 %v6301
      %6346 = vmatpush1.msra.mxu0 %v6300
      %6347 = vmatprep.subr.mxu0 0.0
      %6348 = vmatpush2.msra.mxu0 0.0
      %6349 = vmatprep.subr.mxu0 0.0
      %6350 = vmatpush2.msra.mxu0 0.0
      %6351 = vmatprep.subr.mxu0 0.0
      %6352 = vmatpush2.msra.mxu0 0.0
      %6353 = vmatprep.subr.mxu0 0.0
      %6354 = vmatpush2.msra.mxu0 0.0
      %6355 = vmatprep.subr.mxu0 0.0
      %6356 = vmatpush2.msra.mxu0 0.0
      %6357 = vmatprep.subr.mxu0 0.0
      %6358 = vmatpush2.msra.mxu0 0.0
      %6359 = vmatprep.subr.mxu0 0.0
      %6360 = vmatpush2.msra.mxu0 0.0
      %6361 = vmatprep.subr.mxu0 0.0
      %6362 = vmatpush2.msra.mxu0 0.0
      %6363 = vmatprep.subr.mxu0 0.0
      %6364 = vmatpush2.msra.mxu0 0.0
      %6365 = vmatprep.subr.mxu0 0.0
      %6366 = vmatpush2.msra.mxu0 0.0
      %6367 = vmatprep.subr.mxu0 0.0
      %6368 = vmatpush2.msra.mxu0 0.0
      %6369 = vmatprep.subr.mxu0 0.0
      %6370 = vmatpush2.msra.mxu0 0.0
      %6371 = vmatprep.subr.mxu0 0.0
      %6372 = vmatpush2.msra.mxu0 0.0
      %6373 = vmatprep.subr.mxu0 0.0
      %6374 = vmatpush2.msra.mxu0 0.0
      %6375 = vmatprep.subr.mxu0 0.0
      %6376 = vmatpush2.msra.mxu0 0.0
      %6377 = vmatprep.subr.mxu0 0.0
      %6378 = vmatpush2.msra.mxu0 0.0
      %6379 = vmatprep.mubr.f32.mxu0 0.0
      %6380 = vmatmul.mubr.f32.gmra.mxu0 %v6313
      %v6381 = vpop.f32.mrf.mxu0
      %v6382 = vadd.f32 0.0, %v6381
      %v6383 = vpop.f32.mrf.mxu0
      %v6384 = vadd.f32 0.0, %v6383
      %6385 = vdwg.mxu0
      %6386 = vmatprep.subr.mxu0 0.0
      %6387 = vmatpush1.msra.mxu0 0.0
      %6388 = vmatprep.subr.mxu0 0.0
      %6389 = vmatpush1.msra.mxu0 0.0
      %6390 = vmatprep.subr.mxu0 0.0
      %6391 = vmatpush1.msra.mxu0 0.0
      %6392 = vmatprep.subr.mxu0 0.0
      %6393 = vmatpush1.msra.mxu0 0.0
      %6394 = vmatprep.subr.mxu0 0.0
      %6395 = vmatpush1.msra.mxu0 0.0
      %6396 = vmatprep.subr.mxu0 0.0
      %6397 = vmatpush1.msra.mxu0 0.0
      %6398 = vmatprep.subr.mxu0 0.0
      %6399 = vmatpush1.msra.mxu0 0.0
      %6400 = vmatprep.subr.mxu0 0.0
      %6401 = vmatpush1.msra.mxu0 0.0
      %6402 = vmatprep.subr.mxu0 0.0
      %6403 = vmatpush1.msra.mxu0 0.0
      %6404 = vmatprep.subr.mxu0 0.0
      %6405 = vmatpush1.msra.mxu0 0.0
      %6406 = vmatprep.subr.mxu0 0.0
      %6407 = vmatpush1.msra.mxu0 0.0
      %6408 = vmatprep.subr.mxu0 0.0
      %6409 = vmatpush1.msra.mxu0 0.0
      %6410 = vmatprep.subr.mxu0 0.0
      %6411 = vmatpush1.msra.mxu0 0.0
      %6412 = vmatprep.subr.mxu0 0.0
      %6413 = vmatpush1.msra.mxu0 0.0
      %6414 = vmatprep.subr.mxu0 0.0
      %6415 = vmatpush1.msra.mxu0 %v6305
      %6416 = vmatprep.subr.mxu0 0.0
      %6417 = vmatpush1.msra.mxu0 %v6302
      %6418 = vmatprep.subr.mxu0 0.0
      %6419 = vmatpush2.msra.mxu0 0.0
      %6420 = vmatprep.subr.mxu0 0.0
      %6421 = vmatpush2.msra.mxu0 0.0
      %6422 = vmatprep.subr.mxu0 0.0
      %6423 = vmatpush2.msra.mxu0 0.0
      %6424 = vmatprep.subr.mxu0 0.0
      %6425 = vmatpush2.msra.mxu0 0.0
      %6426 = vmatprep.subr.mxu0 0.0
      %6427 = vmatpush2.msra.mxu0 0.0
      %6428 = vmatprep.subr.mxu0 0.0
      %6429 = vmatpush2.msra.mxu0 0.0
      %6430 = vmatprep.subr.mxu0 0.0
      %6431 = vmatpush2.msra.mxu0 0.0
      %6432 = vmatprep.subr.mxu0 0.0
      %6433 = vmatpush2.msra.mxu0 0.0
      %6434 = vmatprep.subr.mxu0 0.0
      %6435 = vmatpush2.msra.mxu0 0.0
      %6436 = vmatprep.subr.mxu0 0.0
      %6437 = vmatpush2.msra.mxu0 0.0
      %6438 = vmatprep.subr.mxu0 0.0
      %6439 = vmatpush2.msra.mxu0 0.0
      %6440 = vmatprep.subr.mxu0 0.0
      %6441 = vmatpush2.msra.mxu0 0.0
      %6442 = vmatprep.subr.mxu0 0.0
      %6443 = vmatpush2.msra.mxu0 0.0
      %6444 = vmatprep.subr.mxu0 0.0
      %6445 = vmatpush2.msra.mxu0 0.0
      %6446 = vmatprep.subr.mxu0 0.0
      %6447 = vmatpush2.msra.mxu0 0.0
      %6448 = vmatprep.subr.mxu0 0.0
      %6449 = vmatpush2.msra.mxu0 0.0
      %6450 = vmatprep.mubr.f32.mxu0 0.0
      %6451 = vmatmul.mubr.f32.gmra.mxu0 %v6313
      %v6452 = vpop.f32.mrf.mxu0
      %v6453 = vadd.f32 0.0, %v6452
      %v6454 = vpop.f32.mrf.mxu0
      %6455 = vdwg.mxu0
      %v6456 = vadd.f32 %v6279, %v6382
      %v6457 = vadd.f32 %v6280, %v6384
      %v6458 = vadd.f32 %v6281, %v6453
      %s6459 = scalar_lea.vmem %s4, 24
      %v6460 = vld [vmem:[%s6459] sm:$0xf]
      %6461 = vrot.lane.b32.xlu0 %v5387, 49
      %v6462 = vpop.permute.xlu0 %6461
      %6463 = vrot.lane.b32.xlu0 %v5388, 49
      %v6464 = vpop.permute.xlu0 %6463
      %6465 = vrot.lane.b32.xlu0 %v5389, 49
      %v6466 = vpop.permute.xlu0 %6465
      %6467 = vrot.lane.b32.xlu0 %v5390, 49
      %v6468 = vpop.permute.xlu0 %6467
      %6469 = vrot.lane.b32.xlu0 %v5391, 49
      %v6470 = vpop.permute.xlu0 %6469
      %6471 = vrot.lane.b32.xlu0 %v5392, 49
      %v6472 = vpop.permute.xlu0 %6471
      %6473 = vrot.lane.b32.xlu0 %v5393, 49
      %v6474 = vpop.permute.xlu0 %6473
      %6475 = vrot.lane.b32.xlu0 %v5394, 49
      %v6476 = vpop.permute.xlu0 %6475
      %v6477 = vsel %vm3647, %v6462, %v6464
      %v6478 = vsel %vm3647, %v6464, %v6466
      %v6479 = vsel %vm3647, %v6466, %v6468
      %v6480 = vsel %vm3647, %v6470, %v6472
      %v6481 = vsel %vm3647, %v6472, %v6474
      %v6482 = vsel %vm3647, %v6474, %v6476
      %v6490 = vsel %vm5434, %v6460, 0
      %6492 = vmatprep.subr.mxu0 0.0
      %6493 = vmatpush1.msra.mxu0 0.0
      %6494 = vmatprep.subr.mxu0 0.0
      %6495 = vmatpush1.msra.mxu0 0.0
      %6496 = vmatprep.subr.mxu0 0.0
      %6497 = vmatpush1.msra.mxu0 0.0
      %6498 = vmatprep.subr.mxu0 0.0
      %6499 = vmatpush1.msra.mxu0 0.0
      %6500 = vmatprep.subr.mxu0 0.0
      %6501 = vmatpush1.msra.mxu0 0.0
      %6502 = vmatprep.subr.mxu0 0.0
      %6503 = vmatpush1.msra.mxu0 0.0
      %6504 = vmatprep.subr.mxu0 0.0
      %6505 = vmatpush1.msra.mxu0 0.0
      %6506 = vmatprep.subr.mxu0 0.0
      %6507 = vmatpush1.msra.mxu0 0.0
      %6508 = vmatprep.subr.mxu0 0.0
      %6509 = vmatpush1.msra.mxu0 0.0
      %6510 = vmatprep.subr.mxu0 0.0
      %6511 = vmatpush1.msra.mxu0 0.0
      %6512 = vmatprep.subr.mxu0 0.0
      %6513 = vmatpush1.msra.mxu0 0.0
      %6514 = vmatprep.subr.mxu0 0.0
      %6515 = vmatpush1.msra.mxu0 0.0
      %6516 = vmatprep.subr.mxu0 0.0
      %6517 = vmatpush1.msra.mxu0 0.0
      %6518 = vmatprep.subr.mxu0 0.0
      %6519 = vmatpush1.msra.mxu0 0.0
      %6520 = vmatprep.subr.mxu0 %v6481
      %6521 = vmatpush1.msra.mxu0 %v6480
      %6522 = vmatprep.subr.mxu0 %v6478
      %6523 = vmatpush1.msra.mxu0 %v6477
      %6524 = vmatprep.subr.mxu0 0.0
      %6525 = vmatpush2.msra.mxu0 0.0
      %6526 = vmatprep.subr.mxu0 0.0
      %6527 = vmatpush2.msra.mxu0 0.0
      %6528 = vmatprep.subr.mxu0 0.0
      %6529 = vmatpush2.msra.mxu0 0.0
      %6530 = vmatprep.subr.mxu0 0.0
      %6531 = vmatpush2.msra.mxu0 0.0
      %6532 = vmatprep.subr.mxu0 0.0
      %6533 = vmatpush2.msra.mxu0 0.0
      %6534 = vmatprep.subr.mxu0 0.0
      %6535 = vmatpush2.msra.mxu0 0.0
      %6536 = vmatprep.subr.mxu0 0.0
      %6537 = vmatpush2.msra.mxu0 0.0
      %6538 = vmatprep.subr.mxu0 0.0
      %6539 = vmatpush2.msra.mxu0 0.0
      %6540 = vmatprep.subr.mxu0 0.0
      %6541 = vmatpush2.msra.mxu0 0.0
      %6542 = vmatprep.subr.mxu0 0.0
      %6543 = vmatpush2.msra.mxu0 0.0
      %6544 = vmatprep.subr.mxu0 0.0
      %6545 = vmatpush2.msra.mxu0 0.0
      %6546 = vmatprep.subr.mxu0 0.0
      %6547 = vmatpush2.msra.mxu0 0.0
      %6548 = vmatprep.subr.mxu0 0.0
      %6549 = vmatpush2.msra.mxu0 0.0
      %6550 = vmatprep.subr.mxu0 0.0
      %6551 = vmatpush2.msra.mxu0 0.0
      %6552 = vmatprep.subr.mxu0 0.0
      %6553 = vmatpush2.msra.mxu0 0.0
      %6554 = vmatprep.subr.mxu0 0.0
      %6555 = vmatpush2.msra.mxu0 0.0
      %6556 = vmatprep.mubr.f32.mxu0 0.0
      %6557 = vmatmul.mubr.f32.gmra.mxu0 %v6490
      %v6558 = vpop.f32.mrf.mxu0
      %v6559 = vadd.f32 0.0, %v6558
      %v6560 = vpop.f32.mrf.mxu0
      %v6561 = vadd.f32 0.0, %v6560
      %6562 = vdwg.mxu0
      %6563 = vmatprep.subr.mxu0 0.0
      %6564 = vmatpush1.msra.mxu0 0.0
      %6565 = vmatprep.subr.mxu0 0.0
      %6566 = vmatpush1.msra.mxu0 0.0
      %6567 = vmatprep.subr.mxu0 0.0
      %6568 = vmatpush1.msra.mxu0 0.0
      %6569 = vmatprep.subr.mxu0 0.0
      %6570 = vmatpush1.msra.mxu0 0.0
      %6571 = vmatprep.subr.mxu0 0.0
      %6572 = vmatpush1.msra.mxu0 0.0
      %6573 = vmatprep.subr.mxu0 0.0
      %6574 = vmatpush1.msra.mxu0 0.0
      %6575 = vmatprep.subr.mxu0 0.0
      %6576 = vmatpush1.msra.mxu0 0.0
      %6577 = vmatprep.subr.mxu0 0.0
      %6578 = vmatpush1.msra.mxu0 0.0
      %6579 = vmatprep.subr.mxu0 0.0
      %6580 = vmatpush1.msra.mxu0 0.0
      %6581 = vmatprep.subr.mxu0 0.0
      %6582 = vmatpush1.msra.mxu0 0.0
      %6583 = vmatprep.subr.mxu0 0.0
      %6584 = vmatpush1.msra.mxu0 0.0
      %6585 = vmatprep.subr.mxu0 0.0
      %6586 = vmatpush1.msra.mxu0 0.0
      %6587 = vmatprep.subr.mxu0 0.0
      %6588 = vmatpush1.msra.mxu0 0.0
      %6589 = vmatprep.subr.mxu0 0.0
      %6590 = vmatpush1.msra.mxu0 0.0
      %6591 = vmatprep.subr.mxu0 0.0
      %6592 = vmatpush1.msra.mxu0 %v6482
      %6593 = vmatprep.subr.mxu0 0.0
      %6594 = vmatpush1.msra.mxu0 %v6479
      %6595 = vmatprep.subr.mxu0 0.0
      %6596 = vmatpush2.msra.mxu0 0.0
      %6597 = vmatprep.subr.mxu0 0.0
      %6598 = vmatpush2.msra.mxu0 0.0
      %6599 = vmatprep.subr.mxu0 0.0
      %6600 = vmatpush2.msra.mxu0 0.0
      %6601 = vmatprep.subr.mxu0 0.0
      %6602 = vmatpush2.msra.mxu0 0.0
      %6603 = vmatprep.subr.mxu0 0.0
      %6604 = vmatpush2.msra.mxu0 0.0
      %6605 = vmatprep.subr.mxu0 0.0
      %6606 = vmatpush2.msra.mxu0 0.0
      %6607 = vmatprep.subr.mxu0 0.0
      %6608 = vmatpush2.msra.mxu0 0.0
      %6609 = vmatprep.subr.mxu0 0.0
      %6610 = vmatpush2.msra.mxu0 0.0
      %6611 = vmatprep.subr.mxu0 0.0
      %6612 = vmatpush2.msra.mxu0 0.0
      %6613 = vmatprep.subr.mxu0 0.0
      %6614 = vmatpush2.msra.mxu0 0.0
      %6615 = vmatprep.subr.mxu0 0.0
      %6616 = vmatpush2.msra.mxu0 0.0
      %6617 = vmatprep.subr.mxu0 0.0
      %6618 = vmatpush2.msra.mxu0 0.0
      %6619 = vmatprep.subr.mxu0 0.0
      %6620 = vmatpush2.msra.mxu0 0.0
      %6621 = vmatprep.subr.mxu0 0.0
      %6622 = vmatpush2.msra.mxu0 0.0
      %6623 = vmatprep.subr.mxu0 0.0
      %6624 = vmatpush2.msra.mxu0 0.0
      %6625 = vmatprep.subr.mxu0 0.0
      %6626 = vmatpush2.msra.mxu0 0.0
      %6627 = vmatprep.mubr.f32.mxu0 0.0
      %6628 = vmatmul.mubr.f32.gmra.mxu0 %v6490
      %v6629 = vpop.f32.mrf.mxu0
      %v6630 = vadd.f32 0.0, %v6629
      %v6631 = vpop.f32.mrf.mxu0
      %6632 = vdwg.mxu0
      %v6633 = vadd.f32 %v6456, %v6559
      %v6634 = vadd.f32 %v6457, %v6561
      %v6635 = vadd.f32 %v6458, %v6630
      %s6636 = scalar_lea.vmem %s4, 28
      %v6637 = vld [vmem:[%s6636] sm:$0xf]
      %6638 = vrot.lane.b32.xlu0 %v5387, 48
      %v6639 = vpop.permute.xlu0 %6638
      %6640 = vrot.lane.b32.xlu0 %v5388, 48
      %v6641 = vpop.permute.xlu0 %6640
      %6642 = vrot.lane.b32.xlu0 %v5389, 48
      %v6643 = vpop.permute.xlu0 %6642
      %6644 = vrot.lane.b32.xlu0 %v5390, 48
      %v6645 = vpop.permute.xlu0 %6644
      %6646 = vrot.lane.b32.xlu0 %v5391, 48
      %v6647 = vpop.permute.xlu0 %6646
      %6648 = vrot.lane.b32.xlu0 %v5392, 48
      %v6649 = vpop.permute.xlu0 %6648
      %6650 = vrot.lane.b32.xlu0 %v5393, 48
      %v6651 = vpop.permute.xlu0 %6650
      %6652 = vrot.lane.b32.xlu0 %v5394, 48
      %v6653 = vpop.permute.xlu0 %6652
      %v6654 = vsel %vm3832, %v6639, %v6641
      %v6655 = vsel %vm3832, %v6641, %v6643
      %v6656 = vsel %vm3832, %v6643, %v6645
      %v6657 = vsel %vm3832, %v6647, %v6649
      %v6658 = vsel %vm3832, %v6649, %v6651
      %v6659 = vsel %vm3832, %v6651, %v6653
      %v6667 = vsel %vm5434, %v6637, 0
      %6669 = vmatprep.subr.mxu0 0.0
      %6670 = vmatpush1.msra.mxu0 0.0
      %6671 = vmatprep.subr.mxu0 0.0
      %6672 = vmatpush1.msra.mxu0 0.0
      %6673 = vmatprep.subr.mxu0 0.0
      %6674 = vmatpush1.msra.mxu0 0.0
      %6675 = vmatprep.subr.mxu0 0.0
      %6676 = vmatpush1.msra.mxu0 0.0
      %6677 = vmatprep.subr.mxu0 0.0
      %6678 = vmatpush1.msra.mxu0 0.0
      %6679 = vmatprep.subr.mxu0 0.0
      %6680 = vmatpush1.msra.mxu0 0.0
      %6681 = vmatprep.subr.mxu0 0.0
      %6682 = vmatpush1.msra.mxu0 0.0
      %6683 = vmatprep.subr.mxu0 0.0
      %6684 = vmatpush1.msra.mxu0 0.0
      %6685 = vmatprep.subr.mxu0 0.0
      %6686 = vmatpush1.msra.mxu0 0.0
      %6687 = vmatprep.subr.mxu0 0.0
      %6688 = vmatpush1.msra.mxu0 0.0
      %6689 = vmatprep.subr.mxu0 0.0
      %6690 = vmatpush1.msra.mxu0 0.0
      %6691 = vmatprep.subr.mxu0 0.0
      %6692 = vmatpush1.msra.mxu0 0.0
      %6693 = vmatprep.subr.mxu0 0.0
      %6694 = vmatpush1.msra.mxu0 0.0
      %6695 = vmatprep.subr.mxu0 0.0
      %6696 = vmatpush1.msra.mxu0 0.0
      %6697 = vmatprep.subr.mxu0 %v6658
      %6698 = vmatpush1.msra.mxu0 %v6657
      %6699 = vmatprep.subr.mxu0 %v6655
      %6700 = vmatpush1.msra.mxu0 %v6654
      %6701 = vmatprep.subr.mxu0 0.0
      %6702 = vmatpush2.msra.mxu0 0.0
      %6703 = vmatprep.subr.mxu0 0.0
      %6704 = vmatpush2.msra.mxu0 0.0
      %6705 = vmatprep.subr.mxu0 0.0
      %6706 = vmatpush2.msra.mxu0 0.0
      %6707 = vmatprep.subr.mxu0 0.0
      %6708 = vmatpush2.msra.mxu0 0.0
      %6709 = vmatprep.subr.mxu0 0.0
      %6710 = vmatpush2.msra.mxu0 0.0
      %6711 = vmatprep.subr.mxu0 0.0
      %6712 = vmatpush2.msra.mxu0 0.0
      %6713 = vmatprep.subr.mxu0 0.0
      %6714 = vmatpush2.msra.mxu0 0.0
      %6715 = vmatprep.subr.mxu0 0.0
      %6716 = vmatpush2.msra.mxu0 0.0
      %6717 = vmatprep.subr.mxu0 0.0
      %6718 = vmatpush2.msra.mxu0 0.0
      %6719 = vmatprep.subr.mxu0 0.0
      %6720 = vmatpush2.msra.mxu0 0.0
      %6721 = vmatprep.subr.mxu0 0.0
      %6722 = vmatpush2.msra.mxu0 0.0
      %6723 = vmatprep.subr.mxu0 0.0
      %6724 = vmatpush2.msra.mxu0 0.0
      %6725 = vmatprep.subr.mxu0 0.0
      %6726 = vmatpush2.msra.mxu0 0.0
      %6727 = vmatprep.subr.mxu0 0.0
      %6728 = vmatpush2.msra.mxu0 0.0
      %6729 = vmatprep.subr.mxu0 0.0
      %6730 = vmatpush2.msra.mxu0 0.0
      %6731 = vmatprep.subr.mxu0 0.0
      %6732 = vmatpush2.msra.mxu0 0.0
      %6733 = vmatprep.mubr.f32.mxu0 0.0
      %6734 = vmatmul.mubr.f32.gmra.mxu0 %v6667
      %v6735 = vpop.f32.mrf.mxu0
      %v6736 = vadd.f32 0.0, %v6735
      %v6737 = vpop.f32.mrf.mxu0
      %v6738 = vadd.f32 0.0, %v6737
      %6739 = vdwg.mxu0
      %6740 = vmatprep.subr.mxu0 0.0
      %6741 = vmatpush1.msra.mxu0 0.0
      %6742 = vmatprep.subr.mxu0 0.0
      %6743 = vmatpush1.msra.mxu0 0.0
      %6744 = vmatprep.subr.mxu0 0.0
      %6745 = vmatpush1.msra.mxu0 0.0
      %6746 = vmatprep.subr.mxu0 0.0
      %6747 = vmatpush1.msra.mxu0 0.0
      %6748 = vmatprep.subr.mxu0 0.0
      %6749 = vmatpush1.msra.mxu0 0.0
      %6750 = vmatprep.subr.mxu0 0.0
      %6751 = vmatpush1.msra.mxu0 0.0
      %6752 = vmatprep.subr.mxu0 0.0
      %6753 = vmatpush1.msra.mxu0 0.0
      %6754 = vmatprep.subr.mxu0 0.0
      %6755 = vmatpush1.msra.mxu0 0.0
      %6756 = vmatprep.subr.mxu0 0.0
      %6757 = vmatpush1.msra.mxu0 0.0
      %6758 = vmatprep.subr.mxu0 0.0
      %6759 = vmatpush1.msra.mxu0 0.0
      %6760 = vmatprep.subr.mxu0 0.0
      %6761 = vmatpush1.msra.mxu0 0.0
      %6762 = vmatprep.subr.mxu0 0.0
      %6763 = vmatpush1.msra.mxu0 0.0
      %6764 = vmatprep.subr.mxu0 0.0
      %6765 = vmatpush1.msra.mxu0 0.0
      %6766 = vmatprep.subr.mxu0 0.0
      %6767 = vmatpush1.msra.mxu0 0.0
      %6768 = vmatprep.subr.mxu0 0.0
      %6769 = vmatpush1.msra.mxu0 %v6659
      %6770 = vmatprep.subr.mxu0 0.0
      %6771 = vmatpush1.msra.mxu0 %v6656
      %6772 = vmatprep.subr.mxu0 0.0
      %6773 = vmatpush2.msra.mxu0 0.0
      %6774 = vmatprep.subr.mxu0 0.0
      %6775 = vmatpush2.msra.mxu0 0.0
      %6776 = vmatprep.subr.mxu0 0.0
      %6777 = vmatpush2.msra.mxu0 0.0
      %6778 = vmatprep.subr.mxu0 0.0
      %6779 = vmatpush2.msra.mxu0 0.0
      %6780 = vmatprep.subr.mxu0 0.0
      %6781 = vmatpush2.msra.mxu0 0.0
      %6782 = vmatprep.subr.mxu0 0.0
      %6783 = vmatpush2.msra.mxu0 0.0
      %6784 = vmatprep.subr.mxu0 0.0
      %6785 = vmatpush2.msra.mxu0 0.0
      %6786 = vmatprep.subr.mxu0 0.0
      %6787 = vmatpush2.msra.mxu0 0.0
      %6788 = vmatprep.subr.mxu0 0.0
      %6789 = vmatpush2.msra.mxu0 0.0
      %6790 = vmatprep.subr.mxu0 0.0
      %6791 = vmatpush2.msra.mxu0 0.0
      %6792 = vmatprep.subr.mxu0 0.0
      %6793 = vmatpush2.msra.mxu0 0.0
      %6794 = vmatprep.subr.mxu0 0.0
      %6795 = vmatpush2.msra.mxu0 0.0
      %6796 = vmatprep.subr.mxu0 0.0
      %6797 = vmatpush2.msra.mxu0 0.0
      %6798 = vmatprep.subr.mxu0 0.0
      %6799 = vmatpush2.msra.mxu0 0.0
      %6800 = vmatprep.subr.mxu0 0.0
      %6801 = vmatpush2.msra.mxu0 0.0
      %6802 = vmatprep.subr.mxu0 0.0
      %6803 = vmatpush2.msra.mxu0 0.0
      %6804 = vmatprep.mubr.f32.mxu0 0.0
      %6805 = vmatmul.mubr.f32.gmra.mxu0 %v6667
      %v6806 = vpop.f32.mrf.mxu0
      %v6807 = vadd.f32 0.0, %v6806
      %v6808 = vpop.f32.mrf.mxu0
      %6809 = vdwg.mxu0
      %v6810 = vadd.f32 %v6633, %v6736
      %v6811 = vadd.f32 %v6634, %v6738
      %v6812 = vadd.f32 %v6635, %v6807
      %s6813 = scalar_lea.vmem %s4, 32
      %v6814 = vld [vmem:[%s6813] sm:$0xf]
      %6815 = vrot.lane.b32.xlu0 %v5387, 47
      %v6816 = vpop.permute.xlu0 %6815
      %6817 = vrot.lane.b32.xlu0 %v5388, 47
      %v6818 = vpop.permute.xlu0 %6817
      %6819 = vrot.lane.b32.xlu0 %v5389, 47
      %v6820 = vpop.permute.xlu0 %6819
      %6821 = vrot.lane.b32.xlu0 %v5390, 47
      %v6822 = vpop.permute.xlu0 %6821
      %6823 = vrot.lane.b32.xlu0 %v5391, 47
      %v6824 = vpop.permute.xlu0 %6823
      %6825 = vrot.lane.b32.xlu0 %v5392, 47
      %v6826 = vpop.permute.xlu0 %6825
      %6827 = vrot.lane.b32.xlu0 %v5393, 47
      %v6828 = vpop.permute.xlu0 %6827
      %6829 = vrot.lane.b32.xlu0 %v5394, 47
      %v6830 = vpop.permute.xlu0 %6829
      %v6831 = vsel %vm4017, %v6816, %v6818
      %v6832 = vsel %vm4017, %v6818, %v6820
      %v6833 = vsel %vm4017, %v6820, %v6822
      %v6834 = vsel %vm4017, %v6824, %v6826
      %v6835 = vsel %vm4017, %v6826, %v6828
      %v6836 = vsel %vm4017, %v6828, %v6830
      %v6844 = vsel %vm5434, %v6814, 0
      %6846 = vmatprep.subr.mxu0 0.0
      %6847 = vmatpush1.msra.mxu0 0.0
      %6848 = vmatprep.subr.mxu0 0.0
      %6849 = vmatpush1.msra.mxu0 0.0
      %6850 = vmatprep.subr.mxu0 0.0
      %6851 = vmatpush1.msra.mxu0 0.0
      %6852 = vmatprep.subr.mxu0 0.0
      %6853 = vmatpush1.msra.mxu0 0.0
      %6854 = vmatprep.subr.mxu0 0.0
      %6855 = vmatpush1.msra.mxu0 0.0
      %6856 = vmatprep.subr.mxu0 0.0
      %6857 = vmatpush1.msra.mxu0 0.0
      %6858 = vmatprep.subr.mxu0 0.0
      %6859 = vmatpush1.msra.mxu0 0.0
      %6860 = vmatprep.subr.mxu0 0.0
      %6861 = vmatpush1.msra.mxu0 0.0
      %6862 = vmatprep.subr.mxu0 0.0
      %6863 = vmatpush1.msra.mxu0 0.0
      %6864 = vmatprep.subr.mxu0 0.0
      %6865 = vmatpush1.msra.mxu0 0.0
      %6866 = vmatprep.subr.mxu0 0.0
      %6867 = vmatpush1.msra.mxu0 0.0
      %6868 = vmatprep.subr.mxu0 0.0
      %6869 = vmatpush1.msra.mxu0 0.0
      %6870 = vmatprep.subr.mxu0 0.0
      %6871 = vmatpush1.msra.mxu0 0.0
      %6872 = vmatprep.subr.mxu0 0.0
      %6873 = vmatpush1.msra.mxu0 0.0
      %6874 = vmatprep.subr.mxu0 %v6835
      %6875 = vmatpush1.msra.mxu0 %v6834
      %6876 = vmatprep.subr.mxu0 %v6832
      %6877 = vmatpush1.msra.mxu0 %v6831
      %6878 = vmatprep.subr.mxu0 0.0
      %6879 = vmatpush2.msra.mxu0 0.0
      %6880 = vmatprep.subr.mxu0 0.0
      %6881 = vmatpush2.msra.mxu0 0.0
      %6882 = vmatprep.subr.mxu0 0.0
      %6883 = vmatpush2.msra.mxu0 0.0
      %6884 = vmatprep.subr.mxu0 0.0
      %6885 = vmatpush2.msra.mxu0 0.0
      %6886 = vmatprep.subr.mxu0 0.0
      %6887 = vmatpush2.msra.mxu0 0.0
      %6888 = vmatprep.subr.mxu0 0.0
      %6889 = vmatpush2.msra.mxu0 0.0
      %6890 = vmatprep.subr.mxu0 0.0
      %6891 = vmatpush2.msra.mxu0 0.0
      %6892 = vmatprep.subr.mxu0 0.0
      %6893 = vmatpush2.msra.mxu0 0.0
      %6894 = vmatprep.subr.mxu0 0.0
      %6895 = vmatpush2.msra.mxu0 0.0
      %6896 = vmatprep.subr.mxu0 0.0
      %6897 = vmatpush2.msra.mxu0 0.0
      %6898 = vmatprep.subr.mxu0 0.0
      %6899 = vmatpush2.msra.mxu0 0.0
      %6900 = vmatprep.subr.mxu0 0.0
      %6901 = vmatpush2.msra.mxu0 0.0
      %6902 = vmatprep.subr.mxu0 0.0
      %6903 = vmatpush2.msra.mxu0 0.0
      %6904 = vmatprep.subr.mxu0 0.0
      %6905 = vmatpush2.msra.mxu0 0.0
      %6906 = vmatprep.subr.mxu0 0.0
      %6907 = vmatpush2.msra.mxu0 0.0
      %6908 = vmatprep.subr.mxu0 0.0
      %6909 = vmatpush2.msra.mxu0 0.0
      %6910 = vmatprep.mubr.f32.mxu0 0.0
      %6911 = vmatmul.mubr.f32.gmra.mxu0 %v6844
      %v6912 = vpop.f32.mrf.mxu0
      %v6913 = vadd.f32 0.0, %v6912
      %v6914 = vpop.f32.mrf.mxu0
      %v6915 = vadd.f32 0.0, %v6914
      %6916 = vdwg.mxu0
      %6917 = vmatprep.subr.mxu0 0.0
      %6918 = vmatpush1.msra.mxu0 0.0
      %6919 = vmatprep.subr.mxu0 0.0
      %6920 = vmatpush1.msra.mxu0 0.0
      %6921 = vmatprep.subr.mxu0 0.0
      %6922 = vmatpush1.msra.mxu0 0.0
      %6923 = vmatprep.subr.mxu0 0.0
      %6924 = vmatpush1.msra.mxu0 0.0
      %6925 = vmatprep.subr.mxu0 0.0
      %6926 = vmatpush1.msra.mxu0 0.0
      %6927 = vmatprep.subr.mxu0 0.0
      %6928 = vmatpush1.msra.mxu0 0.0
      %6929 = vmatprep.subr.mxu0 0.0
      %6930 = vmatpush1.msra.mxu0 0.0
      %6931 = vmatprep.subr.mxu0 0.0
      %6932 = vmatpush1.msra.mxu0 0.0
      %6933 = vmatprep.subr.mxu0 0.0
      %6934 = vmatpush1.msra.mxu0 0.0
      %6935 = vmatprep.subr.mxu0 0.0
      %6936 = vmatpush1.msra.mxu0 0.0
      %6937 = vmatprep.subr.mxu0 0.0
      %6938 = vmatpush1.msra.mxu0 0.0
      %6939 = vmatprep.subr.mxu0 0.0
      %6940 = vmatpush1.msra.mxu0 0.0
      %6941 = vmatprep.subr.mxu0 0.0
      %6942 = vmatpush1.msra.mxu0 0.0
      %6943 = vmatprep.subr.mxu0 0.0
      %6944 = vmatpush1.msra.mxu0 0.0
      %6945 = vmatprep.subr.mxu0 0.0
      %6946 = vmatpush1.msra.mxu0 %v6836
      %6947 = vmatprep.subr.mxu0 0.0
      %6948 = vmatpush1.msra.mxu0 %v6833
      %6949 = vmatprep.subr.mxu0 0.0
      %6950 = vmatpush2.msra.mxu0 0.0
      %6951 = vmatprep.subr.mxu0 0.0
      %6952 = vmatpush2.msra.mxu0 0.0
      %6953 = vmatprep.subr.mxu0 0.0
      %6954 = vmatpush2.msra.mxu0 0.0
      %6955 = vmatprep.subr.mxu0 0.0
      %6956 = vmatpush2.msra.mxu0 0.0
      %6957 = vmatprep.subr.mxu0 0.0
      %6958 = vmatpush2.msra.mxu0 0.0
      %6959 = vmatprep.subr.mxu0 0.0
      %6960 = vmatpush2.msra.mxu0 0.0
      %6961 = vmatprep.subr.mxu0 0.0
      %6962 = vmatpush2.msra.mxu0 0.0
      %6963 = vmatprep.subr.mxu0 0.0
      %6964 = vmatpush2.msra.mxu0 0.0
      %6965 = vmatprep.subr.mxu0 0.0
      %6966 = vmatpush2.msra.mxu0 0.0
      %6967 = vmatprep.subr.mxu0 0.0
      %6968 = vmatpush2.msra.mxu0 0.0
      %6969 = vmatprep.subr.mxu0 0.0
      %6970 = vmatpush2.msra.mxu0 0.0
      %6971 = vmatprep.subr.mxu0 0.0
      %6972 = vmatpush2.msra.mxu0 0.0
      %6973 = vmatprep.subr.mxu0 0.0
      %6974 = vmatpush2.msra.mxu0 0.0
      %6975 = vmatprep.subr.mxu0 0.0
      %6976 = vmatpush2.msra.mxu0 0.0
      %6977 = vmatprep.subr.mxu0 0.0
      %6978 = vmatpush2.msra.mxu0 0.0
      %6979 = vmatprep.subr.mxu0 0.0
      %6980 = vmatpush2.msra.mxu0 0.0
      %6981 = vmatprep.mubr.f32.mxu0 0.0
      %6982 = vmatmul.mubr.f32.gmra.mxu0 %v6844
      %v6983 = vpop.f32.mrf.mxu0
      %v6984 = vadd.f32 0.0, %v6983
      %v6985 = vpop.f32.mrf.mxu0
      %6986 = vdwg.mxu0
      %v6987 = vadd.f32 %v6810, %v6913
      %v6988 = vadd.f32 %v6811, %v6915
      %v6989 = vadd.f32 %v6812, %v6984
      %v6990 = vld [vmem:[%s5] sm:$0xf]
      %6992 = vset.pattern.permute.xlu0 0
      %6993 = vperm.xlu0 %6992, %v6990
      %v6994 = vpop.permute.xlu0 %6993
      %v6996 = vadd.f32 %v6987, %v6994
      %v6997 = vadd.f32 %v6988, %v6994
      %v6998 = vadd.f32 %v6989, %v6994
      %v6999 = vmul.f32 %v6996, %v5323
      %v7000 = vmul.f32 %v6997, %v5327
      %v7001 = vmul.f32 %v6998, %v5331
      %vm7002 = vcmask 486400
      %7003 = vst.msk [vmem:[#allocation4] sm:$0xf] %vm7002, 0.0
      %v7007 = vcombine.low %v6999, %v7000
      %7008 = vrot.lane.b32.xlu0 %v7007, 60
      %v7009 = vpop.permute.xlu0 %7008
      %7010 = vrot.lane.b32.xlu0 %v7001, 60
      %v7011 = vpop.permute.xlu0 %7010
      %v7012 = vrot.slane %v7009, 4
      %v7013 = vrot.slane %v7011, 4
      %v7014 = vsel %vm5341, %v7012, %v7009
      %v7015 = vsel %vm722, %v7012, %v7013
      %v7016 = vsel %vm5341, %v7015, %v7011
      %vm7019 = vcmask 1043936
      %vm7020 = vcmask 1047556
      %vm7021 = vmor %vm7020, %vm7019
      %7022 = vst.msk [vmem:[#allocation4] sm:$0xff] %vm7021, %v7014
      %vm7023 = vcmask 293892
      %vm7024 = vmor %vm7023, %vm722
      %7025 = vst.msk [vmem:[#allocation4 + $0x8] sm:$0xff] %vm7024, %v7016
      %vm7026 = vcmask 781600
      %7027 = vst.msk [vmem:[#allocation4 + $0xc] sm:$0xf] %vm7026, 0.0
      %v7028 = vld [vmem:[%s6] sm:$0xff]
      %v7029 = vld [vmem:[%s7] sm:$0xff]
      %7031 = vset.pattern.permute.xlu0 0
      %7032 = vperm.xlu0 %7031, %v7029
      %v7033 = vpop.permute.xlu0 %7032
      %v7036 = vsel %vm715, %v7028, 0
      %v7038 = vsel %vm722, %v6999, 0
      %v7040 = vsel %vm722, %v7000, 0
      %v7042 = vsel %vm722, %v7001, 0
      %7044 = vmatprep.subr.mxu0 0.0
      %7045 = vmatpush1.msra.mxu0 0.0
      %7046 = vmatprep.subr.mxu0 0.0
      %7047 = vmatpush1.msra.mxu0 0.0
      %7048 = vmatprep.subr.mxu0 0.0
      %7049 = vmatpush1.msra.mxu0 0.0
      %7050 = vmatprep.subr.mxu0 0.0
      %7051 = vmatpush1.msra.mxu0 0.0
      %7052 = vmatprep.subr.mxu0 0.0
      %7053 = vmatpush1.msra.mxu0 0.0
      %7054 = vmatprep.subr.mxu0 0.0
      %7055 = vmatpush1.msra.mxu0 0.0
      %7056 = vmatprep.subr.mxu0 0.0
      %7057 = vmatpush1.msra.mxu0 0.0
      %7058 = vmatprep.subr.mxu0 0.0
      %7059 = vmatpush1.msra.mxu0 0.0
      %7060 = vmatprep.subr.mxu0 0.0
      %7061 = vmatpush1.msra.mxu0 0.0
      %7062 = vmatprep.subr.mxu0 0.0
      %7063 = vmatpush1.msra.mxu0 0.0
      %7064 = vmatprep.subr.mxu0 0.0
      %7065 = vmatpush1.msra.mxu0 0.0
      %7066 = vmatprep.subr.mxu0 0.0
      %7067 = vmatpush1.msra.mxu0 0.0
      %7068 = vmatprep.subr.mxu0 0.0
      %7069 = vmatpush1.msra.mxu0 0.0
      %7070 = vmatprep.subr.mxu0 0.0
      %7071 = vmatpush1.msra.mxu0 0.0
      %7072 = vmatprep.subr.mxu0 0.0
      %7073 = vmatpush1.msra.mxu0 0.0
      %7074 = vmatprep.subr.mxu0 %v7040
      %7075 = vmatpush1.msra.mxu0 %v7038
      %7076 = vmatprep.subr.mxu0 0.0
      %7077 = vmatpush2.msra.mxu0 0.0
      %7078 = vmatprep.subr.mxu0 0.0
      %7079 = vmatpush2.msra.mxu0 0.0
      %7080 = vmatprep.subr.mxu0 0.0
      %7081 = vmatpush2.msra.mxu0 0.0
      %7082 = vmatprep.subr.mxu0 0.0
      %7083 = vmatpush2.msra.mxu0 0.0
      %7084 = vmatprep.subr.mxu0 0.0
      %7085 = vmatpush2.msra.mxu0 0.0
      %7086 = vmatprep.subr.mxu0 0.0
      %7087 = vmatpush2.msra.mxu0 0.0
      %7088 = vmatprep.subr.mxu0 0.0
      %7089 = vmatpush2.msra.mxu0 0.0
      %7090 = vmatprep.subr.mxu0 0.0
      %7091 = vmatpush2.msra.mxu0 0.0
      %7092 = vmatprep.subr.mxu0 0.0
      %7093 = vmatpush2.msra.mxu0 0.0
      %7094 = vmatprep.subr.mxu0 0.0
      %7095 = vmatpush2.msra.mxu0 0.0
      %7096 = vmatprep.subr.mxu0 0.0
      %7097 = vmatpush2.msra.mxu0 0.0
      %7098 = vmatprep.subr.mxu0 0.0
      %7099 = vmatpush2.msra.mxu0 0.0
      %7100 = vmatprep.subr.mxu0 0.0
      %7101 = vmatpush2.msra.mxu0 0.0
      %7102 = vmatprep.subr.mxu0 0.0
      %7103 = vmatpush2.msra.mxu0 0.0
      %7104 = vmatprep.subr.mxu0 0.0
      %7105 = vmatpush2.msra.mxu0 0.0
      %7106 = vmatprep.subr.mxu0 0.0
      %7107 = vmatpush2.msra.mxu0 0.0
      %7108 = vmatprep.mubr.f32.mxu0 0.0
      %7109 = vmatmul.mubr.f32.gmra.mxu0 %v7036
      %v7110 = vpop.f32.mrf.mxu0
      %v7111 = vadd.f32 %v7033, %v7110
      %v7112 = vpop.f32.mrf.mxu0
      %v7113 = vadd.f32 %v7033, %v7112
      %7114 = vdwg.mxu0
      %7115 = vmatprep.subr.mxu0 0.0
      %7116 = vmatpush1.msra.mxu0 0.0
      %7117 = vmatprep.subr.mxu0 0.0
      %7118 = vmatpush1.msra.mxu0 0.0
      %7119 = vmatprep.subr.mxu0 0.0
      %7120 = vmatpush1.msra.mxu0 0.0
      %7121 = vmatprep.subr.mxu0 0.0
      %7122 = vmatpush1.msra.mxu0 0.0
      %7123 = vmatprep.subr.mxu0 0.0
      %7124 = vmatpush1.msra.mxu0 0.0
      %7125 = vmatprep.subr.mxu0 0.0
      %7126 = vmatpush1.msra.mxu0 0.0
      %7127 = vmatprep.subr.mxu0 0.0
      %7128 = vmatpush1.msra.mxu0 0.0
      %7129 = vmatprep.subr.mxu0 0.0
      %7130 = vmatpush1.msra.mxu0 0.0
      %7131 = vmatprep.subr.mxu0 0.0
      %7132 = vmatpush1.msra.mxu0 0.0
      %7133 = vmatprep.subr.mxu0 0.0
      %7134 = vmatpush1.msra.mxu0 0.0
      %7135 = vmatprep.subr.mxu0 0.0
      %7136 = vmatpush1.msra.mxu0 0.0
      %7137 = vmatprep.subr.mxu0 0.0
      %7138 = vmatpush1.msra.mxu0 0.0
      %7139 = vmatprep.subr.mxu0 0.0
      %7140 = vmatpush1.msra.mxu0 0.0
      %7141 = vmatprep.subr.mxu0 0.0
      %7142 = vmatpush1.msra.mxu0 0.0
      %7143 = vmatprep.subr.mxu0 0.0
      %7144 = vmatpush1.msra.mxu0 0.0
      %7145 = vmatprep.subr.mxu0 0.0
      %7146 = vmatpush1.msra.mxu0 %v7042
      %7147 = vmatprep.subr.mxu0 0.0
      %7148 = vmatpush2.msra.mxu0 0.0
      %7149 = vmatprep.subr.mxu0 0.0
      %7150 = vmatpush2.msra.mxu0 0.0
      %7151 = vmatprep.subr.mxu0 0.0
      %7152 = vmatpush2.msra.mxu0 0.0
      %7153 = vmatprep.subr.mxu0 0.0
      %7154 = vmatpush2.msra.mxu0 0.0
      %7155 = vmatprep.subr.mxu0 0.0
      %7156 = vmatpush2.msra.mxu0 0.0
      %7157 = vmatprep.subr.mxu0 0.0
      %7158 = vmatpush2.msra.mxu0 0.0
      %7159 = vmatprep.subr.mxu0 0.0
      %7160 = vmatpush2.msra.mxu0 0.0
      %7161 = vmatprep.subr.mxu0 0.0
      %7162 = vmatpush2.msra.mxu0 0.0
      %7163 = vmatprep.subr.mxu0 0.0
      %7164 = vmatpush2.msra.mxu0 0.0
      %7165 = vmatprep.subr.mxu0 0.0
      %7166 = vmatpush2.msra.mxu0 0.0
      %7167 = vmatprep.subr.mxu0 0.0
      %7168 = vmatpush2.msra.mxu0 0.0
      %7169 = vmatprep.subr.mxu0 0.0
      %7170 = vmatpush2.msra.mxu0 0.0
      %7171 = vmatprep.subr.mxu0 0.0
      %7172 = vmatpush2.msra.mxu0 0.0
      %7173 = vmatprep.subr.mxu0 0.0
      %7174 = vmatpush2.msra.mxu0 0.0
      %7175 = vmatprep.subr.mxu0 0.0
      %7176 = vmatpush2.msra.mxu0 0.0
      %7177 = vmatprep.subr.mxu0 0.0
      %7178 = vmatpush2.msra.mxu0 0.0
      %7179 = vmatprep.mubr.f32.mxu0 0.0
      %7180 = vmatmul.mubr.f32.gmra.mxu0 %v7036
      %v7181 = vpop.f32.mrf.mxu0
      %v7182 = vadd.f32 %v7033, %v7181
      %v7183 = vpop.f32.mrf.mxu0
      %7184 = vdwg.mxu0
      %v7185 = vmul.f32 %v7111, %v5323
      %v7186 = vmul.f32 %v7113, %v5327
      %v7187 = vmul.f32 %v7182, %v5331
      %7188 = vst.msk [vmem:[#allocation5] sm:$0xff] %vm5341, 0.0
      %7192 = vrot.lane.b32.xlu0 %v7185, 60
      %v7193 = vpop.permute.xlu0 %7192
      %7194 = vrot.lane.b32.xlu0 %v7186, 60
      %v7195 = vpop.permute.xlu0 %7194
      %7196 = vrot.lane.b32.xlu0 %v7187, 60
      %v7197 = vpop.permute.xlu0 %7196
      %v7198 = vsel %vm5341, %v7193, %v7195
      %v7199 = vsel %vm5341, %v7195, %v7197
      %7204 = vst.msk [vmem:[#allocation5] sm:$0xff] %vm5374, %v7193
      %7205 = vst [vmem:[#allocation5 + $0x8] sm:$0xff] %v7198
      %7206 = vst [vmem:[#allocation5 + $0x10] sm:$0xff] %v7199
      %7207 = vst.msk [vmem:[#allocation5 + $0x18] sm:$0xff] %vm5378, %v7197
      %7208 = vst.msk [vmem:[#allocation5 + $0x18] sm:$0xff] %vm5384, 0.0
      %v7209 = vld [vmem:[#allocation5] sm:$0xff]
      %v7210 = vld [vmem:[#allocation5 + $0x8] sm:$0xff]
      %v7211 = vld [vmem:[#allocation5 + $0x10] sm:$0xff]
      %v7212 = vld [vmem:[#allocation5 + $0x18] sm:$0xff]
      %v7213 = vld [vmem:[#allocation4] sm:$0xff]
      %v7214 = vld [vmem:[#allocation4 + $0x8] sm:$0xff]
      %v7215 = vld [vmem:[%s8] sm:$0xff]
      %7217 = vset.pattern.permute.xlu0 0
      %7218 = vperm.xlu0 %7217, %v7215
      %v7219 = vpop.permute.xlu0 %7218
      %v7221 = vmul.f32 %v7219, %v7209
      %v7222 = vmul.f32 %v7219, %v7210
      %v7223 = vmul.f32 %v7219, %v7211
      %v7224 = vmul.f32 %v7219, %v7212
      %v7225 = vadd.f32 %v7221, 0.0
      %v7226 = vadd.f32 %v7222, 0.0
      %v7227 = vadd.f32 %v7223, 0.0
      %v7228 = vadd.f32 %v7224, 0.0
      %v7229 = vld [vmem:[%s10] sm:$0xf]
      %7231 = vset.pattern.permute.xlu0 0
      %7232 = vperm.xlu0 %7231, %v7229
      %v7233 = vpop.permute.xlu0 %7232
      %v7237 = vcombine.high %v7213, %v7213
      %v7238 = vcombine.high %v7214, %v7214
      %7239 = vrot.lane.b32.xlu0 %v7213, 89
      %v7240 = vpop.permute.xlu0 %7239
      %7241 = vrot.lane.b32.xlu0 %v7237, 89
      %v7242 = vpop.permute.xlu0 %7241
      %7243 = vrot.lane.b32.xlu0 %v7214, 89
      %v7244 = vpop.permute.xlu0 %7243
      %7245 = vrot.lane.b32.xlu0 %v7238, 89
      %v7246 = vpop.permute.xlu0 %7245
      %v7247 = vsel %vm1797, %v7240, %v7242
      %v7248 = vsel %vm1797, %v7242, %v7244
      %v7249 = vsel %vm1797, %v7244, %v7246
      %v7253 = vmul.f32 %v7233, %v7247
      %v7254 = vmul.f32 %v7233, %v7248
      %v7255 = vmul.f32 %v7233, %v7249
      %v7256 = vadd.f32 %v7253, 0.0
      %v7257 = vadd.f32 %v7254, 0.0
      %v7258 = vadd.f32 %v7255, 0.0
      %v7259 = vld [vmem:[%s8] sm:$0xff]
      %7261 = vset.pattern.permute.xlu0 1
      %7262 = vperm.xlu0 %7261, %v7259
      %v7263 = vpop.permute.xlu0 %7262
      %v7265 = vmul.f32 %v7263, %v7209
      %v7266 = vmul.f32 %v7263, %v7210
      %v7267 = vmul.f32 %v7263, %v7211
      %v7268 = vmul.f32 %v7263, %v7212
      %7273 = vrot.lane.b32.xlu0 %v7265, 127
      %v7274 = vpop.permute.xlu0 %7273
      %7275 = vrot.lane.b32.xlu0 %v7266, 127
      %v7276 = vpop.permute.xlu0 %7275
      %7277 = vrot.lane.b32.xlu0 %v7267, 127
      %v7278 = vpop.permute.xlu0 %7277
      %7279 = vrot.lane.b32.xlu0 %v7268, 127
      %v7280 = vpop.permute.xlu0 %7279
      %vm7281 = vcmask 1039360
      %v7282 = vsel %vm7281, %v7274, %v7276
      %v7283 = vsel %vm7281, %v7276, %v7278
      %v7284 = vsel %vm7281, %v7278, %v7280
      %v7289 = vadd.f32 %v7225, %v7282
      %v7290 = vadd.f32 %v7226, %v7283
      %v7291 = vadd.f32 %v7227, %v7284
      %v7292 = vadd.f32 %v7228, %v7280
      %v7293 = vld [vmem:[%s10] sm:$0xf]
      %7295 = vset.pattern.permute.xlu0 1
      %7296 = vperm.xlu0 %7295, %v7293
      %v7297 = vpop.permute.xlu0 %7296
      %7299 = vrot.lane.b32.xlu0 %v7213, 88
      %v7300 = vpop.permute.xlu0 %7299
      %7301 = vrot.lane.b32.xlu0 %v7237, 88
      %v7302 = vpop.permute.xlu0 %7301
      %7303 = vrot.lane.b32.xlu0 %v7214, 88
      %v7304 = vpop.permute.xlu0 %7303
      %7305 = vrot.lane.b32.xlu0 %v7238, 88
      %v7306 = vpop.permute.xlu0 %7305
      %v7307 = vsel %vm1982, %v7300, %v7302
      %v7308 = vsel %vm1982, %v7302, %v7304
      %v7309 = vsel %vm1982, %v7304, %v7306
      %v7313 = vmul.f32 %v7297, %v7307
      %v7314 = vmul.f32 %v7297, %v7308
      %v7315 = vmul.f32 %v7297, %v7309
      %v7316 = vadd.f32 %v7256, %v7313
      %v7317 = vadd.f32 %v7257, %v7314
      %v7318 = vadd.f32 %v7258, %v7315
      %v7319 = vld [vmem:[%s8] sm:$0xff]
      %7321 = vset.pattern.permute.xlu0 2
      %7322 = vperm.xlu0 %7321, %v7319
      %v7323 = vpop.permute.xlu0 %7322
      %v7325 = vmul.f32 %v7323, %v7209
      %v7326 = vmul.f32 %v7323, %v7210
      %v7327 = vmul.f32 %v7323, %v7211
      %v7328 = vmul.f32 %v7323, %v7212
      %7333 = vrot.lane.b32.xlu0 %v7325, 126
      %v7334 = vpop.permute.xlu0 %7333
      %7335 = vrot.lane.b32.xlu0 %v7326, 126
      %v7336 = vpop.permute.xlu0 %7335
      %7337 = vrot.lane.b32.xlu0 %v7327, 126
      %v7338 = vpop.permute.xlu0 %7337
      %7339 = vrot.lane.b32.xlu0 %v7328, 126
      %v7340 = vpop.permute.xlu0 %7339
      %vm7341 = vcmask 1031168
      %v7342 = vsel %vm7341, %v7334, %v7336
      %v7343 = vsel %vm7341, %v7336, %v7338
      %v7344 = vsel %vm7341, %v7338, %v7340
      %v7349 = vadd.f32 %v7289, %v7342
      %v7350 = vadd.f32 %v7290, %v7343
      %v7351 = vadd.f32 %v7291, %v7344
      %v7352 = vadd.f32 %v7292, %v7340
      %v7353 = vld [vmem:[%s10] sm:$0xf]
      %7355 = vset.pattern.permute.xlu0 2
      %7356 = vperm.xlu0 %7355, %v7353
      %v7357 = vpop.permute.xlu0 %7356
      %7359 = vrot.lane.b32.xlu0 %v7213, 87
      %v7360 = vpop.permute.xlu0 %7359
      %7361 = vrot.lane.b32.xlu0 %v7237, 87
      %v7362 = vpop.permute.xlu0 %7361
      %7363 = vrot.lane.b32.xlu0 %v7214, 87
      %v7364 = vpop.permute.xlu0 %7363
      %7365 = vrot.lane.b32.xlu0 %v7238, 87
      %v7366 = vpop.permute.xlu0 %7365
      %v7367 = vsel %vm2167, %v7360, %v7362
      %v7368 = vsel %vm2167, %v7362, %v7364
      %v7369 = vsel %vm2167, %v7364, %v7366
      %v7373 = vmul.f32 %v7357, %v7367
      %v7374 = vmul.f32 %v7357, %v7368
      %v7375 = vmul.f32 %v7357, %v7369
      %v7376 = vadd.f32 %v7316, %v7373
      %v7377 = vadd.f32 %v7317, %v7374
      %v7378 = vadd.f32 %v7318, %v7375
      %v7379 = vld [vmem:[%s8] sm:$0xff]
      %7381 = vset.pattern.permute.xlu0 3
      %7382 = vperm.xlu0 %7381, %v7379
      %v7383 = vpop.permute.xlu0 %7382
      %v7385 = vmul.f32 %v7383, %v7209
      %v7386 = vmul.f32 %v7383, %v7210
      %v7387 = vmul.f32 %v7383, %v7211
      %v7388 = vmul.f32 %v7383, %v7212
      %7393 = vrot.lane.b32.xlu0 %v7385, 108
      %v7394 = vpop.permute.xlu0 %7393
      %7395 = vrot.lane.b32.xlu0 %v7386, 108
      %v7396 = vpop.permute.xlu0 %7395
      %7397 = vrot.lane.b32.xlu0 %v7387, 108
      %v7398 = vpop.permute.xlu0 %7397
      %7399 = vrot.lane.b32.xlu0 %v7388, 108
      %v7400 = vpop.permute.xlu0 %7399
      %v7401 = vsel %vm1063, %v7394, %v7396
      %v7402 = vsel %vm1063, %v7396, %v7398
      %v7403 = vsel %vm1063, %v7398, %v7400
      %v7408 = vadd.f32 %v7349, %v7401
      %v7409 = vadd.f32 %v7350, %v7402
      %v7410 = vadd.f32 %v7351, %v7403
      %v7411 = vadd.f32 %v7352, %v7400
      %v7412 = vld [vmem:[%s10] sm:$0xf]
      %7414 = vset.pattern.permute.xlu0 3
      %7415 = vperm.xlu0 %7414, %v7412
      %v7416 = vpop.permute.xlu0 %7415
      %7418 = vrot.lane.b32.xlu0 %v7213, 69
      %v7419 = vpop.permute.xlu0 %7418
      %7420 = vrot.lane.b32.xlu0 %v7237, 69
      %v7421 = vpop.permute.xlu0 %7420
      %7422 = vrot.lane.b32.xlu0 %v7214, 69
      %v7423 = vpop.permute.xlu0 %7422
      %7424 = vrot.lane.b32.xlu0 %v7238, 69
      %v7425 = vpop.permute.xlu0 %7424
      %v7426 = vsel %vm2722, %v7419, %v7421
      %v7427 = vsel %vm2722, %v7421, %v7423
      %v7428 = vsel %vm2722, %v7423, %v7425
      %v7432 = vmul.f32 %v7416, %v7426
      %v7433 = vmul.f32 %v7416, %v7427
      %v7434 = vmul.f32 %v7416, %v7428
      %v7435 = vadd.f32 %v7376, %v7432
      %v7436 = vadd.f32 %v7377, %v7433
      %v7437 = vadd.f32 %v7378, %v7434
      %v7438 = vld [vmem:[%s8] sm:$0xff]
      %7440 = vset.pattern.permute.xlu0 4
      %7441 = vperm.xlu0 %7440, %v7438
      %v7442 = vpop.permute.xlu0 %7441
      %v7444 = vmul.f32 %v7442, %v7209
      %v7445 = vmul.f32 %v7442, %v7210
      %v7446 = vmul.f32 %v7442, %v7211
      %v7447 = vmul.f32 %v7442, %v7212
      %7452 = vrot.lane.b32.xlu0 %v7444, 107
      %v7453 = vpop.permute.xlu0 %7452
      %7454 = vrot.lane.b32.xlu0 %v7445, 107
      %v7455 = vpop.permute.xlu0 %7454
      %7456 = vrot.lane.b32.xlu0 %v7446, 107
      %v7457 = vpop.permute.xlu0 %7456
      %7458 = vrot.lane.b32.xlu0 %v7447, 107
      %v7459 = vpop.permute.xlu0 %7458
      %v7460 = vsel %vm1245, %v7453, %v7455
      %v7461 = vsel %vm1245, %v7455, %v7457
      %v7462 = vsel %vm1245, %v7457, %v7459
      %v7467 = vadd.f32 %v7408, %v7460
      %v7468 = vadd.f32 %v7409, %v7461
      %v7469 = vadd.f32 %v7410, %v7462
      %v7470 = vadd.f32 %v7411, %v7459
      %v7471 = vld [vmem:[%s10] sm:$0xf]
      %7473 = vset.pattern.permute.xlu0 4
      %7474 = vperm.xlu0 %7473, %v7471
      %v7475 = vpop.permute.xlu0 %7474
      %7477 = vrot.lane.b32.xlu0 %v7213, 68
      %v7478 = vpop.permute.xlu0 %7477
      %7479 = vrot.lane.b32.xlu0 %v7237, 68
      %v7480 = vpop.permute.xlu0 %7479
      %7481 = vrot.lane.b32.xlu0 %v7214, 68
      %v7482 = vpop.permute.xlu0 %7481
      %7483 = vrot.lane.b32.xlu0 %v7238, 68
      %v7484 = vpop.permute.xlu0 %7483
      %v7485 = vsel %vm2907, %v7478, %v7480
      %v7486 = vsel %vm2907, %v7480, %v7482
      %v7487 = vsel %vm2907, %v7482, %v7484
      %v7491 = vmul.f32 %v7475, %v7485
      %v7492 = vmul.f32 %v7475, %v7486
      %v7493 = vmul.f32 %v7475, %v7487
      %v7494 = vadd.f32 %v7435, %v7491
      %v7495 = vadd.f32 %v7436, %v7492
      %v7496 = vadd.f32 %v7437, %v7493
      %v7497 = vld [vmem:[%s8] sm:$0xff]
      %7499 = vset.pattern.permute.xlu0 5
      %7500 = vperm.xlu0 %7499, %v7497
      %v7501 = vpop.permute.xlu0 %7500
      %v7503 = vmul.f32 %v7501, %v7209
      %v7504 = vmul.f32 %v7501, %v7210
      %v7505 = vmul.f32 %v7501, %v7211
      %v7506 = vmul.f32 %v7501, %v7212
      %7511 = vrot.lane.b32.xlu0 %v7503, 106
      %v7512 = vpop.permute.xlu0 %7511
      %7513 = vrot.lane.b32.xlu0 %v7504, 106
      %v7514 = vpop.permute.xlu0 %7513
      %7515 = vrot.lane.b32.xlu0 %v7505, 106
      %v7516 = vpop.permute.xlu0 %7515
      %7517 = vrot.lane.b32.xlu0 %v7506, 106
      %v7518 = vpop.permute.xlu0 %7517
      %v7519 = vsel %vm1427, %v7512, %v7514
      %v7520 = vsel %vm1427, %v7514, %v7516
      %v7521 = vsel %vm1427, %v7516, %v7518
      %v7526 = vadd.f32 %v7467, %v7519
      %v7527 = vadd.f32 %v7468, %v7520
      %v7528 = vadd.f32 %v7469, %v7521
      %v7529 = vadd.f32 %v7470, %v7518
      %v7530 = vld [vmem:[%s10] sm:$0xf]
      %7532 = vset.pattern.permute.xlu0 5
      %7533 = vperm.xlu0 %7532, %v7530
      %v7534 = vpop.permute.xlu0 %7533
      %7536 = vrot.lane.b32.xlu0 %v7213, 67
      %v7537 = vpop.permute.xlu0 %7536
      %7538 = vrot.lane.b32.xlu0 %v7237, 67
      %v7539 = vpop.permute.xlu0 %7538
      %7540 = vrot.lane.b32.xlu0 %v7214, 67
      %v7541 = vpop.permute.xlu0 %7540
      %7542 = vrot.lane.b32.xlu0 %v7238, 67
      %v7543 = vpop.permute.xlu0 %7542
      %v7544 = vsel %vm3092, %v7537, %v7539
      %v7545 = vsel %vm3092, %v7539, %v7541
      %v7546 = vsel %vm3092, %v7541, %v7543
      %v7550 = vmul.f32 %v7534, %v7544
      %v7551 = vmul.f32 %v7534, %v7545
      %v7552 = vmul.f32 %v7534, %v7546
      %v7553 = vadd.f32 %v7494, %v7550
      %v7554 = vadd.f32 %v7495, %v7551
      %v7555 = vadd.f32 %v7496, %v7552
      %v7556 = vld [vmem:[%s8] sm:$0xff]
      %7558 = vset.pattern.permute.xlu0 6
      %7559 = vperm.xlu0 %7558, %v7556
      %v7560 = vpop.permute.xlu0 %7559
      %v7562 = vmul.f32 %v7560, %v7209
      %v7563 = vmul.f32 %v7560, %v7210
      %v7564 = vmul.f32 %v7560, %v7211
      %v7565 = vmul.f32 %v7560, %v7212
      %7570 = vrot.lane.b32.xlu0 %v7562, 88
      %v7571 = vpop.permute.xlu0 %7570
      %7572 = vrot.lane.b32.xlu0 %v7563, 88
      %v7573 = vpop.permute.xlu0 %7572
      %7574 = vrot.lane.b32.xlu0 %v7564, 88
      %v7575 = vpop.permute.xlu0 %7574
      %7576 = vrot.lane.b32.xlu0 %v7565, 88
      %v7577 = vpop.permute.xlu0 %7576
      %v7578 = vsel %vm1982, %v7571, %v7573
      %v7579 = vsel %vm1982, %v7573, %v7575
      %v7580 = vsel %vm1982, %v7575, %v7577
      %v7585 = vadd.f32 %v7526, %v7578
      %v7586 = vadd.f32 %v7527, %v7579
      %v7587 = vadd.f32 %v7528, %v7580
      %v7588 = vadd.f32 %v7529, %v7577
      %v7589 = vld [vmem:[%s10] sm:$0xf]
      %7591 = vset.pattern.permute.xlu0 6
      %7592 = vperm.xlu0 %7591, %v7589
      %v7593 = vpop.permute.xlu0 %7592
      %7595 = vrot.lane.b32.xlu0 %v7213, 49
      %v7596 = vpop.permute.xlu0 %7595
      %7597 = vrot.lane.b32.xlu0 %v7237, 49
      %v7598 = vpop.permute.xlu0 %7597
      %7599 = vrot.lane.b32.xlu0 %v7214, 49
      %v7600 = vpop.permute.xlu0 %7599
      %7601 = vrot.lane.b32.xlu0 %v7238, 49
      %v7602 = vpop.permute.xlu0 %7601
      %v7603 = vsel %vm3647, %v7596, %v7598
      %v7604 = vsel %vm3647, %v7598, %v7600
      %v7605 = vsel %vm3647, %v7600, %v7602
      %v7609 = vmul.f32 %v7593, %v7603
      %v7610 = vmul.f32 %v7593, %v7604
      %v7611 = vmul.f32 %v7593, %v7605
      %v7612 = vadd.f32 %v7553, %v7609
      %v7613 = vadd.f32 %v7554, %v7610
      %v7614 = vadd.f32 %v7555, %v7611
      %v7615 = vld [vmem:[%s8] sm:$0xff]
      %7617 = vset.pattern.permute.xlu0 7
      %7618 = vperm.xlu0 %7617, %v7615
      %v7619 = vpop.permute.xlu0 %7618
      %v7621 = vmul.f32 %v7619, %v7209
      %v7622 = vmul.f32 %v7619, %v7210
      %v7623 = vmul.f32 %v7619, %v7211
      %v7624 = vmul.f32 %v7619, %v7212
      %7629 = vrot.lane.b32.xlu0 %v7621, 87
      %v7630 = vpop.permute.xlu0 %7629
      %7631 = vrot.lane.b32.xlu0 %v7622, 87
      %v7632 = vpop.permute.xlu0 %7631
      %7633 = vrot.lane.b32.xlu0 %v7623, 87
      %v7634 = vpop.permute.xlu0 %7633
      %7635 = vrot.lane.b32.xlu0 %v7624, 87
      %v7636 = vpop.permute.xlu0 %7635
      %v7637 = vsel %vm2167, %v7630, %v7632
      %v7638 = vsel %vm2167, %v7632, %v7634
      %v7639 = vsel %vm2167, %v7634, %v7636
      %v7644 = vadd.f32 %v7585, %v7637
      %v7645 = vadd.f32 %v7586, %v7638
      %v7646 = vadd.f32 %v7587, %v7639
      %v7647 = vadd.f32 %v7588, %v7636
      %v7648 = vld [vmem:[%s10] sm:$0xf]
      %7650 = vset.pattern.permute.xlu0 7
      %7651 = vperm.xlu0 %7650, %v7648
      %v7652 = vpop.permute.xlu0 %7651
      %7654 = vrot.lane.b32.xlu0 %v7213, 48
      %v7655 = vpop.permute.xlu0 %7654
      %7656 = vrot.lane.b32.xlu0 %v7237, 48
      %v7657 = vpop.permute.xlu0 %7656
      %7658 = vrot.lane.b32.xlu0 %v7214, 48
      %v7659 = vpop.permute.xlu0 %7658
      %7660 = vrot.lane.b32.xlu0 %v7238, 48
      %v7661 = vpop.permute.xlu0 %7660
      %v7662 = vsel %vm3832, %v7655, %v7657
      %v7663 = vsel %vm3832, %v7657, %v7659
      %v7664 = vsel %vm3832, %v7659, %v7661
      %v7668 = vmul.f32 %v7652, %v7662
      %v7669 = vmul.f32 %v7652, %v7663
      %v7670 = vmul.f32 %v7652, %v7664
      %v7671 = vadd.f32 %v7612, %v7668
      %v7672 = vadd.f32 %v7613, %v7669
      %v7673 = vadd.f32 %v7614, %v7670
      %v7674 = vld [vmem:[%s8] sm:$0xff]
      %7676 = vset.pattern.permute.xlu0 8
      %7677 = vperm.xlu0 %7676, %v7674
      %v7678 = vpop.permute.xlu0 %7677
      %v7680 = vmul.f32 %v7678, %v7209
      %v7681 = vmul.f32 %v7678, %v7210
      %v7682 = vmul.f32 %v7678, %v7211
      %v7683 = vmul.f32 %v7678, %v7212
      %7688 = vrot.lane.b32.xlu0 %v7680, 86
      %v7689 = vpop.permute.xlu0 %7688
      %7690 = vrot.lane.b32.xlu0 %v7681, 86
      %v7691 = vpop.permute.xlu0 %7690
      %7692 = vrot.lane.b32.xlu0 %v7682, 86
      %v7693 = vpop.permute.xlu0 %7692
      %7694 = vrot.lane.b32.xlu0 %v7683, 86
      %v7695 = vpop.permute.xlu0 %7694
      %v7696 = vsel %vm2352, %v7689, %v7691
      %v7697 = vsel %vm2352, %v7691, %v7693
      %v7698 = vsel %vm2352, %v7693, %v7695
      %v7703 = vadd.f32 %v7644, %v7696
      %v7704 = vadd.f32 %v7645, %v7697
      %v7705 = vadd.f32 %v7646, %v7698
      %v7706 = vadd.f32 %v7647, %v7695
      %v7707 = vld [vmem:[%s10] sm:$0xf]
      %7709 = vset.pattern.permute.xlu0 8
      %7710 = vperm.xlu0 %7709, %v7707
      %v7711 = vpop.permute.xlu0 %7710
      %7713 = vrot.lane.b32.xlu0 %v7213, 47
      %v7714 = vpop.permute.xlu0 %7713
      %7715 = vrot.lane.b32.xlu0 %v7237, 47
      %v7716 = vpop.permute.xlu0 %7715
      %7717 = vrot.lane.b32.xlu0 %v7214, 47
      %v7718 = vpop.permute.xlu0 %7717
      %7719 = vrot.lane.b32.xlu0 %v7238, 47
      %v7720 = vpop.permute.xlu0 %7719
      %v7721 = vsel %vm4017, %v7714, %v7716
      %v7722 = vsel %vm4017, %v7716, %v7718
      %v7723 = vsel %vm4017, %v7718, %v7720
      %v7727 = vmul.f32 %v7711, %v7721
      %v7728 = vmul.f32 %v7711, %v7722
      %v7729 = vmul.f32 %v7711, %v7723
      %v7730 = vadd.f32 %v7671, %v7727
      %v7731 = vadd.f32 %v7672, %v7728
      %v7732 = vadd.f32 %v7673, %v7729
      %v7733 = vld [vmem:[%s9] sm:$0xff]
      %7735 = vset.pattern.permute.xlu0 0
      %7736 = vperm.xlu0 %7735, %v7733
      %v7737 = vpop.permute.xlu0 %7736
      %v7739 = vadd.f32 %v7703, %v7737
      %v7740 = vadd.f32 %v7704, %v7737
      %v7741 = vadd.f32 %v7705, %v7737
      %v7742 = vadd.f32 %v7706, %v7737
      %7743 = vrot.lane.b32.xlu0 %v5323, 39
      %v7744 = vpop.permute.xlu0 %7743
      %7745 = vrot.lane.b32.xlu0 %v5327, 39
      %v7746 = vpop.permute.xlu0 %7745
      %7747 = vrot.lane.b32.xlu0 %v5331, 39
      %v7748 = vpop.permute.xlu0 %7747
      %vm7749 = vcmask 318464
      %v7750 = vsel %vm7749, %v7744, %v7746
      %v7751 = vsel %vm7749, %v7746, %v7748
      %v7756 = vmul.f32 %v7739, %v7744
      %v7757 = vmul.f32 %v7740, %v7750
      %v7758 = vmul.f32 %v7741, %v7751
      %v7759 = vmul.f32 %v7742, %v7748
      %v7760 = vld [vmem:[%s11] sm:$0xf]
      %7762 = vset.pattern.permute.xlu0 0
      %7763 = vperm.xlu0 %7762, %v7760
      %v7764 = vpop.permute.xlu0 %7763
      %v7766 = vadd.f32 %v7730, %v7764
      %v7767 = vadd.f32 %v7731, %v7764
      %v7768 = vadd.f32 %v7732, %v7764
      %v7769 = vmul.f32 %v7766, %v5323
      %v7770 = vmul.f32 %v7767, %v5327
      %v7771 = vmul.f32 %v7768, %v5331
      %v7772 = vmul.f32 %v7769, %v7769
      %v7773 = vmul.f32 %v7770, %v7770
      %v7774 = vmul.f32 %v7771, %v7771
      %vm7775 = vcmask 1041408
      %v7776 = vsel %vm7775, %v7772, 0.0
      %v7777 = vsel %vm7775, %v7773, 0.0
      %v7778 = vadd.f32 %v7776, %v7777
      %vm7779 = vcmask 844800
      %v7780 = vsel %vm7779, %v7774, 0.0
      %v7781 = vadd.f32 %v7778, %v7780
      %7782 = vadd.xlane.f32.xlu0 %v7781
      %v7783 = vpop.xlane.xlu0 %7782
      %v7784 = vmax.f32 %v7783, 1e-24
      %v7785 = vrsqrt.pop %v7784
      %v7786 = vmul.f32 %v7769, %v7785
      %v7787 = vmul.f32 %v7770, %v7785
      %v7788 = vmul.f32 %v7771, %v7785
      %v7789 = vmul.f32 %v7756, %v7756
      %v7790 = vmul.f32 %v7757, %v7757
      %v7791 = vmul.f32 %v7758, %v7758
      %v7792 = vmul.f32 %v7759, %v7759
      %7797 = vrot.lane.b32.xlu0 %v7789, 89
      %v7798 = vpop.permute.xlu0 %7797
      %7799 = vrot.lane.b32.xlu0 %v7790, 89
      %v7800 = vpop.permute.xlu0 %7799
      %7801 = vrot.lane.b32.xlu0 %v7791, 89
      %v7802 = vpop.permute.xlu0 %7801
      %7803 = vrot.lane.b32.xlu0 %v7792, 89
      %v7804 = vpop.permute.xlu0 %7803
      %v7805 = vsel %vm1797, %v7798, %v7800
      %v7806 = vsel %vm1797, %v7800, %v7802
      %v7807 = vsel %vm1797, %v7802, %v7804
      %v7811 = vsel %vm7775, %v7805, 0.0
      %v7812 = vsel %vm7775, %v7806, 0.0
      %v7813 = vadd.f32 %v7811, %v7812
      %v7814 = vsel %vm7779, %v7807, 0.0
      %v7815 = vadd.f32 %v7813, %v7814
      %7816 = vadd.xlane.f32.xlu0 %v7815
      %v7817 = vpop.xlane.xlu0 %7816
      %v7818 = vmax.f32 %v7817, 1e-24
      %v7819 = vrsqrt.pop %v7818
      %v7820 = vmul.f32 %v7756, %v7819
      %v7821 = vmul.f32 %v7757, %v7819
      %v7822 = vmul.f32 %v7758, %v7819
      %v7823 = vmul.f32 %v7759, %v7819
      %7828 = vrot.lane.b32.xlu0 %v7820, 89
      %v7829 = vpop.permute.xlu0 %7828
      %7830 = vrot.lane.b32.xlu0 %v7821, 89
      %v7831 = vpop.permute.xlu0 %7830
      %7832 = vrot.lane.b32.xlu0 %v7822, 89
      %v7833 = vpop.permute.xlu0 %7832
      %7834 = vrot.lane.b32.xlu0 %v7823, 89
      %v7835 = vpop.permute.xlu0 %7834
      %v7836 = vsel %vm1797, %v7829, %v7831
      %v7837 = vsel %vm1797, %v7831, %v7833
      %v7838 = vsel %vm1797, %v7833, %v7835
      %vm7841 = vcmask 850944
      %v7843 = vsel %vm7841, %v7788, 0
      %v7845 = vsel %vm7841, %v7838, 0
      %7847 = vmatprep.subr.mxu0 0.0
      %7848 = vmatpush1.xpose.msra.mxu0 0.0
      %7849 = vmatprep.subr.mxu0 0.0
      %7850 = vmatpush1.xpose.msra.mxu0 0.0
      %7851 = vmatprep.subr.mxu0 0.0
      %7852 = vmatpush1.xpose.msra.mxu0 0.0
      %7853 = vmatprep.subr.mxu0 0.0
      %7854 = vmatpush1.xpose.msra.mxu0 0.0
      %7855 = vmatprep.subr.mxu0 0.0
      %7856 = vmatpush1.xpose.msra.mxu0 0.0
      %7857 = vmatprep.subr.mxu0 0.0
      %7858 = vmatpush1.xpose.msra.mxu0 0.0
      %7859 = vmatprep.subr.mxu0 0.0
      %7860 = vmatpush1.xpose.msra.mxu0 0.0
      %7861 = vmatprep.subr.mxu0 0.0
      %7862 = vmatpush1.xpose.msra.mxu0 0.0
      %7863 = vmatprep.subr.mxu0 0.0
      %7864 = vmatpush1.xpose.msra.mxu0 0.0
      %7865 = vmatprep.subr.mxu0 0.0
      %7866 = vmatpush1.xpose.msra.mxu0 0.0
      %7867 = vmatprep.subr.mxu0 0.0
      %7868 = vmatpush1.xpose.msra.mxu0 0.0
      %7869 = vmatprep.subr.mxu0 0.0
      %7870 = vmatpush1.xpose.msra.mxu0 0.0
      %7871 = vmatprep.subr.mxu0 0.0
      %7872 = vmatpush1.xpose.msra.mxu0 0.0
      %7873 = vmatprep.subr.mxu0 0.0
      %7874 = vmatpush1.xpose.msra.mxu0 0.0
      %7875 = vmatprep.subr.mxu0 0.0
      %7876 = vmatpush1.xpose.msra.mxu0 0.0
      %7877 = vmatprep.subr.mxu0 %v7837
      %7878 = vmatpush1.xpose.msra.mxu0 %v7836
      %7879 = vmatprep.subr.mxu0 0.0
      %7880 = vmatpush2.xpose.msra.mxu0 0.0
      %7881 = vmatprep.subr.mxu0 0.0
      %7882 = vmatpush2.xpose.msra.mxu0 0.0
      %7883 = vmatprep.subr.mxu0 0.0
      %7884 = vmatpush2.xpose.msra.mxu0 0.0
      %7885 = vmatprep.subr.mxu0 0.0
      %7886 = vmatpush2.xpose.msra.mxu0 0.0
      %7887 = vmatprep.subr.mxu0 0.0
      %7888 = vmatpush2.xpose.msra.mxu0 0.0
      %7889 = vmatprep.subr.mxu0 0.0
      %7890 = vmatpush2.xpose.msra.mxu0 0.0
      %7891 = vmatprep.subr.mxu0 0.0
      %7892 = vmatpush2.xpose.msra.mxu0 0.0
      %7893 = vmatprep.subr.mxu0 0.0
      %7894 = vmatpush2.xpose.msra.mxu0 0.0
      %7895 = vmatprep.subr.mxu0 0.0
      %7896 = vmatpush2.xpose.msra.mxu0 0.0
      %7897 = vmatprep.subr.mxu0 0.0
      %7898 = vmatpush2.xpose.msra.mxu0 0.0
      %7899 = vmatprep.subr.mxu0 0.0
      %7900 = vmatpush2.xpose.msra.mxu0 0.0
      %7901 = vmatprep.subr.mxu0 0.0
      %7902 = vmatpush2.xpose.msra.mxu0 0.0
      %7903 = vmatprep.subr.mxu0 0.0
      %7904 = vmatpush2.xpose.msra.mxu0 0.0
      %7905 = vmatprep.subr.mxu0 0.0
      %7906 = vmatpush2.xpose.msra.mxu0 0.0
      %7907 = vmatprep.subr.mxu0 0.0
      %7908 = vmatpush2.xpose.msra.mxu0 0.0
      %7909 = vmatprep.subr.mxu0 0.0
      %7910 = vmatpush2.xpose.msra.mxu0 0.0
      %7911 = vmatprep.mubr.f32.mxu0 %v7787
      %7912 = vmatmul.mubr.f32.gmra.mxu0 %v7786
      %v7913 = vpop.f32.mrf.mxu0
      %v7914 = vadd.f32 0.0, %v7913
      %v7915 = vpop.f32.mrf.mxu0
      %7916 = vdwg.mxu0
      %7917 = vmatprep.subr.mxu0 0.0
      %7918 = vmatpush1.xpose.msra.mxu0 0.0
      %7919 = vmatprep.subr.mxu0 0.0
      %7920 = vmatpush1.xpose.msra.mxu0 0.0
      %7921 = vmatprep.subr.mxu0 0.0
      %7922 = vmatpush1.xpose.msra.mxu0 0.0
      %7923 = vmatprep.subr.mxu0 0.0
      %7924 = vmatpush1.xpose.msra.mxu0 0.0
      %7925 = vmatprep.subr.mxu0 0.0
      %7926 = vmatpush1.xpose.msra.mxu0 0.0
      %7927 = vmatprep.subr.mxu0 0.0
      %7928 = vmatpush1.xpose.msra.mxu0 0.0
      %7929 = vmatprep.subr.mxu0 0.0
      %7930 = vmatpush1.xpose.msra.mxu0 0.0
      %7931 = vmatprep.subr.mxu0 0.0
      %7932 = vmatpush1.xpose.msra.mxu0 0.0
      %7933 = vmatprep.subr.mxu0 0.0
      %7934 = vmatpush1.xpose.msra.mxu0 0.0
      %7935 = vmatprep.subr.mxu0 0.0
      %7936 = vmatpush1.xpose.msra.mxu0 0.0
      %7937 = vmatprep.subr.mxu0 0.0
      %7938 = vmatpush1.xpose.msra.mxu0 0.0
      %7939 = vmatprep.subr.mxu0 0.0
      %7940 = vmatpush1.xpose.msra.mxu0 0.0
      %7941 = vmatprep.subr.mxu0 0.0
      %7942 = vmatpush1.xpose.msra.mxu0 0.0
      %7943 = vmatprep.subr.mxu0 0.0
      %7944 = vmatpush1.xpose.msra.mxu0 0.0
      %7945 = vmatprep.subr.mxu0 0.0
      %7946 = vmatpush1.xpose.msra.mxu0 0.0
      %7947 = vmatprep.subr.mxu0 0.0
      %7948 = vmatpush1.xpose.msra.mxu0 %v7845
      %7949 = vmatprep.subr.mxu0 0.0
      %7950 = vmatpush2.xpose.msra.mxu0 0.0
      %7951 = vmatprep.subr.mxu0 0.0
      %7952 = vmatpush2.xpose.msra.mxu0 0.0
      %7953 = vmatprep.subr.mxu0 0.0
      %7954 = vmatpush2.xpose.msra.mxu0 0.0
      %7955 = vmatprep.subr.mxu0 0.0
      %7956 = vmatpush2.xpose.msra.mxu0 0.0
      %7957 = vmatprep.subr.mxu0 0.0
      %7958 = vmatpush2.xpose.msra.mxu0 0.0
      %7959 = vmatprep.subr.mxu0 0.0
      %7960 = vmatpush2.xpose.msra.mxu0 0.0
      %7961 = vmatprep.subr.mxu0 0.0
      %7962 = vmatpush2.xpose.msra.mxu0 0.0
      %7963 = vmatprep.subr.mxu0 0.0
      %7964 = vmatpush2.xpose.msra.mxu0 0.0
      %7965 = vmatprep.subr.mxu0 0.0
      %7966 = vmatpush2.xpose.msra.mxu0 0.0
      %7967 = vmatprep.subr.mxu0 0.0
      %7968 = vmatpush2.xpose.msra.mxu0 0.0
      %7969 = vmatprep.subr.mxu0 0.0
      %7970 = vmatpush2.xpose.msra.mxu0 0.0
      %7971 = vmatprep.subr.mxu0 0.0
      %7972 = vmatpush2.xpose.msra.mxu0 0.0
      %7973 = vmatprep.subr.mxu0 0.0
      %7974 = vmatpush2.xpose.msra.mxu0 0.0
      %7975 = vmatprep.subr.mxu0 0.0
      %7976 = vmatpush2.xpose.msra.mxu0 0.0
      %7977 = vmatprep.subr.mxu0 0.0
      %7978 = vmatpush2.xpose.msra.mxu0 0.0
      %7979 = vmatprep.subr.mxu0 0.0
      %7980 = vmatpush2.xpose.msra.mxu0 0.0
      %7981 = vmatprep.mubr.f32.mxu0 0.0
      %7982 = vmatmul.mubr.f32.gmra.mxu0 %v7843
      %v7983 = vpop.f32.mrf.mxu0
      %v7984 = vadd.f32 %v7914, %v7983
      %v7985 = vpop.f32.mrf.mxu0
      %7986 = vdwg.mxu0
      %v7987 = vld [vmem:[%s12] sm:$0x1]
      %s7989 = vtos %v7987
      %v7990 = vstv %s7989
      %v7992 = vmul.f32 %v7984, %v7990
      %vm7993 = vcmask 9216
      %v7994 = vsel %vm7993, %v7992, -inf
      %7995 = vmax.xlane.f32.xlu0 %v7994
      %v7996 = vpop.xlane.xlu0 %7995
      %v7997 = vsub.f32 %v7992, %v7996
      %v7998 = vmul.f32 %v7997, 1.442695
      %v7999 = vpow.pop %v7998
      %v8000 = vsel %vm7993, %v7999, 0.0
      %8001 = vadd.xlane.f32.xlu0 %v8000
      %v8002 = vpop.xlane.xlu0 %8001
      %v8003 = vrcp.pop %v8002
      %v8004 = vmul.f32 %v7999, %v8003
      %v8009 = vrot.slane %v7756, 4
      %v8010 = vrot.slane %v7757, 4
      %v8011 = vrot.slane %v7758, 4
      %v8012 = vrot.slane %v7759, 4
      %8013 = vrot.lane.b32.xlu0 %v8009, 89
      %v8014 = vpop.permute.xlu0 %8013
      %8015 = vrot.lane.b32.xlu0 %v8010, 89
      %v8016 = vpop.permute.xlu0 %8015
      %8017 = vrot.lane.b32.xlu0 %v8011, 89
      %v8018 = vpop.permute.xlu0 %8017
      %8019 = vrot.lane.b32.xlu0 %v8012, 89
      %v8020 = vpop.permute.xlu0 %8019
      %v8021 = vsel %vm1797, %v8014, %v8016
      %v8022 = vsel %vm1797, %v8016, %v8018
      %v8023 = vsel %vm1797, %v8018, %v8020
      %v8025 = vsel %vm505, %v8004, 0
      %v8027 = vsel %vm7775, %v8021, 0
      %v8029 = vsel %vm7775, %v8022, 0
      %v8031 = vsel %vm7775, %v8023, 0
      %8033 = vmatprep.subr.mxu0 0.0
      %8034 = vmatpush1.msra.mxu0 0.0
      %8035 = vmatprep.subr.mxu0 0.0
      %8036 = vmatpush1.msra.mxu0 0.0
      %8037 = vmatprep.subr.mxu0 0.0
      %8038 = vmatpush1.msra.mxu0 0.0
      %8039 = vmatprep.subr.mxu0 0.0
      %8040 = vmatpush1.msra.mxu0 0.0
      %8041 = vmatprep.subr.mxu0 0.0
      %8042 = vmatpush1.msra.mxu0 0.0
      %8043 = vmatprep.subr.mxu0 0.0
      %8044 = vmatpush1.msra.mxu0 0.0
      %8045 = vmatprep.subr.mxu0 0.0
      %8046 = vmatpush1.msra.mxu0 0.0
      %8047 = vmatprep.subr.mxu0 0.0
      %8048 = vmatpush1.msra.mxu0 0.0
      %8049 = vmatprep.subr.mxu0 0.0
      %8050 = vmatpush1.msra.mxu0 0.0
      %8051 = vmatprep.subr.mxu0 0.0
      %8052 = vmatpush1.msra.mxu0 0.0
      %8053 = vmatprep.subr.mxu0 0.0
      %8054 = vmatpush1.msra.mxu0 0.0
      %8055 = vmatprep.subr.mxu0 0.0
      %8056 = vmatpush1.msra.mxu0 0.0
      %8057 = vmatprep.subr.mxu0 0.0
      %8058 = vmatpush1.msra.mxu0 0.0
      %8059 = vmatprep.subr.mxu0 0.0
      %8060 = vmatpush1.msra.mxu0 0.0
      %8061 = vmatprep.subr.mxu0 0.0
      %8062 = vmatpush1.msra.mxu0 0.0
      %8063 = vmatprep.subr.mxu0 %v8029
      %8064 = vmatpush1.msra.mxu0 %v8027
      %8065 = vmatprep.subr.mxu0 0.0
      %8066 = vmatpush2.msra.mxu0 0.0
      %8067 = vmatprep.subr.mxu0 0.0
      %8068 = vmatpush2.msra.mxu0 0.0
      %8069 = vmatprep.subr.mxu0 0.0
      %8070 = vmatpush2.msra.mxu0 0.0
      %8071 = vmatprep.subr.mxu0 0.0
      %8072 = vmatpush2.msra.mxu0 0.0
      %8073 = vmatprep.subr.mxu0 0.0
      %8074 = vmatpush2.msra.mxu0 0.0
      %8075 = vmatprep.subr.mxu0 0.0
      %8076 = vmatpush2.msra.mxu0 0.0
      %8077 = vmatprep.subr.mxu0 0.0
      %8078 = vmatpush2.msra.mxu0 0.0
      %8079 = vmatprep.subr.mxu0 0.0
      %8080 = vmatpush2.msra.mxu0 0.0
      %8081 = vmatprep.subr.mxu0 0.0
      %8082 = vmatpush2.msra.mxu0 0.0
      %8083 = vmatprep.subr.mxu0 0.0
      %8084 = vmatpush2.msra.mxu0 0.0
      %8085 = vmatprep.subr.mxu0 0.0
      %8086 = vmatpush2.msra.mxu0 0.0
      %8087 = vmatprep.subr.mxu0 0.0
      %8088 = vmatpush2.msra.mxu0 0.0
      %8089 = vmatprep.subr.mxu0 0.0
      %8090 = vmatpush2.msra.mxu0 0.0
      %8091 = vmatprep.subr.mxu0 0.0
      %8092 = vmatpush2.msra.mxu0 0.0
      %8093 = vmatprep.subr.mxu0 0.0
      %8094 = vmatpush2.msra.mxu0 0.0
      %8095 = vmatprep.subr.mxu0 0.0
      %8096 = vmatpush2.msra.mxu0 0.0
      %8097 = vmatprep.mubr.f32.mxu0 0.0
      %8098 = vmatmul.mubr.f32.gmra.mxu0 %v8025
      %v8099 = vpop.f32.mrf.mxu0
      %v8100 = vadd.f32 0.0, %v8099
      %v8101 = vpop.f32.mrf.mxu0
      %v8102 = vadd.f32 0.0, %v8101
      %8103 = vdwg.mxu0
      %8104 = vmatprep.subr.mxu0 0.0
      %8105 = vmatpush1.msra.mxu0 0.0
      %8106 = vmatprep.subr.mxu0 0.0
      %8107 = vmatpush1.msra.mxu0 0.0
      %8108 = vmatprep.subr.mxu0 0.0
      %8109 = vmatpush1.msra.mxu0 0.0
      %8110 = vmatprep.subr.mxu0 0.0
      %8111 = vmatpush1.msra.mxu0 0.0
      %8112 = vmatprep.subr.mxu0 0.0
      %8113 = vmatpush1.msra.mxu0 0.0
      %8114 = vmatprep.subr.mxu0 0.0
      %8115 = vmatpush1.msra.mxu0 0.0
      %8116 = vmatprep.subr.mxu0 0.0
      %8117 = vmatpush1.msra.mxu0 0.0
      %8118 = vmatprep.subr.mxu0 0.0
      %8119 = vmatpush1.msra.mxu0 0.0
      %8120 = vmatprep.subr.mxu0 0.0
      %8121 = vmatpush1.msra.mxu0 0.0
      %8122 = vmatprep.subr.mxu0 0.0
      %8123 = vmatpush1.msra.mxu0 0.0
      %8124 = vmatprep.subr.mxu0 0.0
      %8125 = vmatpush1.msra.mxu0 0.0
      %8126 = vmatprep.subr.mxu0 0.0
      %8127 = vmatpush1.msra.mxu0 0.0
      %8128 = vmatprep.subr.mxu0 0.0
      %8129 = vmatpush1.msra.mxu0 0.0
      %8130 = vmatprep.subr.mxu0 0.0
      %8131 = vmatpush1.msra.mxu0 0.0
      %8132 = vmatprep.subr.mxu0 0.0
      %8133 = vmatpush1.msra.mxu0 0.0
      %8134 = vmatprep.subr.mxu0 0.0
      %8135 = vmatpush1.msra.mxu0 %v8031
      %8136 = vmatprep.subr.mxu0 0.0
      %8137 = vmatpush2.msra.mxu0 0.0
      %8138 = vmatprep.subr.mxu0 0.0
      %8139 = vmatpush2.msra.mxu0 0.0
      %8140 = vmatprep.subr.mxu0 0.0
      %8141 = vmatpush2.msra.mxu0 0.0
      %8142 = vmatprep.subr.mxu0 0.0
      %8143 = vmatpush2.msra.mxu0 0.0
      %8144 = vmatprep.subr.mxu0 0.0
      %8145 = vmatpush2.msra.mxu0 0.0
      %8146 = vmatprep.subr.mxu0 0.0
      %8147 = vmatpush2.msra.mxu0 0.0
      %8148 = vmatprep.subr.mxu0 0.0
      %8149 = vmatpush2.msra.mxu0 0.0
      %8150 = vmatprep.subr.mxu0 0.0
      %8151 = vmatpush2.msra.mxu0 0.0
      %8152 = vmatprep.subr.mxu0 0.0
      %8153 = vmatpush2.msra.mxu0 0.0
      %8154 = vmatprep.subr.mxu0 0.0
      %8155 = vmatpush2.msra.mxu0 0.0
      %8156 = vmatprep.subr.mxu0 0.0
      %8157 = vmatpush2.msra.mxu0 0.0
      %8158 = vmatprep.subr.mxu0 0.0
      %8159 = vmatpush2.msra.mxu0 0.0
      %8160 = vmatprep.subr.mxu0 0.0
      %8161 = vmatpush2.msra.mxu0 0.0
      %8162 = vmatprep.subr.mxu0 0.0
      %8163 = vmatpush2.msra.mxu0 0.0
      %8164 = vmatprep.subr.mxu0 0.0
      %8165 = vmatpush2.msra.mxu0 0.0
      %8166 = vmatprep.subr.mxu0 0.0
      %8167 = vmatpush2.msra.mxu0 0.0
      %8168 = vmatprep.mubr.f32.mxu0 0.0
      %8169 = vmatmul.mubr.f32.gmra.mxu0 %v8025
      %v8170 = vpop.f32.mrf.mxu0
      %v8171 = vadd.f32 0.0, %v8170
      %v8172 = vpop.f32.mrf.mxu0
      %8173 = vdwg.mxu0
      %vm8174 = vcmask 1043458
      %v8175 = vsel %vm8174, %v7772, 0.0
      %v8176 = vsel %vm8174, %v7773, 0.0
      %v8177 = vadd.f32 %v8175, %v8176
      %vm8178 = vcmask 846850
      %v8179 = vsel %vm8178, %v7774, 0.0
      %v8180 = vadd.f32 %v8177, %v8179
      %8181 = vadd.xlane.f32.xlu0 %v8180
      %v8182 = vpop.xlane.xlu0 %8181
      %v8183 = vmax.f32 %v8182, 1e-24
      %v8184 = vrsqrt.pop %v8183
      %v8185 = vmul.f32 %v7769, %v8184
      %v8186 = vmul.f32 %v7770, %v8184
      %v8187 = vmul.f32 %v7771, %v8184
      %v8188 = vsel %vm8174, %v7805, 0.0
      %v8189 = vsel %vm8174, %v7806, 0.0
      %v8190 = vadd.f32 %v8188, %v8189
      %v8191 = vsel %vm8178, %v7807, 0.0
      %v8192 = vadd.f32 %v8190, %v8191
      %8193 = vadd.xlane.f32.xlu0 %v8192
      %v8194 = vpop.xlane.xlu0 %8193
      %v8195 = vmax.f32 %v8194, 1e-24
      %v8196 = vrsqrt.pop %v8195
      %v8197 = vmul.f32 %v7756, %v8196
      %v8198 = vmul.f32 %v7757, %v8196
      %v8199 = vmul.f32 %v7758, %v8196
      %v8200 = vmul.f32 %v7759, %v8196
      %v8204 = vrot.slane %v8185, 2
      %v8205 = vrot.slane %v8186, 2
      %v8206 = vrot.slane %v8187, 2
      %v8213 = vrot.slane %v8197, 2
      %v8214 = vrot.slane %v8198, 2
      %v8215 = vrot.slane %v8199, 2
      %v8216 = vrot.slane %v8200, 2
      %8217 = vrot.lane.b32.xlu0 %v8213, 89
      %v8218 = vpop.permute.xlu0 %8217
      %8219 = vrot.lane.b32.xlu0 %v8214, 89
      %v8220 = vpop.permute.xlu0 %8219
      %8221 = vrot.lane.b32.xlu0 %v8215, 89
      %v8222 = vpop.permute.xlu0 %8221
      %8223 = vrot.lane.b32.xlu0 %v8216, 89
      %v8224 = vpop.permute.xlu0 %8223
      %v8225 = vsel %vm1797, %v8218, %v8220
      %v8226 = vsel %vm1797, %v8220, %v8222
      %v8227 = vsel %vm1797, %v8222, %v8224
      %v8230 = vsel %vm7841, %v8206, 0
      %v8232 = vsel %vm7841, %v8227, 0
      %8234 = vmatprep.subr.mxu0 0.0
      %8235 = vmatpush1.xpose.msra.mxu0 0.0
      %8236 = vmatprep.subr.mxu0 0.0
      %8237 = vmatpush1.xpose.msra.mxu0 0.0
      %8238 = vmatprep.subr.mxu0 0.0
      %8239 = vmatpush1.xpose.msra.mxu0 0.0
      %8240 = vmatprep.subr.mxu0 0.0
      %8241 = vmatpush1.xpose.msra.mxu0 0.0
      %8242 = vmatprep.subr.mxu0 0.0
      %8243 = vmatpush1.xpose.msra.mxu0 0.0
      %8244 = vmatprep.subr.mxu0 0.0
      %8245 = vmatpush1.xpose.msra.mxu0 0.0
      %8246 = vmatprep.subr.mxu0 0.0
      %8247 = vmatpush1.xpose.msra.mxu0 0.0
      %8248 = vmatprep.subr.mxu0 0.0
      %8249 = vmatpush1.xpose.msra.mxu0 0.0
      %8250 = vmatprep.subr.mxu0 0.0
      %8251 = vmatpush1.xpose.msra.mxu0 0.0
      %8252 = vmatprep.subr.mxu0 0.0
      %8253 = vmatpush1.xpose.msra.mxu0 0.0
      %8254 = vmatprep.subr.mxu0 0.0
      %8255 = vmatpush1.xpose.msra.mxu0 0.0
      %8256 = vmatprep.subr.mxu0 0.0
      %8257 = vmatpush1.xpose.msra.mxu0 0.0
      %8258 = vmatprep.subr.mxu0 0.0
      %8259 = vmatpush1.xpose.msra.mxu0 0.0
      %8260 = vmatprep.subr.mxu0 0.0
      %8261 = vmatpush1.xpose.msra.mxu0 0.0
      %8262 = vmatprep.subr.mxu0 0.0
      %8263 = vmatpush1.xpose.msra.mxu0 0.0
      %8264 = vmatprep.subr.mxu0 %v8226
      %8265 = vmatpush1.xpose.msra.mxu0 %v8225
      %8266 = vmatprep.subr.mxu0 0.0
      %8267 = vmatpush2.xpose.msra.mxu0 0.0
      %8268 = vmatprep.subr.mxu0 0.0
      %8269 = vmatpush2.xpose.msra.mxu0 0.0
      %8270 = vmatprep.subr.mxu0 0.0
      %8271 = vmatpush2.xpose.msra.mxu0 0.0
      %8272 = vmatprep.subr.mxu0 0.0
      %8273 = vmatpush2.xpose.msra.mxu0 0.0
      %8274 = vmatprep.subr.mxu0 0.0
      %8275 = vmatpush2.xpose.msra.mxu0 0.0
      %8276 = vmatprep.subr.mxu0 0.0
      %8277 = vmatpush2.xpose.msra.mxu0 0.0
      %8278 = vmatprep.subr.mxu0 0.0
      %8279 = vmatpush2.xpose.msra.mxu0 0.0
      %8280 = vmatprep.subr.mxu0 0.0
      %8281 = vmatpush2.xpose.msra.mxu0 0.0
      %8282 = vmatprep.subr.mxu0 0.0
      %8283 = vmatpush2.xpose.msra.mxu0 0.0
      %8284 = vmatprep.subr.mxu0 0.0
      %8285 = vmatpush2.xpose.msra.mxu0 0.0
      %8286 = vmatprep.subr.mxu0 0.0
      %8287 = vmatpush2.xpose.msra.mxu0 0.0
      %8288 = vmatprep.subr.mxu0 0.0
      %8289 = vmatpush2.xpose.msra.mxu0 0.0
      %8290 = vmatprep.subr.mxu0 0.0
      %8291 = vmatpush2.xpose.msra.mxu0 0.0
      %8292 = vmatprep.subr.mxu0 0.0
      %8293 = vmatpush2.xpose.msra.mxu0 0.0
      %8294 = vmatprep.subr.mxu0 0.0
      %8295 = vmatpush2.xpose.msra.mxu0 0.0
      %8296 = vmatprep.subr.mxu0 0.0
      %8297 = vmatpush2.xpose.msra.mxu0 0.0
      %8298 = vmatprep.mubr.f32.mxu0 %v8205
      %8299 = vmatmul.mubr.f32.gmra.mxu0 %v8204
      %v8300 = vpop.f32.mrf.mxu0
      %v8301 = vadd.f32 0.0, %v8300
      %v8302 = vpop.f32.mrf.mxu0
      %8303 = vdwg.mxu0
      %8304 = vmatprep.subr.mxu0 0.0
      %8305 = vmatpush1.xpose.msra.mxu0 0.0
      %8306 = vmatprep.subr.mxu0 0.0
      %8307 = vmatpush1.xpose.msra.mxu0 0.0
      %8308 = vmatprep.subr.mxu0 0.0
      %8309 = vmatpush1.xpose.msra.mxu0 0.0
      %8310 = vmatprep.subr.mxu0 0.0
      %8311 = vmatpush1.xpose.msra.mxu0 0.0
      %8312 = vmatprep.subr.mxu0 0.0
      %8313 = vmatpush1.xpose.msra.mxu0 0.0
      %8314 = vmatprep.subr.mxu0 0.0
      %8315 = vmatpush1.xpose.msra.mxu0 0.0
      %8316 = vmatprep.subr.mxu0 0.0
      %8317 = vmatpush1.xpose.msra.mxu0 0.0
      %8318 = vmatprep.subr.mxu0 0.0
      %8319 = vmatpush1.xpose.msra.mxu0 0.0
      %8320 = vmatprep.subr.mxu0 0.0
      %8321 = vmatpush1.xpose.msra.mxu0 0.0
      %8322 = vmatprep.subr.mxu0 0.0
      %8323 = vmatpush1.xpose.msra.mxu0 0.0
      %8324 = vmatprep.subr.mxu0 0.0
      %8325 = vmatpush1.xpose.msra.mxu0 0.0
      %8326 = vmatprep.subr.mxu0 0.0
      %8327 = vmatpush1.xpose.msra.mxu0 0.0
      %8328 = vmatprep.subr.mxu0 0.0
      %8329 = vmatpush1.xpose.msra.mxu0 0.0
      %8330 = vmatprep.subr.mxu0 0.0
      %8331 = vmatpush1.xpose.msra.mxu0 0.0
      %8332 = vmatprep.subr.mxu0 0.0
      %8333 = vmatpush1.xpose.msra.mxu0 0.0
      %8334 = vmatprep.subr.mxu0 0.0
      %8335 = vmatpush1.xpose.msra.mxu0 %v8232
      %8336 = vmatprep.subr.mxu0 0.0
      %8337 = vmatpush2.xpose.msra.mxu0 0.0
      %8338 = vmatprep.subr.mxu0 0.0
      %8339 = vmatpush2.xpose.msra.mxu0 0.0
      %8340 = vmatprep.subr.mxu0 0.0
      %8341 = vmatpush2.xpose.msra.mxu0 0.0
      %8342 = vmatprep.subr.mxu0 0.0
      %8343 = vmatpush2.xpose.msra.mxu0 0.0
      %8344 = vmatprep.subr.mxu0 0.0
      %8345 = vmatpush2.xpose.msra.mxu0 0.0
      %8346 = vmatprep.subr.mxu0 0.0
      %8347 = vmatpush2.xpose.msra.mxu0 0.0
      %8348 = vmatprep.subr.mxu0 0.0
      %8349 = vmatpush2.xpose.msra.mxu0 0.0
      %8350 = vmatprep.subr.mxu0 0.0
      %8351 = vmatpush2.xpose.msra.mxu0 0.0
      %8352 = vmatprep.subr.mxu0 0.0
      %8353 = vmatpush2.xpose.msra.mxu0 0.0
      %8354 = vmatprep.subr.mxu0 0.0
      %8355 = vmatpush2.xpose.msra.mxu0 0.0
      %8356 = vmatprep.subr.mxu0 0.0
      %8357 = vmatpush2.xpose.msra.mxu0 0.0
      %8358 = vmatprep.subr.mxu0 0.0
      %8359 = vmatpush2.xpose.msra.mxu0 0.0
      %8360 = vmatprep.subr.mxu0 0.0
      %8361 = vmatpush2.xpose.msra.mxu0 0.0
      %8362 = vmatprep.subr.mxu0 0.0
      %8363 = vmatpush2.xpose.msra.mxu0 0.0
      %8364 = vmatprep.subr.mxu0 0.0
      %8365 = vmatpush2.xpose.msra.mxu0 0.0
      %8366 = vmatprep.subr.mxu0 0.0
      %8367 = vmatpush2.xpose.msra.mxu0 0.0
      %8368 = vmatprep.mubr.f32.mxu0 0.0
      %8369 = vmatmul.mubr.f32.gmra.mxu0 %v8230
      %v8370 = vpop.f32.mrf.mxu0
      %v8371 = vadd.f32 %v8301, %v8370
      %v8372 = vpop.f32.mrf.mxu0
      %8373 = vdwg.mxu0
      %v8374 = vld [vmem:[%s12 + $0x1] sm:$0x1]
      %s8376 = vtos %v8374
      %v8377 = vstv %s8376
      %v8379 = vmul.f32 %v8371, %v8377
      %v8380 = vsel %vm7993, %v8379, -inf
      %8381 = vmax.xlane.f32.xlu0 %v8380
      %v8382 = vpop.xlane.xlu0 %8381
      %v8383 = vsub.f32 %v8379, %v8382
      %v8384 = vmul.f32 %v8383, 1.442695
      %v8385 = vpow.pop %v8384
      %v8386 = vsel %vm7993, %v8385, 0.0
      %8387 = vadd.xlane.f32.xlu0 %v8386
      %v8388 = vpop.xlane.xlu0 %8387
      %v8389 = vrcp.pop %v8388
      %v8390 = vmul.f32 %v8385, %v8389
      %v8391 = vrot.slane %v7756, 6
      %v8392 = vrot.slane %v7757, 6
      %v8393 = vrot.slane %v7758, 6
      %v8394 = vrot.slane %v7759, 6
      %8395 = vrot.lane.b32.xlu0 %v8391, 89
      %v8396 = vpop.permute.xlu0 %8395
      %8397 = vrot.lane.b32.xlu0 %v8392, 89
      %v8398 = vpop.permute.xlu0 %8397
      %8399 = vrot.lane.b32.xlu0 %v8393, 89
      %v8400 = vpop.permute.xlu0 %8399
      %8401 = vrot.lane.b32.xlu0 %v8394, 89
      %v8402 = vpop.permute.xlu0 %8401
      %v8403 = vsel %vm1797, %v8396, %v8398
      %v8404 = vsel %vm1797, %v8398, %v8400
      %v8405 = vsel %vm1797, %v8400, %v8402
      %v8407 = vsel %vm505, %v8390, 0
      %v8409 = vsel %vm7775, %v8403, 0
      %v8411 = vsel %vm7775, %v8404, 0
      %v8413 = vsel %vm7775, %v8405, 0
      %8415 = vmatprep.subr.mxu0 0.0
      %8416 = vmatpush1.msra.mxu0 0.0
      %8417 = vmatprep.subr.mxu0 0.0
      %8418 = vmatpush1.msra.mxu0 0.0
      %8419 = vmatprep.subr.mxu0 0.0
      %8420 = vmatpush1.msra.mxu0 0.0
      %8421 = vmatprep.subr.mxu0 0.0
      %8422 = vmatpush1.msra.mxu0 0.0
      %8423 = vmatprep.subr.mxu0 0.0
      %8424 = vmatpush1.msra.mxu0 0.0
      %8425 = vmatprep.subr.mxu0 0.0
      %8426 = vmatpush1.msra.mxu0 0.0
      %8427 = vmatprep.subr.mxu0 0.0
      %8428 = vmatpush1.msra.mxu0 0.0
      %8429 = vmatprep.subr.mxu0 0.0
      %8430 = vmatpush1.msra.mxu0 0.0
      %8431 = vmatprep.subr.mxu0 0.0
      %8432 = vmatpush1.msra.mxu0 0.0
      %8433 = vmatprep.subr.mxu0 0.0
      %8434 = vmatpush1.msra.mxu0 0.0
      %8435 = vmatprep.subr.mxu0 0.0
      %8436 = vmatpush1.msra.mxu0 0.0
      %8437 = vmatprep.subr.mxu0 0.0
      %8438 = vmatpush1.msra.mxu0 0.0
      %8439 = vmatprep.subr.mxu0 0.0
      %8440 = vmatpush1.msra.mxu0 0.0
      %8441 = vmatprep.subr.mxu0 0.0
      %8442 = vmatpush1.msra.mxu0 0.0
      %8443 = vmatprep.subr.mxu0 0.0
      %8444 = vmatpush1.msra.mxu0 0.0
      %8445 = vmatprep.subr.mxu0 %v8411
      %8446 = vmatpush1.msra.mxu0 %v8409
      %8447 = vmatprep.subr.mxu0 0.0
      %8448 = vmatpush2.msra.mxu0 0.0
      %8449 = vmatprep.subr.mxu0 0.0
      %8450 = vmatpush2.msra.mxu0 0.0
      %8451 = vmatprep.subr.mxu0 0.0
      %8452 = vmatpush2.msra.mxu0 0.0
      %8453 = vmatprep.subr.mxu0 0.0
      %8454 = vmatpush2.msra.mxu0 0.0
      %8455 = vmatprep.subr.mxu0 0.0
      %8456 = vmatpush2.msra.mxu0 0.0
      %8457 = vmatprep.subr.mxu0 0.0
      %8458 = vmatpush2.msra.mxu0 0.0
      %8459 = vmatprep.subr.mxu0 0.0
      %8460 = vmatpush2.msra.mxu0 0.0
      %8461 = vmatprep.subr.mxu0 0.0
      %8462 = vmatpush2.msra.mxu0 0.0
      %8463 = vmatprep.subr.mxu0 0.0
      %8464 = vmatpush2.msra.mxu0 0.0
      %8465 = vmatprep.subr.mxu0 0.0
      %8466 = vmatpush2.msra.mxu0 0.0
      %8467 = vmatprep.subr.mxu0 0.0
      %8468 = vmatpush2.msra.mxu0 0.0
      %8469 = vmatprep.subr.mxu0 0.0
      %8470 = vmatpush2.msra.mxu0 0.0
      %8471 = vmatprep.subr.mxu0 0.0
      %8472 = vmatpush2.msra.mxu0 0.0
      %8473 = vmatprep.subr.mxu0 0.0
      %8474 = vmatpush2.msra.mxu0 0.0
      %8475 = vmatprep.subr.mxu0 0.0
      %8476 = vmatpush2.msra.mxu0 0.0
      %8477 = vmatprep.subr.mxu0 0.0
      %8478 = vmatpush2.msra.mxu0 0.0
      %8479 = vmatprep.mubr.f32.mxu0 0.0
      %8480 = vmatmul.mubr.f32.gmra.mxu0 %v8407
      %v8481 = vpop.f32.mrf.mxu0
      %v8482 = vadd.f32 0.0, %v8481
      %v8483 = vpop.f32.mrf.mxu0
      %v8484 = vadd.f32 0.0, %v8483
      %8485 = vdwg.mxu0
      %8486 = vmatprep.subr.mxu0 0.0
      %8487 = vmatpush1.msra.mxu0 0.0
      %8488 = vmatprep.subr.mxu0 0.0
      %8489 = vmatpush1.msra.mxu0 0.0
      %8490 = vmatprep.subr.mxu0 0.0
      %8491 = vmatpush1.msra.mxu0 0.0
      %8492 = vmatprep.subr.mxu0 0.0
      %8493 = vmatpush1.msra.mxu0 0.0
      %8494 = vmatprep.subr.mxu0 0.0
      %8495 = vmatpush1.msra.mxu0 0.0
      %8496 = vmatprep.subr.mxu0 0.0
      %8497 = vmatpush1.msra.mxu0 0.0
      %8498 = vmatprep.subr.mxu0 0.0
      %8499 = vmatpush1.msra.mxu0 0.0
      %8500 = vmatprep.subr.mxu0 0.0
      %8501 = vmatpush1.msra.mxu0 0.0
      %8502 = vmatprep.subr.mxu0 0.0
      %8503 = vmatpush1.msra.mxu0 0.0
      %8504 = vmatprep.subr.mxu0 0.0
      %8505 = vmatpush1.msra.mxu0 0.0
      %8506 = vmatprep.subr.mxu0 0.0
      %8507 = vmatpush1.msra.mxu0 0.0
      %8508 = vmatprep.subr.mxu0 0.0
      %8509 = vmatpush1.msra.mxu0 0.0
      %8510 = vmatprep.subr.mxu0 0.0
      %8511 = vmatpush1.msra.mxu0 0.0
      %8512 = vmatprep.subr.mxu0 0.0
      %8513 = vmatpush1.msra.mxu0 0.0
      %8514 = vmatprep.subr.mxu0 0.0
      %8515 = vmatpush1.msra.mxu0 0.0
      %8516 = vmatprep.subr.mxu0 0.0
      %8517 = vmatpush1.msra.mxu0 %v8413
      %8518 = vmatprep.subr.mxu0 0.0
      %8519 = vmatpush2.msra.mxu0 0.0
      %8520 = vmatprep.subr.mxu0 0.0
      %8521 = vmatpush2.msra.mxu0 0.0
      %8522 = vmatprep.subr.mxu0 0.0
      %8523 = vmatpush2.msra.mxu0 0.0
      %8524 = vmatprep.subr.mxu0 0.0
      %8525 = vmatpush2.msra.mxu0 0.0
      %8526 = vmatprep.subr.mxu0 0.0
      %8527 = vmatpush2.msra.mxu0 0.0
      %8528 = vmatprep.subr.mxu0 0.0
      %8529 = vmatpush2.msra.mxu0 0.0
      %8530 = vmatprep.subr.mxu0 0.0
      %8531 = vmatpush2.msra.mxu0 0.0
      %8532 = vmatprep.subr.mxu0 0.0
      %8533 = vmatpush2.msra.mxu0 0.0
      %8534 = vmatprep.subr.mxu0 0.0
      %8535 = vmatpush2.msra.mxu0 0.0
      %8536 = vmatprep.subr.mxu0 0.0
      %8537 = vmatpush2.msra.mxu0 0.0
      %8538 = vmatprep.subr.mxu0 0.0
      %8539 = vmatpush2.msra.mxu0 0.0
      %8540 = vmatprep.subr.mxu0 0.0
      %8541 = vmatpush2.msra.mxu0 0.0
      %8542 = vmatprep.subr.mxu0 0.0
      %8543 = vmatpush2.msra.mxu0 0.0
      %8544 = vmatprep.subr.mxu0 0.0
      %8545 = vmatpush2.msra.mxu0 0.0
      %8546 = vmatprep.subr.mxu0 0.0
      %8547 = vmatpush2.msra.mxu0 0.0
      %8548 = vmatprep.subr.mxu0 0.0
      %8549 = vmatpush2.msra.mxu0 0.0
      %8550 = vmatprep.mubr.f32.mxu0 0.0
      %8551 = vmatmul.mubr.f32.gmra.mxu0 %v8407
      %v8552 = vpop.f32.mrf.mxu0
      %v8553 = vadd.f32 0.0, %v8552
      %v8554 = vpop.f32.mrf.mxu0
      %8555 = vdwg.mxu0
      %v8559 = vrot.slane %v8482, 6
      %v8560 = vrot.slane %v8484, 6
      %v8561 = vrot.slane %v8553, 6
      %v8565 = vsel %vm7775, %v8100, %v8559
      %v8566 = vsel %vm7775, %v8102, %v8560
      %v8567 = vsel %vm7775, %v8171, %v8561
      %v8568 = vld [vmem:[%s13] sm:$0xf]
      %v8570 = vsel %vm715, %v8568, 0
      %v8573 = vsel %vm722, %v8565, 0
      %v8576 = vsel %vm722, %v8566, 0
      %v8579 = vsel %vm722, %v8567, 0
      %8581 = vmatprep.subr.mxu0 0.0
      %8582 = vmatpush1.msra.mxu0 0.0
      %8583 = vmatprep.subr.mxu0 0.0
      %8584 = vmatpush1.msra.mxu0 0.0
      %8585 = vmatprep.subr.mxu0 0.0
      %8586 = vmatpush1.msra.mxu0 0.0
      %8587 = vmatprep.subr.mxu0 0.0
      %8588 = vmatpush1.msra.mxu0 0.0
      %8589 = vmatprep.subr.mxu0 0.0
      %8590 = vmatpush1.msra.mxu0 0.0
      %8591 = vmatprep.subr.mxu0 0.0
      %8592 = vmatpush1.msra.mxu0 0.0
      %8593 = vmatprep.subr.mxu0 0.0
      %8594 = vmatpush1.msra.mxu0 0.0
      %8595 = vmatprep.subr.mxu0 0.0
      %8596 = vmatpush1.msra.mxu0 0.0
      %8597 = vmatprep.subr.mxu0 0.0
      %8598 = vmatpush1.msra.mxu0 0.0
      %8599 = vmatprep.subr.mxu0 0.0
      %8600 = vmatpush1.msra.mxu0 0.0
      %8601 = vmatprep.subr.mxu0 0.0
      %8602 = vmatpush1.msra.mxu0 0.0
      %8603 = vmatprep.subr.mxu0 0.0
      %8604 = vmatpush1.msra.mxu0 0.0
      %8605 = vmatprep.subr.mxu0 0.0
      %8606 = vmatpush1.msra.mxu0 0.0
      %8607 = vmatprep.subr.mxu0 0.0
      %8608 = vmatpush1.msra.mxu0 0.0
      %8609 = vmatprep.subr.mxu0 0.0
      %8610 = vmatpush1.msra.mxu0 0.0
      %8611 = vmatprep.subr.mxu0 %v8576
      %8612 = vmatpush1.msra.mxu0 %v8573
      %8613 = vmatprep.subr.mxu0 0.0
      %8614 = vmatpush2.msra.mxu0 0.0
      %8615 = vmatprep.subr.mxu0 0.0
      %8616 = vmatpush2.msra.mxu0 0.0
      %8617 = vmatprep.subr.mxu0 0.0
      %8618 = vmatpush2.msra.mxu0 0.0
      %8619 = vmatprep.subr.mxu0 0.0
      %8620 = vmatpush2.msra.mxu0 0.0
      %8621 = vmatprep.subr.mxu0 0.0
      %8622 = vmatpush2.msra.mxu0 0.0
      %8623 = vmatprep.subr.mxu0 0.0
      %8624 = vmatpush2.msra.mxu0 0.0
      %8625 = vmatprep.subr.mxu0 0.0
      %8626 = vmatpush2.msra.mxu0 0.0
      %8627 = vmatprep.subr.mxu0 0.0
      %8628 = vmatpush2.msra.mxu0 0.0
      %8629 = vmatprep.subr.mxu0 0.0
      %8630 = vmatpush2.msra.mxu0 0.0
      %8631 = vmatprep.subr.mxu0 0.0
      %8632 = vmatpush2.msra.mxu0 0.0
      %8633 = vmatprep.subr.mxu0 0.0
      %8634 = vmatpush2.msra.mxu0 0.0
      %8635 = vmatprep.subr.mxu0 0.0
      %8636 = vmatpush2.msra.mxu0 0.0
      %8637 = vmatprep.subr.mxu0 0.0
      %8638 = vmatpush2.msra.mxu0 0.0
      %8639 = vmatprep.subr.mxu0 0.0
      %8640 = vmatpush2.msra.mxu0 0.0
      %8641 = vmatprep.subr.mxu0 0.0
      %8642 = vmatpush2.msra.mxu0 0.0
      %8643 = vmatprep.subr.mxu0 0.0
      %8644 = vmatpush2.msra.mxu0 0.0
      %8645 = vmatprep.mubr.f32.mxu0 0.0
      %8646 = vmatmul.mubr.f32.gmra.mxu0 %v8570
      %v8647 = vpop.f32.mrf.mxu0
      %v8648 = vadd.f32 0.0, %v8647
      %v8649 = vpop.f32.mrf.mxu0
      %v8650 = vadd.f32 0.0, %v8649
      %8651 = vdwg.mxu0
      %8652 = vmatprep.subr.mxu0 0.0
      %8653 = vmatpush1.msra.mxu0 0.0
      %8654 = vmatprep.subr.mxu0 0.0
      %8655 = vmatpush1.msra.mxu0 0.0
      %8656 = vmatprep.subr.mxu0 0.0
      %8657 = vmatpush1.msra.mxu0 0.0
      %8658 = vmatprep.subr.mxu0 0.0
      %8659 = vmatpush1.msra.mxu0 0.0
      %8660 = vmatprep.subr.mxu0 0.0
      %8661 = vmatpush1.msra.mxu0 0.0
      %8662 = vmatprep.subr.mxu0 0.0
      %8663 = vmatpush1.msra.mxu0 0.0
      %8664 = vmatprep.subr.mxu0 0.0
      %8665 = vmatpush1.msra.mxu0 0.0
      %8666 = vmatprep.subr.mxu0 0.0
      %8667 = vmatpush1.msra.mxu0 0.0
      %8668 = vmatprep.subr.mxu0 0.0
      %8669 = vmatpush1.msra.mxu0 0.0
      %8670 = vmatprep.subr.mxu0 0.0
      %8671 = vmatpush1.msra.mxu0 0.0
      %8672 = vmatprep.subr.mxu0 0.0
      %8673 = vmatpush1.msra.mxu0 0.0
      %8674 = vmatprep.subr.mxu0 0.0
      %8675 = vmatpush1.msra.mxu0 0.0
      %8676 = vmatprep.subr.mxu0 0.0
      %8677 = vmatpush1.msra.mxu0 0.0
      %8678 = vmatprep.subr.mxu0 0.0
      %8679 = vmatpush1.msra.mxu0 0.0
      %8680 = vmatprep.subr.mxu0 0.0
      %8681 = vmatpush1.msra.mxu0 0.0
      %8682 = vmatprep.subr.mxu0 0.0
      %8683 = vmatpush1.msra.mxu0 %v8579
      %8684 = vmatprep.subr.mxu0 0.0
      %8685 = vmatpush2.msra.mxu0 0.0
      %8686 = vmatprep.subr.mxu0 0.0
      %8687 = vmatpush2.msra.mxu0 0.0
      %8688 = vmatprep.subr.mxu0 0.0
      %8689 = vmatpush2.msra.mxu0 0.0
      %8690 = vmatprep.subr.mxu0 0.0
      %8691 = vmatpush2.msra.mxu0 0.0
      %8692 = vmatprep.subr.mxu0 0.0
      %8693 = vmatpush2.msra.mxu0 0.0
      %8694 = vmatprep.subr.mxu0 0.0
      %8695 = vmatpush2.msra.mxu0 0.0
      %8696 = vmatprep.subr.mxu0 0.0
      %8697 = vmatpush2.msra.mxu0 0.0
      %8698 = vmatprep.subr.mxu0 0.0
      %8699 = vmatpush2.msra.mxu0 0.0
      %8700 = vmatprep.subr.mxu0 0.0
      %8701 = vmatpush2.msra.mxu0 0.0
      %8702 = vmatprep.subr.mxu0 0.0
      %8703 = vmatpush2.msra.mxu0 0.0
      %8704 = vmatprep.subr.mxu0 0.0
      %8705 = vmatpush2.msra.mxu0 0.0
      %8706 = vmatprep.subr.mxu0 0.0
      %8707 = vmatpush2.msra.mxu0 0.0
      %8708 = vmatprep.subr.mxu0 0.0
      %8709 = vmatpush2.msra.mxu0 0.0
      %8710 = vmatprep.subr.mxu0 0.0
      %8711 = vmatpush2.msra.mxu0 0.0
      %8712 = vmatprep.subr.mxu0 0.0
      %8713 = vmatpush2.msra.mxu0 0.0
      %8714 = vmatprep.subr.mxu0 0.0
      %8715 = vmatpush2.msra.mxu0 0.0
      %8716 = vmatprep.mubr.f32.mxu0 0.0
      %8717 = vmatmul.mubr.f32.gmra.mxu0 %v8570
      %v8718 = vpop.f32.mrf.mxu0
      %v8719 = vadd.f32 0.0, %v8718
      %v8720 = vpop.f32.mrf.mxu0
      %8721 = vdwg.mxu0
      %8723 = vrot.lane.b32.xlu0 %v8648, 106
      %v8724 = vpop.permute.xlu0 %8723
      %8726 = vrot.lane.b32.xlu0 %v8648, 102
      %v8727 = vpop.permute.xlu0 %8726
      %8729 = vrot.lane.b32.xlu0 %v8648, 98
      %v8730 = vpop.permute.xlu0 %8729
      %8732 = vrot.lane.b32.xlu0 %v8648, 94
      %v8733 = vpop.permute.xlu0 %8732
      %8735 = vrot.lane.b32.xlu0 %v8648, 90
      %v8736 = vpop.permute.xlu0 %8735
      %8739 = vrot.lane.b32.xlu0 %v8648, 86
      %v8740 = vpop.permute.xlu0 %8739
      %8741 = vrot.lane.b32.xlu0 %v8650, 86
      %v8742 = vpop.permute.xlu0 %8741
      %v8743 = vsel %vm2352, %v8740, %v8742
      %8745 = vrot.lane.b32.xlu0 %v8650, 82
      %v8746 = vpop.permute.xlu0 %8745
      %8748 = vrot.lane.b32.xlu0 %v8650, 78
      %v8749 = vpop.permute.xlu0 %8748
      %8751 = vrot.lane.b32.xlu0 %v8650, 74
      %v8752 = vpop.permute.xlu0 %8751
      %8754 = vrot.lane.b32.xlu0 %v8650, 70
      %v8755 = vpop.permute.xlu0 %8754
      %8757 = vrot.lane.b32.xlu0 %v8650, 66
      %v8758 = vpop.permute.xlu0 %8757
      %8761 = vrot.lane.b32.xlu0 %v8650, 62
      %v8762 = vpop.permute.xlu0 %8761
      %8763 = vrot.lane.b32.xlu0 %v8719, 62
      %v8764 = vpop.permute.xlu0 %8763
      %vm8765 = vcmask 506880
      %v8766 = vsel %vm8765, %v8762, %v8764
      %8768 = vrot.lane.b32.xlu0 %v8719, 58
      %v8769 = vpop.permute.xlu0 %8768
      %8771 = vrot.lane.b32.xlu0 %v8719, 54
      %v8772 = vpop.permute.xlu0 %8771
      %8774 = vrot.lane.b32.xlu0 %v8719, 50
      %v8775 = vpop.permute.xlu0 %8774
      %8777 = vrot.lane.b32.xlu0 %v8719, 46
      %v8778 = vpop.permute.xlu0 %8777
      %v8780 = vsel %vm5434, %v8724, %v8727
      %vm8781 = vcmask 261120
      %v8782 = vsel %vm8781, %v8780, %v8730
      %v8783 = vsel %vm3832, %v8782, %v8733
      %vm8784 = vcmask 523264
      %v8785 = vsel %vm8784, %v8783, %v8736
      %vm8786 = vcmask 654336
      %v8787 = vsel %vm8786, %v8785, %v8743
      %vm8788 = vcmask 785408
      %v8789 = vsel %vm8788, %v8787, %v8746
      %v8790 = vsel %vm607, %v8789, %v8749
      %v8791 = vsel %vm5434, %v8752, %v8755
      %v8792 = vsel %vm8781, %v8791, %v8758
      %v8793 = vsel %vm3832, %v8792, %v8766
      %v8794 = vsel %vm8784, %v8793, %v8769
      %v8795 = vsel %vm8786, %v8794, %v8772
      %v8796 = vsel %vm8788, %v8795, %v8775
      %v8797 = vsel %vm607, %v8796, %v8778
      %v8798 = vld [vmem:[%s14] sm:$0xf]
      %8800 = vset.pattern.permute.xlu0 0
      %8801 = vperm.xlu0 %8800, %v8798
      %v8802 = vpop.permute.xlu0 %8801
      %v8804 = vadd.f32 %v8790, %v8802
      %v8805 = vadd.f32 %v8797, %v8802
      %v8808 = vcombine.low %v8804, %v8805
      %8810 = vst [vmem:[%s494] sm:$0xff] %v8808
      %p8811 = scmp.lt.s32.totalorder %s26, 1
      %s8812 = scalar_select %p8811, %s26, 1
      %s8813 = smul.addr %s8812, 2
      %s8814 = smul.addr %s8813, 4
      %s8815 = scalar_lea.vmem %s15, %s8814
      // Predicated region
      $region81: #{attention_c_forward.3} parent=79 // pred_check
        %p8816 = pneg %p364
      $region82: #{attention_c_forward.3} parent=79 // pred_check_branch
        %8818 = sbr.rel (%p8816) target = $region84
      $region83: #{attention_c_forward.3} parent=79 // pred_region
        _
      $region84: #{attention_c_forward.3} parent=79 // pred_fallthru
        _
    $region80: #{attention_c_forward.3} parent=5 // pred_fallthru
      _
    %p8819 = scmp.le.s32.totalorder 2, %s21
    // Predicated region
    $region85: #{attention_c_forward.3} parent=5 // pred_check
      %p8820 = pneg %p8819
    $region86: #{attention_c_forward.3} parent=5 // pred_check_branch
      %8822 = sbr.rel (%p8820) target = $region88
    $region87: #{attention_c_forward.3} parent=5 // pred_region
      %s8823 = ssub.s32 %s21, 2
      // Predicated region
      $region89: #{attention_c_forward.3} parent=87 // pred_check
        %p8824 = pneg %p370
      $region90: #{attention_c_forward.3} parent=87 // pred_check_branch
        %8826 = sbr.rel (%p8824) target = $region92
      $region91: #{attention_c_forward.3} parent=87 // pred_region
        %p8827 = scmp.lt.s32.totalorder %s27, 1
        %s8828 = scalar_select %p8827, %s27, 1
        %s8829 = smul.addr %s8828, 2
        %s8830 = smul.addr %s8829, 4
        %s8831 = scalar_lea.vmem %s15, %s8830
      $region92: #{attention_c_forward.3} parent=87 // pred_fallthru
        _
    $region88: #{attention_c_forward.3} parent=5 // pred_fallthru
      _
  $region6: #{attention_c_forward.3} parent=0 // loop_footer
    %s25 = sadd.s32 1, %s21
  $region7: #{attention_c_forward.3} parent=0 // loop_footer_branch
    %20 = sbr.rel target = $region3
  $region8: #{attention_c_forward.3} parent=0 // loop_exit
    _

</llo_original>
